<compile_context>
chip_gen: v7x
topology: tpu7x:2x2x1
jax: 0.10.0
libtpu: 0.0.40
codegen_flags: <defaults>
</compile_context>

<pallas_src>
import functools

import jax
import jax.numpy as jnp
from jax import lax
from jax.experimental import pallas as pl
from jax.experimental.pallas import tpu as pltpu

LEAKY_SLOPE = 0.2
LN_EPS = 1e-5
NEG_INF = -1e30


# ------------------------------ in-kernel helpers ------------------------------

def _layer_norm(x, gamma, beta):
    """Row-wise LayerNorm over the lane (feature) axis, two-pass stats (f32)."""
    m = jnp.mean(x, axis=-1, keepdims=True)
    d = x - m
    var = jnp.mean(d * d, axis=-1, keepdims=True)
    return d * lax.rsqrt(var + LN_EPS) * gamma + beta


# ----------------------------------- kernel ------------------------------------

def transformer_d_kernel(
    x1_ref, x2_ref,                      # (T, NB, C1), (T, NB, C2)
    bias_ref, hmask_ref,                 # (M, M) additive same-column mask, (nhead, 1, H)
    w1a_ref, w1b_ref, b1_ref,            # (C1, H) bf16, (C2, H) bf16, (1, H) f32
    wq_ref, bq_ref, wk_ref, bk_ref, wv_ref, bv_ref,   # (H, H) bf16 / (1, H) f32
    wo_ref, bo_ref,                      # (H, H) bf16, (1, H) f32
    g1_ref, be1_ref, g2_ref, be2_ref,    # LayerNorm affine, (1, H) f32
    wf1_ref, bf1_ref, wf2_ref, bf2_ref,  # (H, F) bf16, (1, F), (F, H) bf16, (1, H)
    w2_ref, b2_ref,                      # (H, Dout) bf16, (1, Dout) f32
    out_ref,                             # (T, NB, Dout) f32
    *, nhead,
):
    f32, bf16 = jnp.float32, jnp.bfloat16
    T, NB, C1 = x1_ref.shape
    C2 = x2_ref.shape[-1]
    H = wq_ref.shape[0]
    Dout = out_ref.shape[-1]
    M = T * NB                                           # rows per grid step

    # Flatten (T, NB, C) -> (M, C); NB is a multiple of 8 so this is tile-aligned.
    x1 = x1_ref[...].reshape(M, C1).astype(bf16)
    x2 = x2_ref[...].reshape(M, C2).astype(bf16)

    # ---- input Linear fused with the channel concat: [x1|x2] @ W1 = x1@W1a + x2@W1b
    h0 = (jnp.dot(x1, w1a_ref[...], preferred_element_type=f32)
          + jnp.dot(x2, w1b_ref[...], preferred_element_type=f32)
          + b1_ref[...])                                 # (M, H) f32

    # ---- Q/K/V projections (1/sqrt(dh) already folded into wq/bq at prep time)
    h0b = h0.astype(bf16)
    q = jnp.dot(h0b, wq_ref[...], preferred_element_type=f32) + bq_ref[...]
    k = jnp.dot(h0b, wk_ref[...], preferred_element_type=f32) + bk_ref[...]
    v = jnp.dot(h0b, wv_ref[...], preferred_element_type=f32) + bv_ref[...]

    # ---- multi-head attention, batched over all NB columns at once.
    # Per head: mask Q/V to that head's lanes (no lane slicing / concat), compute a
    # full (M, M) score matrix, and use the precomputed additive mask to kill
    # cross-column entries before the softmax.
    kb = k.astype(bf16)
    bias = bias_ref[...]                                 # (M, M) f32, 0 / -1e30
    hm_all = hmask_ref[...]                              # (nhead, 1, H) f32
    attn = jnp.zeros((M, H), f32)
    for h in range(nhead):                               # static, nhead = 8
        hm = hm_all[h]                                   # (1, H)
        qh = (q * hm).astype(bf16)                       # only head-h lanes non-zero
        vh = (v * hm).astype(bf16)
        s = lax.dot_general(qh, kb, (((1,), (1,)), ((), ())),
                            preferred_element_type=f32)  # (M, M) head-h scores
        s = s + bias
        s = s - jnp.max(s, axis=-1, keepdims=True)
        e = jnp.exp(s)
        inv = pl.reciprocal(jnp.sum(e, axis=-1, keepdims=True), approx=True)
        p = (e * inv).astype(bf16)
        attn = attn + jnp.dot(p, vh, preferred_element_type=f32)   # fills head-h lanes

    attn = jnp.dot(attn.astype(bf16), wo_ref[...], preferred_element_type=f32) + bo_ref[...]

    # ---- residual + LayerNorm 1 (post-norm, norm_first=False)
    xa = _layer_norm(h0 + attn, g1_ref[...], be1_ref[...])

    # ---- feed-forward (ReLU)
    f = jnp.dot(xa.astype(bf16), wf1_ref[...], preferred_element_type=f32) + bf1_ref[...]
    f = jnp.maximum(f, 0.0)
    f = jnp.dot(f.astype(bf16), wf2_ref[...], preferred_element_type=f32) + bf2_ref[...]

    # ---- residual + LayerNorm 2
    y = _layer_norm(xa + f, g2_ref[...], be2_ref[...])

    # ---- LeakyReLU(0.2) + output Linear
    y = jnp.where(y > 0, y, LEAKY_SLOPE * y)
    out = jnp.dot(y.astype(bf16), w2_ref[...], preferred_element_type=f32) + b2_ref[...]
    out_ref[...] = out.reshape(T, NB, Dout)


# ---------------------------------- wrapper -------------------------------------

def transformer_d(input1, input2, params, *, nhead=8, block_n=16):
    """input1: (T, N, C1), input2: (T, N, C2) — seq-first (batch_first=False).
    `params` must come from _prepare_params.  Returns (T, N, output_dim)."""
    T, N, C1 = input1.shape
    C2 = input2.shape[-1]
    H = params["wq"].shape[0]
    Dout = params["w2"].shape[1]
    dh = H // nhead

    # Columns per grid step: multiple of 8 (sublane tile) that divides N.
    nb = N if N <= block_n else block_n
    assert N % nb == 0, "batch dim must be divisible by the column block"
    M = T * nb

    # Precomputed (one-time) masks — additive same-column mask over the flattened
    # row order (row = t*nb + n), and per-head lane-selection masks.
    col = jnp.arange(M, dtype=jnp.int32) % nb
    attn_bias = jnp.where(col[:, None] == col[None, :], 0.0, NEG_INF).astype(jnp.float32)
    lane_head = jnp.arange(H, dtype=jnp.int32) // dh
    head_mask = (lane_head[None, :] == jnp.arange(nhead, dtype=jnp.int32)[:, None])
    head_mask = head_mask.astype(jnp.float32).reshape(nhead, 1, H)

    weights = (params["w1a"], params["w1b"], params["b1"],
               params["wq"], params["bq"], params["wk"], params["bk"],
               params["wv"], params["bv"], params["wo"], params["bo"],
               params["g1"], params["be1"], params["g2"], params["be2"],
               params["wf1"], params["bf1"], params["wf2"], params["bf2"],
               params["w2"], params["b2"])

    def _const_spec(shape):
        nd = len(shape)
        return pl.BlockSpec(shape, lambda n, nd=nd: (0,) * nd)

    in_specs = ([pl.BlockSpec((T, nb, C1), lambda n: (0, n, 0)),
                 pl.BlockSpec((T, nb, C2), lambda n: (0, n, 0)),
                 _const_spec(attn_bias.shape),
                 _const_spec(head_mask.shape)]
                + [_const_spec(w.shape) for w in weights])
    out_spec = pl.BlockSpec((T, nb, Dout), lambda n: (0, n, 0))

    return pl.pallas_call(
        functools.partial(transformer_d_kernel, nhead=nhead),
        out_shape=jax.ShapeDtypeStruct((T, N, Dout), jnp.float32),
        grid=(N // nb,),
        in_specs=in_specs,
        out_specs=out_spec,
        compiler_params=pltpu.CompilerParams(
            dimension_semantics=("parallel",),
            vmem_limit_bytes=32 * 1024 * 1024),
    )(input1, input2, attn_bias, head_mask, *weights)


# ----------------------------------- params -------------------------------------

def _make_params(key, c1, c2, hidden, ffn, out_dim):
    """Raw f32 parameters in (in, out) orientation (PyTorch weights transposed;
    the first Linear is split by input source, in_proj split into Q/K/V)."""
    ks = jax.random.split(key, 17)
    s = 0.1

    def rnd(k, shape):
        return s * jax.random.normal(k, shape, jnp.float32)

    return {
        "w1a": rnd(ks[0], (c1, hidden)),
        "w1b": rnd(ks[1], (c2, hidden)),
        "b1":  rnd(ks[2], (1, hidden)),
        "wq":  rnd(ks[3], (hidden, hidden)),
        "bq":  rnd(ks[4], (1, hidden)),
        "wk":  rnd(ks[5], (hidden, hidden)),
        "bk":  rnd(ks[6], (1, hidden)),
        "wv":  rnd(ks[7], (hidden, hidden)),
        "bv":  rnd(ks[8], (1, hidden)),
        "wo":  rnd(ks[9], (hidden, hidden)),
        "bo":  rnd(ks[10], (1, hidden)),
        "g1":  jnp.ones((1, hidden), jnp.float32),
        "be1": jnp.zeros((1, hidden), jnp.float32),
        "g2":  jnp.ones((1, hidden), jnp.float32),
        "be2": jnp.zeros((1, hidden), jnp.float32),
        "wf1": rnd(ks[11], (hidden, ffn)),
        "bf1": rnd(ks[12], (1, ffn)),
        "wf2": rnd(ks[13], (ffn, hidden)),
        "bf2": rnd(ks[14], (1, hidden)),
        "w2":  rnd(ks[15], (hidden, out_dim)),
        "b2":  rnd(ks[16], (1, out_dim)),
    }


def _prepare_params(raw, nhead):
    """One-time prep: fold 1/sqrt(dh) into the Q projection and cast the MXU
    weight operands to bf16.  Biases / LayerNorm affine stay f32."""
    H = raw["wq"].shape[0]
    scale = 1.0 / ((H // nhead) ** 0.5)
    p = dict(raw)
    p["wq"] = raw["wq"] * scale
    p["bq"] = raw["bq"] * scale
    for name in ("w1a", "w1b", "wq", "wk", "wv", "wo", "wf1", "wf2", "w2"):
        p[name] = p[name].astype(jnp.bfloat16)
    return p


# ------------------------------------ main ---------------------------------------

if __name__ == "__main__":
    T, N = 8, 32                # sequence length, batch columns (seq-first layout)
    C1, C2 = 4, 6               # input_1_dim, input_2_dim
    HIDDEN, NHEAD = 64, 8       # module defaults: hidden_dim=64, nhead=8
    FFN = 2048                  # nn.TransformerEncoderLayer default dim_feedforward
    OUT = 16                    # output_dim default

    key = jax.random.PRNGKey(0)
    k1, k2, kp = jax.random.split(key, 3)
    input1 = jax.random.normal(k1, (T, N, C1), jnp.float32)
    input2 = jax.random.normal(k2, (T, N, C2), jnp.float32)
    params = _prepare_params(_make_params(kp, C1, C2, HIDDEN, FFN, OUT), NHEAD)

    out = transformer_d(input1, input2, params, nhead=NHEAD, block_n=16)
    out = jax.block_until_ready(out)
    assert out.shape == (T, N, OUT), out.shape
    print("KERNEL_OK")
</pallas_src>

<mosaic_0001>
module attributes {stable_mosaic.version = 11 : i64} {
  func.func @transformer_d_kernel(%arg0: i32, %arg1: memref<8x16x4xf32, #tpu.memory_space<vmem>>, %arg2: memref<8x16x6xf32, #tpu.memory_space<vmem>>, %arg3: memref<128x128xf32, #tpu.memory_space<vmem>>, %arg4: memref<8x1x64xf32, #tpu.memory_space<vmem>>, %arg5: memref<4x64xbf16, #tpu.memory_space<vmem>>, %arg6: memref<6x64xbf16, #tpu.memory_space<vmem>>, %arg7: memref<1x64xf32, #tpu.memory_space<vmem>>, %arg8: memref<64x64xbf16, #tpu.memory_space<vmem>>, %arg9: memref<1x64xf32, #tpu.memory_space<vmem>>, %arg10: memref<64x64xbf16, #tpu.memory_space<vmem>>, %arg11: memref<1x64xf32, #tpu.memory_space<vmem>>, %arg12: memref<64x64xbf16, #tpu.memory_space<vmem>>, %arg13: memref<1x64xf32, #tpu.memory_space<vmem>>, %arg14: memref<64x64xbf16, #tpu.memory_space<vmem>>, %arg15: memref<1x64xf32, #tpu.memory_space<vmem>>, %arg16: memref<1x64xf32, #tpu.memory_space<vmem>>, %arg17: memref<1x64xf32, #tpu.memory_space<vmem>>, %arg18: memref<1x64xf32, #tpu.memory_space<vmem>>, %arg19: memref<1x64xf32, #tpu.memory_space<vmem>>, %arg20: memref<64x2048xbf16, #tpu.memory_space<vmem>>, %arg21: memref<1x2048xf32, #tpu.memory_space<vmem>>, %arg22: memref<2048x64xbf16, #tpu.memory_space<vmem>>, %arg23: memref<1x64xf32, #tpu.memory_space<vmem>>, %arg24: memref<64x16xbf16, #tpu.memory_space<vmem>>, %arg25: memref<1x16xf32, #tpu.memory_space<vmem>>, %arg26: memref<8x16x16xf32, #tpu.memory_space<vmem>>) attributes {dimension_semantics = [#tpu.dimension_semantics<parallel>], iteration_bounds = array<i64: 2>, scalar_prefetch = 0 : i64, scratch_operands = 0 : i64, tpu.core_type = #tpu.core_type<tc>, window_params = [{transform_indices = @transform_0, window_bounds = array<i64: 8, 16, 4>}, {transform_indices = @transform_1, window_bounds = array<i64: 8, 16, 6>}, {pipeline_mode = #tpu.pipeline_mode<synchronous>, transform_indices = @transform_2, window_bounds = array<i64: 128, 128>}, {pipeline_mode = #tpu.pipeline_mode<synchronous>, transform_indices = @transform_3, window_bounds = array<i64: 8, 1, 64>}, {pipeline_mode = #tpu.pipeline_mode<synchronous>, transform_indices = @transform_4, window_bounds = array<i64: 4, 64>}, {pipeline_mode = #tpu.pipeline_mode<synchronous>, transform_indices = @transform_5, window_bounds = array<i64: 6, 64>}, {pipeline_mode = #tpu.pipeline_mode<synchronous>, transform_indices = @transform_6, window_bounds = array<i64: 1, 64>}, {pipeline_mode = #tpu.pipeline_mode<synchronous>, transform_indices = @transform_7, window_bounds = array<i64: 64, 64>}, {pipeline_mode = #tpu.pipeline_mode<synchronous>, transform_indices = @transform_8, window_bounds = array<i64: 1, 64>}, {pipeline_mode = #tpu.pipeline_mode<synchronous>, transform_indices = @transform_9, window_bounds = array<i64: 64, 64>}, {pipeline_mode = #tpu.pipeline_mode<synchronous>, transform_indices = @transform_10, window_bounds = array<i64: 1, 64>}, {pipeline_mode = #tpu.pipeline_mode<synchronous>, transform_indices = @transform_11, window_bounds = array<i64: 64, 64>}, {pipeline_mode = #tpu.pipeline_mode<synchronous>, transform_indices = @transform_12, window_bounds = array<i64: 1, 64>}, {pipeline_mode = #tpu.pipeline_mode<synchronous>, transform_indices = @transform_13, window_bounds = array<i64: 64, 64>}, {pipeline_mode = #tpu.pipeline_mode<synchronous>, transform_indices = @transform_14, window_bounds = array<i64: 1, 64>}, {pipeline_mode = #tpu.pipeline_mode<synchronous>, transform_indices = @transform_15, window_bounds = array<i64: 1, 64>}, {pipeline_mode = #tpu.pipeline_mode<synchronous>, transform_indices = @transform_16, window_bounds = array<i64: 1, 64>}, {pipeline_mode = #tpu.pipeline_mode<synchronous>, transform_indices = @transform_17, window_bounds = array<i64: 1, 64>}, {pipeline_mode = #tpu.pipeline_mode<synchronous>, transform_indices = @transform_18, window_bounds = array<i64: 1, 64>}, {pipeline_mode = #tpu.pipeline_mode<synchronous>, transform_indices = @transform_19, window_bounds = array<i64: 64, 2048>}, {pipeline_mode = #tpu.pipeline_mode<synchronous>, transform_indices = @transform_20, window_bounds = array<i64: 1, 2048>}, {pipeline_mode = #tpu.pipeline_mode<synchronous>, transform_indices = @transform_21, window_bounds = array<i64: 2048, 64>}, {pipeline_mode = #tpu.pipeline_mode<synchronous>, transform_indices = @transform_22, window_bounds = array<i64: 1, 64>}, {pipeline_mode = #tpu.pipeline_mode<synchronous>, transform_indices = @transform_23, window_bounds = array<i64: 64, 16>}, {pipeline_mode = #tpu.pipeline_mode<synchronous>, transform_indices = @transform_24, window_bounds = array<i64: 1, 16>}, {transform_indices = @transform_25, window_bounds = array<i64: 8, 16, 16>}]} {
    %c0 = arith.constant 0 : index
    %c0_0 = arith.constant 0 : index
    %c0_1 = arith.constant 0 : index
    %0 = vector.load %arg1[%c0, %c0_0, %c0_1] : memref<8x16x4xf32, #tpu.memory_space<vmem>>, vector<8x16x4xf32>
    %1 = vector.shape_cast %0 : vector<8x16x4xf32> to vector<128x4xf32>
    %2 = arith.truncf %1 : vector<128x4xf32> to vector<128x4xbf16>
    %c0_2 = arith.constant 0 : index
    %c0_3 = arith.constant 0 : index
    %c0_4 = arith.constant 0 : index
    %3 = vector.load %arg2[%c0_2, %c0_3, %c0_4] : memref<8x16x6xf32, #tpu.memory_space<vmem>>, vector<8x16x6xf32>
    %4 = vector.shape_cast %3 : vector<8x16x6xf32> to vector<128x6xf32>
    %5 = arith.truncf %4 : vector<128x6xf32> to vector<128x6xbf16>
    %c0_5 = arith.constant 0 : index
    %c0_6 = arith.constant 0 : index
    %6 = vector.load %arg5[%c0_5, %c0_6] : memref<4x64xbf16, #tpu.memory_space<vmem>>, vector<4x64xbf16>
    %cst = arith.constant dense<0.000000e+00> : vector<128x64xf32>
    %7 = tpu.matmul %2, %6, %cst {dimension_numbers = #tpu.dot_dimension_numbers<[1], [0], [0], [1], [0, 0, 1, 1], [], []>} : vector<128x4xbf16>, vector<4x64xbf16>, vector<128x64xf32> -> vector<128x64xf32>
    %c0_7 = arith.constant 0 : index
    %c0_8 = arith.constant 0 : index
    %8 = vector.load %arg6[%c0_7, %c0_8] : memref<6x64xbf16, #tpu.memory_space<vmem>>, vector<6x64xbf16>
    %cst_9 = arith.constant dense<0.000000e+00> : vector<128x64xf32>
    %9 = tpu.matmul %5, %8, %cst_9 {dimension_numbers = #tpu.dot_dimension_numbers<[1], [0], [0], [1], [0, 0, 1, 1], [], []>} : vector<128x6xbf16>, vector<6x64xbf16>, vector<128x64xf32> -> vector<128x64xf32>
    %10 = arith.addf %7, %9 : vector<128x64xf32>
    %c0_10 = arith.constant 0 : index
    %c0_11 = arith.constant 0 : index
    %11 = vector.load %arg7[%c0_10, %c0_11] : memref<1x64xf32, #tpu.memory_space<vmem>>, vector<1x64xf32>
    %12 = vector.broadcast %11 : vector<1x64xf32> to vector<128x64xf32>
    %13 = arith.addf %10, %12 : vector<128x64xf32>
    %14 = arith.truncf %13 : vector<128x64xf32> to vector<128x64xbf16>
    %c0_12 = arith.constant 0 : index
    %c0_13 = arith.constant 0 : index
    %15 = vector.load %arg8[%c0_12, %c0_13] : memref<64x64xbf16, #tpu.memory_space<vmem>>, vector<64x64xbf16>
    %cst_14 = arith.constant dense<0.000000e+00> : vector<128x64xf32>
    %16 = tpu.matmul %14, %15, %cst_14 {dimension_numbers = #tpu.dot_dimension_numbers<[1], [0], [0], [1], [0, 0, 1, 1], [], []>} : vector<128x64xbf16>, vector<64x64xbf16>, vector<128x64xf32> -> vector<128x64xf32>
    %c0_15 = arith.constant 0 : index
    %c0_16 = arith.constant 0 : index
    %17 = vector.load %arg9[%c0_15, %c0_16] : memref<1x64xf32, #tpu.memory_space<vmem>>, vector<1x64xf32>
    %18 = vector.broadcast %17 : vector<1x64xf32> to vector<128x64xf32>
    %19 = arith.addf %16, %18 : vector<128x64xf32>
    %c0_17 = arith.constant 0 : index
    %c0_18 = arith.constant 0 : index
    %20 = vector.load %arg10[%c0_17, %c0_18] : memref<64x64xbf16, #tpu.memory_space<vmem>>, vector<64x64xbf16>
    %cst_19 = arith.constant dense<0.000000e+00> : vector<128x64xf32>
    %21 = tpu.matmul %14, %20, %cst_19 {dimension_numbers = #tpu.dot_dimension_numbers<[1], [0], [0], [1], [0, 0, 1, 1], [], []>} : vector<128x64xbf16>, vector<64x64xbf16>, vector<128x64xf32> -> vector<128x64xf32>
    %c0_20 = arith.constant 0 : index
    %c0_21 = arith.constant 0 : index
    %22 = vector.load %arg11[%c0_20, %c0_21] : memref<1x64xf32, #tpu.memory_space<vmem>>, vector<1x64xf32>
    %23 = vector.broadcast %22 : vector<1x64xf32> to vector<128x64xf32>
    %24 = arith.addf %21, %23 : vector<128x64xf32>
    %c0_22 = arith.constant 0 : index
    %c0_23 = arith.constant 0 : index
    %25 = vector.load %arg12[%c0_22, %c0_23] : memref<64x64xbf16, #tpu.memory_space<vmem>>, vector<64x64xbf16>
    %cst_24 = arith.constant dense<0.000000e+00> : vector<128x64xf32>
    %26 = tpu.matmul %14, %25, %cst_24 {dimension_numbers = #tpu.dot_dimension_numbers<[1], [0], [0], [1], [0, 0, 1, 1], [], []>} : vector<128x64xbf16>, vector<64x64xbf16>, vector<128x64xf32> -> vector<128x64xf32>
    %c0_25 = arith.constant 0 : index
    %c0_26 = arith.constant 0 : index
    %27 = vector.load %arg13[%c0_25, %c0_26] : memref<1x64xf32, #tpu.memory_space<vmem>>, vector<1x64xf32>
    %28 = vector.broadcast %27 : vector<1x64xf32> to vector<128x64xf32>
    %29 = arith.addf %26, %28 : vector<128x64xf32>
    %30 = arith.truncf %24 : vector<128x64xf32> to vector<128x64xbf16>
    %c0_27 = arith.constant 0 : index
    %c0_28 = arith.constant 0 : index
    %31 = vector.load %arg3[%c0_27, %c0_28] : memref<128x128xf32, #tpu.memory_space<vmem>>, vector<128x128xf32>
    %c0_29 = arith.constant 0 : index
    %c0_30 = arith.constant 0 : index
    %c0_31 = arith.constant 0 : index
    %32 = vector.load %arg4[%c0_29, %c0_30, %c0_31] : memref<8x1x64xf32, #tpu.memory_space<vmem>>, vector<8x1x64xf32>
    %cst_32 = arith.constant 0.000000e+00 : f32
    %33 = vector.broadcast %cst_32 : f32 to vector<128x64xf32>
    %34 = vector.extract_strided_slice %32 {offsets = [0, 0, 0], sizes = [1, 1, 64], strides = [1, 1, 1]} : vector<8x1x64xf32> to vector<1x1x64xf32>
    %35 = vector.shape_cast %34 : vector<1x1x64xf32> to vector<1x64xf32>
    %36 = vector.broadcast %35 : vector<1x64xf32> to vector<128x64xf32>
    %37 = arith.mulf %19, %36 : vector<128x64xf32>
    %38 = arith.truncf %37 : vector<128x64xf32> to vector<128x64xbf16>
    %39 = vector.broadcast %35 : vector<1x64xf32> to vector<128x64xf32>
    %40 = arith.mulf %29, %39 : vector<128x64xf32>
    %41 = arith.truncf %40 : vector<128x64xf32> to vector<128x64xbf16>
    %cst_33 = arith.constant dense<0.000000e+00> : vector<128x128xf32>
    %42 = tpu.matmul %38, %30, %cst_33 {dimension_numbers = #tpu.dot_dimension_numbers<[1], [1], [0], [0], [0, 0, 1, 0], [], []>} : vector<128x64xbf16>, vector<128x64xbf16>, vector<128x128xf32> -> vector<128x128xf32>
    %43 = arith.addf %42, %31 : vector<128x128xf32>
    %cst_34 = arith.constant dense<0xFF800000> : vector<128xf32>
    %44 = vector.multi_reduction <maximumf>, %43, %cst_34 [1] : vector<128x128xf32> to vector<128xf32>
    %45 = vector.shape_cast %44 : vector<128xf32> to vector<128x1xf32>
    %46 = vector.broadcast %45 : vector<128x1xf32> to vector<128x128xf32>
    %47 = arith.subf %43, %46 : vector<128x128xf32>
    %48 = math.exp %47 : vector<128x128xf32>
    %cst_35 = arith.constant dense<0.000000e+00> : vector<128xf32>
    %49 = vector.multi_reduction <add>, %48, %cst_35 [1] : vector<128x128xf32> to vector<128xf32>
    %50 = vector.shape_cast %49 : vector<128xf32> to vector<128x1xf32>
    %51 = tpu.reciprocal %50 {approx = true} : vector<128x1xf32> -> vector<128x1xf32>
    %52 = vector.broadcast %51 : vector<128x1xf32> to vector<128x128xf32>
    %53 = arith.mulf %48, %52 : vector<128x128xf32>
    %54 = arith.truncf %53 : vector<128x128xf32> to vector<128x128xbf16>
    %cst_36 = arith.constant dense<0.000000e+00> : vector<128x64xf32>
    %55 = tpu.matmul %54, %41, %cst_36 {dimension_numbers = #tpu.dot_dimension_numbers<[1], [0], [0], [1], [0, 0, 1, 1], [], []>} : vector<128x128xbf16>, vector<128x64xbf16>, vector<128x64xf32> -> vector<128x64xf32>
    %56 = arith.addf %33, %55 : vector<128x64xf32>
    %57 = vector.extract_strided_slice %32 {offsets = [1, 0, 0], sizes = [1, 1, 64], strides = [1, 1, 1]} : vector<8x1x64xf32> to vector<1x1x64xf32>
    %58 = vector.shape_cast %57 : vector<1x1x64xf32> to vector<1x64xf32>
    %59 = vector.broadcast %58 : vector<1x64xf32> to vector<128x64xf32>
    %60 = arith.mulf %19, %59 : vector<128x64xf32>
    %61 = arith.truncf %60 : vector<128x64xf32> to vector<128x64xbf16>
    %62 = vector.broadcast %58 : vector<1x64xf32> to vector<128x64xf32>
    %63 = arith.mulf %29, %62 : vector<128x64xf32>
    %64 = arith.truncf %63 : vector<128x64xf32> to vector<128x64xbf16>
    %cst_37 = arith.constant dense<0.000000e+00> : vector<128x128xf32>
    %65 = tpu.matmul %61, %30, %cst_37 {dimension_numbers = #tpu.dot_dimension_numbers<[1], [1], [0], [0], [0, 0, 1, 0], [], []>} : vector<128x64xbf16>, vector<128x64xbf16>, vector<128x128xf32> -> vector<128x128xf32>
    %66 = arith.addf %65, %31 : vector<128x128xf32>
    %cst_38 = arith.constant dense<0xFF800000> : vector<128xf32>
    %67 = vector.multi_reduction <maximumf>, %66, %cst_38 [1] : vector<128x128xf32> to vector<128xf32>
    %68 = vector.shape_cast %67 : vector<128xf32> to vector<128x1xf32>
    %69 = vector.broadcast %68 : vector<128x1xf32> to vector<128x128xf32>
    %70 = arith.subf %66, %69 : vector<128x128xf32>
    %71 = math.exp %70 : vector<128x128xf32>
    %cst_39 = arith.constant dense<0.000000e+00> : vector<128xf32>
    %72 = vector.multi_reduction <add>, %71, %cst_39 [1] : vector<128x128xf32> to vector<128xf32>
    %73 = vector.shape_cast %72 : vector<128xf32> to vector<128x1xf32>
    %74 = tpu.reciprocal %73 {approx = true} : vector<128x1xf32> -> vector<128x1xf32>
    %75 = vector.broadcast %74 : vector<128x1xf32> to vector<128x128xf32>
    %76 = arith.mulf %71, %75 : vector<128x128xf32>
    %77 = arith.truncf %76 : vector<128x128xf32> to vector<128x128xbf16>
    %cst_40 = arith.constant dense<0.000000e+00> : vector<128x64xf32>
    %78 = tpu.matmul %77, %64, %cst_40 {dimension_numbers = #tpu.dot_dimension_numbers<[1], [0], [0], [1], [0, 0, 1, 1], [], []>} : vector<128x128xbf16>, vector<128x64xbf16>, vector<128x64xf32> -> vector<128x64xf32>
    %79 = arith.addf %56, %78 : vector<128x64xf32>
    %80 = vector.extract_strided_slice %32 {offsets = [2, 0, 0], sizes = [1, 1, 64], strides = [1, 1, 1]} : vector<8x1x64xf32> to vector<1x1x64xf32>
    %81 = vector.shape_cast %80 : vector<1x1x64xf32> to vector<1x64xf32>
    %82 = vector.broadcast %81 : vector<1x64xf32> to vector<128x64xf32>
    %83 = arith.mulf %19, %82 : vector<128x64xf32>
    %84 = arith.truncf %83 : vector<128x64xf32> to vector<128x64xbf16>
    %85 = vector.broadcast %81 : vector<1x64xf32> to vector<128x64xf32>
    %86 = arith.mulf %29, %85 : vector<128x64xf32>
    %87 = arith.truncf %86 : vector<128x64xf32> to vector<128x64xbf16>
    %cst_41 = arith.constant dense<0.000000e+00> : vector<128x128xf32>
    %88 = tpu.matmul %84, %30, %cst_41 {dimension_numbers = #tpu.dot_dimension_numbers<[1], [1], [0], [0], [0, 0, 1, 0], [], []>} : vector<128x64xbf16>, vector<128x64xbf16>, vector<128x128xf32> -> vector<128x128xf32>
    %89 = arith.addf %88, %31 : vector<128x128xf32>
    %cst_42 = arith.constant dense<0xFF800000> : vector<128xf32>
    %90 = vector.multi_reduction <maximumf>, %89, %cst_42 [1] : vector<128x128xf32> to vector<128xf32>
    %91 = vector.shape_cast %90 : vector<128xf32> to vector<128x1xf32>
    %92 = vector.broadcast %91 : vector<128x1xf32> to vector<128x128xf32>
    %93 = arith.subf %89, %92 : vector<128x128xf32>
    %94 = math.exp %93 : vector<128x128xf32>
    %cst_43 = arith.constant dense<0.000000e+00> : vector<128xf32>
    %95 = vector.multi_reduction <add>, %94, %cst_43 [1] : vector<128x128xf32> to vector<128xf32>
    %96 = vector.shape_cast %95 : vector<128xf32> to vector<128x1xf32>
    %97 = tpu.reciprocal %96 {approx = true} : vector<128x1xf32> -> vector<128x1xf32>
    %98 = vector.broadcast %97 : vector<128x1xf32> to vector<128x128xf32>
    %99 = arith.mulf %94, %98 : vector<128x128xf32>
    %100 = arith.truncf %99 : vector<128x128xf32> to vector<128x128xbf16>
    %cst_44 = arith.constant dense<0.000000e+00> : vector<128x64xf32>
    %101 = tpu.matmul %100, %87, %cst_44 {dimension_numbers = #tpu.dot_dimension_numbers<[1], [0], [0], [1], [0, 0, 1, 1], [], []>} : vector<128x128xbf16>, vector<128x64xbf16>, vector<128x64xf32> -> vector<128x64xf32>
    %102 = arith.addf %79, %101 : vector<128x64xf32>
    %103 = vector.extract_strided_slice %32 {offsets = [3, 0, 0], sizes = [1, 1, 64], strides = [1, 1, 1]} : vector<8x1x64xf32> to vector<1x1x64xf32>
    %104 = vector.shape_cast %103 : vector<1x1x64xf32> to vector<1x64xf32>
    %105 = vector.broadcast %104 : vector<1x64xf32> to vector<128x64xf32>
    %106 = arith.mulf %19, %105 : vector<128x64xf32>
    %107 = arith.truncf %106 : vector<128x64xf32> to vector<128x64xbf16>
    %108 = vector.broadcast %104 : vector<1x64xf32> to vector<128x64xf32>
    %109 = arith.mulf %29, %108 : vector<128x64xf32>
    %110 = arith.truncf %109 : vector<128x64xf32> to vector<128x64xbf16>
    %cst_45 = arith.constant dense<0.000000e+00> : vector<128x128xf32>
    %111 = tpu.matmul %107, %30, %cst_45 {dimension_numbers = #tpu.dot_dimension_numbers<[1], [1], [0], [0], [0, 0, 1, 0], [], []>} : vector<128x64xbf16>, vector<128x64xbf16>, vector<128x128xf32> -> vector<128x128xf32>
    %112 = arith.addf %111, %31 : vector<128x128xf32>
    %cst_46 = arith.constant dense<0xFF800000> : vector<128xf32>
    %113 = vector.multi_reduction <maximumf>, %112, %cst_46 [1] : vector<128x128xf32> to vector<128xf32>
    %114 = vector.shape_cast %113 : vector<128xf32> to vector<128x1xf32>
    %115 = vector.broadcast %114 : vector<128x1xf32> to vector<128x128xf32>
    %116 = arith.subf %112, %115 : vector<128x128xf32>
    %117 = math.exp %116 : vector<128x128xf32>
    %cst_47 = arith.constant dense<0.000000e+00> : vector<128xf32>
    %118 = vector.multi_reduction <add>, %117, %cst_47 [1] : vector<128x128xf32> to vector<128xf32>
    %119 = vector.shape_cast %118 : vector<128xf32> to vector<128x1xf32>
    %120 = tpu.reciprocal %119 {approx = true} : vector<128x1xf32> -> vector<128x1xf32>
    %121 = vector.broadcast %120 : vector<128x1xf32> to vector<128x128xf32>
    %122 = arith.mulf %117, %121 : vector<128x128xf32>
    %123 = arith.truncf %122 : vector<128x128xf32> to vector<128x128xbf16>
    %cst_48 = arith.constant dense<0.000000e+00> : vector<128x64xf32>
    %124 = tpu.matmul %123, %110, %cst_48 {dimension_numbers = #tpu.dot_dimension_numbers<[1], [0], [0], [1], [0, 0, 1, 1], [], []>} : vector<128x128xbf16>, vector<128x64xbf16>, vector<128x64xf32> -> vector<128x64xf32>
    %125 = arith.addf %102, %124 : vector<128x64xf32>
    %126 = vector.extract_strided_slice %32 {offsets = [4, 0, 0], sizes = [1, 1, 64], strides = [1, 1, 1]} : vector<8x1x64xf32> to vector<1x1x64xf32>
    %127 = vector.shape_cast %126 : vector<1x1x64xf32> to vector<1x64xf32>
    %128 = vector.broadcast %127 : vector<1x64xf32> to vector<128x64xf32>
    %129 = arith.mulf %19, %128 : vector<128x64xf32>
    %130 = arith.truncf %129 : vector<128x64xf32> to vector<128x64xbf16>
    %131 = vector.broadcast %127 : vector<1x64xf32> to vector<128x64xf32>
    %132 = arith.mulf %29, %131 : vector<128x64xf32>
    %133 = arith.truncf %132 : vector<128x64xf32> to vector<128x64xbf16>
    %cst_49 = arith.constant dense<0.000000e+00> : vector<128x128xf32>
    %134 = tpu.matmul %130, %30, %cst_49 {dimension_numbers = #tpu.dot_dimension_numbers<[1], [1], [0], [0], [0, 0, 1, 0], [], []>} : vector<128x64xbf16>, vector<128x64xbf16>, vector<128x128xf32> -> vector<128x128xf32>
    %135 = arith.addf %134, %31 : vector<128x128xf32>
    %cst_50 = arith.constant dense<0xFF800000> : vector<128xf32>
    %136 = vector.multi_reduction <maximumf>, %135, %cst_50 [1] : vector<128x128xf32> to vector<128xf32>
    %137 = vector.shape_cast %136 : vector<128xf32> to vector<128x1xf32>
    %138 = vector.broadcast %137 : vector<128x1xf32> to vector<128x128xf32>
    %139 = arith.subf %135, %138 : vector<128x128xf32>
    %140 = math.exp %139 : vector<128x128xf32>
    %cst_51 = arith.constant dense<0.000000e+00> : vector<128xf32>
    %141 = vector.multi_reduction <add>, %140, %cst_51 [1] : vector<128x128xf32> to vector<128xf32>
    %142 = vector.shape_cast %141 : vector<128xf32> to vector<128x1xf32>
    %143 = tpu.reciprocal %142 {approx = true} : vector<128x1xf32> -> vector<128x1xf32>
    %144 = vector.broadcast %143 : vector<128x1xf32> to vector<128x128xf32>
    %145 = arith.mulf %140, %144 : vector<128x128xf32>
    %146 = arith.truncf %145 : vector<128x128xf32> to vector<128x128xbf16>
    %cst_52 = arith.constant dense<0.000000e+00> : vector<128x64xf32>
    %147 = tpu.matmul %146, %133, %cst_52 {dimension_numbers = #tpu.dot_dimension_numbers<[1], [0], [0], [1], [0, 0, 1, 1], [], []>} : vector<128x128xbf16>, vector<128x64xbf16>, vector<128x64xf32> -> vector<128x64xf32>
    %148 = arith.addf %125, %147 : vector<128x64xf32>
    %149 = vector.extract_strided_slice %32 {offsets = [5, 0, 0], sizes = [1, 1, 64], strides = [1, 1, 1]} : vector<8x1x64xf32> to vector<1x1x64xf32>
    %150 = vector.shape_cast %149 : vector<1x1x64xf32> to vector<1x64xf32>
    %151 = vector.broadcast %150 : vector<1x64xf32> to vector<128x64xf32>
    %152 = arith.mulf %19, %151 : vector<128x64xf32>
    %153 = arith.truncf %152 : vector<128x64xf32> to vector<128x64xbf16>
    %154 = vector.broadcast %150 : vector<1x64xf32> to vector<128x64xf32>
    %155 = arith.mulf %29, %154 : vector<128x64xf32>
    %156 = arith.truncf %155 : vector<128x64xf32> to vector<128x64xbf16>
    %cst_53 = arith.constant dense<0.000000e+00> : vector<128x128xf32>
    %157 = tpu.matmul %153, %30, %cst_53 {dimension_numbers = #tpu.dot_dimension_numbers<[1], [1], [0], [0], [0, 0, 1, 0], [], []>} : vector<128x64xbf16>, vector<128x64xbf16>, vector<128x128xf32> -> vector<128x128xf32>
    %158 = arith.addf %157, %31 : vector<128x128xf32>
    %cst_54 = arith.constant dense<0xFF800000> : vector<128xf32>
    %159 = vector.multi_reduction <maximumf>, %158, %cst_54 [1] : vector<128x128xf32> to vector<128xf32>
    %160 = vector.shape_cast %159 : vector<128xf32> to vector<128x1xf32>
    %161 = vector.broadcast %160 : vector<128x1xf32> to vector<128x128xf32>
    %162 = arith.subf %158, %161 : vector<128x128xf32>
    %163 = math.exp %162 : vector<128x128xf32>
    %cst_55 = arith.constant dense<0.000000e+00> : vector<128xf32>
    %164 = vector.multi_reduction <add>, %163, %cst_55 [1] : vector<128x128xf32> to vector<128xf32>
    %165 = vector.shape_cast %164 : vector<128xf32> to vector<128x1xf32>
    %166 = tpu.reciprocal %165 {approx = true} : vector<128x1xf32> -> vector<128x1xf32>
    %167 = vector.broadcast %166 : vector<128x1xf32> to vector<128x128xf32>
    %168 = arith.mulf %163, %167 : vector<128x128xf32>
    %169 = arith.truncf %168 : vector<128x128xf32> to vector<128x128xbf16>
    %cst_56 = arith.constant dense<0.000000e+00> : vector<128x64xf32>
    %170 = tpu.matmul %169, %156, %cst_56 {dimension_numbers = #tpu.dot_dimension_numbers<[1], [0], [0], [1], [0, 0, 1, 1], [], []>} : vector<128x128xbf16>, vector<128x64xbf16>, vector<128x64xf32> -> vector<128x64xf32>
    %171 = arith.addf %148, %170 : vector<128x64xf32>
    %172 = vector.extract_strided_slice %32 {offsets = [6, 0, 0], sizes = [1, 1, 64], strides = [1, 1, 1]} : vector<8x1x64xf32> to vector<1x1x64xf32>
    %173 = vector.shape_cast %172 : vector<1x1x64xf32> to vector<1x64xf32>
    %174 = vector.broadcast %173 : vector<1x64xf32> to vector<128x64xf32>
    %175 = arith.mulf %19, %174 : vector<128x64xf32>
    %176 = arith.truncf %175 : vector<128x64xf32> to vector<128x64xbf16>
    %177 = vector.broadcast %173 : vector<1x64xf32> to vector<128x64xf32>
    %178 = arith.mulf %29, %177 : vector<128x64xf32>
    %179 = arith.truncf %178 : vector<128x64xf32> to vector<128x64xbf16>
    %cst_57 = arith.constant dense<0.000000e+00> : vector<128x128xf32>
    %180 = tpu.matmul %176, %30, %cst_57 {dimension_numbers = #tpu.dot_dimension_numbers<[1], [1], [0], [0], [0, 0, 1, 0], [], []>} : vector<128x64xbf16>, vector<128x64xbf16>, vector<128x128xf32> -> vector<128x128xf32>
    %181 = arith.addf %180, %31 : vector<128x128xf32>
    %cst_58 = arith.constant dense<0xFF800000> : vector<128xf32>
    %182 = vector.multi_reduction <maximumf>, %181, %cst_58 [1] : vector<128x128xf32> to vector<128xf32>
    %183 = vector.shape_cast %182 : vector<128xf32> to vector<128x1xf32>
    %184 = vector.broadcast %183 : vector<128x1xf32> to vector<128x128xf32>
    %185 = arith.subf %181, %184 : vector<128x128xf32>
    %186 = math.exp %185 : vector<128x128xf32>
    %cst_59 = arith.constant dense<0.000000e+00> : vector<128xf32>
    %187 = vector.multi_reduction <add>, %186, %cst_59 [1] : vector<128x128xf32> to vector<128xf32>
    %188 = vector.shape_cast %187 : vector<128xf32> to vector<128x1xf32>
    %189 = tpu.reciprocal %188 {approx = true} : vector<128x1xf32> -> vector<128x1xf32>
    %190 = vector.broadcast %189 : vector<128x1xf32> to vector<128x128xf32>
    %191 = arith.mulf %186, %190 : vector<128x128xf32>
    %192 = arith.truncf %191 : vector<128x128xf32> to vector<128x128xbf16>
    %cst_60 = arith.constant dense<0.000000e+00> : vector<128x64xf32>
    %193 = tpu.matmul %192, %179, %cst_60 {dimension_numbers = #tpu.dot_dimension_numbers<[1], [0], [0], [1], [0, 0, 1, 1], [], []>} : vector<128x128xbf16>, vector<128x64xbf16>, vector<128x64xf32> -> vector<128x64xf32>
    %194 = arith.addf %171, %193 : vector<128x64xf32>
    %195 = vector.extract_strided_slice %32 {offsets = [7, 0, 0], sizes = [1, 1, 64], strides = [1, 1, 1]} : vector<8x1x64xf32> to vector<1x1x64xf32>
    %196 = vector.shape_cast %195 : vector<1x1x64xf32> to vector<1x64xf32>
    %197 = vector.broadcast %196 : vector<1x64xf32> to vector<128x64xf32>
    %198 = arith.mulf %19, %197 : vector<128x64xf32>
    %199 = arith.truncf %198 : vector<128x64xf32> to vector<128x64xbf16>
    %200 = vector.broadcast %196 : vector<1x64xf32> to vector<128x64xf32>
    %201 = arith.mulf %29, %200 : vector<128x64xf32>
    %202 = arith.truncf %201 : vector<128x64xf32> to vector<128x64xbf16>
    %cst_61 = arith.constant dense<0.000000e+00> : vector<128x128xf32>
    %203 = tpu.matmul %199, %30, %cst_61 {dimension_numbers = #tpu.dot_dimension_numbers<[1], [1], [0], [0], [0, 0, 1, 0], [], []>} : vector<128x64xbf16>, vector<128x64xbf16>, vector<128x128xf32> -> vector<128x128xf32>
    %204 = arith.addf %203, %31 : vector<128x128xf32>
    %cst_62 = arith.constant dense<0xFF800000> : vector<128xf32>
    %205 = vector.multi_reduction <maximumf>, %204, %cst_62 [1] : vector<128x128xf32> to vector<128xf32>
    %206 = vector.shape_cast %205 : vector<128xf32> to vector<128x1xf32>
    %207 = vector.broadcast %206 : vector<128x1xf32> to vector<128x128xf32>
    %208 = arith.subf %204, %207 : vector<128x128xf32>
    %209 = math.exp %208 : vector<128x128xf32>
    %cst_63 = arith.constant dense<0.000000e+00> : vector<128xf32>
    %210 = vector.multi_reduction <add>, %209, %cst_63 [1] : vector<128x128xf32> to vector<128xf32>
    %211 = vector.shape_cast %210 : vector<128xf32> to vector<128x1xf32>
    %212 = tpu.reciprocal %211 {approx = true} : vector<128x1xf32> -> vector<128x1xf32>
    %213 = vector.broadcast %212 : vector<128x1xf32> to vector<128x128xf32>
    %214 = arith.mulf %209, %213 : vector<128x128xf32>
    %215 = arith.truncf %214 : vector<128x128xf32> to vector<128x128xbf16>
    %cst_64 = arith.constant dense<0.000000e+00> : vector<128x64xf32>
    %216 = tpu.matmul %215, %202, %cst_64 {dimension_numbers = #tpu.dot_dimension_numbers<[1], [0], [0], [1], [0, 0, 1, 1], [], []>} : vector<128x128xbf16>, vector<128x64xbf16>, vector<128x64xf32> -> vector<128x64xf32>
    %217 = arith.addf %194, %216 : vector<128x64xf32>
    %218 = arith.truncf %217 : vector<128x64xf32> to vector<128x64xbf16>
    %c0_65 = arith.constant 0 : index
    %c0_66 = arith.constant 0 : index
    %219 = vector.load %arg14[%c0_65, %c0_66] : memref<64x64xbf16, #tpu.memory_space<vmem>>, vector<64x64xbf16>
    %cst_67 = arith.constant dense<0.000000e+00> : vector<128x64xf32>
    %220 = tpu.matmul %218, %219, %cst_67 {dimension_numbers = #tpu.dot_dimension_numbers<[1], [0], [0], [1], [0, 0, 1, 1], [], []>} : vector<128x64xbf16>, vector<64x64xbf16>, vector<128x64xf32> -> vector<128x64xf32>
    %c0_68 = arith.constant 0 : index
    %c0_69 = arith.constant 0 : index
    %221 = vector.load %arg15[%c0_68, %c0_69] : memref<1x64xf32, #tpu.memory_space<vmem>>, vector<1x64xf32>
    %222 = vector.broadcast %221 : vector<1x64xf32> to vector<128x64xf32>
    %223 = arith.addf %220, %222 : vector<128x64xf32>
    %224 = arith.addf %13, %223 : vector<128x64xf32>
    %c0_70 = arith.constant 0 : index
    %c0_71 = arith.constant 0 : index
    %225 = vector.load %arg16[%c0_70, %c0_71] : memref<1x64xf32, #tpu.memory_space<vmem>>, vector<1x64xf32>
    %c0_72 = arith.constant 0 : index
    %c0_73 = arith.constant 0 : index
    %226 = vector.load %arg17[%c0_72, %c0_73] : memref<1x64xf32, #tpu.memory_space<vmem>>, vector<1x64xf32>
    %cst_74 = arith.constant dense<0.000000e+00> : vector<128xf32>
    %227 = vector.multi_reduction <add>, %224, %cst_74 [1] : vector<128x64xf32> to vector<128xf32>
    %228 = vector.shape_cast %227 : vector<128xf32> to vector<128x1xf32>
    %cst_75 = arith.constant 6.400000e+01 : f32
    %229 = vector.broadcast %cst_75 : f32 to vector<128x1xf32>
    %230 = arith.divf %228, %229 : vector<128x1xf32>
    %231 = vector.broadcast %230 : vector<128x1xf32> to vector<128x64xf32>
    %232 = arith.subf %224, %231 : vector<128x64xf32>
    %233 = arith.mulf %232, %232 : vector<128x64xf32>
    %cst_76 = arith.constant dense<0.000000e+00> : vector<128xf32>
    %234 = vector.multi_reduction <add>, %233, %cst_76 [1] : vector<128x64xf32> to vector<128xf32>
    %235 = vector.shape_cast %234 : vector<128xf32> to vector<128x1xf32>
    %cst_77 = arith.constant 6.400000e+01 : f32
    %236 = vector.broadcast %cst_77 : f32 to vector<128x1xf32>
    %237 = arith.divf %235, %236 : vector<128x1xf32>
    %cst_78 = arith.constant 9.99999974E-6 : f32
    %238 = vector.broadcast %cst_78 : f32 to vector<128x1xf32>
    %239 = arith.addf %237, %238 : vector<128x1xf32>
    %240 = math.rsqrt %239 : vector<128x1xf32>
    %241 = vector.broadcast %240 : vector<128x1xf32> to vector<128x64xf32>
    %242 = arith.mulf %232, %241 : vector<128x64xf32>
    %243 = vector.broadcast %225 : vector<1x64xf32> to vector<128x64xf32>
    %244 = arith.mulf %242, %243 : vector<128x64xf32>
    %245 = vector.broadcast %226 : vector<1x64xf32> to vector<128x64xf32>
    %246 = arith.addf %244, %245 : vector<128x64xf32>
    %247 = arith.truncf %246 : vector<128x64xf32> to vector<128x64xbf16>
    %c0_79 = arith.constant 0 : index
    %c0_80 = arith.constant 0 : index
    %248 = vector.load %arg20[%c0_79, %c0_80] : memref<64x2048xbf16, #tpu.memory_space<vmem>>, vector<64x2048xbf16>
    %cst_81 = arith.constant dense<0.000000e+00> : vector<128x2048xf32>
    %249 = tpu.matmul %247, %248, %cst_81 {dimension_numbers = #tpu.dot_dimension_numbers<[1], [0], [0], [1], [0, 0, 1, 1], [], []>} : vector<128x64xbf16>, vector<64x2048xbf16>, vector<128x2048xf32> -> vector<128x2048xf32>
    %c0_82 = arith.constant 0 : index
    %c0_83 = arith.constant 0 : index
    %250 = vector.load %arg21[%c0_82, %c0_83] : memref<1x2048xf32, #tpu.memory_space<vmem>>, vector<1x2048xf32>
    %251 = vector.broadcast %250 : vector<1x2048xf32> to vector<128x2048xf32>
    %252 = arith.addf %249, %251 : vector<128x2048xf32>
    %cst_84 = arith.constant 0.000000e+00 : f32
    %253 = vector.broadcast %cst_84 : f32 to vector<128x2048xf32>
    %254 = arith.maximumf %252, %253 : vector<128x2048xf32>
    %255 = arith.truncf %254 : vector<128x2048xf32> to vector<128x2048xbf16>
    %c0_85 = arith.constant 0 : index
    %c0_86 = arith.constant 0 : index
    %256 = vector.load %arg22[%c0_85, %c0_86] : memref<2048x64xbf16, #tpu.memory_space<vmem>>, vector<2048x64xbf16>
    %cst_87 = arith.constant dense<0.000000e+00> : vector<128x64xf32>
    %257 = tpu.matmul %255, %256, %cst_87 {dimension_numbers = #tpu.dot_dimension_numbers<[1], [0], [0], [1], [0, 0, 1, 1], [], []>} : vector<128x2048xbf16>, vector<2048x64xbf16>, vector<128x64xf32> -> vector<128x64xf32>
    %c0_88 = arith.constant 0 : index
    %c0_89 = arith.constant 0 : index
    %258 = vector.load %arg23[%c0_88, %c0_89] : memref<1x64xf32, #tpu.memory_space<vmem>>, vector<1x64xf32>
    %259 = vector.broadcast %258 : vector<1x64xf32> to vector<128x64xf32>
    %260 = arith.addf %257, %259 : vector<128x64xf32>
    %261 = arith.addf %246, %260 : vector<128x64xf32>
    %c0_90 = arith.constant 0 : index
    %c0_91 = arith.constant 0 : index
    %262 = vector.load %arg18[%c0_90, %c0_91] : memref<1x64xf32, #tpu.memory_space<vmem>>, vector<1x64xf32>
    %c0_92 = arith.constant 0 : index
    %c0_93 = arith.constant 0 : index
    %263 = vector.load %arg19[%c0_92, %c0_93] : memref<1x64xf32, #tpu.memory_space<vmem>>, vector<1x64xf32>
    %cst_94 = arith.constant dense<0.000000e+00> : vector<128xf32>
    %264 = vector.multi_reduction <add>, %261, %cst_94 [1] : vector<128x64xf32> to vector<128xf32>
    %265 = vector.shape_cast %264 : vector<128xf32> to vector<128x1xf32>
    %cst_95 = arith.constant 6.400000e+01 : f32
    %266 = vector.broadcast %cst_95 : f32 to vector<128x1xf32>
    %267 = arith.divf %265, %266 : vector<128x1xf32>
    %268 = vector.broadcast %267 : vector<128x1xf32> to vector<128x64xf32>
    %269 = arith.subf %261, %268 : vector<128x64xf32>
    %270 = arith.mulf %269, %269 : vector<128x64xf32>
    %cst_96 = arith.constant dense<0.000000e+00> : vector<128xf32>
    %271 = vector.multi_reduction <add>, %270, %cst_96 [1] : vector<128x64xf32> to vector<128xf32>
    %272 = vector.shape_cast %271 : vector<128xf32> to vector<128x1xf32>
    %cst_97 = arith.constant 6.400000e+01 : f32
    %273 = vector.broadcast %cst_97 : f32 to vector<128x1xf32>
    %274 = arith.divf %272, %273 : vector<128x1xf32>
    %cst_98 = arith.constant 9.99999974E-6 : f32
    %275 = vector.broadcast %cst_98 : f32 to vector<128x1xf32>
    %276 = arith.addf %274, %275 : vector<128x1xf32>
    %277 = math.rsqrt %276 : vector<128x1xf32>
    %278 = vector.broadcast %277 : vector<128x1xf32> to vector<128x64xf32>
    %279 = arith.mulf %269, %278 : vector<128x64xf32>
    %280 = vector.broadcast %262 : vector<1x64xf32> to vector<128x64xf32>
    %281 = arith.mulf %279, %280 : vector<128x64xf32>
    %282 = vector.broadcast %263 : vector<1x64xf32> to vector<128x64xf32>
    %283 = arith.addf %281, %282 : vector<128x64xf32>
    %cst_99 = arith.constant 0.000000e+00 : f32
    %284 = vector.broadcast %cst_99 : f32 to vector<128x64xf32>
    %285 = arith.cmpf ogt, %283, %284 : vector<128x64xf32>
    %cst_100 = arith.constant 2.000000e-01 : f32
    %286 = vector.broadcast %cst_100 : f32 to vector<128x64xf32>
    %287 = arith.mulf %286, %283 : vector<128x64xf32>
    %288 = arith.select %285, %283, %287 : vector<128x64xi1>, vector<128x64xf32>
    %289 = arith.truncf %288 : vector<128x64xf32> to vector<128x64xbf16>
    %c0_101 = arith.constant 0 : index
    %c0_102 = arith.constant 0 : index
    %290 = vector.load %arg24[%c0_101, %c0_102] : memref<64x16xbf16, #tpu.memory_space<vmem>>, vector<64x16xbf16>
    %cst_103 = arith.constant dense<0.000000e+00> : vector<128x16xf32>
    %291 = tpu.matmul %289, %290, %cst_103 {dimension_numbers = #tpu.dot_dimension_numbers<[1], [0], [0], [1], [0, 0, 1, 1], [], []>} : vector<128x64xbf16>, vector<64x16xbf16>, vector<128x16xf32> -> vector<128x16xf32>
    %c0_104 = arith.constant 0 : index
    %c0_105 = arith.constant 0 : index
    %292 = vector.load %arg25[%c0_104, %c0_105] : memref<1x16xf32, #tpu.memory_space<vmem>>, vector<1x16xf32>
    %293 = vector.broadcast %292 : vector<1x16xf32> to vector<128x16xf32>
    %294 = arith.addf %291, %293 : vector<128x16xf32>
    %295 = vector.shape_cast %294 : vector<128x16xf32> to vector<8x16x16xf32>
    %c0_106 = arith.constant 0 : index
    %c0_107 = arith.constant 0 : index
    %c0_108 = arith.constant 0 : index
    %296 = vector.load %arg26[%c0_106, %c0_107, %c0_108] : memref<8x16x16xf32, #tpu.memory_space<vmem>>, vector<8x16x16xf32>
    tpu.vector_store %arg26[%c0_106, %c0_107, %c0_108], %295 {strides = array<i32>} : memref<8x16x16xf32, #tpu.memory_space<vmem>>, vector<8x16x16xf32>,
    return
  }
  func.func @transform_0(%arg0: i32) -> (i32, i32, i32) {
    %c0_i32 = arith.constant 0 : i32
    %c0_i32_0 = arith.constant 0 : i32
    %c0_i32_1 = arith.constant 0 : i32
    return %c0_i32, %arg0, %c0_i32_0 : i32, i32, i32
  }
  func.func @transform_1(%arg0: i32) -> (i32, i32, i32) {
    %c0_i32 = arith.constant 0 : i32
    %c0_i32_0 = arith.constant 0 : i32
    %c0_i32_1 = arith.constant 0 : i32
    return %c0_i32, %arg0, %c0_i32_0 : i32, i32, i32
  }
  func.func @transform_2(%arg0: i32) -> (i32, i32) {
    %c0_i32 = arith.constant 0 : i32
    %c0_i32_0 = arith.constant 0 : i32
    %c0_i32_1 = arith.constant 0 : i32
    return %c0_i32, %c0_i32_0 : i32, i32
  }
  func.func @transform_3(%arg0: i32) -> (i32, i32, i32) {
    %c0_i32 = arith.constant 0 : i32
    %c0_i32_0 = arith.constant 0 : i32
    %c0_i32_1 = arith.constant 0 : i32
    %c0_i32_2 = arith.constant 0 : i32
    return %c0_i32, %c0_i32_0, %c0_i32_1 : i32, i32, i32
  }
  func.func @transform_4(%arg0: i32) -> (i32, i32) {
    %c0_i32 = arith.constant 0 : i32
    %c0_i32_0 = arith.constant 0 : i32
    %c0_i32_1 = arith.constant 0 : i32
    return %c0_i32, %c0_i32_0 : i32, i32
  }
  func.func @transform_5(%arg0: i32) -> (i32, i32) {
    %c0_i32 = arith.constant 0 : i32
    %c0_i32_0 = arith.constant 0 : i32
    %c0_i32_1 = arith.constant 0 : i32
    return %c0_i32, %c0_i32_0 : i32, i32
  }
  func.func @transform_6(%arg0: i32) -> (i32, i32) {
    %c0_i32 = arith.constant 0 : i32
    %c0_i32_0 = arith.constant 0 : i32
    %c0_i32_1 = arith.constant 0 : i32
    return %c0_i32, %c0_i32_0 : i32, i32
  }
  func.func @transform_7(%arg0: i32) -> (i32, i32) {
    %c0_i32 = arith.constant 0 : i32
    %c0_i32_0 = arith.constant 0 : i32
    %c0_i32_1 = arith.constant 0 : i32
    return %c0_i32, %c0_i32_0 : i32, i32
  }
  func.func @transform_8(%arg0: i32) -> (i32, i32) {
    %c0_i32 = arith.constant 0 : i32
    %c0_i32_0 = arith.constant 0 : i32
    %c0_i32_1 = arith.constant 0 : i32
    return %c0_i32, %c0_i32_0 : i32, i32
  }
  func.func @transform_9(%arg0: i32) -> (i32, i32) {
    %c0_i32 = arith.constant 0 : i32
    %c0_i32_0 = arith.constant 0 : i32
    %c0_i32_1 = arith.constant 0 : i32
    return %c0_i32, %c0_i32_0 : i32, i32
  }
  func.func @transform_10(%arg0: i32) -> (i32, i32) {
    %c0_i32 = arith.constant 0 : i32
    %c0_i32_0 = arith.constant 0 : i32
    %c0_i32_1 = arith.constant 0 : i32
    return %c0_i32, %c0_i32_0 : i32, i32
  }
  func.func @transform_11(%arg0: i32) -> (i32, i32) {
    %c0_i32 = arith.constant 0 : i32
    %c0_i32_0 = arith.constant 0 : i32
    %c0_i32_1 = arith.constant 0 : i32
    return %c0_i32, %c0_i32_0 : i32, i32
  }
  func.func @transform_12(%arg0: i32) -> (i32, i32) {
    %c0_i32 = arith.constant 0 : i32
    %c0_i32_0 = arith.constant 0 : i32
    %c0_i32_1 = arith.constant 0 : i32
    return %c0_i32, %c0_i32_0 : i32, i32
  }
  func.func @transform_13(%arg0: i32) -> (i32, i32) {
    %c0_i32 = arith.constant 0 : i32
    %c0_i32_0 = arith.constant 0 : i32
    %c0_i32_1 = arith.constant 0 : i32
    return %c0_i32, %c0_i32_0 : i32, i32
  }
  func.func @transform_14(%arg0: i32) -> (i32, i32) {
    %c0_i32 = arith.constant 0 : i32
    %c0_i32_0 = arith.constant 0 : i32
    %c0_i32_1 = arith.constant 0 : i32
    return %c0_i32, %c0_i32_0 : i32, i32
  }
  func.func @transform_15(%arg0: i32) -> (i32, i32) {
    %c0_i32 = arith.constant 0 : i32
    %c0_i32_0 = arith.constant 0 : i32
    %c0_i32_1 = arith.constant 0 : i32
    return %c0_i32, %c0_i32_0 : i32, i32
  }
  func.func @transform_16(%arg0: i32) -> (i32, i32) {
    %c0_i32 = arith.constant 0 : i32
    %c0_i32_0 = arith.constant 0 : i32
    %c0_i32_1 = arith.constant 0 : i32
    return %c0_i32, %c0_i32_0 : i32, i32
  }
  func.func @transform_17(%arg0: i32) -> (i32, i32) {
    %c0_i32 = arith.constant 0 : i32
    %c0_i32_0 = arith.constant 0 : i32
    %c0_i32_1 = arith.constant 0 : i32
    return %c0_i32, %c0_i32_0 : i32, i32
  }
  func.func @transform_18(%arg0: i32) -> (i32, i32) {
    %c0_i32 = arith.constant 0 : i32
    %c0_i32_0 = arith.constant 0 : i32
    %c0_i32_1 = arith.constant 0 : i32
    return %c0_i32, %c0_i32_0 : i32, i32
  }
  func.func @transform_19(%arg0: i32) -> (i32, i32) {
    %c0_i32 = arith.constant 0 : i32
    %c0_i32_0 = arith.constant 0 : i32
    %c0_i32_1 = arith.constant 0 : i32
    return %c0_i32, %c0_i32_0 : i32, i32
  }
  func.func @transform_20(%arg0: i32) -> (i32, i32) {
    %c0_i32 = arith.constant 0 : i32
    %c0_i32_0 = arith.constant 0 : i32
    %c0_i32_1 = arith.constant 0 : i32
    return %c0_i32, %c0_i32_0 : i32, i32
  }
  func.func @transform_21(%arg0: i32) -> (i32, i32) {
    %c0_i32 = arith.constant 0 : i32
    %c0_i32_0 = arith.constant 0 : i32
    %c0_i32_1 = arith.constant 0 : i32
    return %c0_i32, %c0_i32_0 : i32, i32
  }
  func.func @transform_22(%arg0: i32) -> (i32, i32) {
    %c0_i32 = arith.constant 0 : i32
    %c0_i32_0 = arith.constant 0 : i32
    %c0_i32_1 = arith.constant 0 : i32
    return %c0_i32, %c0_i32_0 : i32, i32
  }
  func.func @transform_23(%arg0: i32) -> (i32, i32) {
    %c0_i32 = arith.constant 0 : i32
    %c0_i32_0 = arith.constant 0 : i32
    %c0_i32_1 = arith.constant 0 : i32
    return %c0_i32, %c0_i32_0 : i32, i32
  }
  func.func @transform_24(%arg0: i32) -> (i32, i32) {
    %c0_i32 = arith.constant 0 : i32
    %c0_i32_0 = arith.constant 0 : i32
    %c0_i32_1 = arith.constant 0 : i32
    return %c0_i32, %c0_i32_0 : i32, i32
  }
  func.func @transform_25(%arg0: i32) -> (i32, i32, i32) {
    %c0_i32 = arith.constant 0 : i32
    %c0_i32_0 = arith.constant 0 : i32
    %c0_i32_1 = arith.constant 0 : i32
    return %c0_i32, %arg0, %c0_i32_0 : i32, i32, i32
  }
}

</mosaic_0001>

<llo_original>
// kernel: tpu_custom_call.1
$region0: #{tpu_custom_call.1}
  #allocation0 [shape = 'u32[]', space=smem, size = 0x4, offset = 0x4, fixed_abs, tag = 'smem constant byte address 0x4 - core index']
  #allocation1 [shape = 'u32[144,128]{1,0:T(1,128)}', space=vmem, size = 0x12000, scoped, tag = 'internal scratch']
  %s0 = inlined_call_operand.vmem [shape: f32[8,32,4], index: 0, kind: input, shape index: {}]
  %s1 = inlined_call_operand.vmem [shape: f32[8,32,6], index: 1, kind: input, shape index: {}]
  %s2 = inlined_call_operand.vmem [shape: f32[128,128], index: 2, kind: input, shape index: {}]
  %s3 = inlined_call_operand.vmem [shape: f32[8,1,64], index: 3, kind: input, shape index: {}]
  %s4 = inlined_call_operand.vmem [shape: bf16[4,64], index: 4, kind: input, shape index: {}]
  %s5 = inlined_call_operand.vmem [shape: bf16[6,64], index: 5, kind: input, shape index: {}]
  %s6 = inlined_call_operand.vmem [shape: f32[1,64], index: 6, kind: input, shape index: {}]
  %s7 = inlined_call_operand.vmem [shape: bf16[64,64], index: 7, kind: input, shape index: {}]
  %s8 = inlined_call_operand.vmem [shape: f32[1,64], index: 8, kind: input, shape index: {}]
  %s9 = inlined_call_operand.vmem [shape: bf16[64,64], index: 9, kind: input, shape index: {}]
  %s10 = inlined_call_operand.vmem [shape: f32[1,64], index: 10, kind: input, shape index: {}]
  %s11 = inlined_call_operand.vmem [shape: bf16[64,64], index: 11, kind: input, shape index: {}]
  %s12 = inlined_call_operand.vmem [shape: f32[1,64], index: 12, kind: input, shape index: {}]
  %s13 = inlined_call_operand.vmem [shape: bf16[64,64], index: 13, kind: input, shape index: {}]
  %s14 = inlined_call_operand.vmem [shape: f32[1,64], index: 14, kind: input, shape index: {}]
  %s15 = inlined_call_operand.vmem [shape: f32[1,64], index: 15, kind: input, shape index: {}]
  %s16 = inlined_call_operand.vmem [shape: f32[1,64], index: 16, kind: input, shape index: {}]
  %s17 = inlined_call_operand.vmem [shape: f32[1,64], index: 17, kind: input, shape index: {}]
  %s18 = inlined_call_operand.vmem [shape: f32[1,64], index: 18, kind: input, shape index: {}]
  %s19 = inlined_call_operand.vmem [shape: bf16[64,2048], index: 19, kind: input, shape index: {}]
  %s20 = inlined_call_operand.vmem [shape: f32[1,2048], index: 20, kind: input, shape index: {}]
  %s21 = inlined_call_operand.vmem [shape: bf16[2048,64], index: 21, kind: input, shape index: {}]
  %s22 = inlined_call_operand.vmem [shape: f32[1,64], index: 22, kind: input, shape index: {}]
  %s23 = inlined_call_operand.vmem [shape: bf16[64,16], index: 23, kind: input, shape index: {}]
  %s24 = inlined_call_operand.vmem [shape: f32[1,16], index: 24, kind: input, shape index: {}]
  %s25 = inlined_call_operand.vmem [shape: f32[8,32,16], index: 25, kind: output, shape index: {}]
  %s26 = sld [smem:[#allocation0]]
  $region243: #{tpu_custom_call.1} parent=0
    _
  %s28 = ssub.s32 1, %s26
  %s29 = scalar_select 0, %s28, %s26
  $region1: #{tpu_custom_call.1} parent=0
    #allocation2 [shape = 'u8[131072]{0}', space=vmem, size = 0x20000, scoped, tag = 'input window, operand 0']
    #allocation3 [shape = 'u8[131072]{0}', space=vmem, size = 0x20000, scoped, tag = 'input window, operand 1']
    #allocation4 [shape = 'u8[131072]{0}', space=vmem, size = 0x20000, scoped, tag = 'output window, operand 0']
    loop: start=0, step=1, limit=4
    $region2: #{tpu_custom_call.1} parent=1 // loop_pre_header
      _
    $region3: #{tpu_custom_call.1} parent=1 // loop_header
      %s31 = sphi 0, %s35
      %p32 = scmp.ge.s32.totalorder %s31, 4
      %s41 = sphi 0, %s43
      %s44 = sphi 0, %s41
      %s45 = sphi 0, %s44
      %s61 = sphi 0, %s45
      %s67 = sphi 0, %s69
      %s70 = sphi 0, %s67
      %s71 = sphi 0, %s70
      %s87 = sphi 0, %s71
      %s91 = sphi 0, %s91
      %s93 = sphi 0, %s91
      %s94 = sphi 0, %s93
      %s108 = sphi 0, %s94
      %s112 = sphi 0, %s112
      %s114 = sphi 0, %s112
      %s115 = sphi 0, %s114
      %s129 = sphi 0, %s115
      %s133 = sphi 0, %s133
      %s135 = sphi 0, %s133
      %s136 = sphi 0, %s135
      %s150 = sphi 0, %s136
      %s154 = sphi 0, %s154
      %s156 = sphi 0, %s154
      %s157 = sphi 0, %s156
      %s171 = sphi 0, %s157
      %s175 = sphi 0, %s175
      %s177 = sphi 0, %s175
      %s178 = sphi 0, %s177
      %s192 = sphi 0, %s178
      %s196 = sphi 0, %s196
      %s198 = sphi 0, %s196
      %s199 = sphi 0, %s198
      %s213 = sphi 0, %s199
      %s217 = sphi 0, %s217
      %s219 = sphi 0, %s217
      %s220 = sphi 0, %s219
      %s234 = sphi 0, %s220
      %s238 = sphi 0, %s238
      %s240 = sphi 0, %s238
      %s241 = sphi 0, %s240
      %s255 = sphi 0, %s241
      %s259 = sphi 0, %s259
      %s261 = sphi 0, %s259
      %s262 = sphi 0, %s261
      %s276 = sphi 0, %s262
      %s280 = sphi 0, %s280
      %s282 = sphi 0, %s280
      %s283 = sphi 0, %s282
      %s297 = sphi 0, %s283
      %s301 = sphi 0, %s301
      %s303 = sphi 0, %s301
      %s304 = sphi 0, %s303
      %s318 = sphi 0, %s304
      %s322 = sphi 0, %s322
      %s324 = sphi 0, %s322
      %s325 = sphi 0, %s324
      %s339 = sphi 0, %s325
      %s343 = sphi 0, %s343
      %s345 = sphi 0, %s343
      %s346 = sphi 0, %s345
      %s360 = sphi 0, %s346
      %s364 = sphi 0, %s364
      %s366 = sphi 0, %s364
      %s367 = sphi 0, %s366
      %s381 = sphi 0, %s367
      %s385 = sphi 0, %s385
      %s387 = sphi 0, %s385
      %s388 = sphi 0, %s387
      %s402 = sphi 0, %s388
      %s406 = sphi 0, %s406
      %s408 = sphi 0, %s406
      %s409 = sphi 0, %s408
      %s423 = sphi 0, %s409
      %s427 = sphi 0, %s427
      %s429 = sphi 0, %s427
      %s430 = sphi 0, %s429
      %s444 = sphi 0, %s430
      %s448 = sphi 0, %s448
      %s450 = sphi 0, %s448
      %s451 = sphi 0, %s450
      %s465 = sphi 0, %s451
      %s469 = sphi 0, %s469
      %s471 = sphi 0, %s469
      %s472 = sphi 0, %s471
      %s486 = sphi 0, %s472
      %s490 = sphi 0, %s490
      %s492 = sphi 0, %s490
      %s493 = sphi 0, %s492
      %s507 = sphi 0, %s493
      %s511 = sphi 0, %s511
      %s513 = sphi 0, %s511
      %s514 = sphi 0, %s513
      %s528 = sphi 0, %s514
      %s532 = sphi 0, %s532
      %s534 = sphi 0, %s532
      %s535 = sphi 0, %s534
      %s549 = sphi 0, %s535
      %s553 = sphi 0, %s553
      %s555 = sphi 0, %s553
      %s556 = sphi 0, %s555
      %s570 = sphi 0, %s556
      %s576 = sphi 0, %s578
      %s579 = sphi 0, %s576
      %s580 = sphi 0, %s579
      %s596 = sphi 0, %s580
    $region4: #{tpu_custom_call.1} parent=1 // loop_header_branch
      %34 = sbr.rel (%p32) target = $region8
    $region5: #{tpu_custom_call.1} parent=1 // loop_body
      %s36 = ssub.s32 %s31, 1
      %s37 = ssub.s32 %s31, 2
      %s38 = sadd.s32 %s31, 1
      %s39 = ssub.s32 %s31, %s38
      %p40 = scmp.eq.s32.totalorder %s39, 0
      %s42 = sadd.s32 %s41, 1
      %s43 = scalar_select %p40, %s41, %s42
      %p46 = pneg %p40
      %p47 = scmp.eq.s32.totalorder %s31, 1
      %p48 = por %p46, %p47
      %p49 = scmp.ne.s32.totalorder %s41, %s44
      %p50 = scmp.eq.s32.totalorder %s31, 0
      %p51 = por %p49, %p50
      %p52 = scmp.ne.s32.totalorder %s41, %s44
      %p53 = scmp.eq.s32.totalorder %s36, 1
      %p54 = por %p52, %p53
      %p55 = scmp.ne.s32.totalorder %s44, %s45
      %p56 = scmp.eq.s32.totalorder %s36, 0
      %p57 = por %p55, %p56
      %p58 = scmp.ne.s32.totalorder %s44, %s45
      %p59 = scmp.eq.s32.totalorder %s37, 1
      %p60 = por %p58, %p59
      %p62 = scmp.ne.s32.totalorder %s45, %s61
      %p63 = scmp.eq.s32.totalorder %s37, 0
      %p64 = por %p62, %p63
      %s65 = ssub.s32 %s31, %s38
      %p66 = scmp.eq.s32.totalorder %s65, 0
      %s68 = sadd.s32 %s67, 1
      %s69 = scalar_select %p66, %s67, %s68
      %p72 = pneg %p66
      %p73 = scmp.eq.s32.totalorder %s31, 1
      %p74 = por %p72, %p73
      %p75 = scmp.ne.s32.totalorder %s67, %s70
      %p76 = scmp.eq.s32.totalorder %s31, 0
      %p77 = por %p75, %p76
      %p78 = scmp.ne.s32.totalorder %s67, %s70
      %p79 = scmp.eq.s32.totalorder %s36, 1
      %p80 = por %p78, %p79
      %p81 = scmp.ne.s32.totalorder %s70, %s71
      %p82 = scmp.eq.s32.totalorder %s36, 0
      %p83 = por %p81, %p82
      %p84 = scmp.ne.s32.totalorder %s70, %s71
      %p85 = scmp.eq.s32.totalorder %s37, 1
      %p86 = por %p84, %p85
      %p88 = scmp.ne.s32.totalorder %s71, %s87
      %p89 = scmp.eq.s32.totalorder %s37, 0
      %p90 = por %p88, %p89
      %s92 = sadd.s32 %s91, 1
      %p95 = scmp.eq.s32.totalorder %s31, 1
      %p96 = scmp.ne.s32.totalorder %s91, %s93
      %p97 = scmp.eq.s32.totalorder %s31, 0
      %p98 = por %p96, %p97
      %p99 = scmp.ne.s32.totalorder %s91, %s93
      %p100 = scmp.eq.s32.totalorder %s36, 1
      %p101 = por %p99, %p100
      %p102 = scmp.ne.s32.totalorder %s93, %s94
      %p103 = scmp.eq.s32.totalorder %s36, 0
      %p104 = por %p102, %p103
      %p105 = scmp.ne.s32.totalorder %s93, %s94
      %p106 = scmp.eq.s32.totalorder %s37, 1
      %p107 = por %p105, %p106
      %p109 = scmp.ne.s32.totalorder %s94, %s108
      %p110 = scmp.eq.s32.totalorder %s37, 0
      %p111 = por %p109, %p110
      %s113 = sadd.s32 %s112, 1
      %p116 = scmp.eq.s32.totalorder %s31, 1
      %p117 = scmp.ne.s32.totalorder %s112, %s114
      %p118 = scmp.eq.s32.totalorder %s31, 0
      %p119 = por %p117, %p118
      %p120 = scmp.ne.s32.totalorder %s112, %s114
      %p121 = scmp.eq.s32.totalorder %s36, 1
      %p122 = por %p120, %p121
      %p123 = scmp.ne.s32.totalorder %s114, %s115
      %p124 = scmp.eq.s32.totalorder %s36, 0
      %p125 = por %p123, %p124
      %p126 = scmp.ne.s32.totalorder %s114, %s115
      %p127 = scmp.eq.s32.totalorder %s37, 1
      %p128 = por %p126, %p127
      %p130 = scmp.ne.s32.totalorder %s115, %s129
      %p131 = scmp.eq.s32.totalorder %s37, 0
      %p132 = por %p130, %p131
      %s134 = sadd.s32 %s133, 1
      %p137 = scmp.eq.s32.totalorder %s31, 1
      %p138 = scmp.ne.s32.totalorder %s133, %s135
      %p139 = scmp.eq.s32.totalorder %s31, 0
      %p140 = por %p138, %p139
      %p141 = scmp.ne.s32.totalorder %s133, %s135
      %p142 = scmp.eq.s32.totalorder %s36, 1
      %p143 = por %p141, %p142
      %p144 = scmp.ne.s32.totalorder %s135, %s136
      %p145 = scmp.eq.s32.totalorder %s36, 0
      %p146 = por %p144, %p145
      %p147 = scmp.ne.s32.totalorder %s135, %s136
      %p148 = scmp.eq.s32.totalorder %s37, 1
      %p149 = por %p147, %p148
      %p151 = scmp.ne.s32.totalorder %s136, %s150
      %p152 = scmp.eq.s32.totalorder %s37, 0
      %p153 = por %p151, %p152
      %s155 = sadd.s32 %s154, 1
      %p158 = scmp.eq.s32.totalorder %s31, 1
      %p159 = scmp.ne.s32.totalorder %s154, %s156
      %p160 = scmp.eq.s32.totalorder %s31, 0
      %p161 = por %p159, %p160
      %p162 = scmp.ne.s32.totalorder %s154, %s156
      %p163 = scmp.eq.s32.totalorder %s36, 1
      %p164 = por %p162, %p163
      %p165 = scmp.ne.s32.totalorder %s156, %s157
      %p166 = scmp.eq.s32.totalorder %s36, 0
      %p167 = por %p165, %p166
      %p168 = scmp.ne.s32.totalorder %s156, %s157
      %p169 = scmp.eq.s32.totalorder %s37, 1
      %p170 = por %p168, %p169
      %p172 = scmp.ne.s32.totalorder %s157, %s171
      %p173 = scmp.eq.s32.totalorder %s37, 0
      %p174 = por %p172, %p173
      %s176 = sadd.s32 %s175, 1
      %p179 = scmp.eq.s32.totalorder %s31, 1
      %p180 = scmp.ne.s32.totalorder %s175, %s177
      %p181 = scmp.eq.s32.totalorder %s31, 0
      %p182 = por %p180, %p181
      %p183 = scmp.ne.s32.totalorder %s175, %s177
      %p184 = scmp.eq.s32.totalorder %s36, 1
      %p185 = por %p183, %p184
      %p186 = scmp.ne.s32.totalorder %s177, %s178
      %p187 = scmp.eq.s32.totalorder %s36, 0
      %p188 = por %p186, %p187
      %p189 = scmp.ne.s32.totalorder %s177, %s178
      %p190 = scmp.eq.s32.totalorder %s37, 1
      %p191 = por %p189, %p190
      %p193 = scmp.ne.s32.totalorder %s178, %s192
      %p194 = scmp.eq.s32.totalorder %s37, 0
      %p195 = por %p193, %p194
      %s197 = sadd.s32 %s196, 1
      %p200 = scmp.eq.s32.totalorder %s31, 1
      %p201 = scmp.ne.s32.totalorder %s196, %s198
      %p202 = scmp.eq.s32.totalorder %s31, 0
      %p203 = por %p201, %p202
      %p204 = scmp.ne.s32.totalorder %s196, %s198
      %p205 = scmp.eq.s32.totalorder %s36, 1
      %p206 = por %p204, %p205
      %p207 = scmp.ne.s32.totalorder %s198, %s199
      %p208 = scmp.eq.s32.totalorder %s36, 0
      %p209 = por %p207, %p208
      %p210 = scmp.ne.s32.totalorder %s198, %s199
      %p211 = scmp.eq.s32.totalorder %s37, 1
      %p212 = por %p210, %p211
      %p214 = scmp.ne.s32.totalorder %s199, %s213
      %p215 = scmp.eq.s32.totalorder %s37, 0
      %p216 = por %p214, %p215
      %s218 = sadd.s32 %s217, 1
      %p221 = scmp.eq.s32.totalorder %s31, 1
      %p222 = scmp.ne.s32.totalorder %s217, %s219
      %p223 = scmp.eq.s32.totalorder %s31, 0
      %p224 = por %p222, %p223
      %p225 = scmp.ne.s32.totalorder %s217, %s219
      %p226 = scmp.eq.s32.totalorder %s36, 1
      %p227 = por %p225, %p226
      %p228 = scmp.ne.s32.totalorder %s219, %s220
      %p229 = scmp.eq.s32.totalorder %s36, 0
      %p230 = por %p228, %p229
      %p231 = scmp.ne.s32.totalorder %s219, %s220
      %p232 = scmp.eq.s32.totalorder %s37, 1
      %p233 = por %p231, %p232
      %p235 = scmp.ne.s32.totalorder %s220, %s234
      %p236 = scmp.eq.s32.totalorder %s37, 0
      %p237 = por %p235, %p236
      %s239 = sadd.s32 %s238, 1
      %p242 = scmp.eq.s32.totalorder %s31, 1
      %p243 = scmp.ne.s32.totalorder %s238, %s240
      %p244 = scmp.eq.s32.totalorder %s31, 0
      %p245 = por %p243, %p244
      %p246 = scmp.ne.s32.totalorder %s238, %s240
      %p247 = scmp.eq.s32.totalorder %s36, 1
      %p248 = por %p246, %p247
      %p249 = scmp.ne.s32.totalorder %s240, %s241
      %p250 = scmp.eq.s32.totalorder %s36, 0
      %p251 = por %p249, %p250
      %p252 = scmp.ne.s32.totalorder %s240, %s241
      %p253 = scmp.eq.s32.totalorder %s37, 1
      %p254 = por %p252, %p253
      %p256 = scmp.ne.s32.totalorder %s241, %s255
      %p257 = scmp.eq.s32.totalorder %s37, 0
      %p258 = por %p256, %p257
      %s260 = sadd.s32 %s259, 1
      %p263 = scmp.eq.s32.totalorder %s31, 1
      %p264 = scmp.ne.s32.totalorder %s259, %s261
      %p265 = scmp.eq.s32.totalorder %s31, 0
      %p266 = por %p264, %p265
      %p267 = scmp.ne.s32.totalorder %s259, %s261
      %p268 = scmp.eq.s32.totalorder %s36, 1
      %p269 = por %p267, %p268
      %p270 = scmp.ne.s32.totalorder %s261, %s262
      %p271 = scmp.eq.s32.totalorder %s36, 0
      %p272 = por %p270, %p271
      %p273 = scmp.ne.s32.totalorder %s261, %s262
      %p274 = scmp.eq.s32.totalorder %s37, 1
      %p275 = por %p273, %p274
      %p277 = scmp.ne.s32.totalorder %s262, %s276
      %p278 = scmp.eq.s32.totalorder %s37, 0
      %p279 = por %p277, %p278
      %s281 = sadd.s32 %s280, 1
      %p284 = scmp.eq.s32.totalorder %s31, 1
      %p285 = scmp.ne.s32.totalorder %s280, %s282
      %p286 = scmp.eq.s32.totalorder %s31, 0
      %p287 = por %p285, %p286
      %p288 = scmp.ne.s32.totalorder %s280, %s282
      %p289 = scmp.eq.s32.totalorder %s36, 1
      %p290 = por %p288, %p289
      %p291 = scmp.ne.s32.totalorder %s282, %s283
      %p292 = scmp.eq.s32.totalorder %s36, 0
      %p293 = por %p291, %p292
      %p294 = scmp.ne.s32.totalorder %s282, %s283
      %p295 = scmp.eq.s32.totalorder %s37, 1
      %p296 = por %p294, %p295
      %p298 = scmp.ne.s32.totalorder %s283, %s297
      %p299 = scmp.eq.s32.totalorder %s37, 0
      %p300 = por %p298, %p299
      %s302 = sadd.s32 %s301, 1
      %p305 = scmp.eq.s32.totalorder %s31, 1
      %p306 = scmp.ne.s32.totalorder %s301, %s303
      %p307 = scmp.eq.s32.totalorder %s31, 0
      %p308 = por %p306, %p307
      %p309 = scmp.ne.s32.totalorder %s301, %s303
      %p310 = scmp.eq.s32.totalorder %s36, 1
      %p311 = por %p309, %p310
      %p312 = scmp.ne.s32.totalorder %s303, %s304
      %p313 = scmp.eq.s32.totalorder %s36, 0
      %p314 = por %p312, %p313
      %p315 = scmp.ne.s32.totalorder %s303, %s304
      %p316 = scmp.eq.s32.totalorder %s37, 1
      %p317 = por %p315, %p316
      %p319 = scmp.ne.s32.totalorder %s304, %s318
      %p320 = scmp.eq.s32.totalorder %s37, 0
      %p321 = por %p319, %p320
      %s323 = sadd.s32 %s322, 1
      %p326 = scmp.eq.s32.totalorder %s31, 1
      %p327 = scmp.ne.s32.totalorder %s322, %s324
      %p328 = scmp.eq.s32.totalorder %s31, 0
      %p329 = por %p327, %p328
      %p330 = scmp.ne.s32.totalorder %s322, %s324
      %p331 = scmp.eq.s32.totalorder %s36, 1
      %p332 = por %p330, %p331
      %p333 = scmp.ne.s32.totalorder %s324, %s325
      %p334 = scmp.eq.s32.totalorder %s36, 0
      %p335 = por %p333, %p334
      %p336 = scmp.ne.s32.totalorder %s324, %s325
      %p337 = scmp.eq.s32.totalorder %s37, 1
      %p338 = por %p336, %p337
      %p340 = scmp.ne.s32.totalorder %s325, %s339
      %p341 = scmp.eq.s32.totalorder %s37, 0
      %p342 = por %p340, %p341
      %s344 = sadd.s32 %s343, 1
      %p347 = scmp.eq.s32.totalorder %s31, 1
      %p348 = scmp.ne.s32.totalorder %s343, %s345
      %p349 = scmp.eq.s32.totalorder %s31, 0
      %p350 = por %p348, %p349
      %p351 = scmp.ne.s32.totalorder %s343, %s345
      %p352 = scmp.eq.s32.totalorder %s36, 1
      %p353 = por %p351, %p352
      %p354 = scmp.ne.s32.totalorder %s345, %s346
      %p355 = scmp.eq.s32.totalorder %s36, 0
      %p356 = por %p354, %p355
      %p357 = scmp.ne.s32.totalorder %s345, %s346
      %p358 = scmp.eq.s32.totalorder %s37, 1
      %p359 = por %p357, %p358
      %p361 = scmp.ne.s32.totalorder %s346, %s360
      %p362 = scmp.eq.s32.totalorder %s37, 0
      %p363 = por %p361, %p362
      %s365 = sadd.s32 %s364, 1
      %p368 = scmp.eq.s32.totalorder %s31, 1
      %p369 = scmp.ne.s32.totalorder %s364, %s366
      %p370 = scmp.eq.s32.totalorder %s31, 0
      %p371 = por %p369, %p370
      %p372 = scmp.ne.s32.totalorder %s364, %s366
      %p373 = scmp.eq.s32.totalorder %s36, 1
      %p374 = por %p372, %p373
      %p375 = scmp.ne.s32.totalorder %s366, %s367
      %p376 = scmp.eq.s32.totalorder %s36, 0
      %p377 = por %p375, %p376
      %p378 = scmp.ne.s32.totalorder %s366, %s367
      %p379 = scmp.eq.s32.totalorder %s37, 1
      %p380 = por %p378, %p379
      %p382 = scmp.ne.s32.totalorder %s367, %s381
      %p383 = scmp.eq.s32.totalorder %s37, 0
      %p384 = por %p382, %p383
      %s386 = sadd.s32 %s385, 1
      %p389 = scmp.eq.s32.totalorder %s31, 1
      %p390 = scmp.ne.s32.totalorder %s385, %s387
      %p391 = scmp.eq.s32.totalorder %s31, 0
      %p392 = por %p390, %p391
      %p393 = scmp.ne.s32.totalorder %s385, %s387
      %p394 = scmp.eq.s32.totalorder %s36, 1
      %p395 = por %p393, %p394
      %p396 = scmp.ne.s32.totalorder %s387, %s388
      %p397 = scmp.eq.s32.totalorder %s36, 0
      %p398 = por %p396, %p397
      %p399 = scmp.ne.s32.totalorder %s387, %s388
      %p400 = scmp.eq.s32.totalorder %s37, 1
      %p401 = por %p399, %p400
      %p403 = scmp.ne.s32.totalorder %s388, %s402
      %p404 = scmp.eq.s32.totalorder %s37, 0
      %p405 = por %p403, %p404
      %s407 = sadd.s32 %s406, 1
      %p410 = scmp.eq.s32.totalorder %s31, 1
      %p411 = scmp.ne.s32.totalorder %s406, %s408
      %p412 = scmp.eq.s32.totalorder %s31, 0
      %p413 = por %p411, %p412
      %p414 = scmp.ne.s32.totalorder %s406, %s408
      %p415 = scmp.eq.s32.totalorder %s36, 1
      %p416 = por %p414, %p415
      %p417 = scmp.ne.s32.totalorder %s408, %s409
      %p418 = scmp.eq.s32.totalorder %s36, 0
      %p419 = por %p417, %p418
      %p420 = scmp.ne.s32.totalorder %s408, %s409
      %p421 = scmp.eq.s32.totalorder %s37, 1
      %p422 = por %p420, %p421
      %p424 = scmp.ne.s32.totalorder %s409, %s423
      %p425 = scmp.eq.s32.totalorder %s37, 0
      %p426 = por %p424, %p425
      %s428 = sadd.s32 %s427, 1
      %p431 = scmp.eq.s32.totalorder %s31, 1
      %p432 = scmp.ne.s32.totalorder %s427, %s429
      %p433 = scmp.eq.s32.totalorder %s31, 0
      %p434 = por %p432, %p433
      %p435 = scmp.ne.s32.totalorder %s427, %s429
      %p436 = scmp.eq.s32.totalorder %s36, 1
      %p437 = por %p435, %p436
      %p438 = scmp.ne.s32.totalorder %s429, %s430
      %p439 = scmp.eq.s32.totalorder %s36, 0
      %p440 = por %p438, %p439
      %p441 = scmp.ne.s32.totalorder %s429, %s430
      %p442 = scmp.eq.s32.totalorder %s37, 1
      %p443 = por %p441, %p442
      %p445 = scmp.ne.s32.totalorder %s430, %s444
      %p446 = scmp.eq.s32.totalorder %s37, 0
      %p447 = por %p445, %p446
      %s449 = sadd.s32 %s448, 1
      %p452 = scmp.eq.s32.totalorder %s31, 1
      %p453 = scmp.ne.s32.totalorder %s448, %s450
      %p454 = scmp.eq.s32.totalorder %s31, 0
      %p455 = por %p453, %p454
      %p456 = scmp.ne.s32.totalorder %s448, %s450
      %p457 = scmp.eq.s32.totalorder %s36, 1
      %p458 = por %p456, %p457
      %p459 = scmp.ne.s32.totalorder %s450, %s451
      %p460 = scmp.eq.s32.totalorder %s36, 0
      %p461 = por %p459, %p460
      %p462 = scmp.ne.s32.totalorder %s450, %s451
      %p463 = scmp.eq.s32.totalorder %s37, 1
      %p464 = por %p462, %p463
      %p466 = scmp.ne.s32.totalorder %s451, %s465
      %p467 = scmp.eq.s32.totalorder %s37, 0
      %p468 = por %p466, %p467
      %s470 = sadd.s32 %s469, 1
      %p473 = scmp.eq.s32.totalorder %s31, 1
      %p474 = scmp.ne.s32.totalorder %s469, %s471
      %p475 = scmp.eq.s32.totalorder %s31, 0
      %p476 = por %p474, %p475
      %p477 = scmp.ne.s32.totalorder %s469, %s471
      %p478 = scmp.eq.s32.totalorder %s36, 1
      %p479 = por %p477, %p478
      %p480 = scmp.ne.s32.totalorder %s471, %s472
      %p481 = scmp.eq.s32.totalorder %s36, 0
      %p482 = por %p480, %p481
      %p483 = scmp.ne.s32.totalorder %s471, %s472
      %p484 = scmp.eq.s32.totalorder %s37, 1
      %p485 = por %p483, %p484
      %p487 = scmp.ne.s32.totalorder %s472, %s486
      %p488 = scmp.eq.s32.totalorder %s37, 0
      %p489 = por %p487, %p488
      %s491 = sadd.s32 %s490, 1
      %p494 = scmp.eq.s32.totalorder %s31, 1
      %p495 = scmp.ne.s32.totalorder %s490, %s492
      %p496 = scmp.eq.s32.totalorder %s31, 0
      %p497 = por %p495, %p496
      %p498 = scmp.ne.s32.totalorder %s490, %s492
      %p499 = scmp.eq.s32.totalorder %s36, 1
      %p500 = por %p498, %p499
      %p501 = scmp.ne.s32.totalorder %s492, %s493
      %p502 = scmp.eq.s32.totalorder %s36, 0
      %p503 = por %p501, %p502
      %p504 = scmp.ne.s32.totalorder %s492, %s493
      %p505 = scmp.eq.s32.totalorder %s37, 1
      %p506 = por %p504, %p505
      %p508 = scmp.ne.s32.totalorder %s493, %s507
      %p509 = scmp.eq.s32.totalorder %s37, 0
      %p510 = por %p508, %p509
      %s512 = sadd.s32 %s511, 1
      %p515 = scmp.eq.s32.totalorder %s31, 1
      %p516 = scmp.ne.s32.totalorder %s511, %s513
      %p517 = scmp.eq.s32.totalorder %s31, 0
      %p518 = por %p516, %p517
      %p519 = scmp.ne.s32.totalorder %s511, %s513
      %p520 = scmp.eq.s32.totalorder %s36, 1
      %p521 = por %p519, %p520
      %p522 = scmp.ne.s32.totalorder %s513, %s514
      %p523 = scmp.eq.s32.totalorder %s36, 0
      %p524 = por %p522, %p523
      %p525 = scmp.ne.s32.totalorder %s513, %s514
      %p526 = scmp.eq.s32.totalorder %s37, 1
      %p527 = por %p525, %p526
      %p529 = scmp.ne.s32.totalorder %s514, %s528
      %p530 = scmp.eq.s32.totalorder %s37, 0
      %p531 = por %p529, %p530
      %s533 = sadd.s32 %s532, 1
      %p536 = scmp.eq.s32.totalorder %s31, 1
      %p537 = scmp.ne.s32.totalorder %s532, %s534
      %p538 = scmp.eq.s32.totalorder %s31, 0
      %p539 = por %p537, %p538
      %p540 = scmp.ne.s32.totalorder %s532, %s534
      %p541 = scmp.eq.s32.totalorder %s36, 1
      %p542 = por %p540, %p541
      %p543 = scmp.ne.s32.totalorder %s534, %s535
      %p544 = scmp.eq.s32.totalorder %s36, 0
      %p545 = por %p543, %p544
      %p546 = scmp.ne.s32.totalorder %s534, %s535
      %p547 = scmp.eq.s32.totalorder %s37, 1
      %p548 = por %p546, %p547
      %p550 = scmp.ne.s32.totalorder %s535, %s549
      %p551 = scmp.eq.s32.totalorder %s37, 0
      %p552 = por %p550, %p551
      %s554 = sadd.s32 %s553, 1
      %p557 = scmp.eq.s32.totalorder %s31, 1
      %p558 = scmp.ne.s32.totalorder %s553, %s555
      %p559 = scmp.eq.s32.totalorder %s31, 0
      %p560 = por %p558, %p559
      %p561 = scmp.ne.s32.totalorder %s553, %s555
      %p562 = scmp.eq.s32.totalorder %s36, 1
      %p563 = por %p561, %p562
      %p564 = scmp.ne.s32.totalorder %s555, %s556
      %p565 = scmp.eq.s32.totalorder %s36, 0
      %p566 = por %p564, %p565
      %p567 = scmp.ne.s32.totalorder %s555, %s556
      %p568 = scmp.eq.s32.totalorder %s37, 1
      %p569 = por %p567, %p568
      %p571 = scmp.ne.s32.totalorder %s556, %s570
      %p572 = scmp.eq.s32.totalorder %s37, 0
      %p573 = por %p571, %p572
      %s574 = ssub.s32 %s31, %s38
      %p575 = scmp.eq.s32.totalorder %s574, 0
      %s577 = sadd.s32 %s576, 1
      %s578 = scalar_select %p575, %s576, %s577
      %p581 = pneg %p575
      %p582 = scmp.eq.s32.totalorder %s31, 1
      %p583 = por %p581, %p582
      %p584 = scmp.ne.s32.totalorder %s576, %s579
      %p585 = scmp.eq.s32.totalorder %s31, 0
      %p586 = por %p584, %p585
      %p587 = scmp.ne.s32.totalorder %s576, %s579
      %p588 = scmp.eq.s32.totalorder %s36, 1
      %p589 = por %p587, %p588
      %p590 = scmp.ne.s32.totalorder %s579, %s580
      %p591 = scmp.eq.s32.totalorder %s36, 0
      %p592 = por %p590, %p591
      %p593 = scmp.ne.s32.totalorder %s579, %s580
      %p594 = scmp.eq.s32.totalorder %s37, 1
      %p595 = por %p593, %p594
      %p597 = scmp.ne.s32.totalorder %s580, %s596
      %p598 = scmp.eq.s32.totalorder %s37, 0
      %p599 = por %p597, %p598
      %p600 = scmp.le.s32.totalorder 1, %s31
      %p601 = scmp.lt.s32.totalorder %s31, 3
      %p602 = pnand %p600, %p601
      %p603 = pneg %p602
      // Predicated region
      $region9: #{tpu_custom_call.1} parent=5 // pred_check
        _
      $region10: #{tpu_custom_call.1} parent=5 // pred_check_branch
        %605 = sbr.rel (%p602) target = $region12
      $region11: #{tpu_custom_call.1} parent=5 // pred_region
        %s606 = ssub.s32 %s31, 1
        // Predicated region
        $region13: #{tpu_custom_call.1} parent=11 // pred_check
          %p607 = pneg %p104
        $region14: #{tpu_custom_call.1} parent=11 // pred_check_branch
          %609 = sbr.rel (%p607) target = $region16
        $region15: #{tpu_custom_call.1} parent=11 // pred_region
          _
        $region16: #{tpu_custom_call.1} parent=11 // pred_fallthru
          _
        // Predicated region
        $region17: #{tpu_custom_call.1} parent=11 // pred_check
          %p610 = pneg %p125
        $region18: #{tpu_custom_call.1} parent=11 // pred_check_branch
          %612 = sbr.rel (%p610) target = $region20
        $region19: #{tpu_custom_call.1} parent=11 // pred_region
          _
        $region20: #{tpu_custom_call.1} parent=11 // pred_fallthru
          _
        // Predicated region
        $region21: #{tpu_custom_call.1} parent=11 // pred_check
          %p613 = pneg %p146
        $region22: #{tpu_custom_call.1} parent=11 // pred_check_branch
          %615 = sbr.rel (%p613) target = $region24
        $region23: #{tpu_custom_call.1} parent=11 // pred_region
          _
        $region24: #{tpu_custom_call.1} parent=11 // pred_fallthru
          _
        // Predicated region
        $region25: #{tpu_custom_call.1} parent=11 // pred_check
          %p616 = pneg %p167
        $region26: #{tpu_custom_call.1} parent=11 // pred_check_branch
          %618 = sbr.rel (%p616) target = $region28
        $region27: #{tpu_custom_call.1} parent=11 // pred_region
          _
        $region28: #{tpu_custom_call.1} parent=11 // pred_fallthru
          _
        // Predicated region
        $region29: #{tpu_custom_call.1} parent=11 // pred_check
          %p619 = pneg %p188
        $region30: #{tpu_custom_call.1} parent=11 // pred_check_branch
          %621 = sbr.rel (%p619) target = $region32
        $region31: #{tpu_custom_call.1} parent=11 // pred_region
          _
        $region32: #{tpu_custom_call.1} parent=11 // pred_fallthru
          _
        // Predicated region
        $region33: #{tpu_custom_call.1} parent=11 // pred_check
          %p622 = pneg %p209
        $region34: #{tpu_custom_call.1} parent=11 // pred_check_branch
          %624 = sbr.rel (%p622) target = $region36
        $region35: #{tpu_custom_call.1} parent=11 // pred_region
          _
        $region36: #{tpu_custom_call.1} parent=11 // pred_fallthru
          _
        // Predicated region
        $region37: #{tpu_custom_call.1} parent=11 // pred_check
          %p625 = pneg %p230
        $region38: #{tpu_custom_call.1} parent=11 // pred_check_branch
          %627 = sbr.rel (%p625) target = $region40
        $region39: #{tpu_custom_call.1} parent=11 // pred_region
          _
        $region40: #{tpu_custom_call.1} parent=11 // pred_fallthru
          _
        // Predicated region
        $region41: #{tpu_custom_call.1} parent=11 // pred_check
          %p628 = pneg %p251
        $region42: #{tpu_custom_call.1} parent=11 // pred_check_branch
          %630 = sbr.rel (%p628) target = $region44
        $region43: #{tpu_custom_call.1} parent=11 // pred_region
          _
        $region44: #{tpu_custom_call.1} parent=11 // pred_fallthru
          _
        // Predicated region
        $region45: #{tpu_custom_call.1} parent=11 // pred_check
          %p631 = pneg %p272
        $region46: #{tpu_custom_call.1} parent=11 // pred_check_branch
          %633 = sbr.rel (%p631) target = $region48
        $region47: #{tpu_custom_call.1} parent=11 // pred_region
          _
        $region48: #{tpu_custom_call.1} parent=11 // pred_fallthru
          _
        // Predicated region
        $region49: #{tpu_custom_call.1} parent=11 // pred_check
          %p634 = pneg %p293
        $region50: #{tpu_custom_call.1} parent=11 // pred_check_branch
          %636 = sbr.rel (%p634) target = $region52
        $region51: #{tpu_custom_call.1} parent=11 // pred_region
          _
        $region52: #{tpu_custom_call.1} parent=11 // pred_fallthru
          _
        // Predicated region
        $region53: #{tpu_custom_call.1} parent=11 // pred_check
          %p637 = pneg %p314
        $region54: #{tpu_custom_call.1} parent=11 // pred_check_branch
          %639 = sbr.rel (%p637) target = $region56
        $region55: #{tpu_custom_call.1} parent=11 // pred_region
          _
        $region56: #{tpu_custom_call.1} parent=11 // pred_fallthru
          _
        // Predicated region
        $region57: #{tpu_custom_call.1} parent=11 // pred_check
          %p640 = pneg %p335
        $region58: #{tpu_custom_call.1} parent=11 // pred_check_branch
          %642 = sbr.rel (%p640) target = $region60
        $region59: #{tpu_custom_call.1} parent=11 // pred_region
          _
        $region60: #{tpu_custom_call.1} parent=11 // pred_fallthru
          _
        // Predicated region
        $region61: #{tpu_custom_call.1} parent=11 // pred_check
          %p643 = pneg %p356
        $region62: #{tpu_custom_call.1} parent=11 // pred_check_branch
          %645 = sbr.rel (%p643) target = $region64
        $region63: #{tpu_custom_call.1} parent=11 // pred_region
          _
        $region64: #{tpu_custom_call.1} parent=11 // pred_fallthru
          _
        // Predicated region
        $region65: #{tpu_custom_call.1} parent=11 // pred_check
          %p646 = pneg %p377
        $region66: #{tpu_custom_call.1} parent=11 // pred_check_branch
          %648 = sbr.rel (%p646) target = $region68
        $region67: #{tpu_custom_call.1} parent=11 // pred_region
          _
        $region68: #{tpu_custom_call.1} parent=11 // pred_fallthru
          _
        // Predicated region
        $region69: #{tpu_custom_call.1} parent=11 // pred_check
          %p649 = pneg %p398
        $region70: #{tpu_custom_call.1} parent=11 // pred_check_branch
          %651 = sbr.rel (%p649) target = $region72
        $region71: #{tpu_custom_call.1} parent=11 // pred_region
          _
        $region72: #{tpu_custom_call.1} parent=11 // pred_fallthru
          _
        // Predicated region
        $region73: #{tpu_custom_call.1} parent=11 // pred_check
          %p652 = pneg %p419
        $region74: #{tpu_custom_call.1} parent=11 // pred_check_branch
          %654 = sbr.rel (%p652) target = $region76
        $region75: #{tpu_custom_call.1} parent=11 // pred_region
          _
        $region76: #{tpu_custom_call.1} parent=11 // pred_fallthru
          _
        // Predicated region
        $region77: #{tpu_custom_call.1} parent=11 // pred_check
          %p655 = pneg %p440
        $region78: #{tpu_custom_call.1} parent=11 // pred_check_branch
          %657 = sbr.rel (%p655) target = $region80
        $region79: #{tpu_custom_call.1} parent=11 // pred_region
          _
        $region80: #{tpu_custom_call.1} parent=11 // pred_fallthru
          _
        // Predicated region
        $region81: #{tpu_custom_call.1} parent=11 // pred_check
          %p658 = pneg %p461
        $region82: #{tpu_custom_call.1} parent=11 // pred_check_branch
          %660 = sbr.rel (%p658) target = $region84
        $region83: #{tpu_custom_call.1} parent=11 // pred_region
          _
        $region84: #{tpu_custom_call.1} parent=11 // pred_fallthru
          _
        // Predicated region
        $region85: #{tpu_custom_call.1} parent=11 // pred_check
          %p661 = pneg %p482
        $region86: #{tpu_custom_call.1} parent=11 // pred_check_branch
          %663 = sbr.rel (%p661) target = $region88
        $region87: #{tpu_custom_call.1} parent=11 // pred_region
          _
        $region88: #{tpu_custom_call.1} parent=11 // pred_fallthru
          _
        // Predicated region
        $region89: #{tpu_custom_call.1} parent=11 // pred_check
          %p664 = pneg %p503
        $region90: #{tpu_custom_call.1} parent=11 // pred_check_branch
          %666 = sbr.rel (%p664) target = $region92
        $region91: #{tpu_custom_call.1} parent=11 // pred_region
          _
        $region92: #{tpu_custom_call.1} parent=11 // pred_fallthru
          _
        // Predicated region
        $region93: #{tpu_custom_call.1} parent=11 // pred_check
          %p667 = pneg %p524
        $region94: #{tpu_custom_call.1} parent=11 // pred_check_branch
          %669 = sbr.rel (%p667) target = $region96
        $region95: #{tpu_custom_call.1} parent=11 // pred_region
          _
        $region96: #{tpu_custom_call.1} parent=11 // pred_fallthru
          _
        // Predicated region
        $region97: #{tpu_custom_call.1} parent=11 // pred_check
          %p670 = pneg %p545
        $region98: #{tpu_custom_call.1} parent=11 // pred_check_branch
          %672 = sbr.rel (%p670) target = $region100
        $region99: #{tpu_custom_call.1} parent=11 // pred_region
          _
        $region100: #{tpu_custom_call.1} parent=11 // pred_fallthru
          _
        // Predicated region
        $region101: #{tpu_custom_call.1} parent=11 // pred_check
          %p673 = pneg %p566
        $region102: #{tpu_custom_call.1} parent=11 // pred_check_branch
          %675 = sbr.rel (%p673) target = $region104
        $region103: #{tpu_custom_call.1} parent=11 // pred_region
          _
        $region104: #{tpu_custom_call.1} parent=11 // pred_fallthru
          _
      $region12: #{tpu_custom_call.1} parent=5 // pred_fallthru
        _
      %p676 = scmp.lt.s32.totalorder %s31, 2
      // Predicated region
      $region105: #{tpu_custom_call.1} parent=5 // pred_check
        %p677 = pneg %p676
      $region106: #{tpu_custom_call.1} parent=5 // pred_check_branch
        %679 = sbr.rel (%p677) target = $region108
      $region107: #{tpu_custom_call.1} parent=5 // pred_region
        // Predicated region
        $region109: #{tpu_custom_call.1} parent=107 // pred_check
          %p680 = pneg %p51
        $region110: #{tpu_custom_call.1} parent=107 // pred_check_branch
          %682 = sbr.rel (%p680) target = $region112
        $region111: #{tpu_custom_call.1} parent=107 // pred_region
          %s683 = sand.u32 %s41, 1
          %s684 = sand.u32 %s41, 1
          %s685 = smul.addr %s684, 128
          %s686 = scalar_lea.vmem [#allocation2], %s685
          %s687 = smul.u32 2, %s31
          %s688 = smul.addr %s687, 8
          %s689 = scalar_lea.vmem %s0, %s688
          // Predicated region
          $region113: #{tpu_custom_call.1} parent=111 // pred_check
            _
          $region114: #{tpu_custom_call.1} parent=111 // pred_check_branch
            %691 = sbr.rel (0) target = $region116
          $region115: #{tpu_custom_call.1} parent=111 // pred_region
            // Predicated region
            $region117: #{tpu_custom_call.1} parent=115 // pred_check
              _
            $region118: #{tpu_custom_call.1} parent=115 // pred_check_branch
              %693 = sbr.rel (0) target = $region120
            $region119: #{tpu_custom_call.1} parent=115 // pred_region
              // Predicated region
              $region132: #{tpu_custom_call.1} parent=119 // pred_check
                _
              $region133: #{tpu_custom_call.1} parent=119 // pred_check_branch
                %738 = sbr.rel (0) target = $region135
              $region134: #{tpu_custom_call.1} parent=119 // pred_region
                loop: start=0, step=1, limit=1
                $region136: #{tpu_custom_call.1} parent=134 // loop_pre_header
                  _
                $region137: #{tpu_custom_call.1} parent=134 // loop_header
                  %s740 = sphi 0, %s744
                  %p741 = scmp.ge.s32.totalorder %s740, 1
                  %s745 = sphi %s689, %s689
                  %s746 = sphi %s686, %s686
                $region138: #{tpu_custom_call.1} parent=134 // loop_header_branch
                  %743 = sbr.rel (%p741) target = $region142
                $region139: #{tpu_custom_call.1} parent=134 // loop_body
                  %v747 = vld [vmem:[%s745] sm:$0xff]
                  %748 = vst [vmem:[%s746] sm:$0xff] %v747
                  %v749 = vld [vmem:[%s745 + $0x8] sm:$0xff]
                  %750 = vst [vmem:[%s746 + $0x8] sm:$0xff] %v749
                  %v751 = vld [vmem:[%s745 + $0x20] sm:$0xff]
                  %752 = vst [vmem:[%s746 + $0x10] sm:$0xff] %v751
                  %v753 = vld [vmem:[%s745 + $0x28] sm:$0xff]
                  %754 = vst [vmem:[%s746 + $0x18] sm:$0xff] %v753
                  %v755 = vld [vmem:[%s745 + $0x40] sm:$0xff]
                  %756 = vst [vmem:[%s746 + $0x20] sm:$0xff] %v755
                  %v757 = vld [vmem:[%s745 + $0x48] sm:$0xff]
                  %758 = vst [vmem:[%s746 + $0x28] sm:$0xff] %v757
                  %v759 = vld [vmem:[%s745 + $0x60] sm:$0xff]
                  %760 = vst [vmem:[%s746 + $0x30] sm:$0xff] %v759
                  %v761 = vld [vmem:[%s745 + $0x68] sm:$0xff]
                  %762 = vst [vmem:[%s746 + $0x38] sm:$0xff] %v761
                  %v763 = vld [vmem:[%s745 + $0x80] sm:$0xff]
                  %764 = vst [vmem:[%s746 + $0x40] sm:$0xff] %v763
                  %v765 = vld [vmem:[%s745 + $0x88] sm:$0xff]
                  %766 = vst [vmem:[%s746 + $0x48] sm:$0xff] %v765
                  %v767 = vld [vmem:[%s745 + $0xa0] sm:$0xff]
                  %768 = vst [vmem:[%s746 + $0x50] sm:$0xff] %v767
                  %v769 = vld [vmem:[%s745 + $0xa8] sm:$0xff]
                  %770 = vst [vmem:[%s746 + $0x58] sm:$0xff] %v769
                  %v771 = vld [vmem:[%s745 + $0xc0] sm:$0xff]
                  %772 = vst [vmem:[%s746 + $0x60] sm:$0xff] %v771
                  %v773 = vld [vmem:[%s745 + $0xc8] sm:$0xff]
                  %774 = vst [vmem:[%s746 + $0x68] sm:$0xff] %v773
                  %v775 = vld [vmem:[%s745 + $0xe0] sm:$0xff]
                  %776 = vst [vmem:[%s746 + $0x70] sm:$0xff] %v775
                  %v777 = vld [vmem:[%s745 + $0xe8] sm:$0xff]
                  %778 = vst [vmem:[%s746 + $0x78] sm:$0xff] %v777
                $region140: #{tpu_custom_call.1} parent=134 // loop_footer
                  %s744 = sadd.s32 1, %s740
                $region141: #{tpu_custom_call.1} parent=134 // loop_footer_branch
                  %739 = sbr.rel target = $region137
                $region142: #{tpu_custom_call.1} parent=134 // loop_exit
                  _
              $region135: #{tpu_custom_call.1} parent=119 // pred_fallthru
                _
              // Predicated region
              $region143: #{tpu_custom_call.1} parent=119 // pred_check
                _
              $region144: #{tpu_custom_call.1} parent=119 // pred_check_branch
                %780 = sbr.rel target = $region146
              $region145: #{tpu_custom_call.1} parent=119 // pred_region
                _
              $region146: #{tpu_custom_call.1} parent=119 // pred_fallthru
                _
            $region120: #{tpu_custom_call.1} parent=115 // pred_fallthru
              _
            // Predicated region
            $region121: #{tpu_custom_call.1} parent=115 // pred_check
              _
            $region122: #{tpu_custom_call.1} parent=115 // pred_check_branch
              %695 = sbr.rel target = $region124
            $region123: #{tpu_custom_call.1} parent=115 // pred_region
              loop: start=0, step=1, limit=1
              $region125: #{tpu_custom_call.1} parent=123 // loop_pre_header
                _
              $region126: #{tpu_custom_call.1} parent=123 // loop_header
                %s698 = sphi 0, %s702
                %p699 = scmp.ge.s32.totalorder %s698, 1
                %s703 = sphi %s689, %s689
                %s704 = sphi %s686, %s686
              $region127: #{tpu_custom_call.1} parent=123 // loop_header_branch
                %701 = sbr.rel (%p699) target = $region131
              $region128: #{tpu_custom_call.1} parent=123 // loop_body
                %v705 = vld [vmem:[%s703] sm:$0xff]
                %706 = vst [vmem:[%s704] sm:$0xff] %v705
                %v707 = vld [vmem:[%s703 + $0x8] sm:$0xff]
                %708 = vst [vmem:[%s704 + $0x8] sm:$0xff] %v707
                %v709 = vld [vmem:[%s703 + $0x20] sm:$0xff]
                %710 = vst [vmem:[%s704 + $0x10] sm:$0xff] %v709
                %v711 = vld [vmem:[%s703 + $0x28] sm:$0xff]
                %712 = vst [vmem:[%s704 + $0x18] sm:$0xff] %v711
                %v713 = vld [vmem:[%s703 + $0x40] sm:$0xff]
                %714 = vst [vmem:[%s704 + $0x20] sm:$0xff] %v713
                %v715 = vld [vmem:[%s703 + $0x48] sm:$0xff]
                %716 = vst [vmem:[%s704 + $0x28] sm:$0xff] %v715
                %v717 = vld [vmem:[%s703 + $0x60] sm:$0xff]
                %718 = vst [vmem:[%s704 + $0x30] sm:$0xff] %v717
                %v719 = vld [vmem:[%s703 + $0x68] sm:$0xff]
                %720 = vst [vmem:[%s704 + $0x38] sm:$0xff] %v719
                %v721 = vld [vmem:[%s703 + $0x80] sm:$0xff]
                %722 = vst [vmem:[%s704 + $0x40] sm:$0xff] %v721
                %v723 = vld [vmem:[%s703 + $0x88] sm:$0xff]
                %724 = vst [vmem:[%s704 + $0x48] sm:$0xff] %v723
                %v725 = vld [vmem:[%s703 + $0xa0] sm:$0xff]
                %726 = vst [vmem:[%s704 + $0x50] sm:$0xff] %v725
                %v727 = vld [vmem:[%s703 + $0xa8] sm:$0xff]
                %728 = vst [vmem:[%s704 + $0x58] sm:$0xff] %v727
                %v729 = vld [vmem:[%s703 + $0xc0] sm:$0xff]
                %730 = vst [vmem:[%s704 + $0x60] sm:$0xff] %v729
                %v731 = vld [vmem:[%s703 + $0xc8] sm:$0xff]
                %732 = vst [vmem:[%s704 + $0x68] sm:$0xff] %v731
                %v733 = vld [vmem:[%s703 + $0xe0] sm:$0xff]
                %734 = vst [vmem:[%s704 + $0x70] sm:$0xff] %v733
                %v735 = vld [vmem:[%s703 + $0xe8] sm:$0xff]
                %736 = vst [vmem:[%s704 + $0x78] sm:$0xff] %v735
              $region129: #{tpu_custom_call.1} parent=123 // loop_footer
                %s702 = sadd.s32 1, %s698
              $region130: #{tpu_custom_call.1} parent=123 // loop_footer_branch
                %697 = sbr.rel target = $region126
              $region131: #{tpu_custom_call.1} parent=123 // loop_exit
                _
            $region124: #{tpu_custom_call.1} parent=115 // pred_fallthru
              _
          $region116: #{tpu_custom_call.1} parent=111 // pred_fallthru
            _
          %781 = vnop
        $region112: #{tpu_custom_call.1} parent=107 // pred_fallthru
          _
        // Predicated region
        $region147: #{tpu_custom_call.1} parent=107 // pred_check
          %p782 = pneg %p77
        $region148: #{tpu_custom_call.1} parent=107 // pred_check_branch
          %784 = sbr.rel (%p782) target = $region150
        $region149: #{tpu_custom_call.1} parent=107 // pred_region
          %s785 = sand.u32 %s67, 1
          %s786 = sand.u32 %s67, 1
          %s787 = smul.addr %s786, 128
          %s788 = scalar_lea.vmem [#allocation3], %s787
          %s789 = smul.u32 2, %s31
          %s790 = smul.addr %s789, 8
          %s791 = scalar_lea.vmem %s1, %s790
          // Predicated region
          $region151: #{tpu_custom_call.1} parent=149 // pred_check
            _
          $region152: #{tpu_custom_call.1} parent=149 // pred_check_branch
            %793 = sbr.rel (0) target = $region154
          $region153: #{tpu_custom_call.1} parent=149 // pred_region
            // Predicated region
            $region155: #{tpu_custom_call.1} parent=153 // pred_check
              _
            $region156: #{tpu_custom_call.1} parent=153 // pred_check_branch
              %795 = sbr.rel (0) target = $region158
            $region157: #{tpu_custom_call.1} parent=153 // pred_region
              // Predicated region
              $region170: #{tpu_custom_call.1} parent=157 // pred_check
                _
              $region171: #{tpu_custom_call.1} parent=157 // pred_check_branch
                %840 = sbr.rel (0) target = $region173
              $region172: #{tpu_custom_call.1} parent=157 // pred_region
                loop: start=0, step=1, limit=1
                $region174: #{tpu_custom_call.1} parent=172 // loop_pre_header
                  _
                $region175: #{tpu_custom_call.1} parent=172 // loop_header
                  %s842 = sphi 0, %s846
                  %p843 = scmp.ge.s32.totalorder %s842, 1
                  %s847 = sphi %s791, %s791
                  %s848 = sphi %s788, %s788
                $region176: #{tpu_custom_call.1} parent=172 // loop_header_branch
                  %845 = sbr.rel (%p843) target = $region180
                $region177: #{tpu_custom_call.1} parent=172 // loop_body
                  %v849 = vld [vmem:[%s847] sm:$0xff]
                  %850 = vst [vmem:[%s848] sm:$0xff] %v849
                  %v851 = vld [vmem:[%s847 + $0x8] sm:$0xff]
                  %852 = vst [vmem:[%s848 + $0x8] sm:$0xff] %v851
                  %v853 = vld [vmem:[%s847 + $0x20] sm:$0xff]
                  %854 = vst [vmem:[%s848 + $0x10] sm:$0xff] %v853
                  %v855 = vld [vmem:[%s847 + $0x28] sm:$0xff]
                  %856 = vst [vmem:[%s848 + $0x18] sm:$0xff] %v855
                  %v857 = vld [vmem:[%s847 + $0x40] sm:$0xff]
                  %858 = vst [vmem:[%s848 + $0x20] sm:$0xff] %v857
                  %v859 = vld [vmem:[%s847 + $0x48] sm:$0xff]
                  %860 = vst [vmem:[%s848 + $0x28] sm:$0xff] %v859
                  %v861 = vld [vmem:[%s847 + $0x60] sm:$0xff]
                  %862 = vst [vmem:[%s848 + $0x30] sm:$0xff] %v861
                  %v863 = vld [vmem:[%s847 + $0x68] sm:$0xff]
                  %864 = vst [vmem:[%s848 + $0x38] sm:$0xff] %v863
                  %v865 = vld [vmem:[%s847 + $0x80] sm:$0xff]
                  %866 = vst [vmem:[%s848 + $0x40] sm:$0xff] %v865
                  %v867 = vld [vmem:[%s847 + $0x88] sm:$0xff]
                  %868 = vst [vmem:[%s848 + $0x48] sm:$0xff] %v867
                  %v869 = vld [vmem:[%s847 + $0xa0] sm:$0xff]
                  %870 = vst [vmem:[%s848 + $0x50] sm:$0xff] %v869
                  %v871 = vld [vmem:[%s847 + $0xa8] sm:$0xff]
                  %872 = vst [vmem:[%s848 + $0x58] sm:$0xff] %v871
                  %v873 = vld [vmem:[%s847 + $0xc0] sm:$0xff]
                  %874 = vst [vmem:[%s848 + $0x60] sm:$0xff] %v873
                  %v875 = vld [vmem:[%s847 + $0xc8] sm:$0xff]
                  %876 = vst [vmem:[%s848 + $0x68] sm:$0xff] %v875
                  %v877 = vld [vmem:[%s847 + $0xe0] sm:$0xff]
                  %878 = vst [vmem:[%s848 + $0x70] sm:$0xff] %v877
                  %v879 = vld [vmem:[%s847 + $0xe8] sm:$0xff]
                  %880 = vst [vmem:[%s848 + $0x78] sm:$0xff] %v879
                $region178: #{tpu_custom_call.1} parent=172 // loop_footer
                  %s846 = sadd.s32 1, %s842
                $region179: #{tpu_custom_call.1} parent=172 // loop_footer_branch
                  %841 = sbr.rel target = $region175
                $region180: #{tpu_custom_call.1} parent=172 // loop_exit
                  _
              $region173: #{tpu_custom_call.1} parent=157 // pred_fallthru
                _
              // Predicated region
              $region181: #{tpu_custom_call.1} parent=157 // pred_check
                _
              $region182: #{tpu_custom_call.1} parent=157 // pred_check_branch
                %882 = sbr.rel target = $region184
              $region183: #{tpu_custom_call.1} parent=157 // pred_region
                _
              $region184: #{tpu_custom_call.1} parent=157 // pred_fallthru
                _
            $region158: #{tpu_custom_call.1} parent=153 // pred_fallthru
              _
            // Predicated region
            $region159: #{tpu_custom_call.1} parent=153 // pred_check
              _
            $region160: #{tpu_custom_call.1} parent=153 // pred_check_branch
              %797 = sbr.rel target = $region162
            $region161: #{tpu_custom_call.1} parent=153 // pred_region
              loop: start=0, step=1, limit=1
              $region163: #{tpu_custom_call.1} parent=161 // loop_pre_header
                _
              $region164: #{tpu_custom_call.1} parent=161 // loop_header
                %s800 = sphi 0, %s804
                %p801 = scmp.ge.s32.totalorder %s800, 1
                %s805 = sphi %s791, %s791
                %s806 = sphi %s788, %s788
              $region165: #{tpu_custom_call.1} parent=161 // loop_header_branch
                %803 = sbr.rel (%p801) target = $region169
              $region166: #{tpu_custom_call.1} parent=161 // loop_body
                %v807 = vld [vmem:[%s805] sm:$0xff]
                %808 = vst [vmem:[%s806] sm:$0xff] %v807
                %v809 = vld [vmem:[%s805 + $0x8] sm:$0xff]
                %810 = vst [vmem:[%s806 + $0x8] sm:$0xff] %v809
                %v811 = vld [vmem:[%s805 + $0x20] sm:$0xff]
                %812 = vst [vmem:[%s806 + $0x10] sm:$0xff] %v811
                %v813 = vld [vmem:[%s805 + $0x28] sm:$0xff]
                %814 = vst [vmem:[%s806 + $0x18] sm:$0xff] %v813
                %v815 = vld [vmem:[%s805 + $0x40] sm:$0xff]
                %816 = vst [vmem:[%s806 + $0x20] sm:$0xff] %v815
                %v817 = vld [vmem:[%s805 + $0x48] sm:$0xff]
                %818 = vst [vmem:[%s806 + $0x28] sm:$0xff] %v817
                %v819 = vld [vmem:[%s805 + $0x60] sm:$0xff]
                %820 = vst [vmem:[%s806 + $0x30] sm:$0xff] %v819
                %v821 = vld [vmem:[%s805 + $0x68] sm:$0xff]
                %822 = vst [vmem:[%s806 + $0x38] sm:$0xff] %v821
                %v823 = vld [vmem:[%s805 + $0x80] sm:$0xff]
                %824 = vst [vmem:[%s806 + $0x40] sm:$0xff] %v823
                %v825 = vld [vmem:[%s805 + $0x88] sm:$0xff]
                %826 = vst [vmem:[%s806 + $0x48] sm:$0xff] %v825
                %v827 = vld [vmem:[%s805 + $0xa0] sm:$0xff]
                %828 = vst [vmem:[%s806 + $0x50] sm:$0xff] %v827
                %v829 = vld [vmem:[%s805 + $0xa8] sm:$0xff]
                %830 = vst [vmem:[%s806 + $0x58] sm:$0xff] %v829
                %v831 = vld [vmem:[%s805 + $0xc0] sm:$0xff]
                %832 = vst [vmem:[%s806 + $0x60] sm:$0xff] %v831
                %v833 = vld [vmem:[%s805 + $0xc8] sm:$0xff]
                %834 = vst [vmem:[%s806 + $0x68] sm:$0xff] %v833
                %v835 = vld [vmem:[%s805 + $0xe0] sm:$0xff]
                %836 = vst [vmem:[%s806 + $0x70] sm:$0xff] %v835
                %v837 = vld [vmem:[%s805 + $0xe8] sm:$0xff]
                %838 = vst [vmem:[%s806 + $0x78] sm:$0xff] %v837
              $region167: #{tpu_custom_call.1} parent=161 // loop_footer
                %s804 = sadd.s32 1, %s800
              $region168: #{tpu_custom_call.1} parent=161 // loop_footer_branch
                %799 = sbr.rel target = $region164
              $region169: #{tpu_custom_call.1} parent=161 // loop_exit
                _
            $region162: #{tpu_custom_call.1} parent=153 // pred_fallthru
              _
          $region154: #{tpu_custom_call.1} parent=149 // pred_fallthru
            _
          %883 = vnop
        $region150: #{tpu_custom_call.1} parent=107 // pred_fallthru
          _
      $region108: #{tpu_custom_call.1} parent=5 // pred_fallthru
        _
      %p884 = scmp.le.s32.totalorder 1, %s31
      %p885 = scmp.lt.s32.totalorder %s31, 3
      %p886 = pnand %p884, %p885
      %p887 = pneg %p886
      // Predicated region
      $region185: #{tpu_custom_call.1} parent=5 // pred_check
        _
      $region186: #{tpu_custom_call.1} parent=5 // pred_check_branch
        %889 = sbr.rel (%p886) target = $region188
      $region187: #{tpu_custom_call.1} parent=5 // pred_region
        %s890 = ssub.s32 %s31, 1
        %s891 = sand.u32 %s44, 1
        %s892 = sand.u32 %s44, 1
        %s893 = smul.addr %s892, 128
        %s894 = scalar_lea.vmem [#allocation2], %s893
        // Predicated region
        $region189: #{tpu_custom_call.1} parent=187 // pred_check
          %p895 = pneg %p57
        $region190: #{tpu_custom_call.1} parent=187 // pred_check_branch
          %897 = sbr.rel (%p895) target = $region192
        $region191: #{tpu_custom_call.1} parent=187 // pred_region
          _
        $region192: #{tpu_custom_call.1} parent=187 // pred_fallthru
          _
        %s898 = sand.u32 %s70, 1
        %s899 = sand.u32 %s70, 1
        %s900 = smul.addr %s899, 128
        %s901 = scalar_lea.vmem [#allocation3], %s900
        // Predicated region
        $region193: #{tpu_custom_call.1} parent=187 // pred_check
          %p902 = pneg %p83
        $region194: #{tpu_custom_call.1} parent=187 // pred_check_branch
          %904 = sbr.rel (%p902) target = $region196
        $region195: #{tpu_custom_call.1} parent=187 // pred_region
          _
        $region196: #{tpu_custom_call.1} parent=187 // pred_fallthru
          _
        %s905 = sand.u32 %s44, 1
        %s906 = sand.u32 %s44, 1
        %s907 = smul.addr %s906, 128
        %s908 = scalar_lea.vmem [#allocation2], %s907
        %p909 = pneg %p57
        %p910 = pneg %p54
        %s911 = sand.u32 %s70, 1
        %s912 = sand.u32 %s70, 1
        %s913 = smul.addr %s912, 128
        %s914 = scalar_lea.vmem [#allocation3], %s913
        %p915 = pneg %p83
        %p916 = pneg %p80
        %p917 = pneg %p104
        %p918 = pneg %p101
        %p919 = pneg %p125
        %p920 = pneg %p122
        %p921 = pneg %p146
        %p922 = pneg %p143
        %p923 = pneg %p167
        %p924 = pneg %p164
        %p925 = pneg %p188
        %p926 = pneg %p185
        %p927 = pneg %p209
        %p928 = pneg %p206
        %p929 = pneg %p230
        %p930 = pneg %p227
        %p931 = pneg %p251
        %p932 = pneg %p248
        %p933 = pneg %p272
        %p934 = pneg %p269
        %p935 = pneg %p293
        %p936 = pneg %p290
        %p937 = pneg %p314
        %p938 = pneg %p311
        %p939 = pneg %p335
        %p940 = pneg %p332
        %p941 = pneg %p356
        %p942 = pneg %p353
        %p943 = pneg %p377
        %p944 = pneg %p374
        %p945 = pneg %p398
        %p946 = pneg %p395
        %p947 = pneg %p419
        %p948 = pneg %p416
        %p949 = pneg %p440
        %p950 = pneg %p437
        %p951 = pneg %p461
        %p952 = pneg %p458
        %p953 = pneg %p482
        %p954 = pneg %p479
        %p955 = pneg %p503
        %p956 = pneg %p500
        %p957 = pneg %p524
        %p958 = pneg %p521
        %p959 = pneg %p545
        %p960 = pneg %p542
        %p961 = pneg %p566
        %p962 = pneg %p563
        %p963 = pneg %p592
        %p964 = pneg %p589
        %s965 = sand.u32 %s579, 1
        %s966 = sand.u32 %s579, 1
        %s967 = smul.addr %s966, 128
        %s968 = scalar_lea.vmem [#allocation4], %s967
        %s969 = smul.u32 2, %s36
        %s970 = smul.u32 2, %s36
        %s971 = smul.u32 2, %s36
        %v973 = vld [vmem:[%s894] sm:$0xff]
        %v974 = vld [vmem:[%s894 + $0x8] sm:$0xff]
        %v975 = vld [vmem:[%s894 + $0x10] sm:$0xff]
        %v976 = vld [vmem:[%s894 + $0x18] sm:$0xff]
        %v977 = vld [vmem:[%s894 + $0x20] sm:$0xff]
        %v978 = vld [vmem:[%s894 + $0x28] sm:$0xff]
        %v979 = vld [vmem:[%s894 + $0x30] sm:$0xff]
        %v980 = vld [vmem:[%s894 + $0x38] sm:$0xff]
        %v981 = vld [vmem:[%s894 + $0x40] sm:$0xff]
        %v982 = vld [vmem:[%s894 + $0x48] sm:$0xff]
        %v983 = vld [vmem:[%s894 + $0x50] sm:$0xff]
        %v984 = vld [vmem:[%s894 + $0x58] sm:$0xff]
        %v985 = vld [vmem:[%s894 + $0x60] sm:$0xff]
        %v986 = vld [vmem:[%s894 + $0x68] sm:$0xff]
        %v987 = vld [vmem:[%s894 + $0x70] sm:$0xff]
        %v988 = vld [vmem:[%s894 + $0x78] sm:$0xff]
        %v989 = vpack.c.bf16 %v974, %v973
        %v990 = vpack.c.bf16 %v976, %v975
        %v991 = vpack.c.bf16 %v978, %v977
        %v992 = vpack.c.bf16 %v980, %v979
        %v993 = vpack.c.bf16 %v982, %v981
        %v994 = vpack.c.bf16 %v984, %v983
        %v995 = vpack.c.bf16 %v986, %v985
        %v996 = vpack.c.bf16 %v988, %v987
        %v997 = vld [vmem:[%s901] sm:$0xff]
        %v998 = vld [vmem:[%s901 + $0x8] sm:$0xff]
        %v999 = vld [vmem:[%s901 + $0x10] sm:$0xff]
        %v1000 = vld [vmem:[%s901 + $0x18] sm:$0xff]
        %v1001 = vld [vmem:[%s901 + $0x20] sm:$0xff]
        %v1002 = vld [vmem:[%s901 + $0x28] sm:$0xff]
        %v1003 = vld [vmem:[%s901 + $0x30] sm:$0xff]
        %v1004 = vld [vmem:[%s901 + $0x38] sm:$0xff]
        %v1005 = vld [vmem:[%s901 + $0x40] sm:$0xff]
        %v1006 = vld [vmem:[%s901 + $0x48] sm:$0xff]
        %v1007 = vld [vmem:[%s901 + $0x50] sm:$0xff]
        %v1008 = vld [vmem:[%s901 + $0x58] sm:$0xff]
        %v1009 = vld [vmem:[%s901 + $0x60] sm:$0xff]
        %v1010 = vld [vmem:[%s901 + $0x68] sm:$0xff]
        %v1011 = vld [vmem:[%s901 + $0x70] sm:$0xff]
        %v1012 = vld [vmem:[%s901 + $0x78] sm:$0xff]
        %v1013 = vpack.c.bf16 %v998, %v997
        %v1014 = vpack.c.bf16 %v1000, %v999
        %v1015 = vpack.c.bf16 %v1002, %v1001
        %v1016 = vpack.c.bf16 %v1004, %v1003
        %v1017 = vpack.c.bf16 %v1006, %v1005
        %v1018 = vpack.c.bf16 %v1008, %v1007
        %v1019 = vpack.c.bf16 %v1010, %v1009
        %v1020 = vpack.c.bf16 %v1012, %v1011
        %v1021 = vld [vmem:[%s4] sm:$0x3]
        %v1022 = vld [vmem:[%s5] sm:$0x7]
        %vm1023 = vcmask 48128
        %v1025 = vsel %vm1023, %v1013, 0
        %v1028 = vsel %vm1023, %v1014, 0
        %v1031 = vsel %vm1023, %v1015, 0
        %v1034 = vsel %vm1023, %v1016, 0
        %v1037 = vsel %vm1023, %v1017, 0
        %v1040 = vsel %vm1023, %v1018, 0
        %v1043 = vsel %vm1023, %v1019, 0
        %v1046 = vsel %vm1023, %v1020, 0
        %vm1048 = vcmask 1042432
        %v1050 = vsel %vm1048, %v1022, 0
        %1052 = vmatprep.subr.bf16.mxu0 0
        %1053 = vmatpush1.bf16.msra.mxu0 %v1050
        %1054 = vmatprep.subr.bf16.mxu0 0
        %1055 = vmatpush1.bf16.msra.mxu0 0
        %1056 = vmatprep.subr.bf16.mxu0 0
        %1057 = vmatpush1.bf16.msra.mxu0 0
        %1058 = vmatprep.subr.bf16.mxu0 0
        %1059 = vmatpush1.bf16.msra.mxu0 0
        %1060 = vmatprep.subr.bf16.mxu0 0
        %1061 = vmatpush1.bf16.msra.mxu0 0
        %1062 = vmatprep.subr.bf16.mxu0 0
        %1063 = vmatpush1.bf16.msra.mxu0 0
        %1064 = vmatprep.subr.bf16.mxu0 0
        %1065 = vmatpush1.bf16.msra.mxu0 0
        %1066 = vmatprep.subr.bf16.mxu0 0
        %1067 = vmatpush1.bf16.msra.mxu0 0
        %1068 = vmatprep.subr.bf16.mxu0 0
        %1069 = vmatpush1.bf16.msra.mxu0 0
        %1070 = vmatprep.subr.bf16.mxu0 0
        %1071 = vmatpush1.bf16.msra.mxu0 0
        %1072 = vmatprep.subr.bf16.mxu0 0
        %1073 = vmatpush1.bf16.msra.mxu0 0
        %1074 = vmatprep.subr.bf16.mxu0 0
        %1075 = vmatpush1.bf16.msra.mxu0 0
        %1076 = vmatprep.subr.bf16.mxu0 0
        %1077 = vmatpush1.bf16.msra.mxu0 0
        %1078 = vmatprep.subr.bf16.mxu0 0
        %1079 = vmatpush1.bf16.msra.mxu0 0
        %1080 = vmatprep.subr.bf16.mxu0 0
        %1081 = vmatpush1.bf16.msra.mxu0 0
        %1082 = vmatprep.subr.bf16.mxu0 0
        %1083 = vmatpush1.bf16.msra.mxu0 0
        %1084 = vmatprep.mubr.bf16.mxu0 0
        %1085 = vmatmul.mubr.bf16.gmra.mrb[0].mxu0 %v1025
        %v1086 = vpop.f32.mrb[0].mxu0
        %v1087 = vadd.f32 0.0, %v1086
        %v1088 = vpop.f32.mrb[0].mxu0
        %v1089 = vpop.f32.mrb[0].mxu0
        %v1090 = vadd.f32 0.0, %v1089
        %v1091 = vpop.f32.mrb[0].mxu0
        %1092 = vmatprep.mubr.bf16.mxu0 0
        %1093 = vmatmul.mubr.bf16.gmra.mrb[0].mxu0 %v1028
        %v1094 = vpop.f32.mrb[0].mxu0
        %v1095 = vadd.f32 0.0, %v1094
        %v1096 = vpop.f32.mrb[0].mxu0
        %v1097 = vpop.f32.mrb[0].mxu0
        %v1098 = vadd.f32 0.0, %v1097
        %v1099 = vpop.f32.mrb[0].mxu0
        %1100 = vmatprep.mubr.bf16.mxu0 0
        %1101 = vmatmul.mubr.bf16.gmra.mrb[0].mxu0 %v1031
        %v1102 = vpop.f32.mrb[0].mxu0
        %v1103 = vadd.f32 0.0, %v1102
        %v1104 = vpop.f32.mrb[0].mxu0
        %v1105 = vpop.f32.mrb[0].mxu0
        %v1106 = vadd.f32 0.0, %v1105
        %v1107 = vpop.f32.mrb[0].mxu0
        %1108 = vmatprep.mubr.bf16.mxu0 0
        %1109 = vmatmul.mubr.bf16.gmra.mrb[0].mxu0 %v1034
        %v1110 = vpop.f32.mrb[0].mxu0
        %v1111 = vadd.f32 0.0, %v1110
        %v1112 = vpop.f32.mrb[0].mxu0
        %v1113 = vpop.f32.mrb[0].mxu0
        %v1114 = vadd.f32 0.0, %v1113
        %v1115 = vpop.f32.mrb[0].mxu0
        %1116 = vmatprep.mubr.bf16.mxu0 0
        %1117 = vmatmul.mubr.bf16.gmra.mrb[0].mxu0 %v1037
        %v1118 = vpop.f32.mrb[0].mxu0
        %v1119 = vadd.f32 0.0, %v1118
        %v1120 = vpop.f32.mrb[0].mxu0
        %v1121 = vpop.f32.mrb[0].mxu0
        %v1122 = vadd.f32 0.0, %v1121
        %v1123 = vpop.f32.mrb[0].mxu0
        %1124 = vmatprep.mubr.bf16.mxu0 0
        %1125 = vmatmul.mubr.bf16.gmra.mrb[0].mxu0 %v1040
        %v1126 = vpop.f32.mrb[0].mxu0
        %v1127 = vadd.f32 0.0, %v1126
        %v1128 = vpop.f32.mrb[0].mxu0
        %v1129 = vpop.f32.mrb[0].mxu0
        %v1130 = vadd.f32 0.0, %v1129
        %v1131 = vpop.f32.mrb[0].mxu0
        %1132 = vmatprep.mubr.bf16.mxu0 0
        %1133 = vmatmul.mubr.bf16.gmra.mrb[0].mxu0 %v1043
        %v1134 = vpop.f32.mrb[0].mxu0
        %v1135 = vadd.f32 0.0, %v1134
        %v1136 = vpop.f32.mrb[0].mxu0
        %v1137 = vpop.f32.mrb[0].mxu0
        %v1138 = vadd.f32 0.0, %v1137
        %v1139 = vpop.f32.mrb[0].mxu0
        %1140 = vmatprep.mubr.bf16.mxu0 0
        %1141 = vmatmul.mubr.bf16.gmra.mrb[0].mxu0 %v1046
        %v1142 = vpop.f32.mrb[0].mxu0
        %v1143 = vadd.f32 0.0, %v1142
        %v1144 = vpop.f32.mrb[0].mxu0
        %v1145 = vpop.f32.mrb[0].mxu0
        %v1146 = vadd.f32 0.0, %v1145
        %v1147 = vpop.f32.mrb[0].mxu0
        %1148 = vdwg.mxu0
        %vm1149 = vcmask 31744
        %v1151 = vsel %vm1149, %v989, 0
        %v1154 = vsel %vm1149, %v990, 0
        %v1157 = vsel %vm1149, %v991, 0
        %v1160 = vsel %vm1149, %v992, 0
        %v1163 = vsel %vm1149, %v993, 0
        %v1166 = vsel %vm1149, %v994, 0
        %v1169 = vsel %vm1149, %v995, 0
        %v1172 = vsel %vm1149, %v996, 0
        %vm1174 = vcmask 1041408
        %v1176 = vsel %vm1174, %v1021, 0
        %1178 = vmatprep.subr.bf16.mxu0 0
        %1179 = vmatpush1.bf16.msra.mxu0 %v1176
        %1180 = vmatprep.subr.bf16.mxu0 0
        %1181 = vmatpush1.bf16.msra.mxu0 0
        %1182 = vmatprep.subr.bf16.mxu0 0
        %1183 = vmatpush1.bf16.msra.mxu0 0
        %1184 = vmatprep.subr.bf16.mxu0 0
        %1185 = vmatpush1.bf16.msra.mxu0 0
        %1186 = vmatprep.subr.bf16.mxu0 0
        %1187 = vmatpush1.bf16.msra.mxu0 0
        %1188 = vmatprep.subr.bf16.mxu0 0
        %1189 = vmatpush1.bf16.msra.mxu0 0
        %1190 = vmatprep.subr.bf16.mxu0 0
        %1191 = vmatpush1.bf16.msra.mxu0 0
        %1192 = vmatprep.subr.bf16.mxu0 0
        %1193 = vmatpush1.bf16.msra.mxu0 0
        %1194 = vmatprep.subr.bf16.mxu0 0
        %1195 = vmatpush1.bf16.msra.mxu0 0
        %1196 = vmatprep.subr.bf16.mxu0 0
        %1197 = vmatpush1.bf16.msra.mxu0 0
        %1198 = vmatprep.subr.bf16.mxu0 0
        %1199 = vmatpush1.bf16.msra.mxu0 0
        %1200 = vmatprep.subr.bf16.mxu0 0
        %1201 = vmatpush1.bf16.msra.mxu0 0
        %1202 = vmatprep.subr.bf16.mxu0 0
        %1203 = vmatpush1.bf16.msra.mxu0 0
        %1204 = vmatprep.subr.bf16.mxu0 0
        %1205 = vmatpush1.bf16.msra.mxu0 0
        %1206 = vmatprep.subr.bf16.mxu0 0
        %1207 = vmatpush1.bf16.msra.mxu0 0
        %1208 = vmatprep.subr.bf16.mxu0 0
        %1209 = vmatpush1.bf16.msra.mxu0 0
        %1210 = vmatprep.mubr.bf16.mxu0 0
        %1211 = vmatmul.mubr.bf16.gmra.mrb[0].mxu0 %v1151
        %v1212 = vpop.f32.mrb[0].mxu0
        %v1213 = vadd.f32 %v1087, %v1212
        %v1214 = vpop.f32.mrb[0].mxu0
        %v1215 = vpop.f32.mrb[0].mxu0
        %v1216 = vadd.f32 %v1090, %v1215
        %v1217 = vpop.f32.mrb[0].mxu0
        %1218 = vmatprep.mubr.bf16.mxu0 0
        %1219 = vmatmul.mubr.bf16.gmra.mrb[0].mxu0 %v1154
        %v1220 = vpop.f32.mrb[0].mxu0
        %v1221 = vadd.f32 %v1095, %v1220
        %v1222 = vpop.f32.mrb[0].mxu0
        %v1223 = vpop.f32.mrb[0].mxu0
        %v1224 = vadd.f32 %v1098, %v1223
        %v1225 = vpop.f32.mrb[0].mxu0
        %1226 = vmatprep.mubr.bf16.mxu0 0
        %1227 = vmatmul.mubr.bf16.gmra.mrb[0].mxu0 %v1157
        %v1228 = vpop.f32.mrb[0].mxu0
        %v1229 = vadd.f32 %v1103, %v1228
        %v1230 = vpop.f32.mrb[0].mxu0
        %v1231 = vpop.f32.mrb[0].mxu0
        %v1232 = vadd.f32 %v1106, %v1231
        %v1233 = vpop.f32.mrb[0].mxu0
        %1234 = vmatprep.mubr.bf16.mxu0 0
        %1235 = vmatmul.mubr.bf16.gmra.mrb[0].mxu0 %v1160
        %v1236 = vpop.f32.mrb[0].mxu0
        %v1237 = vadd.f32 %v1111, %v1236
        %v1238 = vpop.f32.mrb[0].mxu0
        %v1239 = vpop.f32.mrb[0].mxu0
        %v1240 = vadd.f32 %v1114, %v1239
        %v1241 = vpop.f32.mrb[0].mxu0
        %1242 = vmatprep.mubr.bf16.mxu0 0
        %1243 = vmatmul.mubr.bf16.gmra.mrb[0].mxu0 %v1163
        %v1244 = vpop.f32.mrb[0].mxu0
        %v1245 = vadd.f32 %v1119, %v1244
        %v1246 = vpop.f32.mrb[0].mxu0
        %v1247 = vpop.f32.mrb[0].mxu0
        %v1248 = vadd.f32 %v1122, %v1247
        %v1249 = vpop.f32.mrb[0].mxu0
        %1250 = vmatprep.mubr.bf16.mxu0 0
        %1251 = vmatmul.mubr.bf16.gmra.mrb[0].mxu0 %v1166
        %v1252 = vpop.f32.mrb[0].mxu0
        %v1253 = vadd.f32 %v1127, %v1252
        %v1254 = vpop.f32.mrb[0].mxu0
        %v1255 = vpop.f32.mrb[0].mxu0
        %v1256 = vadd.f32 %v1130, %v1255
        %v1257 = vpop.f32.mrb[0].mxu0
        %1258 = vmatprep.mubr.bf16.mxu0 0
        %1259 = vmatmul.mubr.bf16.gmra.mrb[0].mxu0 %v1169
        %v1260 = vpop.f32.mrb[0].mxu0
        %v1261 = vadd.f32 %v1135, %v1260
        %v1262 = vpop.f32.mrb[0].mxu0
        %v1263 = vpop.f32.mrb[0].mxu0
        %v1264 = vadd.f32 %v1138, %v1263
        %v1265 = vpop.f32.mrb[0].mxu0
        %1266 = vmatprep.mubr.bf16.mxu0 0
        %1267 = vmatmul.mubr.bf16.gmra.mrb[0].mxu0 %v1172
        %v1268 = vpop.f32.mrb[0].mxu0
        %v1269 = vadd.f32 %v1143, %v1268
        %v1270 = vpop.f32.mrb[0].mxu0
        %v1271 = vpop.f32.mrb[0].mxu0
        %v1272 = vadd.f32 %v1146, %v1271
        %v1273 = vpop.f32.mrb[0].mxu0
        %1274 = vdwg.mxu0
        %v1275 = vld [vmem:[%s6] sm:$0x1]
        %v1277 = vlaneseq
        %v1278 = vshrl.u32 %v1277, 7
        %v1279 = vsub.s32 0, %v1278
        %v1280 = vrot.slane %v1275, %v1279
        %v1282 = vadd.f32 %v1213, %v1280
        %v1283 = vadd.f32 %v1216, %v1280
        %v1284 = vadd.f32 %v1221, %v1280
        %v1285 = vadd.f32 %v1224, %v1280
        %v1286 = vadd.f32 %v1229, %v1280
        %v1287 = vadd.f32 %v1232, %v1280
        %v1288 = vadd.f32 %v1237, %v1280
        %v1289 = vadd.f32 %v1240, %v1280
        %v1290 = vadd.f32 %v1245, %v1280
        %v1291 = vadd.f32 %v1248, %v1280
        %v1292 = vadd.f32 %v1253, %v1280
        %v1293 = vadd.f32 %v1256, %v1280
        %v1294 = vadd.f32 %v1261, %v1280
        %v1295 = vadd.f32 %v1264, %v1280
        %v1296 = vadd.f32 %v1269, %v1280
        %v1297 = vadd.f32 %v1272, %v1280
        %v1298 = vpack.c.bf16 %v1283, %v1282
        %v1299 = vpack.c.bf16 %v1285, %v1284
        %v1300 = vpack.c.bf16 %v1287, %v1286
        %v1301 = vpack.c.bf16 %v1289, %v1288
        %v1302 = vpack.c.bf16 %v1291, %v1290
        %v1303 = vpack.c.bf16 %v1293, %v1292
        %v1304 = vpack.c.bf16 %v1295, %v1294
        %v1305 = vpack.c.bf16 %v1297, %v1296
        %v1306 = vld [vmem:[%s7] sm:$0xf]
        %v1307 = vld [vmem:[%s7 + $0x4] sm:$0xf]
        %v1308 = vld [vmem:[%s7 + $0x8] sm:$0xf]
        %v1309 = vld [vmem:[%s7 + $0xc] sm:$0xf]
        %v1310 = vld [vmem:[%s7 + $0x10] sm:$0xf]
        %v1311 = vld [vmem:[%s7 + $0x14] sm:$0xf]
        %v1312 = vld [vmem:[%s7 + $0x18] sm:$0xf]
        %v1313 = vld [vmem:[%s7 + $0x1c] sm:$0xf]
        %v1314 = vld [vmem:[%s8] sm:$0x1]
        %v1316 = vlaneseq
        %v1317 = vshrl.u32 %v1316, 7
        %v1318 = vsub.s32 0, %v1317
        %v1319 = vrot.slane %v1314, %v1318
        %v1329 = vunpack.c.l.b16 %v1306
        %v1330 = vunpack.c.l.b16 %v1307
        %v1331 = vunpack.c.l.b16 %v1308
        %v1332 = vunpack.c.l.b16 %v1309
        %v1333 = vunpack.c.l.b16 %v1310
        %v1334 = vunpack.c.l.b16 %v1311
        %v1335 = vunpack.c.l.b16 %v1312
        %v1336 = vunpack.c.l.b16 %v1313
        %v1337 = vpack.c.b16 %v1330, %v1329
        %v1338 = vpack.c.b16 %v1332, %v1331
        %v1339 = vpack.c.b16 %v1334, %v1333
        %v1340 = vpack.c.b16 %v1336, %v1335
        %vm1345 = vcmask 523264
        %v1347 = vsel %vm1345, %v1298, 0
        %v1350 = vsel %vm1345, %v1299, 0
        %v1353 = vsel %vm1345, %v1300, 0
        %v1356 = vsel %vm1345, %v1301, 0
        %v1359 = vsel %vm1345, %v1302, 0
        %v1362 = vsel %vm1345, %v1303, 0
        %v1365 = vsel %vm1345, %v1304, 0
        %v1368 = vsel %vm1345, %v1305, 0
        %1370 = vmatprep.subr.bf16.mxu0 0
        %1371 = vmatpush1.bf16.msra.mxu0 %v1337
        %1372 = vmatprep.subr.bf16.mxu0 0
        %1373 = vmatpush1.bf16.msra.mxu0 %v1338
        %1374 = vmatprep.subr.bf16.mxu0 0
        %1375 = vmatpush1.bf16.msra.mxu0 %v1339
        %1376 = vmatprep.subr.bf16.mxu0 0
        %1377 = vmatpush1.bf16.msra.mxu0 %v1340
        %1378 = vmatprep.subr.bf16.mxu0 0
        %1379 = vmatpush1.bf16.msra.mxu0 0
        %1380 = vmatprep.subr.bf16.mxu0 0
        %1381 = vmatpush1.bf16.msra.mxu0 0
        %1382 = vmatprep.subr.bf16.mxu0 0
        %1383 = vmatpush1.bf16.msra.mxu0 0
        %1384 = vmatprep.subr.bf16.mxu0 0
        %1385 = vmatpush1.bf16.msra.mxu0 0
        %1386 = vmatprep.subr.bf16.mxu0 0
        %1387 = vmatpush1.bf16.msra.mxu0 0
        %1388 = vmatprep.subr.bf16.mxu0 0
        %1389 = vmatpush1.bf16.msra.mxu0 0
        %1390 = vmatprep.subr.bf16.mxu0 0
        %1391 = vmatpush1.bf16.msra.mxu0 0
        %1392 = vmatprep.subr.bf16.mxu0 0
        %1393 = vmatpush1.bf16.msra.mxu0 0
        %1394 = vmatprep.subr.bf16.mxu0 0
        %1395 = vmatpush1.bf16.msra.mxu0 0
        %1396 = vmatprep.subr.bf16.mxu0 0
        %1397 = vmatpush1.bf16.msra.mxu0 0
        %1398 = vmatprep.subr.bf16.mxu0 0
        %1399 = vmatpush1.bf16.msra.mxu0 0
        %1400 = vmatprep.subr.bf16.mxu0 0
        %1401 = vmatpush1.bf16.msra.mxu0 0
        %1402 = vmatprep.mubr.bf16.mxu0 0
        %1403 = vmatmul.mubr.bf16.gmra.mrb[0].mxu0 %v1347
        %v1404 = vpop.f32.mrb[0].mxu0
        %v1405 = vadd.f32 %v1319, %v1404
        %v1406 = vpop.f32.mrb[0].mxu0
        %v1407 = vpop.f32.mrb[0].mxu0
        %v1408 = vadd.f32 %v1319, %v1407
        %v1409 = vpop.f32.mrb[0].mxu0
        %1410 = vmatprep.mubr.bf16.mxu0 0
        %1411 = vmatmul.mubr.bf16.gmra.mrb[0].mxu0 %v1350
        %v1412 = vpop.f32.mrb[0].mxu0
        %v1413 = vadd.f32 %v1319, %v1412
        %v1414 = vpop.f32.mrb[0].mxu0
        %v1415 = vpop.f32.mrb[0].mxu0
        %v1416 = vadd.f32 %v1319, %v1415
        %v1417 = vpop.f32.mrb[0].mxu0
        %1418 = vmatprep.mubr.bf16.mxu0 0
        %1419 = vmatmul.mubr.bf16.gmra.mrb[0].mxu0 %v1353
        %v1420 = vpop.f32.mrb[0].mxu0
        %v1421 = vadd.f32 %v1319, %v1420
        %v1422 = vpop.f32.mrb[0].mxu0
        %v1423 = vpop.f32.mrb[0].mxu0
        %v1424 = vadd.f32 %v1319, %v1423
        %v1425 = vpop.f32.mrb[0].mxu0
        %1426 = vmatprep.mubr.bf16.mxu0 0
        %1427 = vmatmul.mubr.bf16.gmra.mrb[0].mxu0 %v1356
        %v1428 = vpop.f32.mrb[0].mxu0
        %v1429 = vadd.f32 %v1319, %v1428
        %v1430 = vpop.f32.mrb[0].mxu0
        %v1431 = vpop.f32.mrb[0].mxu0
        %v1432 = vadd.f32 %v1319, %v1431
        %v1433 = vpop.f32.mrb[0].mxu0
        %1434 = vmatprep.mubr.bf16.mxu0 0
        %1435 = vmatmul.mubr.bf16.gmra.mrb[0].mxu0 %v1359
        %v1436 = vpop.f32.mrb[0].mxu0
        %v1437 = vadd.f32 %v1319, %v1436
        %v1438 = vpop.f32.mrb[0].mxu0
        %v1439 = vpop.f32.mrb[0].mxu0
        %v1440 = vadd.f32 %v1319, %v1439
        %v1441 = vpop.f32.mrb[0].mxu0
        %1442 = vmatprep.mubr.bf16.mxu0 0
        %1443 = vmatmul.mubr.bf16.gmra.mrb[0].mxu0 %v1362
        %v1444 = vpop.f32.mrb[0].mxu0
        %v1445 = vadd.f32 %v1319, %v1444
        %v1446 = vpop.f32.mrb[0].mxu0
        %v1447 = vpop.f32.mrb[0].mxu0
        %v1448 = vadd.f32 %v1319, %v1447
        %v1449 = vpop.f32.mrb[0].mxu0
        %1450 = vmatprep.mubr.bf16.mxu0 0
        %1451 = vmatmul.mubr.bf16.gmra.mrb[0].mxu0 %v1365
        %v1452 = vpop.f32.mrb[0].mxu0
        %v1453 = vadd.f32 %v1319, %v1452
        %v1454 = vpop.f32.mrb[0].mxu0
        %v1455 = vpop.f32.mrb[0].mxu0
        %v1456 = vadd.f32 %v1319, %v1455
        %v1457 = vpop.f32.mrb[0].mxu0
        %1458 = vmatprep.mubr.bf16.mxu0 0
        %1459 = vmatmul.mubr.bf16.gmra.mrb[0].mxu0 %v1368
        %v1460 = vpop.f32.mrb[0].mxu0
        %v1461 = vadd.f32 %v1319, %v1460
        %v1462 = vpop.f32.mrb[0].mxu0
        %v1463 = vpop.f32.mrb[0].mxu0
        %v1464 = vadd.f32 %v1319, %v1463
        %v1465 = vpop.f32.mrb[0].mxu0
        %1466 = vdwg.mxu0
        %v1467 = vld [vmem:[%s9] sm:$0xf]
        %v1468 = vld [vmem:[%s9 + $0x4] sm:$0xf]
        %v1469 = vld [vmem:[%s9 + $0x8] sm:$0xf]
        %v1470 = vld [vmem:[%s9 + $0xc] sm:$0xf]
        %v1471 = vld [vmem:[%s9 + $0x10] sm:$0xf]
        %v1472 = vld [vmem:[%s9 + $0x14] sm:$0xf]
        %v1473 = vld [vmem:[%s9 + $0x18] sm:$0xf]
        %v1474 = vld [vmem:[%s9 + $0x1c] sm:$0xf]
        %v1475 = vld [vmem:[%s10] sm:$0x1]
        %v1477 = vlaneseq
        %v1478 = vshrl.u32 %v1477, 7
        %v1479 = vsub.s32 0, %v1478
        %v1480 = vrot.slane %v1475, %v1479
        %v1490 = vunpack.c.l.b16 %v1467
        %v1491 = vunpack.c.l.b16 %v1468
        %v1492 = vunpack.c.l.b16 %v1469
        %v1493 = vunpack.c.l.b16 %v1470
        %v1494 = vunpack.c.l.b16 %v1471
        %v1495 = vunpack.c.l.b16 %v1472
        %v1496 = vunpack.c.l.b16 %v1473
        %v1497 = vunpack.c.l.b16 %v1474
        %v1498 = vpack.c.b16 %v1491, %v1490
        %v1499 = vpack.c.b16 %v1493, %v1492
        %v1500 = vpack.c.b16 %v1495, %v1494
        %v1501 = vpack.c.b16 %v1497, %v1496
        %1506 = vmatprep.subr.bf16.mxu0 0
        %1507 = vmatpush1.bf16.msra.mxu0 %v1498
        %1508 = vmatprep.subr.bf16.mxu0 0
        %1509 = vmatpush1.bf16.msra.mxu0 %v1499
        %1510 = vmatprep.subr.bf16.mxu0 0
        %1511 = vmatpush1.bf16.msra.mxu0 %v1500
        %1512 = vmatprep.subr.bf16.mxu0 0
        %1513 = vmatpush1.bf16.msra.mxu0 %v1501
        %1514 = vmatprep.subr.bf16.mxu0 0
        %1515 = vmatpush1.bf16.msra.mxu0 0
        %1516 = vmatprep.subr.bf16.mxu0 0
        %1517 = vmatpush1.bf16.msra.mxu0 0
        %1518 = vmatprep.subr.bf16.mxu0 0
        %1519 = vmatpush1.bf16.msra.mxu0 0
        %1520 = vmatprep.subr.bf16.mxu0 0
        %1521 = vmatpush1.bf16.msra.mxu0 0
        %1522 = vmatprep.subr.bf16.mxu0 0
        %1523 = vmatpush1.bf16.msra.mxu0 0
        %1524 = vmatprep.subr.bf16.mxu0 0
        %1525 = vmatpush1.bf16.msra.mxu0 0
        %1526 = vmatprep.subr.bf16.mxu0 0
        %1527 = vmatpush1.bf16.msra.mxu0 0
        %1528 = vmatprep.subr.bf16.mxu0 0
        %1529 = vmatpush1.bf16.msra.mxu0 0
        %1530 = vmatprep.subr.bf16.mxu0 0
        %1531 = vmatpush1.bf16.msra.mxu0 0
        %1532 = vmatprep.subr.bf16.mxu0 0
        %1533 = vmatpush1.bf16.msra.mxu0 0
        %1534 = vmatprep.subr.bf16.mxu0 0
        %1535 = vmatpush1.bf16.msra.mxu0 0
        %1536 = vmatprep.subr.bf16.mxu0 0
        %1537 = vmatpush1.bf16.msra.mxu0 0
        %1538 = vmatprep.mubr.bf16.mxu0 0
        %1539 = vmatmul.mubr.bf16.gmra.mrb[0].mxu0 %v1347
        %v1540 = vpop.f32.mrb[0].mxu0
        %v1541 = vadd.f32 %v1480, %v1540
        %v1542 = vpop.f32.mrb[0].mxu0
        %v1543 = vpop.f32.mrb[0].mxu0
        %v1544 = vadd.f32 %v1480, %v1543
        %v1545 = vpop.f32.mrb[0].mxu0
        %1546 = vmatprep.mubr.bf16.mxu0 0
        %1547 = vmatmul.mubr.bf16.gmra.mrb[0].mxu0 %v1350
        %v1548 = vpop.f32.mrb[0].mxu0
        %v1549 = vadd.f32 %v1480, %v1548
        %v1550 = vpop.f32.mrb[0].mxu0
        %v1551 = vpop.f32.mrb[0].mxu0
        %v1552 = vadd.f32 %v1480, %v1551
        %v1553 = vpop.f32.mrb[0].mxu0
        %1554 = vmatprep.mubr.bf16.mxu0 0
        %1555 = vmatmul.mubr.bf16.gmra.mrb[0].mxu0 %v1353
        %v1556 = vpop.f32.mrb[0].mxu0
        %v1557 = vadd.f32 %v1480, %v1556
        %v1558 = vpop.f32.mrb[0].mxu0
        %v1559 = vpop.f32.mrb[0].mxu0
        %v1560 = vadd.f32 %v1480, %v1559
        %v1561 = vpop.f32.mrb[0].mxu0
        %1562 = vmatprep.mubr.bf16.mxu0 0
        %1563 = vmatmul.mubr.bf16.gmra.mrb[0].mxu0 %v1356
        %v1564 = vpop.f32.mrb[0].mxu0
        %v1565 = vadd.f32 %v1480, %v1564
        %v1566 = vpop.f32.mrb[0].mxu0
        %v1567 = vpop.f32.mrb[0].mxu0
        %v1568 = vadd.f32 %v1480, %v1567
        %v1569 = vpop.f32.mrb[0].mxu0
        %1570 = vmatprep.mubr.bf16.mxu0 0
        %1571 = vmatmul.mubr.bf16.gmra.mrb[0].mxu0 %v1359
        %v1572 = vpop.f32.mrb[0].mxu0
        %v1573 = vadd.f32 %v1480, %v1572
        %v1574 = vpop.f32.mrb[0].mxu0
        %v1575 = vpop.f32.mrb[0].mxu0
        %v1576 = vadd.f32 %v1480, %v1575
        %v1577 = vpop.f32.mrb[0].mxu0
        %1578 = vmatprep.mubr.bf16.mxu0 0
        %1579 = vmatmul.mubr.bf16.gmra.mrb[0].mxu0 %v1362
        %v1580 = vpop.f32.mrb[0].mxu0
        %v1581 = vadd.f32 %v1480, %v1580
        %v1582 = vpop.f32.mrb[0].mxu0
        %v1583 = vpop.f32.mrb[0].mxu0
        %v1584 = vadd.f32 %v1480, %v1583
        %v1585 = vpop.f32.mrb[0].mxu0
        %1586 = vmatprep.mubr.bf16.mxu0 0
        %1587 = vmatmul.mubr.bf16.gmra.mrb[0].mxu0 %v1365
        %v1588 = vpop.f32.mrb[0].mxu0
        %v1589 = vadd.f32 %v1480, %v1588
        %v1590 = vpop.f32.mrb[0].mxu0
        %v1591 = vpop.f32.mrb[0].mxu0
        %v1592 = vadd.f32 %v1480, %v1591
        %v1593 = vpop.f32.mrb[0].mxu0
        %1594 = vmatprep.mubr.bf16.mxu0 0
        %1595 = vmatmul.mubr.bf16.gmra.mrb[0].mxu0 %v1368
        %v1596 = vpop.f32.mrb[0].mxu0
        %v1597 = vadd.f32 %v1480, %v1596
        %v1598 = vpop.f32.mrb[0].mxu0
        %v1599 = vpop.f32.mrb[0].mxu0
        %v1600 = vadd.f32 %v1480, %v1599
        %v1601 = vpop.f32.mrb[0].mxu0
        %1602 = vdwg.mxu0
        %v1603 = vld [vmem:[%s11] sm:$0xf]
        %v1604 = vld [vmem:[%s11 + $0x4] sm:$0xf]
        %v1605 = vld [vmem:[%s11 + $0x8] sm:$0xf]
        %v1606 = vld [vmem:[%s11 + $0xc] sm:$0xf]
        %v1607 = vld [vmem:[%s11 + $0x10] sm:$0xf]
        %v1608 = vld [vmem:[%s11 + $0x14] sm:$0xf]
        %v1609 = vld [vmem:[%s11 + $0x18] sm:$0xf]
        %v1610 = vld [vmem:[%s11 + $0x1c] sm:$0xf]
        %v1611 = vld [vmem:[%s12] sm:$0x1]
        %v1613 = vlaneseq
        %v1614 = vshrl.u32 %v1613, 7
        %v1615 = vsub.s32 0, %v1614
        %v1616 = vrot.slane %v1611, %v1615
        %v1626 = vunpack.c.l.b16 %v1603
        %v1627 = vunpack.c.l.b16 %v1604
        %v1628 = vunpack.c.l.b16 %v1605
        %v1629 = vunpack.c.l.b16 %v1606
        %v1630 = vunpack.c.l.b16 %v1607
        %v1631 = vunpack.c.l.b16 %v1608
        %v1632 = vunpack.c.l.b16 %v1609
        %v1633 = vunpack.c.l.b16 %v1610
        %v1634 = vpack.c.b16 %v1627, %v1626
        %v1635 = vpack.c.b16 %v1629, %v1628
        %v1636 = vpack.c.b16 %v1631, %v1630
        %v1637 = vpack.c.b16 %v1633, %v1632
        %1642 = vmatprep.subr.bf16.mxu0 0
        %1643 = vmatpush1.bf16.msra.mxu0 %v1634
        %1644 = vmatprep.subr.bf16.mxu0 0
        %1645 = vmatpush1.bf16.msra.mxu0 %v1635
        %1646 = vmatprep.subr.bf16.mxu0 0
        %1647 = vmatpush1.bf16.msra.mxu0 %v1636
        %1648 = vmatprep.subr.bf16.mxu0 0
        %1649 = vmatpush1.bf16.msra.mxu0 %v1637
        %1650 = vmatprep.subr.bf16.mxu0 0
        %1651 = vmatpush1.bf16.msra.mxu0 0
        %1652 = vmatprep.subr.bf16.mxu0 0
        %1653 = vmatpush1.bf16.msra.mxu0 0
        %1654 = vmatprep.subr.bf16.mxu0 0
        %1655 = vmatpush1.bf16.msra.mxu0 0
        %1656 = vmatprep.subr.bf16.mxu0 0
        %1657 = vmatpush1.bf16.msra.mxu0 0
        %1658 = vmatprep.subr.bf16.mxu0 0
        %1659 = vmatpush1.bf16.msra.mxu0 0
        %1660 = vmatprep.subr.bf16.mxu0 0
        %1661 = vmatpush1.bf16.msra.mxu0 0
        %1662 = vmatprep.subr.bf16.mxu0 0
        %1663 = vmatpush1.bf16.msra.mxu0 0
        %1664 = vmatprep.subr.bf16.mxu0 0
        %1665 = vmatpush1.bf16.msra.mxu0 0
        %1666 = vmatprep.subr.bf16.mxu0 0
        %1667 = vmatpush1.bf16.msra.mxu0 0
        %1668 = vmatprep.subr.bf16.mxu0 0
        %1669 = vmatpush1.bf16.msra.mxu0 0
        %1670 = vmatprep.subr.bf16.mxu0 0
        %1671 = vmatpush1.bf16.msra.mxu0 0
        %1672 = vmatprep.subr.bf16.mxu0 0
        %1673 = vmatpush1.bf16.msra.mxu0 0
        %1674 = vmatprep.mubr.bf16.mxu0 0
        %1675 = vmatmul.mubr.bf16.gmra.mrb[0].mxu0 %v1347
        %v1676 = vpop.f32.mrb[0].mxu0
        %v1677 = vadd.f32 %v1616, %v1676
        %v1678 = vpop.f32.mrb[0].mxu0
        %v1679 = vpop.f32.mrb[0].mxu0
        %v1680 = vadd.f32 %v1616, %v1679
        %v1681 = vpop.f32.mrb[0].mxu0
        %1682 = vmatprep.mubr.bf16.mxu0 0
        %1683 = vmatmul.mubr.bf16.gmra.mrb[0].mxu0 %v1350
        %v1684 = vpop.f32.mrb[0].mxu0
        %v1685 = vadd.f32 %v1616, %v1684
        %v1686 = vpop.f32.mrb[0].mxu0
        %v1687 = vpop.f32.mrb[0].mxu0
        %v1688 = vadd.f32 %v1616, %v1687
        %v1689 = vpop.f32.mrb[0].mxu0
        %1690 = vmatprep.mubr.bf16.mxu0 0
        %1691 = vmatmul.mubr.bf16.gmra.mrb[0].mxu0 %v1353
        %v1692 = vpop.f32.mrb[0].mxu0
        %v1693 = vadd.f32 %v1616, %v1692
        %v1694 = vpop.f32.mrb[0].mxu0
        %v1695 = vpop.f32.mrb[0].mxu0
        %v1696 = vadd.f32 %v1616, %v1695
        %v1697 = vpop.f32.mrb[0].mxu0
        %1698 = vmatprep.mubr.bf16.mxu0 0
        %1699 = vmatmul.mubr.bf16.gmra.mrb[0].mxu0 %v1356
        %v1700 = vpop.f32.mrb[0].mxu0
        %v1701 = vadd.f32 %v1616, %v1700
        %v1702 = vpop.f32.mrb[0].mxu0
        %v1703 = vpop.f32.mrb[0].mxu0
        %v1704 = vadd.f32 %v1616, %v1703
        %v1705 = vpop.f32.mrb[0].mxu0
        %1706 = vmatprep.mubr.bf16.mxu0 0
        %1707 = vmatmul.mubr.bf16.gmra.mrb[0].mxu0 %v1359
        %v1708 = vpop.f32.mrb[0].mxu0
        %v1709 = vadd.f32 %v1616, %v1708
        %v1710 = vpop.f32.mrb[0].mxu0
        %v1711 = vpop.f32.mrb[0].mxu0
        %v1712 = vadd.f32 %v1616, %v1711
        %v1713 = vpop.f32.mrb[0].mxu0
        %1714 = vmatprep.mubr.bf16.mxu0 0
        %1715 = vmatmul.mubr.bf16.gmra.mrb[0].mxu0 %v1362
        %v1716 = vpop.f32.mrb[0].mxu0
        %v1717 = vadd.f32 %v1616, %v1716
        %v1718 = vpop.f32.mrb[0].mxu0
        %v1719 = vpop.f32.mrb[0].mxu0
        %v1720 = vadd.f32 %v1616, %v1719
        %v1721 = vpop.f32.mrb[0].mxu0
        %1722 = vmatprep.mubr.bf16.mxu0 0
        %1723 = vmatmul.mubr.bf16.gmra.mrb[0].mxu0 %v1365
        %v1724 = vpop.f32.mrb[0].mxu0
        %v1725 = vadd.f32 %v1616, %v1724
        %v1726 = vpop.f32.mrb[0].mxu0
        %v1727 = vpop.f32.mrb[0].mxu0
        %v1728 = vadd.f32 %v1616, %v1727
        %v1729 = vpop.f32.mrb[0].mxu0
        %1730 = vmatprep.mubr.bf16.mxu0 0
        %1731 = vmatmul.mubr.bf16.gmra.mrb[0].mxu0 %v1368
        %v1732 = vpop.f32.mrb[0].mxu0
        %v1733 = vadd.f32 %v1616, %v1732
        %v1734 = vpop.f32.mrb[0].mxu0
        %v1735 = vpop.f32.mrb[0].mxu0
        %v1736 = vadd.f32 %v1616, %v1735
        %v1737 = vpop.f32.mrb[0].mxu0
        %1738 = vdwg.mxu0
        %v1739 = vpack.c.bf16 %v1544, %v1541
        %v1740 = vpack.c.bf16 %v1552, %v1549
        %v1741 = vpack.c.bf16 %v1560, %v1557
        %v1742 = vpack.c.bf16 %v1568, %v1565
        %v1743 = vpack.c.bf16 %v1576, %v1573
        %v1744 = vpack.c.bf16 %v1584, %v1581
        %v1745 = vpack.c.bf16 %v1592, %v1589
        %v1746 = vpack.c.bf16 %v1600, %v1597
        %v1747 = vld [vmem:[%s2] sm:$0xff]
        %v1748 = vld [vmem:[%s2 + $0x8] sm:$0xff]
        %v1749 = vld [vmem:[%s2 + $0x10] sm:$0xff]
        %v1750 = vld [vmem:[%s2 + $0x18] sm:$0xff]
        %v1751 = vld [vmem:[%s2 + $0x20] sm:$0xff]
        %v1752 = vld [vmem:[%s2 + $0x28] sm:$0xff]
        %v1753 = vld [vmem:[%s2 + $0x30] sm:$0xff]
        %v1754 = vld [vmem:[%s2 + $0x38] sm:$0xff]
        %v1755 = vld [vmem:[%s2 + $0x40] sm:$0xff]
        %v1756 = vld [vmem:[%s2 + $0x48] sm:$0xff]
        %v1757 = vld [vmem:[%s2 + $0x50] sm:$0xff]
        %v1758 = vld [vmem:[%s2 + $0x58] sm:$0xff]
        %v1759 = vld [vmem:[%s2 + $0x60] sm:$0xff]
        %v1760 = vld [vmem:[%s2 + $0x68] sm:$0xff]
        %v1761 = vld [vmem:[%s2 + $0x70] sm:$0xff]
        %v1762 = vld [vmem:[%s2 + $0x78] sm:$0xff]
        %v1763 = vld [vmem:[%s3] sm:$0x1]
        %v1764 = vld [vmem:[%s3 + $0x1] sm:$0x1]
        %v1765 = vld [vmem:[%s3 + $0x2] sm:$0x1]
        %v1766 = vld [vmem:[%s3 + $0x3] sm:$0x1]
        %v1767 = vld [vmem:[%s3 + $0x4] sm:$0x1]
        %v1768 = vld [vmem:[%s3 + $0x5] sm:$0x1]
        %v1769 = vld [vmem:[%s3 + $0x6] sm:$0x1]
        %v1770 = vld [vmem:[%s3 + $0x7] sm:$0x1]
        %v1772 = vlaneseq
        %v1773 = vshrl.u32 %v1772, 7
        %v1774 = vsub.s32 0, %v1773
        %v1775 = vrot.slane %v1763, %v1774
        %v1777 = vmul.f32 %v1405, %v1775
        %v1778 = vmul.f32 %v1408, %v1775
        %v1779 = vmul.f32 %v1413, %v1775
        %v1780 = vmul.f32 %v1416, %v1775
        %v1781 = vmul.f32 %v1421, %v1775
        %v1782 = vmul.f32 %v1424, %v1775
        %v1783 = vmul.f32 %v1429, %v1775
        %v1784 = vmul.f32 %v1432, %v1775
        %v1785 = vmul.f32 %v1437, %v1775
        %v1786 = vmul.f32 %v1440, %v1775
        %v1787 = vmul.f32 %v1445, %v1775
        %v1788 = vmul.f32 %v1448, %v1775
        %v1789 = vmul.f32 %v1453, %v1775
        %v1790 = vmul.f32 %v1456, %v1775
        %v1791 = vmul.f32 %v1461, %v1775
        %v1792 = vmul.f32 %v1464, %v1775
        %v1793 = vpack.c.bf16 %v1778, %v1777
        %v1794 = vpack.c.bf16 %v1780, %v1779
        %v1795 = vpack.c.bf16 %v1782, %v1781
        %v1796 = vpack.c.bf16 %v1784, %v1783
        %v1797 = vpack.c.bf16 %v1786, %v1785
        %v1798 = vpack.c.bf16 %v1788, %v1787
        %v1799 = vpack.c.bf16 %v1790, %v1789
        %v1800 = vpack.c.bf16 %v1792, %v1791
        %v1801 = vmul.f32 %v1677, %v1775
        %v1802 = vmul.f32 %v1680, %v1775
        %v1803 = vmul.f32 %v1685, %v1775
        %v1804 = vmul.f32 %v1688, %v1775
        %v1805 = vmul.f32 %v1693, %v1775
        %v1806 = vmul.f32 %v1696, %v1775
        %v1807 = vmul.f32 %v1701, %v1775
        %v1808 = vmul.f32 %v1704, %v1775
        %v1809 = vmul.f32 %v1709, %v1775
        %v1810 = vmul.f32 %v1712, %v1775
        %v1811 = vmul.f32 %v1717, %v1775
        %v1812 = vmul.f32 %v1720, %v1775
        %v1813 = vmul.f32 %v1725, %v1775
        %v1814 = vmul.f32 %v1728, %v1775
        %v1815 = vmul.f32 %v1733, %v1775
        %v1816 = vmul.f32 %v1736, %v1775
        %v1817 = vpack.c.bf16 %v1802, %v1801
        %v1818 = vpack.c.bf16 %v1804, %v1803
        %v1819 = vpack.c.bf16 %v1806, %v1805
        %v1820 = vpack.c.bf16 %v1808, %v1807
        %v1821 = vpack.c.bf16 %v1810, %v1809
        %v1822 = vpack.c.bf16 %v1812, %v1811
        %v1823 = vpack.c.bf16 %v1814, %v1813
        %v1824 = vpack.c.bf16 %v1816, %v1815
        %v1826 = vsel %vm1345, %v1793, 0
        %v1829 = vsel %vm1345, %v1794, 0
        %v1832 = vsel %vm1345, %v1795, 0
        %v1835 = vsel %vm1345, %v1796, 0
        %v1838 = vsel %vm1345, %v1797, 0
        %v1841 = vsel %vm1345, %v1798, 0
        %v1844 = vsel %vm1345, %v1799, 0
        %v1847 = vsel %vm1345, %v1800, 0
        %v1850 = vsel %vm1345, %v1739, 0
        %v1853 = vsel %vm1345, %v1740, 0
        %v1856 = vsel %vm1345, %v1741, 0
        %v1859 = vsel %vm1345, %v1742, 0
        %v1862 = vsel %vm1345, %v1743, 0
        %v1865 = vsel %vm1345, %v1744, 0
        %v1868 = vsel %vm1345, %v1745, 0
        %v1871 = vsel %vm1345, %v1746, 0
        %1873 = vmatprep.subr.bf16.mxu0 0
        %1874 = vmatpush1.bf16.xpose.msra.mxu0 %v1850
        %1875 = vmatprep.subr.bf16.mxu0 0
        %1876 = vmatpush1.bf16.xpose.msra.mxu0 %v1853
        %1877 = vmatprep.subr.bf16.mxu0 0
        %1878 = vmatpush1.bf16.xpose.msra.mxu0 %v1856
        %1879 = vmatprep.subr.bf16.mxu0 0
        %1880 = vmatpush1.bf16.xpose.msra.mxu0 %v1859
        %1881 = vmatprep.subr.bf16.mxu0 0
        %1882 = vmatpush1.bf16.xpose.msra.mxu0 %v1862
        %1883 = vmatprep.subr.bf16.mxu0 0
        %1884 = vmatpush1.bf16.xpose.msra.mxu0 %v1865
        %1885 = vmatprep.subr.bf16.mxu0 0
        %1886 = vmatpush1.bf16.xpose.msra.mxu0 %v1868
        %1887 = vmatprep.subr.bf16.mxu0 0
        %1888 = vmatpush1.bf16.xpose.msra.mxu0 %v1871
        %1889 = vmatprep.subr.bf16.mxu0 0
        %1890 = vmatpush1.bf16.xpose.msra.mxu0 0
        %1891 = vmatprep.subr.bf16.mxu0 0
        %1892 = vmatpush1.bf16.xpose.msra.mxu0 0
        %1893 = vmatprep.subr.bf16.mxu0 0
        %1894 = vmatpush1.bf16.xpose.msra.mxu0 0
        %1895 = vmatprep.subr.bf16.mxu0 0
        %1896 = vmatpush1.bf16.xpose.msra.mxu0 0
        %1897 = vmatprep.subr.bf16.mxu0 0
        %1898 = vmatpush1.bf16.xpose.msra.mxu0 0
        %1899 = vmatprep.subr.bf16.mxu0 0
        %1900 = vmatpush1.bf16.xpose.msra.mxu0 0
        %1901 = vmatprep.subr.bf16.mxu0 0
        %1902 = vmatpush1.bf16.xpose.msra.mxu0 0
        %1903 = vmatprep.subr.bf16.mxu0 0
        %1904 = vmatpush1.bf16.xpose.msra.mxu0 0
        %1905 = vmatprep.mubr.bf16.mxu0 0
        %1906 = vmatmul.mubr.bf16.gmra.mrb[0].mxu0 %v1826
        %v1907 = vpop.f32.mrb[0].mxu0
        %v1908 = vadd.f32 %v1747, %v1907
        %v1909 = vpop.f32.mrb[0].mxu0
        %v1910 = vpop.f32.mrb[0].mxu0
        %v1911 = vadd.f32 %v1748, %v1910
        %v1912 = vpop.f32.mrb[0].mxu0
        %1913 = vmatprep.mubr.bf16.mxu0 0
        %1914 = vmatmul.mubr.bf16.gmra.mrb[0].mxu0 %v1829
        %v1915 = vpop.f32.mrb[0].mxu0
        %v1916 = vadd.f32 %v1749, %v1915
        %v1917 = vpop.f32.mrb[0].mxu0
        %v1918 = vpop.f32.mrb[0].mxu0
        %v1919 = vadd.f32 %v1750, %v1918
        %v1920 = vpop.f32.mrb[0].mxu0
        %1921 = vmatprep.mubr.bf16.mxu0 0
        %1922 = vmatmul.mubr.bf16.gmra.mrb[0].mxu0 %v1832
        %v1923 = vpop.f32.mrb[0].mxu0
        %v1924 = vadd.f32 %v1751, %v1923
        %v1925 = vpop.f32.mrb[0].mxu0
        %v1926 = vpop.f32.mrb[0].mxu0
        %v1927 = vadd.f32 %v1752, %v1926
        %v1928 = vpop.f32.mrb[0].mxu0
        %1929 = vmatprep.mubr.bf16.mxu0 0
        %1930 = vmatmul.mubr.bf16.gmra.mrb[0].mxu0 %v1835
        %v1931 = vpop.f32.mrb[0].mxu0
        %v1932 = vadd.f32 %v1753, %v1931
        %v1933 = vpop.f32.mrb[0].mxu0
        %v1934 = vpop.f32.mrb[0].mxu0
        %v1935 = vadd.f32 %v1754, %v1934
        %v1936 = vpop.f32.mrb[0].mxu0
        %1937 = vmatprep.mubr.bf16.mxu0 0
        %1938 = vmatmul.mubr.bf16.gmra.mrb[0].mxu0 %v1838
        %v1939 = vpop.f32.mrb[0].mxu0
        %v1940 = vadd.f32 %v1755, %v1939
        %v1941 = vpop.f32.mrb[0].mxu0
        %v1942 = vpop.f32.mrb[0].mxu0
        %v1943 = vadd.f32 %v1756, %v1942
        %v1944 = vpop.f32.mrb[0].mxu0
        %1945 = vmatprep.mubr.bf16.mxu0 0
        %1946 = vmatmul.mubr.bf16.gmra.mrb[0].mxu0 %v1841
        %v1947 = vpop.f32.mrb[0].mxu0
        %v1948 = vadd.f32 %v1757, %v1947
        %v1949 = vpop.f32.mrb[0].mxu0
        %v1950 = vpop.f32.mrb[0].mxu0
        %v1951 = vadd.f32 %v1758, %v1950
        %v1952 = vpop.f32.mrb[0].mxu0
        %1953 = vmatprep.mubr.bf16.mxu0 0
        %1954 = vmatmul.mubr.bf16.gmra.mrb[0].mxu0 %v1844
        %v1955 = vpop.f32.mrb[0].mxu0
        %v1956 = vadd.f32 %v1759, %v1955
        %v1957 = vpop.f32.mrb[0].mxu0
        %v1958 = vpop.f32.mrb[0].mxu0
        %v1959 = vadd.f32 %v1760, %v1958
        %v1960 = vpop.f32.mrb[0].mxu0
        %1961 = vmatprep.mubr.bf16.mxu0 0
        %1962 = vmatmul.mubr.bf16.gmra.mrb[0].mxu0 %v1847
        %v1963 = vpop.f32.mrb[0].mxu0
        %v1964 = vadd.f32 %v1761, %v1963
        %v1965 = vpop.f32.mrb[0].mxu0
        %v1966 = vpop.f32.mrb[0].mxu0
        %v1967 = vadd.f32 %v1762, %v1966
        %v1968 = vpop.f32.mrb[0].mxu0
        %1969 = vdwg.mxu0
        %1970 = vmax.xlane.f32.xlu0 %v1908
        %v1971 = vpop.xlane.xlu0 %1970
        %1972 = vmax.xlane.f32.xlu0 %v1911
        %v1973 = vpop.xlane.xlu0 %1972
        %1974 = vmax.xlane.f32.xlu0 %v1916
        %v1975 = vpop.xlane.xlu0 %1974
        %1976 = vmax.xlane.f32.xlu0 %v1919
        %v1977 = vpop.xlane.xlu0 %1976
        %1978 = vmax.xlane.f32.xlu0 %v1924
        %v1979 = vpop.xlane.xlu0 %1978
        %1980 = vmax.xlane.f32.xlu0 %v1927
        %v1981 = vpop.xlane.xlu0 %1980
        %1982 = vmax.xlane.f32.xlu0 %v1932
        %v1983 = vpop.xlane.xlu0 %1982
        %1984 = vmax.xlane.f32.xlu0 %v1935
        %v1985 = vpop.xlane.xlu0 %1984
        %1986 = vmax.xlane.f32.xlu0 %v1940
        %v1987 = vpop.xlane.xlu0 %1986
        %1988 = vmax.xlane.f32.xlu0 %v1943
        %v1989 = vpop.xlane.xlu0 %1988
        %1990 = vmax.xlane.f32.xlu0 %v1948
        %v1991 = vpop.xlane.xlu0 %1990
        %1992 = vmax.xlane.f32.xlu0 %v1951
        %v1993 = vpop.xlane.xlu0 %1992
        %1994 = vmax.xlane.f32.xlu0 %v1956
        %v1995 = vpop.xlane.xlu0 %1994
        %1996 = vmax.xlane.f32.xlu0 %v1959
        %v1997 = vpop.xlane.xlu0 %1996
        %1998 = vmax.xlane.f32.xlu0 %v1964
        %v1999 = vpop.xlane.xlu0 %1998
        %2000 = vmax.xlane.f32.xlu0 %v1967
        %v2001 = vpop.xlane.xlu0 %2000
        %v2002 = vsub.f32 %v1908, %v1971
        %v2003 = vsub.f32 %v1911, %v1973
        %v2004 = vsub.f32 %v1916, %v1975
        %v2005 = vsub.f32 %v1919, %v1977
        %v2006 = vsub.f32 %v1924, %v1979
        %v2007 = vsub.f32 %v1927, %v1981
        %v2008 = vsub.f32 %v1932, %v1983
        %v2009 = vsub.f32 %v1935, %v1985
        %v2010 = vsub.f32 %v1940, %v1987
        %v2011 = vsub.f32 %v1943, %v1989
        %v2012 = vsub.f32 %v1948, %v1991
        %v2013 = vsub.f32 %v1951, %v1993
        %v2014 = vsub.f32 %v1956, %v1995
        %v2015 = vsub.f32 %v1959, %v1997
        %v2016 = vsub.f32 %v1964, %v1999
        %v2017 = vsub.f32 %v1967, %v2001
        %v2018 = vmul.f32 %v2002, 1.442695
        %v2019 = vpow.pop %v2018
        %v2020 = vmul.f32 %v2003, 1.442695
        %v2021 = vpow.pop %v2020
        %v2022 = vmul.f32 %v2004, 1.442695
        %v2023 = vpow.pop %v2022
        %v2024 = vmul.f32 %v2005, 1.442695
        %v2025 = vpow.pop %v2024
        %v2026 = vmul.f32 %v2006, 1.442695
        %v2027 = vpow.pop %v2026
        %v2028 = vmul.f32 %v2007, 1.442695
        %v2029 = vpow.pop %v2028
        %v2030 = vmul.f32 %v2008, 1.442695
        %v2031 = vpow.pop %v2030
        %v2032 = vmul.f32 %v2009, 1.442695
        %v2033 = vpow.pop %v2032
        %v2034 = vmul.f32 %v2010, 1.442695
        %v2035 = vpow.pop %v2034
        %v2036 = vmul.f32 %v2011, 1.442695
        %v2037 = vpow.pop %v2036
        %v2038 = vmul.f32 %v2012, 1.442695
        %v2039 = vpow.pop %v2038
        %v2040 = vmul.f32 %v2013, 1.442695
        %v2041 = vpow.pop %v2040
        %v2042 = vmul.f32 %v2014, 1.442695
        %v2043 = vpow.pop %v2042
        %v2044 = vmul.f32 %v2015, 1.442695
        %v2045 = vpow.pop %v2044
        %v2046 = vmul.f32 %v2016, 1.442695
        %v2047 = vpow.pop %v2046
        %v2048 = vmul.f32 %v2017, 1.442695
        %v2049 = vpow.pop %v2048
        %2050 = vadd.xlane.f32.xlu0 %v2019
        %v2051 = vpop.xlane.xlu0 %2050
        %2052 = vadd.xlane.f32.xlu0 %v2021
        %v2053 = vpop.xlane.xlu0 %2052
        %2054 = vadd.xlane.f32.xlu0 %v2023
        %v2055 = vpop.xlane.xlu0 %2054
        %2056 = vadd.xlane.f32.xlu0 %v2025
        %v2057 = vpop.xlane.xlu0 %2056
        %2058 = vadd.xlane.f32.xlu0 %v2027
        %v2059 = vpop.xlane.xlu0 %2058
        %2060 = vadd.xlane.f32.xlu0 %v2029
        %v2061 = vpop.xlane.xlu0 %2060
        %2062 = vadd.xlane.f32.xlu0 %v2031
        %v2063 = vpop.xlane.xlu0 %2062
        %2064 = vadd.xlane.f32.xlu0 %v2033
        %v2065 = vpop.xlane.xlu0 %2064
        %2066 = vadd.xlane.f32.xlu0 %v2035
        %v2067 = vpop.xlane.xlu0 %2066
        %2068 = vadd.xlane.f32.xlu0 %v2037
        %v2069 = vpop.xlane.xlu0 %2068
        %2070 = vadd.xlane.f32.xlu0 %v2039
        %v2071 = vpop.xlane.xlu0 %2070
        %2072 = vadd.xlane.f32.xlu0 %v2041
        %v2073 = vpop.xlane.xlu0 %2072
        %2074 = vadd.xlane.f32.xlu0 %v2043
        %v2075 = vpop.xlane.xlu0 %2074
        %2076 = vadd.xlane.f32.xlu0 %v2045
        %v2077 = vpop.xlane.xlu0 %2076
        %2078 = vadd.xlane.f32.xlu0 %v2047
        %v2079 = vpop.xlane.xlu0 %2078
        %2080 = vadd.xlane.f32.xlu0 %v2049
        %v2081 = vpop.xlane.xlu0 %2080
        %v2082 = vrcp.pop %v2051
        %v2083 = vrcp.pop %v2053
        %v2084 = vrcp.pop %v2055
        %v2085 = vrcp.pop %v2057
        %v2086 = vrcp.pop %v2059
        %v2087 = vrcp.pop %v2061
        %v2088 = vrcp.pop %v2063
        %v2089 = vrcp.pop %v2065
        %v2090 = vrcp.pop %v2067
        %v2091 = vrcp.pop %v2069
        %v2092 = vrcp.pop %v2071
        %v2093 = vrcp.pop %v2073
        %v2094 = vrcp.pop %v2075
        %v2095 = vrcp.pop %v2077
        %v2096 = vrcp.pop %v2079
        %v2097 = vrcp.pop %v2081
        %v2098 = vmul.f32 %v2019, %v2082
        %v2099 = vmul.f32 %v2021, %v2083
        %v2100 = vmul.f32 %v2023, %v2084
        %v2101 = vmul.f32 %v2025, %v2085
        %v2102 = vmul.f32 %v2027, %v2086
        %v2103 = vmul.f32 %v2029, %v2087
        %v2104 = vmul.f32 %v2031, %v2088
        %v2105 = vmul.f32 %v2033, %v2089
        %v2106 = vmul.f32 %v2035, %v2090
        %v2107 = vmul.f32 %v2037, %v2091
        %v2108 = vmul.f32 %v2039, %v2092
        %v2109 = vmul.f32 %v2041, %v2093
        %v2110 = vmul.f32 %v2043, %v2094
        %v2111 = vmul.f32 %v2045, %v2095
        %v2112 = vmul.f32 %v2047, %v2096
        %v2113 = vmul.f32 %v2049, %v2097
        %v2114 = vpack.c.bf16 %v2099, %v2098
        %v2115 = vpack.c.bf16 %v2101, %v2100
        %v2116 = vpack.c.bf16 %v2103, %v2102
        %v2117 = vpack.c.bf16 %v2105, %v2104
        %v2118 = vpack.c.bf16 %v2107, %v2106
        %v2119 = vpack.c.bf16 %v2109, %v2108
        %v2120 = vpack.c.bf16 %v2111, %v2110
        %v2121 = vpack.c.bf16 %v2113, %v2112
        %v2123 = vlaneseq
        %v2124 = vshrl.u32 %v2123, 7
        %v2125 = vsub.s32 0, %v2124
        %v2126 = vrot.slane %v1764, %v2125
        %v2128 = vmul.f32 %v1405, %v2126
        %v2129 = vmul.f32 %v1408, %v2126
        %v2130 = vmul.f32 %v1413, %v2126
        %v2131 = vmul.f32 %v1416, %v2126
        %v2132 = vmul.f32 %v1421, %v2126
        %v2133 = vmul.f32 %v1424, %v2126
        %v2134 = vmul.f32 %v1429, %v2126
        %v2135 = vmul.f32 %v1432, %v2126
        %v2136 = vmul.f32 %v1437, %v2126
        %v2137 = vmul.f32 %v1440, %v2126
        %v2138 = vmul.f32 %v1445, %v2126
        %v2139 = vmul.f32 %v1448, %v2126
        %v2140 = vmul.f32 %v1453, %v2126
        %v2141 = vmul.f32 %v1456, %v2126
        %v2142 = vmul.f32 %v1461, %v2126
        %v2143 = vmul.f32 %v1464, %v2126
        %v2144 = vpack.c.bf16 %v2129, %v2128
        %v2145 = vpack.c.bf16 %v2131, %v2130
        %v2146 = vpack.c.bf16 %v2133, %v2132
        %v2147 = vpack.c.bf16 %v2135, %v2134
        %v2148 = vpack.c.bf16 %v2137, %v2136
        %v2149 = vpack.c.bf16 %v2139, %v2138
        %v2150 = vpack.c.bf16 %v2141, %v2140
        %v2151 = vpack.c.bf16 %v2143, %v2142
        %v2152 = vmul.f32 %v1677, %v2126
        %v2153 = vmul.f32 %v1680, %v2126
        %v2154 = vmul.f32 %v1685, %v2126
        %v2155 = vmul.f32 %v1688, %v2126
        %v2156 = vmul.f32 %v1693, %v2126
        %v2157 = vmul.f32 %v1696, %v2126
        %v2158 = vmul.f32 %v1701, %v2126
        %v2159 = vmul.f32 %v1704, %v2126
        %v2160 = vmul.f32 %v1709, %v2126
        %v2161 = vmul.f32 %v1712, %v2126
        %v2162 = vmul.f32 %v1717, %v2126
        %v2163 = vmul.f32 %v1720, %v2126
        %v2164 = vmul.f32 %v1725, %v2126
        %v2165 = vmul.f32 %v1728, %v2126
        %v2166 = vmul.f32 %v1733, %v2126
        %v2167 = vmul.f32 %v1736, %v2126
        %v2168 = vpack.c.bf16 %v2153, %v2152
        %v2169 = vpack.c.bf16 %v2155, %v2154
        %v2170 = vpack.c.bf16 %v2157, %v2156
        %v2171 = vpack.c.bf16 %v2159, %v2158
        %v2172 = vpack.c.bf16 %v2161, %v2160
        %v2173 = vpack.c.bf16 %v2163, %v2162
        %v2174 = vpack.c.bf16 %v2165, %v2164
        %v2175 = vpack.c.bf16 %v2167, %v2166
        %v2177 = vsel %vm1345, %v2144, 0
        %v2180 = vsel %vm1345, %v2145, 0
        %v2183 = vsel %vm1345, %v2146, 0
        %v2186 = vsel %vm1345, %v2147, 0
        %v2189 = vsel %vm1345, %v2148, 0
        %v2192 = vsel %vm1345, %v2149, 0
        %v2195 = vsel %vm1345, %v2150, 0
        %v2198 = vsel %vm1345, %v2151, 0
        %2200 = vmatprep.subr.bf16.mxu0 0
        %2201 = vmatpush1.bf16.xpose.msra.mxu0 %v1850
        %2202 = vmatprep.subr.bf16.mxu0 0
        %2203 = vmatpush1.bf16.xpose.msra.mxu0 %v1853
        %2204 = vmatprep.subr.bf16.mxu0 0
        %2205 = vmatpush1.bf16.xpose.msra.mxu0 %v1856
        %2206 = vmatprep.subr.bf16.mxu0 0
        %2207 = vmatpush1.bf16.xpose.msra.mxu0 %v1859
        %2208 = vmatprep.subr.bf16.mxu0 0
        %2209 = vmatpush1.bf16.xpose.msra.mxu0 %v1862
        %2210 = vmatprep.subr.bf16.mxu0 0
        %2211 = vmatpush1.bf16.xpose.msra.mxu0 %v1865
        %2212 = vmatprep.subr.bf16.mxu0 0
        %2213 = vmatpush1.bf16.xpose.msra.mxu0 %v1868
        %2214 = vmatprep.subr.bf16.mxu0 0
        %2215 = vmatpush1.bf16.xpose.msra.mxu0 %v1871
        %2216 = vmatprep.subr.bf16.mxu0 0
        %2217 = vmatpush1.bf16.xpose.msra.mxu0 0
        %2218 = vmatprep.subr.bf16.mxu0 0
        %2219 = vmatpush1.bf16.xpose.msra.mxu0 0
        %2220 = vmatprep.subr.bf16.mxu0 0
        %2221 = vmatpush1.bf16.xpose.msra.mxu0 0
        %2222 = vmatprep.subr.bf16.mxu0 0
        %2223 = vmatpush1.bf16.xpose.msra.mxu0 0
        %2224 = vmatprep.subr.bf16.mxu0 0
        %2225 = vmatpush1.bf16.xpose.msra.mxu0 0
        %2226 = vmatprep.subr.bf16.mxu0 0
        %2227 = vmatpush1.bf16.xpose.msra.mxu0 0
        %2228 = vmatprep.subr.bf16.mxu0 0
        %2229 = vmatpush1.bf16.xpose.msra.mxu0 0
        %2230 = vmatprep.subr.bf16.mxu0 0
        %2231 = vmatpush1.bf16.xpose.msra.mxu0 0
        %2232 = vmatprep.mubr.bf16.mxu0 0
        %2233 = vmatmul.mubr.bf16.gmra.mrb[0].mxu0 %v2177
        %v2234 = vpop.f32.mrb[0].mxu0
        %v2235 = vadd.f32 %v1747, %v2234
        %v2236 = vpop.f32.mrb[0].mxu0
        %v2237 = vpop.f32.mrb[0].mxu0
        %v2238 = vadd.f32 %v1748, %v2237
        %v2239 = vpop.f32.mrb[0].mxu0
        %2240 = vmatprep.mubr.bf16.mxu0 0
        %2241 = vmatmul.mubr.bf16.gmra.mrb[0].mxu0 %v2180
        %v2242 = vpop.f32.mrb[0].mxu0
        %v2243 = vadd.f32 %v1749, %v2242
        %v2244 = vpop.f32.mrb[0].mxu0
        %v2245 = vpop.f32.mrb[0].mxu0
        %v2246 = vadd.f32 %v1750, %v2245
        %v2247 = vpop.f32.mrb[0].mxu0
        %2248 = vmatprep.mubr.bf16.mxu0 0
        %2249 = vmatmul.mubr.bf16.gmra.mrb[0].mxu0 %v2183
        %v2250 = vpop.f32.mrb[0].mxu0
        %v2251 = vadd.f32 %v1751, %v2250
        %v2252 = vpop.f32.mrb[0].mxu0
        %v2253 = vpop.f32.mrb[0].mxu0
        %v2254 = vadd.f32 %v1752, %v2253
        %v2255 = vpop.f32.mrb[0].mxu0
        %2256 = vmatprep.mubr.bf16.mxu0 0
        %2257 = vmatmul.mubr.bf16.gmra.mrb[0].mxu0 %v2186
        %v2258 = vpop.f32.mrb[0].mxu0
        %v2259 = vadd.f32 %v1753, %v2258
        %v2260 = vpop.f32.mrb[0].mxu0
        %v2261 = vpop.f32.mrb[0].mxu0
        %v2262 = vadd.f32 %v1754, %v2261
        %v2263 = vpop.f32.mrb[0].mxu0
        %2264 = vmatprep.mubr.bf16.mxu0 0
        %2265 = vmatmul.mubr.bf16.gmra.mrb[0].mxu0 %v2189
        %v2266 = vpop.f32.mrb[0].mxu0
        %v2267 = vadd.f32 %v1755, %v2266
        %v2268 = vpop.f32.mrb[0].mxu0
        %v2269 = vpop.f32.mrb[0].mxu0
        %v2270 = vadd.f32 %v1756, %v2269
        %v2271 = vpop.f32.mrb[0].mxu0
        %2272 = vmatprep.mubr.bf16.mxu0 0
        %2273 = vmatmul.mubr.bf16.gmra.mrb[0].mxu0 %v2192
        %v2274 = vpop.f32.mrb[0].mxu0
        %v2275 = vadd.f32 %v1757, %v2274
        %v2276 = vpop.f32.mrb[0].mxu0
        %v2277 = vpop.f32.mrb[0].mxu0
        %v2278 = vadd.f32 %v1758, %v2277
        %v2279 = vpop.f32.mrb[0].mxu0
        %2280 = vmatprep.mubr.bf16.mxu0 0
        %2281 = vmatmul.mubr.bf16.gmra.mrb[0].mxu0 %v2195
        %v2282 = vpop.f32.mrb[0].mxu0
        %v2283 = vadd.f32 %v1759, %v2282
        %v2284 = vpop.f32.mrb[0].mxu0
        %v2285 = vpop.f32.mrb[0].mxu0
        %v2286 = vadd.f32 %v1760, %v2285
        %v2287 = vpop.f32.mrb[0].mxu0
        %2288 = vmatprep.mubr.bf16.mxu0 0
        %2289 = vmatmul.mubr.bf16.gmra.mrb[0].mxu0 %v2198
        %v2290 = vpop.f32.mrb[0].mxu0
        %v2291 = vadd.f32 %v1761, %v2290
        %v2292 = vpop.f32.mrb[0].mxu0
        %v2293 = vpop.f32.mrb[0].mxu0
        %v2294 = vadd.f32 %v1762, %v2293
        %v2295 = vpop.f32.mrb[0].mxu0
        %2296 = vdwg.mxu0
        %2297 = vmax.xlane.f32.xlu0 %v2235
        %v2298 = vpop.xlane.xlu0 %2297
        %2299 = vmax.xlane.f32.xlu0 %v2238
        %v2300 = vpop.xlane.xlu0 %2299
        %2301 = vmax.xlane.f32.xlu0 %v2243
        %v2302 = vpop.xlane.xlu0 %2301
        %2303 = vmax.xlane.f32.xlu0 %v2246
        %v2304 = vpop.xlane.xlu0 %2303
        %2305 = vmax.xlane.f32.xlu0 %v2251
        %v2306 = vpop.xlane.xlu0 %2305
        %2307 = vmax.xlane.f32.xlu0 %v2254
        %v2308 = vpop.xlane.xlu0 %2307
        %2309 = vmax.xlane.f32.xlu0 %v2259
        %v2310 = vpop.xlane.xlu0 %2309
        %2311 = vmax.xlane.f32.xlu0 %v2262
        %v2312 = vpop.xlane.xlu0 %2311
        %2313 = vmax.xlane.f32.xlu0 %v2267
        %v2314 = vpop.xlane.xlu0 %2313
        %2315 = vmax.xlane.f32.xlu0 %v2270
        %v2316 = vpop.xlane.xlu0 %2315
        %2317 = vmax.xlane.f32.xlu0 %v2275
        %v2318 = vpop.xlane.xlu0 %2317
        %2319 = vmax.xlane.f32.xlu0 %v2278
        %v2320 = vpop.xlane.xlu0 %2319
        %2321 = vmax.xlane.f32.xlu0 %v2283
        %v2322 = vpop.xlane.xlu0 %2321
        %2323 = vmax.xlane.f32.xlu0 %v2286
        %v2324 = vpop.xlane.xlu0 %2323
        %2325 = vmax.xlane.f32.xlu0 %v2291
        %v2326 = vpop.xlane.xlu0 %2325
        %2327 = vmax.xlane.f32.xlu0 %v2294
        %v2328 = vpop.xlane.xlu0 %2327
        %v2329 = vsub.f32 %v2235, %v2298
        %v2330 = vsub.f32 %v2238, %v2300
        %v2331 = vsub.f32 %v2243, %v2302
        %v2332 = vsub.f32 %v2246, %v2304
        %v2333 = vsub.f32 %v2251, %v2306
        %v2334 = vsub.f32 %v2254, %v2308
        %v2335 = vsub.f32 %v2259, %v2310
        %v2336 = vsub.f32 %v2262, %v2312
        %v2337 = vsub.f32 %v2267, %v2314
        %v2338 = vsub.f32 %v2270, %v2316
        %v2339 = vsub.f32 %v2275, %v2318
        %v2340 = vsub.f32 %v2278, %v2320
        %v2341 = vsub.f32 %v2283, %v2322
        %v2342 = vsub.f32 %v2286, %v2324
        %v2343 = vsub.f32 %v2291, %v2326
        %v2344 = vsub.f32 %v2294, %v2328
        %v2345 = vmul.f32 %v2329, 1.442695
        %v2346 = vpow.pop %v2345
        %v2347 = vmul.f32 %v2330, 1.442695
        %v2348 = vpow.pop %v2347
        %v2349 = vmul.f32 %v2331, 1.442695
        %v2350 = vpow.pop %v2349
        %v2351 = vmul.f32 %v2332, 1.442695
        %v2352 = vpow.pop %v2351
        %v2353 = vmul.f32 %v2333, 1.442695
        %v2354 = vpow.pop %v2353
        %v2355 = vmul.f32 %v2334, 1.442695
        %v2356 = vpow.pop %v2355
        %v2357 = vmul.f32 %v2335, 1.442695
        %v2358 = vpow.pop %v2357
        %v2359 = vmul.f32 %v2336, 1.442695
        %v2360 = vpow.pop %v2359
        %v2361 = vmul.f32 %v2337, 1.442695
        %v2362 = vpow.pop %v2361
        %v2363 = vmul.f32 %v2338, 1.442695
        %v2364 = vpow.pop %v2363
        %v2365 = vmul.f32 %v2339, 1.442695
        %v2366 = vpow.pop %v2365
        %v2367 = vmul.f32 %v2340, 1.442695
        %v2368 = vpow.pop %v2367
        %v2369 = vmul.f32 %v2341, 1.442695
        %v2370 = vpow.pop %v2369
        %v2371 = vmul.f32 %v2342, 1.442695
        %v2372 = vpow.pop %v2371
        %v2373 = vmul.f32 %v2343, 1.442695
        %v2374 = vpow.pop %v2373
        %v2375 = vmul.f32 %v2344, 1.442695
        %v2376 = vpow.pop %v2375
        %2377 = vadd.xlane.f32.xlu0 %v2346
        %v2378 = vpop.xlane.xlu0 %2377
        %2379 = vadd.xlane.f32.xlu0 %v2348
        %v2380 = vpop.xlane.xlu0 %2379
        %2381 = vadd.xlane.f32.xlu0 %v2350
        %v2382 = vpop.xlane.xlu0 %2381
        %2383 = vadd.xlane.f32.xlu0 %v2352
        %v2384 = vpop.xlane.xlu0 %2383
        %2385 = vadd.xlane.f32.xlu0 %v2354
        %v2386 = vpop.xlane.xlu0 %2385
        %2387 = vadd.xlane.f32.xlu0 %v2356
        %v2388 = vpop.xlane.xlu0 %2387
        %2389 = vadd.xlane.f32.xlu0 %v2358
        %v2390 = vpop.xlane.xlu0 %2389
        %2391 = vadd.xlane.f32.xlu0 %v2360
        %v2392 = vpop.xlane.xlu0 %2391
        %2393 = vadd.xlane.f32.xlu0 %v2362
        %v2394 = vpop.xlane.xlu0 %2393
        %2395 = vadd.xlane.f32.xlu0 %v2364
        %v2396 = vpop.xlane.xlu0 %2395
        %2397 = vadd.xlane.f32.xlu0 %v2366
        %v2398 = vpop.xlane.xlu0 %2397
        %2399 = vadd.xlane.f32.xlu0 %v2368
        %v2400 = vpop.xlane.xlu0 %2399
        %2401 = vadd.xlane.f32.xlu0 %v2370
        %v2402 = vpop.xlane.xlu0 %2401
        %2403 = vadd.xlane.f32.xlu0 %v2372
        %v2404 = vpop.xlane.xlu0 %2403
        %2405 = vadd.xlane.f32.xlu0 %v2374
        %v2406 = vpop.xlane.xlu0 %2405
        %2407 = vadd.xlane.f32.xlu0 %v2376
        %v2408 = vpop.xlane.xlu0 %2407
        %v2409 = vrcp.pop %v2378
        %v2410 = vrcp.pop %v2380
        %v2411 = vrcp.pop %v2382
        %v2412 = vrcp.pop %v2384
        %v2413 = vrcp.pop %v2386
        %v2414 = vrcp.pop %v2388
        %v2415 = vrcp.pop %v2390
        %v2416 = vrcp.pop %v2392
        %v2417 = vrcp.pop %v2394
        %v2418 = vrcp.pop %v2396
        %v2419 = vrcp.pop %v2398
        %v2420 = vrcp.pop %v2400
        %v2421 = vrcp.pop %v2402
        %v2422 = vrcp.pop %v2404
        %v2423 = vrcp.pop %v2406
        %v2424 = vrcp.pop %v2408
        %v2425 = vmul.f32 %v2346, %v2409
        %v2426 = vmul.f32 %v2348, %v2410
        %v2427 = vmul.f32 %v2350, %v2411
        %v2428 = vmul.f32 %v2352, %v2412
        %v2429 = vmul.f32 %v2354, %v2413
        %v2430 = vmul.f32 %v2356, %v2414
        %v2431 = vmul.f32 %v2358, %v2415
        %v2432 = vmul.f32 %v2360, %v2416
        %v2433 = vmul.f32 %v2362, %v2417
        %v2434 = vmul.f32 %v2364, %v2418
        %v2435 = vmul.f32 %v2366, %v2419
        %v2436 = vmul.f32 %v2368, %v2420
        %v2437 = vmul.f32 %v2370, %v2421
        %v2438 = vmul.f32 %v2372, %v2422
        %v2439 = vmul.f32 %v2374, %v2423
        %v2440 = vmul.f32 %v2376, %v2424
        %v2441 = vpack.c.bf16 %v2426, %v2425
        %v2442 = vpack.c.bf16 %v2428, %v2427
        %v2443 = vpack.c.bf16 %v2430, %v2429
        %v2444 = vpack.c.bf16 %v2432, %v2431
        %v2445 = vpack.c.bf16 %v2434, %v2433
        %v2446 = vpack.c.bf16 %v2436, %v2435
        %v2447 = vpack.c.bf16 %v2438, %v2437
        %v2448 = vpack.c.bf16 %v2440, %v2439
        %2449 = vmatprep.subr.bf16.mxu0 0
        %2450 = vmatpush1.bf16.msra.mxu0 %v2168
        %2451 = vmatprep.subr.bf16.mxu0 0
        %2452 = vmatpush1.bf16.msra.mxu0 %v2169
        %2453 = vmatprep.subr.bf16.mxu0 0
        %2454 = vmatpush1.bf16.msra.mxu0 %v2170
        %2455 = vmatprep.subr.bf16.mxu0 0
        %2456 = vmatpush1.bf16.msra.mxu0 %v2171
        %2457 = vmatprep.subr.bf16.mxu0 0
        %2458 = vmatpush1.bf16.msra.mxu0 %v2172
        %2459 = vmatprep.subr.bf16.mxu0 0
        %2460 = vmatpush1.bf16.msra.mxu0 %v2173
        %2461 = vmatprep.subr.bf16.mxu0 0
        %2462 = vmatpush1.bf16.msra.mxu0 %v2174
        %2463 = vmatprep.subr.bf16.mxu0 0
        %2464 = vmatpush1.bf16.msra.mxu0 %v2175
        %2465 = vmatprep.subr.bf16.mxu0 0
        %2466 = vmatpush1.bf16.msra.mxu0 0
        %2467 = vmatprep.subr.bf16.mxu0 0
        %2468 = vmatpush1.bf16.msra.mxu0 0
        %2469 = vmatprep.subr.bf16.mxu0 0
        %2470 = vmatpush1.bf16.msra.mxu0 0
        %2471 = vmatprep.subr.bf16.mxu0 0
        %2472 = vmatpush1.bf16.msra.mxu0 0
        %2473 = vmatprep.subr.bf16.mxu0 0
        %2474 = vmatpush1.bf16.msra.mxu0 0
        %2475 = vmatprep.subr.bf16.mxu0 0
        %2476 = vmatpush1.bf16.msra.mxu0 0
        %2477 = vmatprep.subr.bf16.mxu0 0
        %2478 = vmatpush1.bf16.msra.mxu0 0
        %2479 = vmatprep.subr.bf16.mxu0 0
        %2480 = vmatpush1.bf16.msra.mxu0 0
        %2481 = vmatprep.mubr.bf16.mxu0 0
        %2482 = vmatmul.mubr.bf16.gmra.mrb[0].mxu0 %v2441
        %v2483 = vpop.f32.mrb[0].mxu0
        %v2484 = vadd.f32 0.0, %v2483
        %v2485 = vpop.f32.mrb[0].mxu0
        %v2486 = vpop.f32.mrb[0].mxu0
        %v2487 = vadd.f32 0.0, %v2486
        %v2488 = vpop.f32.mrb[0].mxu0
        %2489 = vmatprep.mubr.bf16.mxu0 0
        %2490 = vmatmul.mubr.bf16.gmra.mrb[0].mxu0 %v2442
        %v2491 = vpop.f32.mrb[0].mxu0
        %v2492 = vadd.f32 0.0, %v2491
        %v2493 = vpop.f32.mrb[0].mxu0
        %v2494 = vpop.f32.mrb[0].mxu0
        %v2495 = vadd.f32 0.0, %v2494
        %v2496 = vpop.f32.mrb[0].mxu0
        %2497 = vmatprep.mubr.bf16.mxu0 0
        %2498 = vmatmul.mubr.bf16.gmra.mrb[0].mxu0 %v2443
        %v2499 = vpop.f32.mrb[0].mxu0
        %v2500 = vadd.f32 0.0, %v2499
        %v2501 = vpop.f32.mrb[0].mxu0
        %v2502 = vpop.f32.mrb[0].mxu0
        %v2503 = vadd.f32 0.0, %v2502
        %v2504 = vpop.f32.mrb[0].mxu0
        %2505 = vmatprep.mubr.bf16.mxu0 0
        %2506 = vmatmul.mubr.bf16.gmra.mrb[0].mxu0 %v2444
        %v2507 = vpop.f32.mrb[0].mxu0
        %v2508 = vadd.f32 0.0, %v2507
        %v2509 = vpop.f32.mrb[0].mxu0
        %v2510 = vpop.f32.mrb[0].mxu0
        %v2511 = vadd.f32 0.0, %v2510
        %v2512 = vpop.f32.mrb[0].mxu0
        %2513 = vmatprep.mubr.bf16.mxu0 0
        %2514 = vmatmul.mubr.bf16.gmra.mrb[0].mxu0 %v2445
        %v2515 = vpop.f32.mrb[0].mxu0
        %v2516 = vadd.f32 0.0, %v2515
        %v2517 = vpop.f32.mrb[0].mxu0
        %v2518 = vpop.f32.mrb[0].mxu0
        %v2519 = vadd.f32 0.0, %v2518
        %v2520 = vpop.f32.mrb[0].mxu0
        %2521 = vmatprep.mubr.bf16.mxu0 0
        %2522 = vmatmul.mubr.bf16.gmra.mrb[0].mxu0 %v2446
        %v2523 = vpop.f32.mrb[0].mxu0
        %v2524 = vadd.f32 0.0, %v2523
        %v2525 = vpop.f32.mrb[0].mxu0
        %v2526 = vpop.f32.mrb[0].mxu0
        %v2527 = vadd.f32 0.0, %v2526
        %v2528 = vpop.f32.mrb[0].mxu0
        %2529 = vmatprep.mubr.bf16.mxu0 0
        %2530 = vmatmul.mubr.bf16.gmra.mrb[0].mxu0 %v2447
        %v2531 = vpop.f32.mrb[0].mxu0
        %v2532 = vadd.f32 0.0, %v2531
        %v2533 = vpop.f32.mrb[0].mxu0
        %v2534 = vpop.f32.mrb[0].mxu0
        %v2535 = vadd.f32 0.0, %v2534
        %v2536 = vpop.f32.mrb[0].mxu0
        %2537 = vmatprep.mubr.bf16.mxu0 0
        %2538 = vmatmul.mubr.bf16.gmra.mrb[0].mxu0 %v2448
        %v2539 = vpop.f32.mrb[0].mxu0
        %v2540 = vadd.f32 0.0, %v2539
        %v2541 = vpop.f32.mrb[0].mxu0
        %v2542 = vpop.f32.mrb[0].mxu0
        %v2543 = vadd.f32 0.0, %v2542
        %v2544 = vpop.f32.mrb[0].mxu0
        %2545 = vdwg.mxu0
        %2546 = vmatprep.subr.bf16.mxu0 0
        %2547 = vmatpush1.bf16.msra.mxu0 %v1817
        %2548 = vmatprep.subr.bf16.mxu0 0
        %2549 = vmatpush1.bf16.msra.mxu0 %v1818
        %2550 = vmatprep.subr.bf16.mxu0 0
        %2551 = vmatpush1.bf16.msra.mxu0 %v1819
        %2552 = vmatprep.subr.bf16.mxu0 0
        %2553 = vmatpush1.bf16.msra.mxu0 %v1820
        %2554 = vmatprep.subr.bf16.mxu0 0
        %2555 = vmatpush1.bf16.msra.mxu0 %v1821
        %2556 = vmatprep.subr.bf16.mxu0 0
        %2557 = vmatpush1.bf16.msra.mxu0 %v1822
        %2558 = vmatprep.subr.bf16.mxu0 0
        %2559 = vmatpush1.bf16.msra.mxu0 %v1823
        %2560 = vmatprep.subr.bf16.mxu0 0
        %2561 = vmatpush1.bf16.msra.mxu0 %v1824
        %2562 = vmatprep.subr.bf16.mxu0 0
        %2563 = vmatpush1.bf16.msra.mxu0 0
        %2564 = vmatprep.subr.bf16.mxu0 0
        %2565 = vmatpush1.bf16.msra.mxu0 0
        %2566 = vmatprep.subr.bf16.mxu0 0
        %2567 = vmatpush1.bf16.msra.mxu0 0
        %2568 = vmatprep.subr.bf16.mxu0 0
        %2569 = vmatpush1.bf16.msra.mxu0 0
        %2570 = vmatprep.subr.bf16.mxu0 0
        %2571 = vmatpush1.bf16.msra.mxu0 0
        %2572 = vmatprep.subr.bf16.mxu0 0
        %2573 = vmatpush1.bf16.msra.mxu0 0
        %2574 = vmatprep.subr.bf16.mxu0 0
        %2575 = vmatpush1.bf16.msra.mxu0 0
        %2576 = vmatprep.subr.bf16.mxu0 0
        %2577 = vmatpush1.bf16.msra.mxu0 0
        %2578 = vmatprep.mubr.bf16.mxu0 0
        %2579 = vmatmul.mubr.bf16.gmra.mrb[0].mxu0 %v2114
        %v2580 = vpop.f32.mrb[0].mxu0
        %v2581 = vadd.f32 %v2484, %v2580
        %v2582 = vpop.f32.mrb[0].mxu0
        %v2583 = vpop.f32.mrb[0].mxu0
        %v2584 = vadd.f32 %v2487, %v2583
        %v2585 = vpop.f32.mrb[0].mxu0
        %2586 = vmatprep.mubr.bf16.mxu0 0
        %2587 = vmatmul.mubr.bf16.gmra.mrb[0].mxu0 %v2115
        %v2588 = vpop.f32.mrb[0].mxu0
        %v2589 = vadd.f32 %v2492, %v2588
        %v2590 = vpop.f32.mrb[0].mxu0
        %v2591 = vpop.f32.mrb[0].mxu0
        %v2592 = vadd.f32 %v2495, %v2591
        %v2593 = vpop.f32.mrb[0].mxu0
        %2594 = vmatprep.mubr.bf16.mxu0 0
        %2595 = vmatmul.mubr.bf16.gmra.mrb[0].mxu0 %v2116
        %v2596 = vpop.f32.mrb[0].mxu0
        %v2597 = vadd.f32 %v2500, %v2596
        %v2598 = vpop.f32.mrb[0].mxu0
        %v2599 = vpop.f32.mrb[0].mxu0
        %v2600 = vadd.f32 %v2503, %v2599
        %v2601 = vpop.f32.mrb[0].mxu0
        %2602 = vmatprep.mubr.bf16.mxu0 0
        %2603 = vmatmul.mubr.bf16.gmra.mrb[0].mxu0 %v2117
        %v2604 = vpop.f32.mrb[0].mxu0
        %v2605 = vadd.f32 %v2508, %v2604
        %v2606 = vpop.f32.mrb[0].mxu0
        %v2607 = vpop.f32.mrb[0].mxu0
        %v2608 = vadd.f32 %v2511, %v2607
        %v2609 = vpop.f32.mrb[0].mxu0
        %2610 = vmatprep.mubr.bf16.mxu0 0
        %2611 = vmatmul.mubr.bf16.gmra.mrb[0].mxu0 %v2118
        %v2612 = vpop.f32.mrb[0].mxu0
        %v2613 = vadd.f32 %v2516, %v2612
        %v2614 = vpop.f32.mrb[0].mxu0
        %v2615 = vpop.f32.mrb[0].mxu0
        %v2616 = vadd.f32 %v2519, %v2615
        %v2617 = vpop.f32.mrb[0].mxu0
        %2618 = vmatprep.mubr.bf16.mxu0 0
        %2619 = vmatmul.mubr.bf16.gmra.mrb[0].mxu0 %v2119
        %v2620 = vpop.f32.mrb[0].mxu0
        %v2621 = vadd.f32 %v2524, %v2620
        %v2622 = vpop.f32.mrb[0].mxu0
        %v2623 = vpop.f32.mrb[0].mxu0
        %v2624 = vadd.f32 %v2527, %v2623
        %v2625 = vpop.f32.mrb[0].mxu0
        %2626 = vmatprep.mubr.bf16.mxu0 0
        %2627 = vmatmul.mubr.bf16.gmra.mrb[0].mxu0 %v2120
        %v2628 = vpop.f32.mrb[0].mxu0
        %v2629 = vadd.f32 %v2532, %v2628
        %v2630 = vpop.f32.mrb[0].mxu0
        %v2631 = vpop.f32.mrb[0].mxu0
        %v2632 = vadd.f32 %v2535, %v2631
        %v2633 = vpop.f32.mrb[0].mxu0
        %2634 = vmatprep.mubr.bf16.mxu0 0
        %2635 = vmatmul.mubr.bf16.gmra.mrb[0].mxu0 %v2121
        %v2636 = vpop.f32.mrb[0].mxu0
        %v2637 = vadd.f32 %v2540, %v2636
        %v2638 = vpop.f32.mrb[0].mxu0
        %v2639 = vpop.f32.mrb[0].mxu0
        %v2640 = vadd.f32 %v2543, %v2639
        %v2641 = vpop.f32.mrb[0].mxu0
        %2642 = vdwg.mxu0
        %v2644 = vlaneseq
        %v2645 = vshrl.u32 %v2644, 7
        %v2646 = vsub.s32 0, %v2645
        %v2647 = vrot.slane %v1765, %v2646
        %v2649 = vmul.f32 %v1405, %v2647
        %v2650 = vmul.f32 %v1408, %v2647
        %v2651 = vmul.f32 %v1413, %v2647
        %v2652 = vmul.f32 %v1416, %v2647
        %v2653 = vmul.f32 %v1421, %v2647
        %v2654 = vmul.f32 %v1424, %v2647
        %v2655 = vmul.f32 %v1429, %v2647
        %v2656 = vmul.f32 %v1432, %v2647
        %v2657 = vmul.f32 %v1437, %v2647
        %v2658 = vmul.f32 %v1440, %v2647
        %v2659 = vmul.f32 %v1445, %v2647
        %v2660 = vmul.f32 %v1448, %v2647
        %v2661 = vmul.f32 %v1453, %v2647
        %v2662 = vmul.f32 %v1456, %v2647
        %v2663 = vmul.f32 %v1461, %v2647
        %v2664 = vmul.f32 %v1464, %v2647
        %v2665 = vpack.c.bf16 %v2650, %v2649
        %v2666 = vpack.c.bf16 %v2652, %v2651
        %v2667 = vpack.c.bf16 %v2654, %v2653
        %v2668 = vpack.c.bf16 %v2656, %v2655
        %v2669 = vpack.c.bf16 %v2658, %v2657
        %v2670 = vpack.c.bf16 %v2660, %v2659
        %v2671 = vpack.c.bf16 %v2662, %v2661
        %v2672 = vpack.c.bf16 %v2664, %v2663
        %v2673 = vmul.f32 %v1677, %v2647
        %v2674 = vmul.f32 %v1680, %v2647
        %v2675 = vmul.f32 %v1685, %v2647
        %v2676 = vmul.f32 %v1688, %v2647
        %v2677 = vmul.f32 %v1693, %v2647
        %v2678 = vmul.f32 %v1696, %v2647
        %v2679 = vmul.f32 %v1701, %v2647
        %v2680 = vmul.f32 %v1704, %v2647
        %v2681 = vmul.f32 %v1709, %v2647
        %v2682 = vmul.f32 %v1712, %v2647
        %v2683 = vmul.f32 %v1717, %v2647
        %v2684 = vmul.f32 %v1720, %v2647
        %v2685 = vmul.f32 %v1725, %v2647
        %v2686 = vmul.f32 %v1728, %v2647
        %v2687 = vmul.f32 %v1733, %v2647
        %v2688 = vmul.f32 %v1736, %v2647
        %v2689 = vpack.c.bf16 %v2674, %v2673
        %v2690 = vpack.c.bf16 %v2676, %v2675
        %v2691 = vpack.c.bf16 %v2678, %v2677
        %v2692 = vpack.c.bf16 %v2680, %v2679
        %v2693 = vpack.c.bf16 %v2682, %v2681
        %v2694 = vpack.c.bf16 %v2684, %v2683
        %v2695 = vpack.c.bf16 %v2686, %v2685
        %v2696 = vpack.c.bf16 %v2688, %v2687
        %v2698 = vsel %vm1345, %v2665, 0
        %v2701 = vsel %vm1345, %v2666, 0
        %v2704 = vsel %vm1345, %v2667, 0
        %v2707 = vsel %vm1345, %v2668, 0
        %v2710 = vsel %vm1345, %v2669, 0
        %v2713 = vsel %vm1345, %v2670, 0
        %v2716 = vsel %vm1345, %v2671, 0
        %v2719 = vsel %vm1345, %v2672, 0
        %2721 = vmatprep.subr.bf16.mxu0 0
        %2722 = vmatpush1.bf16.xpose.msra.mxu0 %v1850
        %2723 = vmatprep.subr.bf16.mxu0 0
        %2724 = vmatpush1.bf16.xpose.msra.mxu0 %v1853
        %2725 = vmatprep.subr.bf16.mxu0 0
        %2726 = vmatpush1.bf16.xpose.msra.mxu0 %v1856
        %2727 = vmatprep.subr.bf16.mxu0 0
        %2728 = vmatpush1.bf16.xpose.msra.mxu0 %v1859
        %2729 = vmatprep.subr.bf16.mxu0 0
        %2730 = vmatpush1.bf16.xpose.msra.mxu0 %v1862
        %2731 = vmatprep.subr.bf16.mxu0 0
        %2732 = vmatpush1.bf16.xpose.msra.mxu0 %v1865
        %2733 = vmatprep.subr.bf16.mxu0 0
        %2734 = vmatpush1.bf16.xpose.msra.mxu0 %v1868
        %2735 = vmatprep.subr.bf16.mxu0 0
        %2736 = vmatpush1.bf16.xpose.msra.mxu0 %v1871
        %2737 = vmatprep.subr.bf16.mxu0 0
        %2738 = vmatpush1.bf16.xpose.msra.mxu0 0
        %2739 = vmatprep.subr.bf16.mxu0 0
        %2740 = vmatpush1.bf16.xpose.msra.mxu0 0
        %2741 = vmatprep.subr.bf16.mxu0 0
        %2742 = vmatpush1.bf16.xpose.msra.mxu0 0
        %2743 = vmatprep.subr.bf16.mxu0 0
        %2744 = vmatpush1.bf16.xpose.msra.mxu0 0
        %2745 = vmatprep.subr.bf16.mxu0 0
        %2746 = vmatpush1.bf16.xpose.msra.mxu0 0
        %2747 = vmatprep.subr.bf16.mxu0 0
        %2748 = vmatpush1.bf16.xpose.msra.mxu0 0
        %2749 = vmatprep.subr.bf16.mxu0 0
        %2750 = vmatpush1.bf16.xpose.msra.mxu0 0
        %2751 = vmatprep.subr.bf16.mxu0 0
        %2752 = vmatpush1.bf16.xpose.msra.mxu0 0
        %2753 = vmatprep.mubr.bf16.mxu0 0
        %2754 = vmatmul.mubr.bf16.gmra.mrb[0].mxu0 %v2698
        %v2755 = vpop.f32.mrb[0].mxu0
        %v2756 = vadd.f32 %v1747, %v2755
        %v2757 = vpop.f32.mrb[0].mxu0
        %v2758 = vpop.f32.mrb[0].mxu0
        %v2759 = vadd.f32 %v1748, %v2758
        %v2760 = vpop.f32.mrb[0].mxu0
        %2761 = vmatprep.mubr.bf16.mxu0 0
        %2762 = vmatmul.mubr.bf16.gmra.mrb[0].mxu0 %v2701
        %v2763 = vpop.f32.mrb[0].mxu0
        %v2764 = vadd.f32 %v1749, %v2763
        %v2765 = vpop.f32.mrb[0].mxu0
        %v2766 = vpop.f32.mrb[0].mxu0
        %v2767 = vadd.f32 %v1750, %v2766
        %v2768 = vpop.f32.mrb[0].mxu0
        %2769 = vmatprep.mubr.bf16.mxu0 0
        %2770 = vmatmul.mubr.bf16.gmra.mrb[0].mxu0 %v2704
        %v2771 = vpop.f32.mrb[0].mxu0
        %v2772 = vadd.f32 %v1751, %v2771
        %v2773 = vpop.f32.mrb[0].mxu0
        %v2774 = vpop.f32.mrb[0].mxu0
        %v2775 = vadd.f32 %v1752, %v2774
        %v2776 = vpop.f32.mrb[0].mxu0
        %2777 = vmatprep.mubr.bf16.mxu0 0
        %2778 = vmatmul.mubr.bf16.gmra.mrb[0].mxu0 %v2707
        %v2779 = vpop.f32.mrb[0].mxu0
        %v2780 = vadd.f32 %v1753, %v2779
        %v2781 = vpop.f32.mrb[0].mxu0
        %v2782 = vpop.f32.mrb[0].mxu0
        %v2783 = vadd.f32 %v1754, %v2782
        %v2784 = vpop.f32.mrb[0].mxu0
        %2785 = vmatprep.mubr.bf16.mxu0 0
        %2786 = vmatmul.mubr.bf16.gmra.mrb[0].mxu0 %v2710
        %v2787 = vpop.f32.mrb[0].mxu0
        %v2788 = vadd.f32 %v1755, %v2787
        %v2789 = vpop.f32.mrb[0].mxu0
        %v2790 = vpop.f32.mrb[0].mxu0
        %v2791 = vadd.f32 %v1756, %v2790
        %v2792 = vpop.f32.mrb[0].mxu0
        %2793 = vmatprep.mubr.bf16.mxu0 0
        %2794 = vmatmul.mubr.bf16.gmra.mrb[0].mxu0 %v2713
        %v2795 = vpop.f32.mrb[0].mxu0
        %v2796 = vadd.f32 %v1757, %v2795
        %v2797 = vpop.f32.mrb[0].mxu0
        %v2798 = vpop.f32.mrb[0].mxu0
        %v2799 = vadd.f32 %v1758, %v2798
        %v2800 = vpop.f32.mrb[0].mxu0
        %2801 = vmatprep.mubr.bf16.mxu0 0
        %2802 = vmatmul.mubr.bf16.gmra.mrb[0].mxu0 %v2716
        %v2803 = vpop.f32.mrb[0].mxu0
        %v2804 = vadd.f32 %v1759, %v2803
        %v2805 = vpop.f32.mrb[0].mxu0
        %v2806 = vpop.f32.mrb[0].mxu0
        %v2807 = vadd.f32 %v1760, %v2806
        %v2808 = vpop.f32.mrb[0].mxu0
        %2809 = vmatprep.mubr.bf16.mxu0 0
        %2810 = vmatmul.mubr.bf16.gmra.mrb[0].mxu0 %v2719
        %v2811 = vpop.f32.mrb[0].mxu0
        %v2812 = vadd.f32 %v1761, %v2811
        %v2813 = vpop.f32.mrb[0].mxu0
        %v2814 = vpop.f32.mrb[0].mxu0
        %v2815 = vadd.f32 %v1762, %v2814
        %v2816 = vpop.f32.mrb[0].mxu0
        %2817 = vdwg.mxu0
        %2818 = vmax.xlane.f32.xlu0 %v2756
        %v2819 = vpop.xlane.xlu0 %2818
        %2820 = vmax.xlane.f32.xlu0 %v2759
        %v2821 = vpop.xlane.xlu0 %2820
        %2822 = vmax.xlane.f32.xlu0 %v2764
        %v2823 = vpop.xlane.xlu0 %2822
        %2824 = vmax.xlane.f32.xlu0 %v2767
        %v2825 = vpop.xlane.xlu0 %2824
        %2826 = vmax.xlane.f32.xlu0 %v2772
        %v2827 = vpop.xlane.xlu0 %2826
        %2828 = vmax.xlane.f32.xlu0 %v2775
        %v2829 = vpop.xlane.xlu0 %2828
        %2830 = vmax.xlane.f32.xlu0 %v2780
        %v2831 = vpop.xlane.xlu0 %2830
        %2832 = vmax.xlane.f32.xlu0 %v2783
        %v2833 = vpop.xlane.xlu0 %2832
        %2834 = vmax.xlane.f32.xlu0 %v2788
        %v2835 = vpop.xlane.xlu0 %2834
        %2836 = vmax.xlane.f32.xlu0 %v2791
        %v2837 = vpop.xlane.xlu0 %2836
        %2838 = vmax.xlane.f32.xlu0 %v2796
        %v2839 = vpop.xlane.xlu0 %2838
        %2840 = vmax.xlane.f32.xlu0 %v2799
        %v2841 = vpop.xlane.xlu0 %2840
        %2842 = vmax.xlane.f32.xlu0 %v2804
        %v2843 = vpop.xlane.xlu0 %2842
        %2844 = vmax.xlane.f32.xlu0 %v2807
        %v2845 = vpop.xlane.xlu0 %2844
        %2846 = vmax.xlane.f32.xlu0 %v2812
        %v2847 = vpop.xlane.xlu0 %2846
        %2848 = vmax.xlane.f32.xlu0 %v2815
        %v2849 = vpop.xlane.xlu0 %2848
        %v2850 = vsub.f32 %v2756, %v2819
        %v2851 = vsub.f32 %v2759, %v2821
        %v2852 = vsub.f32 %v2764, %v2823
        %v2853 = vsub.f32 %v2767, %v2825
        %v2854 = vsub.f32 %v2772, %v2827
        %v2855 = vsub.f32 %v2775, %v2829
        %v2856 = vsub.f32 %v2780, %v2831
        %v2857 = vsub.f32 %v2783, %v2833
        %v2858 = vsub.f32 %v2788, %v2835
        %v2859 = vsub.f32 %v2791, %v2837
        %v2860 = vsub.f32 %v2796, %v2839
        %v2861 = vsub.f32 %v2799, %v2841
        %v2862 = vsub.f32 %v2804, %v2843
        %v2863 = vsub.f32 %v2807, %v2845
        %v2864 = vsub.f32 %v2812, %v2847
        %v2865 = vsub.f32 %v2815, %v2849
        %v2866 = vmul.f32 %v2850, 1.442695
        %v2867 = vpow.pop %v2866
        %v2868 = vmul.f32 %v2851, 1.442695
        %v2869 = vpow.pop %v2868
        %v2870 = vmul.f32 %v2852, 1.442695
        %v2871 = vpow.pop %v2870
        %v2872 = vmul.f32 %v2853, 1.442695
        %v2873 = vpow.pop %v2872
        %v2874 = vmul.f32 %v2854, 1.442695
        %v2875 = vpow.pop %v2874
        %v2876 = vmul.f32 %v2855, 1.442695
        %v2877 = vpow.pop %v2876
        %v2878 = vmul.f32 %v2856, 1.442695
        %v2879 = vpow.pop %v2878
        %v2880 = vmul.f32 %v2857, 1.442695
        %v2881 = vpow.pop %v2880
        %v2882 = vmul.f32 %v2858, 1.442695
        %v2883 = vpow.pop %v2882
        %v2884 = vmul.f32 %v2859, 1.442695
        %v2885 = vpow.pop %v2884
        %v2886 = vmul.f32 %v2860, 1.442695
        %v2887 = vpow.pop %v2886
        %v2888 = vmul.f32 %v2861, 1.442695
        %v2889 = vpow.pop %v2888
        %v2890 = vmul.f32 %v2862, 1.442695
        %v2891 = vpow.pop %v2890
        %v2892 = vmul.f32 %v2863, 1.442695
        %v2893 = vpow.pop %v2892
        %v2894 = vmul.f32 %v2864, 1.442695
        %v2895 = vpow.pop %v2894
        %v2896 = vmul.f32 %v2865, 1.442695
        %v2897 = vpow.pop %v2896
        %2898 = vadd.xlane.f32.xlu0 %v2867
        %v2899 = vpop.xlane.xlu0 %2898
        %2900 = vadd.xlane.f32.xlu0 %v2869
        %v2901 = vpop.xlane.xlu0 %2900
        %2902 = vadd.xlane.f32.xlu0 %v2871
        %v2903 = vpop.xlane.xlu0 %2902
        %2904 = vadd.xlane.f32.xlu0 %v2873
        %v2905 = vpop.xlane.xlu0 %2904
        %2906 = vadd.xlane.f32.xlu0 %v2875
        %v2907 = vpop.xlane.xlu0 %2906
        %2908 = vadd.xlane.f32.xlu0 %v2877
        %v2909 = vpop.xlane.xlu0 %2908
        %2910 = vadd.xlane.f32.xlu0 %v2879
        %v2911 = vpop.xlane.xlu0 %2910
        %2912 = vadd.xlane.f32.xlu0 %v2881
        %v2913 = vpop.xlane.xlu0 %2912
        %2914 = vadd.xlane.f32.xlu0 %v2883
        %v2915 = vpop.xlane.xlu0 %2914
        %2916 = vadd.xlane.f32.xlu0 %v2885
        %v2917 = vpop.xlane.xlu0 %2916
        %2918 = vadd.xlane.f32.xlu0 %v2887
        %v2919 = vpop.xlane.xlu0 %2918
        %2920 = vadd.xlane.f32.xlu0 %v2889
        %v2921 = vpop.xlane.xlu0 %2920
        %2922 = vadd.xlane.f32.xlu0 %v2891
        %v2923 = vpop.xlane.xlu0 %2922
        %2924 = vadd.xlane.f32.xlu0 %v2893
        %v2925 = vpop.xlane.xlu0 %2924
        %2926 = vadd.xlane.f32.xlu0 %v2895
        %v2927 = vpop.xlane.xlu0 %2926
        %2928 = vadd.xlane.f32.xlu0 %v2897
        %v2929 = vpop.xlane.xlu0 %2928
        %v2930 = vrcp.pop %v2899
        %v2931 = vrcp.pop %v2901
        %v2932 = vrcp.pop %v2903
        %v2933 = vrcp.pop %v2905
        %v2934 = vrcp.pop %v2907
        %v2935 = vrcp.pop %v2909
        %v2936 = vrcp.pop %v2911
        %v2937 = vrcp.pop %v2913
        %v2938 = vrcp.pop %v2915
        %v2939 = vrcp.pop %v2917
        %v2940 = vrcp.pop %v2919
        %v2941 = vrcp.pop %v2921
        %v2942 = vrcp.pop %v2923
        %v2943 = vrcp.pop %v2925
        %v2944 = vrcp.pop %v2927
        %v2945 = vrcp.pop %v2929
        %v2946 = vmul.f32 %v2867, %v2930
        %v2947 = vmul.f32 %v2869, %v2931
        %v2948 = vmul.f32 %v2871, %v2932
        %v2949 = vmul.f32 %v2873, %v2933
        %v2950 = vmul.f32 %v2875, %v2934
        %v2951 = vmul.f32 %v2877, %v2935
        %v2952 = vmul.f32 %v2879, %v2936
        %v2953 = vmul.f32 %v2881, %v2937
        %v2954 = vmul.f32 %v2883, %v2938
        %v2955 = vmul.f32 %v2885, %v2939
        %v2956 = vmul.f32 %v2887, %v2940
        %v2957 = vmul.f32 %v2889, %v2941
        %v2958 = vmul.f32 %v2891, %v2942
        %v2959 = vmul.f32 %v2893, %v2943
        %v2960 = vmul.f32 %v2895, %v2944
        %v2961 = vmul.f32 %v2897, %v2945
        %v2962 = vpack.c.bf16 %v2947, %v2946
        %v2963 = vpack.c.bf16 %v2949, %v2948
        %v2964 = vpack.c.bf16 %v2951, %v2950
        %v2965 = vpack.c.bf16 %v2953, %v2952
        %v2966 = vpack.c.bf16 %v2955, %v2954
        %v2967 = vpack.c.bf16 %v2957, %v2956
        %v2968 = vpack.c.bf16 %v2959, %v2958
        %v2969 = vpack.c.bf16 %v2961, %v2960
        %2970 = vmatprep.subr.bf16.mxu0 0
        %2971 = vmatpush1.bf16.msra.mxu0 %v2689
        %2972 = vmatprep.subr.bf16.mxu0 0
        %2973 = vmatpush1.bf16.msra.mxu0 %v2690
        %2974 = vmatprep.subr.bf16.mxu0 0
        %2975 = vmatpush1.bf16.msra.mxu0 %v2691
        %2976 = vmatprep.subr.bf16.mxu0 0
        %2977 = vmatpush1.bf16.msra.mxu0 %v2692
        %2978 = vmatprep.subr.bf16.mxu0 0
        %2979 = vmatpush1.bf16.msra.mxu0 %v2693
        %2980 = vmatprep.subr.bf16.mxu0 0
        %2981 = vmatpush1.bf16.msra.mxu0 %v2694
        %2982 = vmatprep.subr.bf16.mxu0 0
        %2983 = vmatpush1.bf16.msra.mxu0 %v2695
        %2984 = vmatprep.subr.bf16.mxu0 0
        %2985 = vmatpush1.bf16.msra.mxu0 %v2696
        %2986 = vmatprep.subr.bf16.mxu0 0
        %2987 = vmatpush1.bf16.msra.mxu0 0
        %2988 = vmatprep.subr.bf16.mxu0 0
        %2989 = vmatpush1.bf16.msra.mxu0 0
        %2990 = vmatprep.subr.bf16.mxu0 0
        %2991 = vmatpush1.bf16.msra.mxu0 0
        %2992 = vmatprep.subr.bf16.mxu0 0
        %2993 = vmatpush1.bf16.msra.mxu0 0
        %2994 = vmatprep.subr.bf16.mxu0 0
        %2995 = vmatpush1.bf16.msra.mxu0 0
        %2996 = vmatprep.subr.bf16.mxu0 0
        %2997 = vmatpush1.bf16.msra.mxu0 0
        %2998 = vmatprep.subr.bf16.mxu0 0
        %2999 = vmatpush1.bf16.msra.mxu0 0
        %3000 = vmatprep.subr.bf16.mxu0 0
        %3001 = vmatpush1.bf16.msra.mxu0 0
        %3002 = vmatprep.mubr.bf16.mxu0 0
        %3003 = vmatmul.mubr.bf16.gmra.mrb[0].mxu0 %v2962
        %v3004 = vpop.f32.mrb[0].mxu0
        %v3005 = vadd.f32 0.0, %v3004
        %v3006 = vpop.f32.mrb[0].mxu0
        %v3007 = vpop.f32.mrb[0].mxu0
        %v3008 = vadd.f32 0.0, %v3007
        %v3009 = vpop.f32.mrb[0].mxu0
        %3010 = vmatprep.mubr.bf16.mxu0 0
        %3011 = vmatmul.mubr.bf16.gmra.mrb[0].mxu0 %v2963
        %v3012 = vpop.f32.mrb[0].mxu0
        %v3013 = vadd.f32 0.0, %v3012
        %v3014 = vpop.f32.mrb[0].mxu0
        %v3015 = vpop.f32.mrb[0].mxu0
        %v3016 = vadd.f32 0.0, %v3015
        %v3017 = vpop.f32.mrb[0].mxu0
        %3018 = vmatprep.mubr.bf16.mxu0 0
        %3019 = vmatmul.mubr.bf16.gmra.mrb[0].mxu0 %v2964
        %v3020 = vpop.f32.mrb[0].mxu0
        %v3021 = vadd.f32 0.0, %v3020
        %v3022 = vpop.f32.mrb[0].mxu0
        %v3023 = vpop.f32.mrb[0].mxu0
        %v3024 = vadd.f32 0.0, %v3023
        %v3025 = vpop.f32.mrb[0].mxu0
        %3026 = vmatprep.mubr.bf16.mxu0 0
        %3027 = vmatmul.mubr.bf16.gmra.mrb[0].mxu0 %v2965
        %v3028 = vpop.f32.mrb[0].mxu0
        %v3029 = vadd.f32 0.0, %v3028
        %v3030 = vpop.f32.mrb[0].mxu0
        %v3031 = vpop.f32.mrb[0].mxu0
        %v3032 = vadd.f32 0.0, %v3031
        %v3033 = vpop.f32.mrb[0].mxu0
        %3034 = vmatprep.mubr.bf16.mxu0 0
        %3035 = vmatmul.mubr.bf16.gmra.mrb[0].mxu0 %v2966
        %v3036 = vpop.f32.mrb[0].mxu0
        %v3037 = vadd.f32 0.0, %v3036
        %v3038 = vpop.f32.mrb[0].mxu0
        %v3039 = vpop.f32.mrb[0].mxu0
        %v3040 = vadd.f32 0.0, %v3039
        %v3041 = vpop.f32.mrb[0].mxu0
        %3042 = vmatprep.mubr.bf16.mxu0 0
        %3043 = vmatmul.mubr.bf16.gmra.mrb[0].mxu0 %v2967
        %v3044 = vpop.f32.mrb[0].mxu0
        %v3045 = vadd.f32 0.0, %v3044
        %v3046 = vpop.f32.mrb[0].mxu0
        %v3047 = vpop.f32.mrb[0].mxu0
        %v3048 = vadd.f32 0.0, %v3047
        %v3049 = vpop.f32.mrb[0].mxu0
        %3050 = vmatprep.mubr.bf16.mxu0 0
        %3051 = vmatmul.mubr.bf16.gmra.mrb[0].mxu0 %v2968
        %v3052 = vpop.f32.mrb[0].mxu0
        %v3053 = vadd.f32 0.0, %v3052
        %v3054 = vpop.f32.mrb[0].mxu0
        %v3055 = vpop.f32.mrb[0].mxu0
        %v3056 = vadd.f32 0.0, %v3055
        %v3057 = vpop.f32.mrb[0].mxu0
        %3058 = vmatprep.mubr.bf16.mxu0 0
        %3059 = vmatmul.mubr.bf16.gmra.mrb[0].mxu0 %v2969
        %v3060 = vpop.f32.mrb[0].mxu0
        %v3061 = vadd.f32 0.0, %v3060
        %v3062 = vpop.f32.mrb[0].mxu0
        %v3063 = vpop.f32.mrb[0].mxu0
        %v3064 = vadd.f32 0.0, %v3063
        %v3065 = vpop.f32.mrb[0].mxu0
        %3066 = vdwg.mxu0
        %v3067 = vadd.f32 %v2581, %v3005
        %v3068 = vadd.f32 %v2584, %v3008
        %v3069 = vadd.f32 %v2589, %v3013
        %v3070 = vadd.f32 %v2592, %v3016
        %v3071 = vadd.f32 %v2597, %v3021
        %v3072 = vadd.f32 %v2600, %v3024
        %v3073 = vadd.f32 %v2605, %v3029
        %v3074 = vadd.f32 %v2608, %v3032
        %v3075 = vadd.f32 %v2613, %v3037
        %v3076 = vadd.f32 %v2616, %v3040
        %v3077 = vadd.f32 %v2621, %v3045
        %v3078 = vadd.f32 %v2624, %v3048
        %v3079 = vadd.f32 %v2629, %v3053
        %v3080 = vadd.f32 %v2632, %v3056
        %v3081 = vadd.f32 %v2637, %v3061
        %v3082 = vadd.f32 %v2640, %v3064
        %v3084 = vlaneseq
        %v3085 = vshrl.u32 %v3084, 7
        %v3086 = vsub.s32 0, %v3085
        %v3087 = vrot.slane %v1766, %v3086
        %v3089 = vmul.f32 %v1405, %v3087
        %v3090 = vmul.f32 %v1408, %v3087
        %v3091 = vmul.f32 %v1413, %v3087
        %v3092 = vmul.f32 %v1416, %v3087
        %v3093 = vmul.f32 %v1421, %v3087
        %v3094 = vmul.f32 %v1424, %v3087
        %v3095 = vmul.f32 %v1429, %v3087
        %v3096 = vmul.f32 %v1432, %v3087
        %v3097 = vmul.f32 %v1437, %v3087
        %v3098 = vmul.f32 %v1440, %v3087
        %v3099 = vmul.f32 %v1445, %v3087
        %v3100 = vmul.f32 %v1448, %v3087
        %v3101 = vmul.f32 %v1453, %v3087
        %v3102 = vmul.f32 %v1456, %v3087
        %v3103 = vmul.f32 %v1461, %v3087
        %v3104 = vmul.f32 %v1464, %v3087
        %v3105 = vpack.c.bf16 %v3090, %v3089
        %v3106 = vpack.c.bf16 %v3092, %v3091
        %v3107 = vpack.c.bf16 %v3094, %v3093
        %v3108 = vpack.c.bf16 %v3096, %v3095
        %v3109 = vpack.c.bf16 %v3098, %v3097
        %v3110 = vpack.c.bf16 %v3100, %v3099
        %v3111 = vpack.c.bf16 %v3102, %v3101
        %v3112 = vpack.c.bf16 %v3104, %v3103
        %v3113 = vmul.f32 %v1677, %v3087
        %v3114 = vmul.f32 %v1680, %v3087
        %v3115 = vmul.f32 %v1685, %v3087
        %v3116 = vmul.f32 %v1688, %v3087
        %v3117 = vmul.f32 %v1693, %v3087
        %v3118 = vmul.f32 %v1696, %v3087
        %v3119 = vmul.f32 %v1701, %v3087
        %v3120 = vmul.f32 %v1704, %v3087
        %v3121 = vmul.f32 %v1709, %v3087
        %v3122 = vmul.f32 %v1712, %v3087
        %v3123 = vmul.f32 %v1717, %v3087
        %v3124 = vmul.f32 %v1720, %v3087
        %v3125 = vmul.f32 %v1725, %v3087
        %v3126 = vmul.f32 %v1728, %v3087
        %v3127 = vmul.f32 %v1733, %v3087
        %v3128 = vmul.f32 %v1736, %v3087
        %v3129 = vpack.c.bf16 %v3114, %v3113
        %v3130 = vpack.c.bf16 %v3116, %v3115
        %v3131 = vpack.c.bf16 %v3118, %v3117
        %v3132 = vpack.c.bf16 %v3120, %v3119
        %v3133 = vpack.c.bf16 %v3122, %v3121
        %v3134 = vpack.c.bf16 %v3124, %v3123
        %v3135 = vpack.c.bf16 %v3126, %v3125
        %v3136 = vpack.c.bf16 %v3128, %v3127
        %v3138 = vsel %vm1345, %v3105, 0
        %v3141 = vsel %vm1345, %v3106, 0
        %v3144 = vsel %vm1345, %v3107, 0
        %v3147 = vsel %vm1345, %v3108, 0
        %v3150 = vsel %vm1345, %v3109, 0
        %v3153 = vsel %vm1345, %v3110, 0
        %v3156 = vsel %vm1345, %v3111, 0
        %v3159 = vsel %vm1345, %v3112, 0
        %3161 = vmatprep.subr.bf16.mxu0 0
        %3162 = vmatpush1.bf16.xpose.msra.mxu0 %v1850
        %3163 = vmatprep.subr.bf16.mxu0 0
        %3164 = vmatpush1.bf16.xpose.msra.mxu0 %v1853
        %3165 = vmatprep.subr.bf16.mxu0 0
        %3166 = vmatpush1.bf16.xpose.msra.mxu0 %v1856
        %3167 = vmatprep.subr.bf16.mxu0 0
        %3168 = vmatpush1.bf16.xpose.msra.mxu0 %v1859
        %3169 = vmatprep.subr.bf16.mxu0 0
        %3170 = vmatpush1.bf16.xpose.msra.mxu0 %v1862
        %3171 = vmatprep.subr.bf16.mxu0 0
        %3172 = vmatpush1.bf16.xpose.msra.mxu0 %v1865
        %3173 = vmatprep.subr.bf16.mxu0 0
        %3174 = vmatpush1.bf16.xpose.msra.mxu0 %v1868
        %3175 = vmatprep.subr.bf16.mxu0 0
        %3176 = vmatpush1.bf16.xpose.msra.mxu0 %v1871
        %3177 = vmatprep.subr.bf16.mxu0 0
        %3178 = vmatpush1.bf16.xpose.msra.mxu0 0
        %3179 = vmatprep.subr.bf16.mxu0 0
        %3180 = vmatpush1.bf16.xpose.msra.mxu0 0
        %3181 = vmatprep.subr.bf16.mxu0 0
        %3182 = vmatpush1.bf16.xpose.msra.mxu0 0
        %3183 = vmatprep.subr.bf16.mxu0 0
        %3184 = vmatpush1.bf16.xpose.msra.mxu0 0
        %3185 = vmatprep.subr.bf16.mxu0 0
        %3186 = vmatpush1.bf16.xpose.msra.mxu0 0
        %3187 = vmatprep.subr.bf16.mxu0 0
        %3188 = vmatpush1.bf16.xpose.msra.mxu0 0
        %3189 = vmatprep.subr.bf16.mxu0 0
        %3190 = vmatpush1.bf16.xpose.msra.mxu0 0
        %3191 = vmatprep.subr.bf16.mxu0 0
        %3192 = vmatpush1.bf16.xpose.msra.mxu0 0
        %3193 = vmatprep.mubr.bf16.mxu0 0
        %3194 = vmatmul.mubr.bf16.gmra.mrb[0].mxu0 %v3138
        %v3195 = vpop.f32.mrb[0].mxu0
        %v3196 = vadd.f32 %v1747, %v3195
        %v3197 = vpop.f32.mrb[0].mxu0
        %v3198 = vpop.f32.mrb[0].mxu0
        %v3199 = vadd.f32 %v1748, %v3198
        %v3200 = vpop.f32.mrb[0].mxu0
        %3201 = vmatprep.mubr.bf16.mxu0 0
        %3202 = vmatmul.mubr.bf16.gmra.mrb[0].mxu0 %v3141
        %v3203 = vpop.f32.mrb[0].mxu0
        %v3204 = vadd.f32 %v1749, %v3203
        %v3205 = vpop.f32.mrb[0].mxu0
        %v3206 = vpop.f32.mrb[0].mxu0
        %v3207 = vadd.f32 %v1750, %v3206
        %v3208 = vpop.f32.mrb[0].mxu0
        %3209 = vmatprep.mubr.bf16.mxu0 0
        %3210 = vmatmul.mubr.bf16.gmra.mrb[0].mxu0 %v3144
        %v3211 = vpop.f32.mrb[0].mxu0
        %v3212 = vadd.f32 %v1751, %v3211
        %v3213 = vpop.f32.mrb[0].mxu0
        %v3214 = vpop.f32.mrb[0].mxu0
        %v3215 = vadd.f32 %v1752, %v3214
        %v3216 = vpop.f32.mrb[0].mxu0
        %3217 = vmatprep.mubr.bf16.mxu0 0
        %3218 = vmatmul.mubr.bf16.gmra.mrb[0].mxu0 %v3147
        %v3219 = vpop.f32.mrb[0].mxu0
        %v3220 = vadd.f32 %v1753, %v3219
        %v3221 = vpop.f32.mrb[0].mxu0
        %v3222 = vpop.f32.mrb[0].mxu0
        %v3223 = vadd.f32 %v1754, %v3222
        %v3224 = vpop.f32.mrb[0].mxu0
        %3225 = vmatprep.mubr.bf16.mxu0 0
        %3226 = vmatmul.mubr.bf16.gmra.mrb[0].mxu0 %v3150
        %v3227 = vpop.f32.mrb[0].mxu0
        %v3228 = vadd.f32 %v1755, %v3227
        %v3229 = vpop.f32.mrb[0].mxu0
        %v3230 = vpop.f32.mrb[0].mxu0
        %v3231 = vadd.f32 %v1756, %v3230
        %v3232 = vpop.f32.mrb[0].mxu0
        %3233 = vmatprep.mubr.bf16.mxu0 0
        %3234 = vmatmul.mubr.bf16.gmra.mrb[0].mxu0 %v3153
        %v3235 = vpop.f32.mrb[0].mxu0
        %v3236 = vadd.f32 %v1757, %v3235
        %v3237 = vpop.f32.mrb[0].mxu0
        %v3238 = vpop.f32.mrb[0].mxu0
        %v3239 = vadd.f32 %v1758, %v3238
        %v3240 = vpop.f32.mrb[0].mxu0
        %3241 = vmatprep.mubr.bf16.mxu0 0
        %3242 = vmatmul.mubr.bf16.gmra.mrb[0].mxu0 %v3156
        %v3243 = vpop.f32.mrb[0].mxu0
        %v3244 = vadd.f32 %v1759, %v3243
        %v3245 = vpop.f32.mrb[0].mxu0
        %v3246 = vpop.f32.mrb[0].mxu0
        %v3247 = vadd.f32 %v1760, %v3246
        %v3248 = vpop.f32.mrb[0].mxu0
        %3249 = vmatprep.mubr.bf16.mxu0 0
        %3250 = vmatmul.mubr.bf16.gmra.mrb[0].mxu0 %v3159
        %v3251 = vpop.f32.mrb[0].mxu0
        %v3252 = vadd.f32 %v1761, %v3251
        %v3253 = vpop.f32.mrb[0].mxu0
        %v3254 = vpop.f32.mrb[0].mxu0
        %v3255 = vadd.f32 %v1762, %v3254
        %v3256 = vpop.f32.mrb[0].mxu0
        %3257 = vdwg.mxu0
        %3258 = vmax.xlane.f32.xlu0 %v3196
        %v3259 = vpop.xlane.xlu0 %3258
        %3260 = vmax.xlane.f32.xlu0 %v3199
        %v3261 = vpop.xlane.xlu0 %3260
        %3262 = vmax.xlane.f32.xlu0 %v3204
        %v3263 = vpop.xlane.xlu0 %3262
        %3264 = vmax.xlane.f32.xlu0 %v3207
        %v3265 = vpop.xlane.xlu0 %3264
        %3266 = vmax.xlane.f32.xlu0 %v3212
        %v3267 = vpop.xlane.xlu0 %3266
        %3268 = vmax.xlane.f32.xlu0 %v3215
        %v3269 = vpop.xlane.xlu0 %3268
        %3270 = vmax.xlane.f32.xlu0 %v3220
        %v3271 = vpop.xlane.xlu0 %3270
        %3272 = vmax.xlane.f32.xlu0 %v3223
        %v3273 = vpop.xlane.xlu0 %3272
        %3274 = vmax.xlane.f32.xlu0 %v3228
        %v3275 = vpop.xlane.xlu0 %3274
        %3276 = vmax.xlane.f32.xlu0 %v3231
        %v3277 = vpop.xlane.xlu0 %3276
        %3278 = vmax.xlane.f32.xlu0 %v3236
        %v3279 = vpop.xlane.xlu0 %3278
        %3280 = vmax.xlane.f32.xlu0 %v3239
        %v3281 = vpop.xlane.xlu0 %3280
        %3282 = vmax.xlane.f32.xlu0 %v3244
        %v3283 = vpop.xlane.xlu0 %3282
        %3284 = vmax.xlane.f32.xlu0 %v3247
        %v3285 = vpop.xlane.xlu0 %3284
        %3286 = vmax.xlane.f32.xlu0 %v3252
        %v3287 = vpop.xlane.xlu0 %3286
        %3288 = vmax.xlane.f32.xlu0 %v3255
        %v3289 = vpop.xlane.xlu0 %3288
        %v3290 = vsub.f32 %v3196, %v3259
        %v3291 = vsub.f32 %v3199, %v3261
        %v3292 = vsub.f32 %v3204, %v3263
        %v3293 = vsub.f32 %v3207, %v3265
        %v3294 = vsub.f32 %v3212, %v3267
        %v3295 = vsub.f32 %v3215, %v3269
        %v3296 = vsub.f32 %v3220, %v3271
        %v3297 = vsub.f32 %v3223, %v3273
        %v3298 = vsub.f32 %v3228, %v3275
        %v3299 = vsub.f32 %v3231, %v3277
        %v3300 = vsub.f32 %v3236, %v3279
        %v3301 = vsub.f32 %v3239, %v3281
        %v3302 = vsub.f32 %v3244, %v3283
        %v3303 = vsub.f32 %v3247, %v3285
        %v3304 = vsub.f32 %v3252, %v3287
        %v3305 = vsub.f32 %v3255, %v3289
        %v3306 = vmul.f32 %v3290, 1.442695
        %v3307 = vpow.pop %v3306
        %v3308 = vmul.f32 %v3291, 1.442695
        %v3309 = vpow.pop %v3308
        %v3310 = vmul.f32 %v3292, 1.442695
        %v3311 = vpow.pop %v3310
        %v3312 = vmul.f32 %v3293, 1.442695
        %v3313 = vpow.pop %v3312
        %v3314 = vmul.f32 %v3294, 1.442695
        %v3315 = vpow.pop %v3314
        %v3316 = vmul.f32 %v3295, 1.442695
        %v3317 = vpow.pop %v3316
        %v3318 = vmul.f32 %v3296, 1.442695
        %v3319 = vpow.pop %v3318
        %v3320 = vmul.f32 %v3297, 1.442695
        %v3321 = vpow.pop %v3320
        %v3322 = vmul.f32 %v3298, 1.442695
        %v3323 = vpow.pop %v3322
        %v3324 = vmul.f32 %v3299, 1.442695
        %v3325 = vpow.pop %v3324
        %v3326 = vmul.f32 %v3300, 1.442695
        %v3327 = vpow.pop %v3326
        %v3328 = vmul.f32 %v3301, 1.442695
        %v3329 = vpow.pop %v3328
        %v3330 = vmul.f32 %v3302, 1.442695
        %v3331 = vpow.pop %v3330
        %v3332 = vmul.f32 %v3303, 1.442695
        %v3333 = vpow.pop %v3332
        %v3334 = vmul.f32 %v3304, 1.442695
        %v3335 = vpow.pop %v3334
        %v3336 = vmul.f32 %v3305, 1.442695
        %v3337 = vpow.pop %v3336
        %3338 = vadd.xlane.f32.xlu0 %v3307
        %v3339 = vpop.xlane.xlu0 %3338
        %3340 = vadd.xlane.f32.xlu0 %v3309
        %v3341 = vpop.xlane.xlu0 %3340
        %3342 = vadd.xlane.f32.xlu0 %v3311
        %v3343 = vpop.xlane.xlu0 %3342
        %3344 = vadd.xlane.f32.xlu0 %v3313
        %v3345 = vpop.xlane.xlu0 %3344
        %3346 = vadd.xlane.f32.xlu0 %v3315
        %v3347 = vpop.xlane.xlu0 %3346
        %3348 = vadd.xlane.f32.xlu0 %v3317
        %v3349 = vpop.xlane.xlu0 %3348
        %3350 = vadd.xlane.f32.xlu0 %v3319
        %v3351 = vpop.xlane.xlu0 %3350
        %3352 = vadd.xlane.f32.xlu0 %v3321
        %v3353 = vpop.xlane.xlu0 %3352
        %3354 = vadd.xlane.f32.xlu0 %v3323
        %v3355 = vpop.xlane.xlu0 %3354
        %3356 = vadd.xlane.f32.xlu0 %v3325
        %v3357 = vpop.xlane.xlu0 %3356
        %3358 = vadd.xlane.f32.xlu0 %v3327
        %v3359 = vpop.xlane.xlu0 %3358
        %3360 = vadd.xlane.f32.xlu0 %v3329
        %v3361 = vpop.xlane.xlu0 %3360
        %3362 = vadd.xlane.f32.xlu0 %v3331
        %v3363 = vpop.xlane.xlu0 %3362
        %3364 = vadd.xlane.f32.xlu0 %v3333
        %v3365 = vpop.xlane.xlu0 %3364
        %3366 = vadd.xlane.f32.xlu0 %v3335
        %v3367 = vpop.xlane.xlu0 %3366
        %3368 = vadd.xlane.f32.xlu0 %v3337
        %v3369 = vpop.xlane.xlu0 %3368
        %v3370 = vrcp.pop %v3339
        %v3371 = vrcp.pop %v3341
        %v3372 = vrcp.pop %v3343
        %v3373 = vrcp.pop %v3345
        %v3374 = vrcp.pop %v3347
        %v3375 = vrcp.pop %v3349
        %v3376 = vrcp.pop %v3351
        %v3377 = vrcp.pop %v3353
        %v3378 = vrcp.pop %v3355
        %v3379 = vrcp.pop %v3357
        %v3380 = vrcp.pop %v3359
        %v3381 = vrcp.pop %v3361
        %v3382 = vrcp.pop %v3363
        %v3383 = vrcp.pop %v3365
        %v3384 = vrcp.pop %v3367
        %v3385 = vrcp.pop %v3369
        %v3386 = vmul.f32 %v3307, %v3370
        %v3387 = vmul.f32 %v3309, %v3371
        %v3388 = vmul.f32 %v3311, %v3372
        %v3389 = vmul.f32 %v3313, %v3373
        %v3390 = vmul.f32 %v3315, %v3374
        %v3391 = vmul.f32 %v3317, %v3375
        %v3392 = vmul.f32 %v3319, %v3376
        %v3393 = vmul.f32 %v3321, %v3377
        %v3394 = vmul.f32 %v3323, %v3378
        %v3395 = vmul.f32 %v3325, %v3379
        %v3396 = vmul.f32 %v3327, %v3380
        %v3397 = vmul.f32 %v3329, %v3381
        %v3398 = vmul.f32 %v3331, %v3382
        %v3399 = vmul.f32 %v3333, %v3383
        %v3400 = vmul.f32 %v3335, %v3384
        %v3401 = vmul.f32 %v3337, %v3385
        %v3402 = vpack.c.bf16 %v3387, %v3386
        %v3403 = vpack.c.bf16 %v3389, %v3388
        %v3404 = vpack.c.bf16 %v3391, %v3390
        %v3405 = vpack.c.bf16 %v3393, %v3392
        %v3406 = vpack.c.bf16 %v3395, %v3394
        %v3407 = vpack.c.bf16 %v3397, %v3396
        %v3408 = vpack.c.bf16 %v3399, %v3398
        %v3409 = vpack.c.bf16 %v3401, %v3400
        %3410 = vmatprep.subr.bf16.mxu0 0
        %3411 = vmatpush1.bf16.msra.mxu0 %v3129
        %3412 = vmatprep.subr.bf16.mxu0 0
        %3413 = vmatpush1.bf16.msra.mxu0 %v3130
        %3414 = vmatprep.subr.bf16.mxu0 0
        %3415 = vmatpush1.bf16.msra.mxu0 %v3131
        %3416 = vmatprep.subr.bf16.mxu0 0
        %3417 = vmatpush1.bf16.msra.mxu0 %v3132
        %3418 = vmatprep.subr.bf16.mxu0 0
        %3419 = vmatpush1.bf16.msra.mxu0 %v3133
        %3420 = vmatprep.subr.bf16.mxu0 0
        %3421 = vmatpush1.bf16.msra.mxu0 %v3134
        %3422 = vmatprep.subr.bf16.mxu0 0
        %3423 = vmatpush1.bf16.msra.mxu0 %v3135
        %3424 = vmatprep.subr.bf16.mxu0 0
        %3425 = vmatpush1.bf16.msra.mxu0 %v3136
        %3426 = vmatprep.subr.bf16.mxu0 0
        %3427 = vmatpush1.bf16.msra.mxu0 0
        %3428 = vmatprep.subr.bf16.mxu0 0
        %3429 = vmatpush1.bf16.msra.mxu0 0
        %3430 = vmatprep.subr.bf16.mxu0 0
        %3431 = vmatpush1.bf16.msra.mxu0 0
        %3432 = vmatprep.subr.bf16.mxu0 0
        %3433 = vmatpush1.bf16.msra.mxu0 0
        %3434 = vmatprep.subr.bf16.mxu0 0
        %3435 = vmatpush1.bf16.msra.mxu0 0
        %3436 = vmatprep.subr.bf16.mxu0 0
        %3437 = vmatpush1.bf16.msra.mxu0 0
        %3438 = vmatprep.subr.bf16.mxu0 0
        %3439 = vmatpush1.bf16.msra.mxu0 0
        %3440 = vmatprep.subr.bf16.mxu0 0
        %3441 = vmatpush1.bf16.msra.mxu0 0
        %3442 = vmatprep.mubr.bf16.mxu0 0
        %3443 = vmatmul.mubr.bf16.gmra.mrb[0].mxu0 %v3402
        %v3444 = vpop.f32.mrb[0].mxu0
        %v3445 = vadd.f32 0.0, %v3444
        %v3446 = vpop.f32.mrb[0].mxu0
        %v3447 = vpop.f32.mrb[0].mxu0
        %v3448 = vadd.f32 0.0, %v3447
        %v3449 = vpop.f32.mrb[0].mxu0
        %3450 = vmatprep.mubr.bf16.mxu0 0
        %3451 = vmatmul.mubr.bf16.gmra.mrb[0].mxu0 %v3403
        %v3452 = vpop.f32.mrb[0].mxu0
        %v3453 = vadd.f32 0.0, %v3452
        %v3454 = vpop.f32.mrb[0].mxu0
        %v3455 = vpop.f32.mrb[0].mxu0
        %v3456 = vadd.f32 0.0, %v3455
        %v3457 = vpop.f32.mrb[0].mxu0
        %3458 = vmatprep.mubr.bf16.mxu0 0
        %3459 = vmatmul.mubr.bf16.gmra.mrb[0].mxu0 %v3404
        %v3460 = vpop.f32.mrb[0].mxu0
        %v3461 = vadd.f32 0.0, %v3460
        %v3462 = vpop.f32.mrb[0].mxu0
        %v3463 = vpop.f32.mrb[0].mxu0
        %v3464 = vadd.f32 0.0, %v3463
        %v3465 = vpop.f32.mrb[0].mxu0
        %3466 = vmatprep.mubr.bf16.mxu0 0
        %3467 = vmatmul.mubr.bf16.gmra.mrb[0].mxu0 %v3405
        %v3468 = vpop.f32.mrb[0].mxu0
        %v3469 = vadd.f32 0.0, %v3468
        %v3470 = vpop.f32.mrb[0].mxu0
        %v3471 = vpop.f32.mrb[0].mxu0
        %v3472 = vadd.f32 0.0, %v3471
        %v3473 = vpop.f32.mrb[0].mxu0
        %3474 = vmatprep.mubr.bf16.mxu0 0
        %3475 = vmatmul.mubr.bf16.gmra.mrb[0].mxu0 %v3406
        %v3476 = vpop.f32.mrb[0].mxu0
        %v3477 = vadd.f32 0.0, %v3476
        %v3478 = vpop.f32.mrb[0].mxu0
        %v3479 = vpop.f32.mrb[0].mxu0
        %v3480 = vadd.f32 0.0, %v3479
        %v3481 = vpop.f32.mrb[0].mxu0
        %3482 = vmatprep.mubr.bf16.mxu0 0
        %3483 = vmatmul.mubr.bf16.gmra.mrb[0].mxu0 %v3407
        %v3484 = vpop.f32.mrb[0].mxu0
        %v3485 = vadd.f32 0.0, %v3484
        %v3486 = vpop.f32.mrb[0].mxu0
        %v3487 = vpop.f32.mrb[0].mxu0
        %v3488 = vadd.f32 0.0, %v3487
        %v3489 = vpop.f32.mrb[0].mxu0
        %3490 = vmatprep.mubr.bf16.mxu0 0
        %3491 = vmatmul.mubr.bf16.gmra.mrb[0].mxu0 %v3408
        %v3492 = vpop.f32.mrb[0].mxu0
        %v3493 = vadd.f32 0.0, %v3492
        %v3494 = vpop.f32.mrb[0].mxu0
        %v3495 = vpop.f32.mrb[0].mxu0
        %v3496 = vadd.f32 0.0, %v3495
        %v3497 = vpop.f32.mrb[0].mxu0
        %3498 = vmatprep.mubr.bf16.mxu0 0
        %3499 = vmatmul.mubr.bf16.gmra.mrb[0].mxu0 %v3409
        %v3500 = vpop.f32.mrb[0].mxu0
        %v3501 = vadd.f32 0.0, %v3500
        %v3502 = vpop.f32.mrb[0].mxu0
        %v3503 = vpop.f32.mrb[0].mxu0
        %v3504 = vadd.f32 0.0, %v3503
        %v3505 = vpop.f32.mrb[0].mxu0
        %3506 = vdwg.mxu0
        %v3507 = vadd.f32 %v3067, %v3445
        %v3508 = vadd.f32 %v3068, %v3448
        %v3509 = vadd.f32 %v3069, %v3453
        %v3510 = vadd.f32 %v3070, %v3456
        %v3511 = vadd.f32 %v3071, %v3461
        %v3512 = vadd.f32 %v3072, %v3464
        %v3513 = vadd.f32 %v3073, %v3469
        %v3514 = vadd.f32 %v3074, %v3472
        %v3515 = vadd.f32 %v3075, %v3477
        %v3516 = vadd.f32 %v3076, %v3480
        %v3517 = vadd.f32 %v3077, %v3485
        %v3518 = vadd.f32 %v3078, %v3488
        %v3519 = vadd.f32 %v3079, %v3493
        %v3520 = vadd.f32 %v3080, %v3496
        %v3521 = vadd.f32 %v3081, %v3501
        %v3522 = vadd.f32 %v3082, %v3504
        %v3524 = vlaneseq
        %v3525 = vshrl.u32 %v3524, 7
        %v3526 = vsub.s32 0, %v3525
        %v3527 = vrot.slane %v1767, %v3526
        %v3529 = vmul.f32 %v1405, %v3527
        %v3530 = vmul.f32 %v1408, %v3527
        %v3531 = vmul.f32 %v1413, %v3527
        %v3532 = vmul.f32 %v1416, %v3527
        %v3533 = vmul.f32 %v1421, %v3527
        %v3534 = vmul.f32 %v1424, %v3527
        %v3535 = vmul.f32 %v1429, %v3527
        %v3536 = vmul.f32 %v1432, %v3527
        %v3537 = vmul.f32 %v1437, %v3527
        %v3538 = vmul.f32 %v1440, %v3527
        %v3539 = vmul.f32 %v1445, %v3527
        %v3540 = vmul.f32 %v1448, %v3527
        %v3541 = vmul.f32 %v1453, %v3527
        %v3542 = vmul.f32 %v1456, %v3527
        %v3543 = vmul.f32 %v1461, %v3527
        %v3544 = vmul.f32 %v1464, %v3527
        %v3545 = vpack.c.bf16 %v3530, %v3529
        %v3546 = vpack.c.bf16 %v3532, %v3531
        %v3547 = vpack.c.bf16 %v3534, %v3533
        %v3548 = vpack.c.bf16 %v3536, %v3535
        %v3549 = vpack.c.bf16 %v3538, %v3537
        %v3550 = vpack.c.bf16 %v3540, %v3539
        %v3551 = vpack.c.bf16 %v3542, %v3541
        %v3552 = vpack.c.bf16 %v3544, %v3543
        %v3553 = vmul.f32 %v1677, %v3527
        %v3554 = vmul.f32 %v1680, %v3527
        %v3555 = vmul.f32 %v1685, %v3527
        %v3556 = vmul.f32 %v1688, %v3527
        %v3557 = vmul.f32 %v1693, %v3527
        %v3558 = vmul.f32 %v1696, %v3527
        %v3559 = vmul.f32 %v1701, %v3527
        %v3560 = vmul.f32 %v1704, %v3527
        %v3561 = vmul.f32 %v1709, %v3527
        %v3562 = vmul.f32 %v1712, %v3527
        %v3563 = vmul.f32 %v1717, %v3527
        %v3564 = vmul.f32 %v1720, %v3527
        %v3565 = vmul.f32 %v1725, %v3527
        %v3566 = vmul.f32 %v1728, %v3527
        %v3567 = vmul.f32 %v1733, %v3527
        %v3568 = vmul.f32 %v1736, %v3527
        %v3569 = vpack.c.bf16 %v3554, %v3553
        %v3570 = vpack.c.bf16 %v3556, %v3555
        %v3571 = vpack.c.bf16 %v3558, %v3557
        %v3572 = vpack.c.bf16 %v3560, %v3559
        %v3573 = vpack.c.bf16 %v3562, %v3561
        %v3574 = vpack.c.bf16 %v3564, %v3563
        %v3575 = vpack.c.bf16 %v3566, %v3565
        %v3576 = vpack.c.bf16 %v3568, %v3567
        %v3578 = vsel %vm1345, %v3545, 0
        %v3581 = vsel %vm1345, %v3546, 0
        %v3584 = vsel %vm1345, %v3547, 0
        %v3587 = vsel %vm1345, %v3548, 0
        %v3590 = vsel %vm1345, %v3549, 0
        %v3593 = vsel %vm1345, %v3550, 0
        %v3596 = vsel %vm1345, %v3551, 0
        %v3599 = vsel %vm1345, %v3552, 0
        %3601 = vmatprep.subr.bf16.mxu0 0
        %3602 = vmatpush1.bf16.xpose.msra.mxu0 %v1850
        %3603 = vmatprep.subr.bf16.mxu0 0
        %3604 = vmatpush1.bf16.xpose.msra.mxu0 %v1853
        %3605 = vmatprep.subr.bf16.mxu0 0
        %3606 = vmatpush1.bf16.xpose.msra.mxu0 %v1856
        %3607 = vmatprep.subr.bf16.mxu0 0
        %3608 = vmatpush1.bf16.xpose.msra.mxu0 %v1859
        %3609 = vmatprep.subr.bf16.mxu0 0
        %3610 = vmatpush1.bf16.xpose.msra.mxu0 %v1862
        %3611 = vmatprep.subr.bf16.mxu0 0
        %3612 = vmatpush1.bf16.xpose.msra.mxu0 %v1865
        %3613 = vmatprep.subr.bf16.mxu0 0
        %3614 = vmatpush1.bf16.xpose.msra.mxu0 %v1868
        %3615 = vmatprep.subr.bf16.mxu0 0
        %3616 = vmatpush1.bf16.xpose.msra.mxu0 %v1871
        %3617 = vmatprep.subr.bf16.mxu0 0
        %3618 = vmatpush1.bf16.xpose.msra.mxu0 0
        %3619 = vmatprep.subr.bf16.mxu0 0
        %3620 = vmatpush1.bf16.xpose.msra.mxu0 0
        %3621 = vmatprep.subr.bf16.mxu0 0
        %3622 = vmatpush1.bf16.xpose.msra.mxu0 0
        %3623 = vmatprep.subr.bf16.mxu0 0
        %3624 = vmatpush1.bf16.xpose.msra.mxu0 0
        %3625 = vmatprep.subr.bf16.mxu0 0
        %3626 = vmatpush1.bf16.xpose.msra.mxu0 0
        %3627 = vmatprep.subr.bf16.mxu0 0
        %3628 = vmatpush1.bf16.xpose.msra.mxu0 0
        %3629 = vmatprep.subr.bf16.mxu0 0
        %3630 = vmatpush1.bf16.xpose.msra.mxu0 0
        %3631 = vmatprep.subr.bf16.mxu0 0
        %3632 = vmatpush1.bf16.xpose.msra.mxu0 0
        %3633 = vmatprep.mubr.bf16.mxu0 0
        %3634 = vmatmul.mubr.bf16.gmra.mrb[0].mxu0 %v3578
        %v3635 = vpop.f32.mrb[0].mxu0
        %v3636 = vadd.f32 %v1747, %v3635
        %v3637 = vpop.f32.mrb[0].mxu0
        %v3638 = vpop.f32.mrb[0].mxu0
        %v3639 = vadd.f32 %v1748, %v3638
        %v3640 = vpop.f32.mrb[0].mxu0
        %3641 = vmatprep.mubr.bf16.mxu0 0
        %3642 = vmatmul.mubr.bf16.gmra.mrb[0].mxu0 %v3581
        %v3643 = vpop.f32.mrb[0].mxu0
        %v3644 = vadd.f32 %v1749, %v3643
        %v3645 = vpop.f32.mrb[0].mxu0
        %v3646 = vpop.f32.mrb[0].mxu0
        %v3647 = vadd.f32 %v1750, %v3646
        %v3648 = vpop.f32.mrb[0].mxu0
        %3649 = vmatprep.mubr.bf16.mxu0 0
        %3650 = vmatmul.mubr.bf16.gmra.mrb[0].mxu0 %v3584
        %v3651 = vpop.f32.mrb[0].mxu0
        %v3652 = vadd.f32 %v1751, %v3651
        %v3653 = vpop.f32.mrb[0].mxu0
        %v3654 = vpop.f32.mrb[0].mxu0
        %v3655 = vadd.f32 %v1752, %v3654
        %v3656 = vpop.f32.mrb[0].mxu0
        %3657 = vmatprep.mubr.bf16.mxu0 0
        %3658 = vmatmul.mubr.bf16.gmra.mrb[0].mxu0 %v3587
        %v3659 = vpop.f32.mrb[0].mxu0
        %v3660 = vadd.f32 %v1753, %v3659
        %v3661 = vpop.f32.mrb[0].mxu0
        %v3662 = vpop.f32.mrb[0].mxu0
        %v3663 = vadd.f32 %v1754, %v3662
        %v3664 = vpop.f32.mrb[0].mxu0
        %3665 = vmatprep.mubr.bf16.mxu0 0
        %3666 = vmatmul.mubr.bf16.gmra.mrb[0].mxu0 %v3590
        %v3667 = vpop.f32.mrb[0].mxu0
        %v3668 = vadd.f32 %v1755, %v3667
        %v3669 = vpop.f32.mrb[0].mxu0
        %v3670 = vpop.f32.mrb[0].mxu0
        %v3671 = vadd.f32 %v1756, %v3670
        %v3672 = vpop.f32.mrb[0].mxu0
        %3673 = vmatprep.mubr.bf16.mxu0 0
        %3674 = vmatmul.mubr.bf16.gmra.mrb[0].mxu0 %v3593
        %v3675 = vpop.f32.mrb[0].mxu0
        %v3676 = vadd.f32 %v1757, %v3675
        %v3677 = vpop.f32.mrb[0].mxu0
        %v3678 = vpop.f32.mrb[0].mxu0
        %v3679 = vadd.f32 %v1758, %v3678
        %v3680 = vpop.f32.mrb[0].mxu0
        %3681 = vmatprep.mubr.bf16.mxu0 0
        %3682 = vmatmul.mubr.bf16.gmra.mrb[0].mxu0 %v3596
        %v3683 = vpop.f32.mrb[0].mxu0
        %v3684 = vadd.f32 %v1759, %v3683
        %v3685 = vpop.f32.mrb[0].mxu0
        %v3686 = vpop.f32.mrb[0].mxu0
        %v3687 = vadd.f32 %v1760, %v3686
        %v3688 = vpop.f32.mrb[0].mxu0
        %3689 = vmatprep.mubr.bf16.mxu0 0
        %3690 = vmatmul.mubr.bf16.gmra.mrb[0].mxu0 %v3599
        %v3691 = vpop.f32.mrb[0].mxu0
        %v3692 = vadd.f32 %v1761, %v3691
        %v3693 = vpop.f32.mrb[0].mxu0
        %v3694 = vpop.f32.mrb[0].mxu0
        %v3695 = vadd.f32 %v1762, %v3694
        %v3696 = vpop.f32.mrb[0].mxu0
        %3697 = vdwg.mxu0
        %3698 = vmax.xlane.f32.xlu0 %v3636
        %v3699 = vpop.xlane.xlu0 %3698
        %3700 = vmax.xlane.f32.xlu0 %v3639
        %v3701 = vpop.xlane.xlu0 %3700
        %3702 = vmax.xlane.f32.xlu0 %v3644
        %v3703 = vpop.xlane.xlu0 %3702
        %3704 = vmax.xlane.f32.xlu0 %v3647
        %v3705 = vpop.xlane.xlu0 %3704
        %3706 = vmax.xlane.f32.xlu0 %v3652
        %v3707 = vpop.xlane.xlu0 %3706
        %3708 = vmax.xlane.f32.xlu0 %v3655
        %v3709 = vpop.xlane.xlu0 %3708
        %3710 = vmax.xlane.f32.xlu0 %v3660
        %v3711 = vpop.xlane.xlu0 %3710
        %3712 = vmax.xlane.f32.xlu0 %v3663
        %v3713 = vpop.xlane.xlu0 %3712
        %3714 = vmax.xlane.f32.xlu0 %v3668
        %v3715 = vpop.xlane.xlu0 %3714
        %3716 = vmax.xlane.f32.xlu0 %v3671
        %v3717 = vpop.xlane.xlu0 %3716
        %3718 = vmax.xlane.f32.xlu0 %v3676
        %v3719 = vpop.xlane.xlu0 %3718
        %3720 = vmax.xlane.f32.xlu0 %v3679
        %v3721 = vpop.xlane.xlu0 %3720
        %3722 = vmax.xlane.f32.xlu0 %v3684
        %v3723 = vpop.xlane.xlu0 %3722
        %3724 = vmax.xlane.f32.xlu0 %v3687
        %v3725 = vpop.xlane.xlu0 %3724
        %3726 = vmax.xlane.f32.xlu0 %v3692
        %v3727 = vpop.xlane.xlu0 %3726
        %3728 = vmax.xlane.f32.xlu0 %v3695
        %v3729 = vpop.xlane.xlu0 %3728
        %v3730 = vsub.f32 %v3636, %v3699
        %v3731 = vsub.f32 %v3639, %v3701
        %v3732 = vsub.f32 %v3644, %v3703
        %v3733 = vsub.f32 %v3647, %v3705
        %v3734 = vsub.f32 %v3652, %v3707
        %v3735 = vsub.f32 %v3655, %v3709
        %v3736 = vsub.f32 %v3660, %v3711
        %v3737 = vsub.f32 %v3663, %v3713
        %v3738 = vsub.f32 %v3668, %v3715
        %v3739 = vsub.f32 %v3671, %v3717
        %v3740 = vsub.f32 %v3676, %v3719
        %v3741 = vsub.f32 %v3679, %v3721
        %v3742 = vsub.f32 %v3684, %v3723
        %v3743 = vsub.f32 %v3687, %v3725
        %v3744 = vsub.f32 %v3692, %v3727
        %v3745 = vsub.f32 %v3695, %v3729
        %v3746 = vmul.f32 %v3730, 1.442695
        %v3747 = vpow.pop %v3746
        %v3748 = vmul.f32 %v3731, 1.442695
        %v3749 = vpow.pop %v3748
        %v3750 = vmul.f32 %v3732, 1.442695
        %v3751 = vpow.pop %v3750
        %v3752 = vmul.f32 %v3733, 1.442695
        %v3753 = vpow.pop %v3752
        %v3754 = vmul.f32 %v3734, 1.442695
        %v3755 = vpow.pop %v3754
        %v3756 = vmul.f32 %v3735, 1.442695
        %v3757 = vpow.pop %v3756
        %v3758 = vmul.f32 %v3736, 1.442695
        %v3759 = vpow.pop %v3758
        %v3760 = vmul.f32 %v3737, 1.442695
        %v3761 = vpow.pop %v3760
        %v3762 = vmul.f32 %v3738, 1.442695
        %v3763 = vpow.pop %v3762
        %v3764 = vmul.f32 %v3739, 1.442695
        %v3765 = vpow.pop %v3764
        %v3766 = vmul.f32 %v3740, 1.442695
        %v3767 = vpow.pop %v3766
        %v3768 = vmul.f32 %v3741, 1.442695
        %v3769 = vpow.pop %v3768
        %v3770 = vmul.f32 %v3742, 1.442695
        %v3771 = vpow.pop %v3770
        %v3772 = vmul.f32 %v3743, 1.442695
        %v3773 = vpow.pop %v3772
        %v3774 = vmul.f32 %v3744, 1.442695
        %v3775 = vpow.pop %v3774
        %v3776 = vmul.f32 %v3745, 1.442695
        %v3777 = vpow.pop %v3776
        %3778 = vadd.xlane.f32.xlu0 %v3747
        %v3779 = vpop.xlane.xlu0 %3778
        %3780 = vadd.xlane.f32.xlu0 %v3749
        %v3781 = vpop.xlane.xlu0 %3780
        %3782 = vadd.xlane.f32.xlu0 %v3751
        %v3783 = vpop.xlane.xlu0 %3782
        %3784 = vadd.xlane.f32.xlu0 %v3753
        %v3785 = vpop.xlane.xlu0 %3784
        %3786 = vadd.xlane.f32.xlu0 %v3755
        %v3787 = vpop.xlane.xlu0 %3786
        %3788 = vadd.xlane.f32.xlu0 %v3757
        %v3789 = vpop.xlane.xlu0 %3788
        %3790 = vadd.xlane.f32.xlu0 %v3759
        %v3791 = vpop.xlane.xlu0 %3790
        %3792 = vadd.xlane.f32.xlu0 %v3761
        %v3793 = vpop.xlane.xlu0 %3792
        %3794 = vadd.xlane.f32.xlu0 %v3763
        %v3795 = vpop.xlane.xlu0 %3794
        %3796 = vadd.xlane.f32.xlu0 %v3765
        %v3797 = vpop.xlane.xlu0 %3796
        %3798 = vadd.xlane.f32.xlu0 %v3767
        %v3799 = vpop.xlane.xlu0 %3798
        %3800 = vadd.xlane.f32.xlu0 %v3769
        %v3801 = vpop.xlane.xlu0 %3800
        %3802 = vadd.xlane.f32.xlu0 %v3771
        %v3803 = vpop.xlane.xlu0 %3802
        %3804 = vadd.xlane.f32.xlu0 %v3773
        %v3805 = vpop.xlane.xlu0 %3804
        %3806 = vadd.xlane.f32.xlu0 %v3775
        %v3807 = vpop.xlane.xlu0 %3806
        %3808 = vadd.xlane.f32.xlu0 %v3777
        %v3809 = vpop.xlane.xlu0 %3808
        %v3810 = vrcp.pop %v3779
        %v3811 = vrcp.pop %v3781
        %v3812 = vrcp.pop %v3783
        %v3813 = vrcp.pop %v3785
        %v3814 = vrcp.pop %v3787
        %v3815 = vrcp.pop %v3789
        %v3816 = vrcp.pop %v3791
        %v3817 = vrcp.pop %v3793
        %v3818 = vrcp.pop %v3795
        %v3819 = vrcp.pop %v3797
        %v3820 = vrcp.pop %v3799
        %v3821 = vrcp.pop %v3801
        %v3822 = vrcp.pop %v3803
        %v3823 = vrcp.pop %v3805
        %v3824 = vrcp.pop %v3807
        %v3825 = vrcp.pop %v3809
        %v3826 = vmul.f32 %v3747, %v3810
        %v3827 = vmul.f32 %v3749, %v3811
        %v3828 = vmul.f32 %v3751, %v3812
        %v3829 = vmul.f32 %v3753, %v3813
        %v3830 = vmul.f32 %v3755, %v3814
        %v3831 = vmul.f32 %v3757, %v3815
        %v3832 = vmul.f32 %v3759, %v3816
        %v3833 = vmul.f32 %v3761, %v3817
        %v3834 = vmul.f32 %v3763, %v3818
        %v3835 = vmul.f32 %v3765, %v3819
        %v3836 = vmul.f32 %v3767, %v3820
        %v3837 = vmul.f32 %v3769, %v3821
        %v3838 = vmul.f32 %v3771, %v3822
        %v3839 = vmul.f32 %v3773, %v3823
        %v3840 = vmul.f32 %v3775, %v3824
        %v3841 = vmul.f32 %v3777, %v3825
        %v3842 = vpack.c.bf16 %v3827, %v3826
        %v3843 = vpack.c.bf16 %v3829, %v3828
        %v3844 = vpack.c.bf16 %v3831, %v3830
        %v3845 = vpack.c.bf16 %v3833, %v3832
        %v3846 = vpack.c.bf16 %v3835, %v3834
        %v3847 = vpack.c.bf16 %v3837, %v3836
        %v3848 = vpack.c.bf16 %v3839, %v3838
        %v3849 = vpack.c.bf16 %v3841, %v3840
        %3850 = vmatprep.subr.bf16.mxu0 0
        %3851 = vmatpush1.bf16.msra.mxu0 %v3569
        %3852 = vmatprep.subr.bf16.mxu0 0
        %3853 = vmatpush1.bf16.msra.mxu0 %v3570
        %3854 = vmatprep.subr.bf16.mxu0 0
        %3855 = vmatpush1.bf16.msra.mxu0 %v3571
        %3856 = vmatprep.subr.bf16.mxu0 0
        %3857 = vmatpush1.bf16.msra.mxu0 %v3572
        %3858 = vmatprep.subr.bf16.mxu0 0
        %3859 = vmatpush1.bf16.msra.mxu0 %v3573
        %3860 = vmatprep.subr.bf16.mxu0 0
        %3861 = vmatpush1.bf16.msra.mxu0 %v3574
        %3862 = vmatprep.subr.bf16.mxu0 0
        %3863 = vmatpush1.bf16.msra.mxu0 %v3575
        %3864 = vmatprep.subr.bf16.mxu0 0
        %3865 = vmatpush1.bf16.msra.mxu0 %v3576
        %3866 = vmatprep.subr.bf16.mxu0 0
        %3867 = vmatpush1.bf16.msra.mxu0 0
        %3868 = vmatprep.subr.bf16.mxu0 0
        %3869 = vmatpush1.bf16.msra.mxu0 0
        %3870 = vmatprep.subr.bf16.mxu0 0
        %3871 = vmatpush1.bf16.msra.mxu0 0
        %3872 = vmatprep.subr.bf16.mxu0 0
        %3873 = vmatpush1.bf16.msra.mxu0 0
        %3874 = vmatprep.subr.bf16.mxu0 0
        %3875 = vmatpush1.bf16.msra.mxu0 0
        %3876 = vmatprep.subr.bf16.mxu0 0
        %3877 = vmatpush1.bf16.msra.mxu0 0
        %3878 = vmatprep.subr.bf16.mxu0 0
        %3879 = vmatpush1.bf16.msra.mxu0 0
        %3880 = vmatprep.subr.bf16.mxu0 0
        %3881 = vmatpush1.bf16.msra.mxu0 0
        %3882 = vmatprep.mubr.bf16.mxu0 0
        %3883 = vmatmul.mubr.bf16.gmra.mrb[0].mxu0 %v3842
        %v3884 = vpop.f32.mrb[0].mxu0
        %v3885 = vadd.f32 0.0, %v3884
        %v3886 = vpop.f32.mrb[0].mxu0
        %v3887 = vpop.f32.mrb[0].mxu0
        %v3888 = vadd.f32 0.0, %v3887
        %v3889 = vpop.f32.mrb[0].mxu0
        %3890 = vmatprep.mubr.bf16.mxu0 0
        %3891 = vmatmul.mubr.bf16.gmra.mrb[0].mxu0 %v3843
        %v3892 = vpop.f32.mrb[0].mxu0
        %v3893 = vadd.f32 0.0, %v3892
        %v3894 = vpop.f32.mrb[0].mxu0
        %v3895 = vpop.f32.mrb[0].mxu0
        %v3896 = vadd.f32 0.0, %v3895
        %v3897 = vpop.f32.mrb[0].mxu0
        %3898 = vmatprep.mubr.bf16.mxu0 0
        %3899 = vmatmul.mubr.bf16.gmra.mrb[0].mxu0 %v3844
        %v3900 = vpop.f32.mrb[0].mxu0
        %v3901 = vadd.f32 0.0, %v3900
        %v3902 = vpop.f32.mrb[0].mxu0
        %v3903 = vpop.f32.mrb[0].mxu0
        %v3904 = vadd.f32 0.0, %v3903
        %v3905 = vpop.f32.mrb[0].mxu0
        %3906 = vmatprep.mubr.bf16.mxu0 0
        %3907 = vmatmul.mubr.bf16.gmra.mrb[0].mxu0 %v3845
        %v3908 = vpop.f32.mrb[0].mxu0
        %v3909 = vadd.f32 0.0, %v3908
        %v3910 = vpop.f32.mrb[0].mxu0
        %v3911 = vpop.f32.mrb[0].mxu0
        %v3912 = vadd.f32 0.0, %v3911
        %v3913 = vpop.f32.mrb[0].mxu0
        %3914 = vmatprep.mubr.bf16.mxu0 0
        %3915 = vmatmul.mubr.bf16.gmra.mrb[0].mxu0 %v3846
        %v3916 = vpop.f32.mrb[0].mxu0
        %v3917 = vadd.f32 0.0, %v3916
        %v3918 = vpop.f32.mrb[0].mxu0
        %v3919 = vpop.f32.mrb[0].mxu0
        %v3920 = vadd.f32 0.0, %v3919
        %v3921 = vpop.f32.mrb[0].mxu0
        %3922 = vmatprep.mubr.bf16.mxu0 0
        %3923 = vmatmul.mubr.bf16.gmra.mrb[0].mxu0 %v3847
        %v3924 = vpop.f32.mrb[0].mxu0
        %v3925 = vadd.f32 0.0, %v3924
        %v3926 = vpop.f32.mrb[0].mxu0
        %v3927 = vpop.f32.mrb[0].mxu0
        %v3928 = vadd.f32 0.0, %v3927
        %v3929 = vpop.f32.mrb[0].mxu0
        %3930 = vmatprep.mubr.bf16.mxu0 0
        %3931 = vmatmul.mubr.bf16.gmra.mrb[0].mxu0 %v3848
        %v3932 = vpop.f32.mrb[0].mxu0
        %v3933 = vadd.f32 0.0, %v3932
        %v3934 = vpop.f32.mrb[0].mxu0
        %v3935 = vpop.f32.mrb[0].mxu0
        %v3936 = vadd.f32 0.0, %v3935
        %v3937 = vpop.f32.mrb[0].mxu0
        %3938 = vmatprep.mubr.bf16.mxu0 0
        %3939 = vmatmul.mubr.bf16.gmra.mrb[0].mxu0 %v3849
        %v3940 = vpop.f32.mrb[0].mxu0
        %v3941 = vadd.f32 0.0, %v3940
        %v3942 = vpop.f32.mrb[0].mxu0
        %v3943 = vpop.f32.mrb[0].mxu0
        %v3944 = vadd.f32 0.0, %v3943
        %v3945 = vpop.f32.mrb[0].mxu0
        %3946 = vdwg.mxu0
        %v3947 = vadd.f32 %v3507, %v3885
        %v3948 = vadd.f32 %v3508, %v3888
        %v3949 = vadd.f32 %v3509, %v3893
        %v3950 = vadd.f32 %v3510, %v3896
        %v3951 = vadd.f32 %v3511, %v3901
        %v3952 = vadd.f32 %v3512, %v3904
        %v3953 = vadd.f32 %v3513, %v3909
        %v3954 = vadd.f32 %v3514, %v3912
        %v3955 = vadd.f32 %v3515, %v3917
        %v3956 = vadd.f32 %v3516, %v3920
        %v3957 = vadd.f32 %v3517, %v3925
        %v3958 = vadd.f32 %v3518, %v3928
        %v3959 = vadd.f32 %v3519, %v3933
        %v3960 = vadd.f32 %v3520, %v3936
        %v3961 = vadd.f32 %v3521, %v3941
        %v3962 = vadd.f32 %v3522, %v3944
        %v3964 = vlaneseq
        %v3965 = vshrl.u32 %v3964, 7
        %v3966 = vsub.s32 0, %v3965
        %v3967 = vrot.slane %v1768, %v3966
        %v3969 = vmul.f32 %v1405, %v3967
        %v3970 = vmul.f32 %v1408, %v3967
        %v3971 = vmul.f32 %v1413, %v3967
        %v3972 = vmul.f32 %v1416, %v3967
        %v3973 = vmul.f32 %v1421, %v3967
        %v3974 = vmul.f32 %v1424, %v3967
        %v3975 = vmul.f32 %v1429, %v3967
        %v3976 = vmul.f32 %v1432, %v3967
        %v3977 = vmul.f32 %v1437, %v3967
        %v3978 = vmul.f32 %v1440, %v3967
        %v3979 = vmul.f32 %v1445, %v3967
        %v3980 = vmul.f32 %v1448, %v3967
        %v3981 = vmul.f32 %v1453, %v3967
        %v3982 = vmul.f32 %v1456, %v3967
        %v3983 = vmul.f32 %v1461, %v3967
        %v3984 = vmul.f32 %v1464, %v3967
        %v3985 = vpack.c.bf16 %v3970, %v3969
        %v3986 = vpack.c.bf16 %v3972, %v3971
        %v3987 = vpack.c.bf16 %v3974, %v3973
        %v3988 = vpack.c.bf16 %v3976, %v3975
        %v3989 = vpack.c.bf16 %v3978, %v3977
        %v3990 = vpack.c.bf16 %v3980, %v3979
        %v3991 = vpack.c.bf16 %v3982, %v3981
        %v3992 = vpack.c.bf16 %v3984, %v3983
        %v3993 = vmul.f32 %v1677, %v3967
        %v3994 = vmul.f32 %v1680, %v3967
        %v3995 = vmul.f32 %v1685, %v3967
        %v3996 = vmul.f32 %v1688, %v3967
        %v3997 = vmul.f32 %v1693, %v3967
        %v3998 = vmul.f32 %v1696, %v3967
        %v3999 = vmul.f32 %v1701, %v3967
        %v4000 = vmul.f32 %v1704, %v3967
        %v4001 = vmul.f32 %v1709, %v3967
        %v4002 = vmul.f32 %v1712, %v3967
        %v4003 = vmul.f32 %v1717, %v3967
        %v4004 = vmul.f32 %v1720, %v3967
        %v4005 = vmul.f32 %v1725, %v3967
        %v4006 = vmul.f32 %v1728, %v3967
        %v4007 = vmul.f32 %v1733, %v3967
        %v4008 = vmul.f32 %v1736, %v3967
        %v4009 = vpack.c.bf16 %v3994, %v3993
        %v4010 = vpack.c.bf16 %v3996, %v3995
        %v4011 = vpack.c.bf16 %v3998, %v3997
        %v4012 = vpack.c.bf16 %v4000, %v3999
        %v4013 = vpack.c.bf16 %v4002, %v4001
        %v4014 = vpack.c.bf16 %v4004, %v4003
        %v4015 = vpack.c.bf16 %v4006, %v4005
        %v4016 = vpack.c.bf16 %v4008, %v4007
        %v4018 = vsel %vm1345, %v3985, 0
        %v4021 = vsel %vm1345, %v3986, 0
        %v4024 = vsel %vm1345, %v3987, 0
        %v4027 = vsel %vm1345, %v3988, 0
        %v4030 = vsel %vm1345, %v3989, 0
        %v4033 = vsel %vm1345, %v3990, 0
        %v4036 = vsel %vm1345, %v3991, 0
        %v4039 = vsel %vm1345, %v3992, 0
        %4041 = vmatprep.subr.bf16.mxu0 0
        %4042 = vmatpush1.bf16.xpose.msra.mxu0 %v1850
        %4043 = vmatprep.subr.bf16.mxu0 0
        %4044 = vmatpush1.bf16.xpose.msra.mxu0 %v1853
        %4045 = vmatprep.subr.bf16.mxu0 0
        %4046 = vmatpush1.bf16.xpose.msra.mxu0 %v1856
        %4047 = vmatprep.subr.bf16.mxu0 0
        %4048 = vmatpush1.bf16.xpose.msra.mxu0 %v1859
        %4049 = vmatprep.subr.bf16.mxu0 0
        %4050 = vmatpush1.bf16.xpose.msra.mxu0 %v1862
        %4051 = vmatprep.subr.bf16.mxu0 0
        %4052 = vmatpush1.bf16.xpose.msra.mxu0 %v1865
        %4053 = vmatprep.subr.bf16.mxu0 0
        %4054 = vmatpush1.bf16.xpose.msra.mxu0 %v1868
        %4055 = vmatprep.subr.bf16.mxu0 0
        %4056 = vmatpush1.bf16.xpose.msra.mxu0 %v1871
        %4057 = vmatprep.subr.bf16.mxu0 0
        %4058 = vmatpush1.bf16.xpose.msra.mxu0 0
        %4059 = vmatprep.subr.bf16.mxu0 0
        %4060 = vmatpush1.bf16.xpose.msra.mxu0 0
        %4061 = vmatprep.subr.bf16.mxu0 0
        %4062 = vmatpush1.bf16.xpose.msra.mxu0 0
        %4063 = vmatprep.subr.bf16.mxu0 0
        %4064 = vmatpush1.bf16.xpose.msra.mxu0 0
        %4065 = vmatprep.subr.bf16.mxu0 0
        %4066 = vmatpush1.bf16.xpose.msra.mxu0 0
        %4067 = vmatprep.subr.bf16.mxu0 0
        %4068 = vmatpush1.bf16.xpose.msra.mxu0 0
        %4069 = vmatprep.subr.bf16.mxu0 0
        %4070 = vmatpush1.bf16.xpose.msra.mxu0 0
        %4071 = vmatprep.subr.bf16.mxu0 0
        %4072 = vmatpush1.bf16.xpose.msra.mxu0 0
        %4073 = vmatprep.mubr.bf16.mxu0 0
        %4074 = vmatmul.mubr.bf16.gmra.mrb[0].mxu0 %v4018
        %v4075 = vpop.f32.mrb[0].mxu0
        %v4076 = vadd.f32 %v1747, %v4075
        %v4077 = vpop.f32.mrb[0].mxu0
        %v4078 = vpop.f32.mrb[0].mxu0
        %v4079 = vadd.f32 %v1748, %v4078
        %v4080 = vpop.f32.mrb[0].mxu0
        %4081 = vmatprep.mubr.bf16.mxu0 0
        %4082 = vmatmul.mubr.bf16.gmra.mrb[0].mxu0 %v4021
        %v4083 = vpop.f32.mrb[0].mxu0
        %v4084 = vadd.f32 %v1749, %v4083
        %v4085 = vpop.f32.mrb[0].mxu0
        %v4086 = vpop.f32.mrb[0].mxu0
        %v4087 = vadd.f32 %v1750, %v4086
        %v4088 = vpop.f32.mrb[0].mxu0
        %4089 = vmatprep.mubr.bf16.mxu0 0
        %4090 = vmatmul.mubr.bf16.gmra.mrb[0].mxu0 %v4024
        %v4091 = vpop.f32.mrb[0].mxu0
        %v4092 = vadd.f32 %v1751, %v4091
        %v4093 = vpop.f32.mrb[0].mxu0
        %v4094 = vpop.f32.mrb[0].mxu0
        %v4095 = vadd.f32 %v1752, %v4094
        %v4096 = vpop.f32.mrb[0].mxu0
        %4097 = vmatprep.mubr.bf16.mxu0 0
        %4098 = vmatmul.mubr.bf16.gmra.mrb[0].mxu0 %v4027
        %v4099 = vpop.f32.mrb[0].mxu0
        %v4100 = vadd.f32 %v1753, %v4099
        %v4101 = vpop.f32.mrb[0].mxu0
        %v4102 = vpop.f32.mrb[0].mxu0
        %v4103 = vadd.f32 %v1754, %v4102
        %v4104 = vpop.f32.mrb[0].mxu0
        %4105 = vmatprep.mubr.bf16.mxu0 0
        %4106 = vmatmul.mubr.bf16.gmra.mrb[0].mxu0 %v4030
        %v4107 = vpop.f32.mrb[0].mxu0
        %v4108 = vadd.f32 %v1755, %v4107
        %v4109 = vpop.f32.mrb[0].mxu0
        %v4110 = vpop.f32.mrb[0].mxu0
        %v4111 = vadd.f32 %v1756, %v4110
        %v4112 = vpop.f32.mrb[0].mxu0
        %4113 = vmatprep.mubr.bf16.mxu0 0
        %4114 = vmatmul.mubr.bf16.gmra.mrb[0].mxu0 %v4033
        %v4115 = vpop.f32.mrb[0].mxu0
        %v4116 = vadd.f32 %v1757, %v4115
        %v4117 = vpop.f32.mrb[0].mxu0
        %v4118 = vpop.f32.mrb[0].mxu0
        %v4119 = vadd.f32 %v1758, %v4118
        %v4120 = vpop.f32.mrb[0].mxu0
        %4121 = vmatprep.mubr.bf16.mxu0 0
        %4122 = vmatmul.mubr.bf16.gmra.mrb[0].mxu0 %v4036
        %v4123 = vpop.f32.mrb[0].mxu0
        %v4124 = vadd.f32 %v1759, %v4123
        %v4125 = vpop.f32.mrb[0].mxu0
        %v4126 = vpop.f32.mrb[0].mxu0
        %v4127 = vadd.f32 %v1760, %v4126
        %v4128 = vpop.f32.mrb[0].mxu0
        %4129 = vmatprep.mubr.bf16.mxu0 0
        %4130 = vmatmul.mubr.bf16.gmra.mrb[0].mxu0 %v4039
        %v4131 = vpop.f32.mrb[0].mxu0
        %v4132 = vadd.f32 %v1761, %v4131
        %v4133 = vpop.f32.mrb[0].mxu0
        %v4134 = vpop.f32.mrb[0].mxu0
        %v4135 = vadd.f32 %v1762, %v4134
        %v4136 = vpop.f32.mrb[0].mxu0
        %4137 = vdwg.mxu0
        %4138 = vmax.xlane.f32.xlu0 %v4076
        %v4139 = vpop.xlane.xlu0 %4138
        %4140 = vmax.xlane.f32.xlu0 %v4079
        %v4141 = vpop.xlane.xlu0 %4140
        %4142 = vmax.xlane.f32.xlu0 %v4084
        %v4143 = vpop.xlane.xlu0 %4142
        %4144 = vmax.xlane.f32.xlu0 %v4087
        %v4145 = vpop.xlane.xlu0 %4144
        %4146 = vmax.xlane.f32.xlu0 %v4092
        %v4147 = vpop.xlane.xlu0 %4146
        %4148 = vmax.xlane.f32.xlu0 %v4095
        %v4149 = vpop.xlane.xlu0 %4148
        %4150 = vmax.xlane.f32.xlu0 %v4100
        %v4151 = vpop.xlane.xlu0 %4150
        %4152 = vmax.xlane.f32.xlu0 %v4103
        %v4153 = vpop.xlane.xlu0 %4152
        %4154 = vmax.xlane.f32.xlu0 %v4108
        %v4155 = vpop.xlane.xlu0 %4154
        %4156 = vmax.xlane.f32.xlu0 %v4111
        %v4157 = vpop.xlane.xlu0 %4156
        %4158 = vmax.xlane.f32.xlu0 %v4116
        %v4159 = vpop.xlane.xlu0 %4158
        %4160 = vmax.xlane.f32.xlu0 %v4119
        %v4161 = vpop.xlane.xlu0 %4160
        %4162 = vmax.xlane.f32.xlu0 %v4124
        %v4163 = vpop.xlane.xlu0 %4162
        %4164 = vmax.xlane.f32.xlu0 %v4127
        %v4165 = vpop.xlane.xlu0 %4164
        %4166 = vmax.xlane.f32.xlu0 %v4132
        %v4167 = vpop.xlane.xlu0 %4166
        %4168 = vmax.xlane.f32.xlu0 %v4135
        %v4169 = vpop.xlane.xlu0 %4168
        %v4170 = vsub.f32 %v4076, %v4139
        %v4171 = vsub.f32 %v4079, %v4141
        %v4172 = vsub.f32 %v4084, %v4143
        %v4173 = vsub.f32 %v4087, %v4145
        %v4174 = vsub.f32 %v4092, %v4147
        %v4175 = vsub.f32 %v4095, %v4149
        %v4176 = vsub.f32 %v4100, %v4151
        %v4177 = vsub.f32 %v4103, %v4153
        %v4178 = vsub.f32 %v4108, %v4155
        %v4179 = vsub.f32 %v4111, %v4157
        %v4180 = vsub.f32 %v4116, %v4159
        %v4181 = vsub.f32 %v4119, %v4161
        %v4182 = vsub.f32 %v4124, %v4163
        %v4183 = vsub.f32 %v4127, %v4165
        %v4184 = vsub.f32 %v4132, %v4167
        %v4185 = vsub.f32 %v4135, %v4169
        %v4186 = vmul.f32 %v4170, 1.442695
        %v4187 = vpow.pop %v4186
        %v4188 = vmul.f32 %v4171, 1.442695
        %v4189 = vpow.pop %v4188
        %v4190 = vmul.f32 %v4172, 1.442695
        %v4191 = vpow.pop %v4190
        %v4192 = vmul.f32 %v4173, 1.442695
        %v4193 = vpow.pop %v4192
        %v4194 = vmul.f32 %v4174, 1.442695
        %v4195 = vpow.pop %v4194
        %v4196 = vmul.f32 %v4175, 1.442695
        %v4197 = vpow.pop %v4196
        %v4198 = vmul.f32 %v4176, 1.442695
        %v4199 = vpow.pop %v4198
        %v4200 = vmul.f32 %v4177, 1.442695
        %v4201 = vpow.pop %v4200
        %v4202 = vmul.f32 %v4178, 1.442695
        %v4203 = vpow.pop %v4202
        %v4204 = vmul.f32 %v4179, 1.442695
        %v4205 = vpow.pop %v4204
        %v4206 = vmul.f32 %v4180, 1.442695
        %v4207 = vpow.pop %v4206
        %v4208 = vmul.f32 %v4181, 1.442695
        %v4209 = vpow.pop %v4208
        %v4210 = vmul.f32 %v4182, 1.442695
        %v4211 = vpow.pop %v4210
        %v4212 = vmul.f32 %v4183, 1.442695
        %v4213 = vpow.pop %v4212
        %v4214 = vmul.f32 %v4184, 1.442695
        %v4215 = vpow.pop %v4214
        %v4216 = vmul.f32 %v4185, 1.442695
        %v4217 = vpow.pop %v4216
        %4218 = vadd.xlane.f32.xlu0 %v4187
        %v4219 = vpop.xlane.xlu0 %4218
        %4220 = vadd.xlane.f32.xlu0 %v4189
        %v4221 = vpop.xlane.xlu0 %4220
        %4222 = vadd.xlane.f32.xlu0 %v4191
        %v4223 = vpop.xlane.xlu0 %4222
        %4224 = vadd.xlane.f32.xlu0 %v4193
        %v4225 = vpop.xlane.xlu0 %4224
        %4226 = vadd.xlane.f32.xlu0 %v4195
        %v4227 = vpop.xlane.xlu0 %4226
        %4228 = vadd.xlane.f32.xlu0 %v4197
        %v4229 = vpop.xlane.xlu0 %4228
        %4230 = vadd.xlane.f32.xlu0 %v4199
        %v4231 = vpop.xlane.xlu0 %4230
        %4232 = vadd.xlane.f32.xlu0 %v4201
        %v4233 = vpop.xlane.xlu0 %4232
        %4234 = vadd.xlane.f32.xlu0 %v4203
        %v4235 = vpop.xlane.xlu0 %4234
        %4236 = vadd.xlane.f32.xlu0 %v4205
        %v4237 = vpop.xlane.xlu0 %4236
        %4238 = vadd.xlane.f32.xlu0 %v4207
        %v4239 = vpop.xlane.xlu0 %4238
        %4240 = vadd.xlane.f32.xlu0 %v4209
        %v4241 = vpop.xlane.xlu0 %4240
        %4242 = vadd.xlane.f32.xlu0 %v4211
        %v4243 = vpop.xlane.xlu0 %4242
        %4244 = vadd.xlane.f32.xlu0 %v4213
        %v4245 = vpop.xlane.xlu0 %4244
        %4246 = vadd.xlane.f32.xlu0 %v4215
        %v4247 = vpop.xlane.xlu0 %4246
        %4248 = vadd.xlane.f32.xlu0 %v4217
        %v4249 = vpop.xlane.xlu0 %4248
        %v4250 = vrcp.pop %v4219
        %v4251 = vrcp.pop %v4221
        %v4252 = vrcp.pop %v4223
        %v4253 = vrcp.pop %v4225
        %v4254 = vrcp.pop %v4227
        %v4255 = vrcp.pop %v4229
        %v4256 = vrcp.pop %v4231
        %v4257 = vrcp.pop %v4233
        %v4258 = vrcp.pop %v4235
        %v4259 = vrcp.pop %v4237
        %v4260 = vrcp.pop %v4239
        %v4261 = vrcp.pop %v4241
        %v4262 = vrcp.pop %v4243
        %v4263 = vrcp.pop %v4245
        %v4264 = vrcp.pop %v4247
        %v4265 = vrcp.pop %v4249
        %v4266 = vmul.f32 %v4187, %v4250
        %v4267 = vmul.f32 %v4189, %v4251
        %v4268 = vmul.f32 %v4191, %v4252
        %v4269 = vmul.f32 %v4193, %v4253
        %v4270 = vmul.f32 %v4195, %v4254
        %v4271 = vmul.f32 %v4197, %v4255
        %v4272 = vmul.f32 %v4199, %v4256
        %v4273 = vmul.f32 %v4201, %v4257
        %v4274 = vmul.f32 %v4203, %v4258
        %v4275 = vmul.f32 %v4205, %v4259
        %v4276 = vmul.f32 %v4207, %v4260
        %v4277 = vmul.f32 %v4209, %v4261
        %v4278 = vmul.f32 %v4211, %v4262
        %v4279 = vmul.f32 %v4213, %v4263
        %v4280 = vmul.f32 %v4215, %v4264
        %v4281 = vmul.f32 %v4217, %v4265
        %v4282 = vpack.c.bf16 %v4267, %v4266
        %v4283 = vpack.c.bf16 %v4269, %v4268
        %v4284 = vpack.c.bf16 %v4271, %v4270
        %v4285 = vpack.c.bf16 %v4273, %v4272
        %v4286 = vpack.c.bf16 %v4275, %v4274
        %v4287 = vpack.c.bf16 %v4277, %v4276
        %v4288 = vpack.c.bf16 %v4279, %v4278
        %v4289 = vpack.c.bf16 %v4281, %v4280
        %4290 = vmatprep.subr.bf16.mxu0 0
        %4291 = vmatpush1.bf16.msra.mxu0 %v4009
        %4292 = vmatprep.subr.bf16.mxu0 0
        %4293 = vmatpush1.bf16.msra.mxu0 %v4010
        %4294 = vmatprep.subr.bf16.mxu0 0
        %4295 = vmatpush1.bf16.msra.mxu0 %v4011
        %4296 = vmatprep.subr.bf16.mxu0 0
        %4297 = vmatpush1.bf16.msra.mxu0 %v4012
        %4298 = vmatprep.subr.bf16.mxu0 0
        %4299 = vmatpush1.bf16.msra.mxu0 %v4013
        %4300 = vmatprep.subr.bf16.mxu0 0
        %4301 = vmatpush1.bf16.msra.mxu0 %v4014
        %4302 = vmatprep.subr.bf16.mxu0 0
        %4303 = vmatpush1.bf16.msra.mxu0 %v4015
        %4304 = vmatprep.subr.bf16.mxu0 0
        %4305 = vmatpush1.bf16.msra.mxu0 %v4016
        %4306 = vmatprep.subr.bf16.mxu0 0
        %4307 = vmatpush1.bf16.msra.mxu0 0
        %4308 = vmatprep.subr.bf16.mxu0 0
        %4309 = vmatpush1.bf16.msra.mxu0 0
        %4310 = vmatprep.subr.bf16.mxu0 0
        %4311 = vmatpush1.bf16.msra.mxu0 0
        %4312 = vmatprep.subr.bf16.mxu0 0
        %4313 = vmatpush1.bf16.msra.mxu0 0
        %4314 = vmatprep.subr.bf16.mxu0 0
        %4315 = vmatpush1.bf16.msra.mxu0 0
        %4316 = vmatprep.subr.bf16.mxu0 0
        %4317 = vmatpush1.bf16.msra.mxu0 0
        %4318 = vmatprep.subr.bf16.mxu0 0
        %4319 = vmatpush1.bf16.msra.mxu0 0
        %4320 = vmatprep.subr.bf16.mxu0 0
        %4321 = vmatpush1.bf16.msra.mxu0 0
        %4322 = vmatprep.mubr.bf16.mxu0 0
        %4323 = vmatmul.mubr.bf16.gmra.mrb[0].mxu0 %v4282
        %v4324 = vpop.f32.mrb[0].mxu0
        %v4325 = vadd.f32 0.0, %v4324
        %v4326 = vpop.f32.mrb[0].mxu0
        %v4327 = vpop.f32.mrb[0].mxu0
        %v4328 = vadd.f32 0.0, %v4327
        %v4329 = vpop.f32.mrb[0].mxu0
        %4330 = vmatprep.mubr.bf16.mxu0 0
        %4331 = vmatmul.mubr.bf16.gmra.mrb[0].mxu0 %v4283
        %v4332 = vpop.f32.mrb[0].mxu0
        %v4333 = vadd.f32 0.0, %v4332
        %v4334 = vpop.f32.mrb[0].mxu0
        %v4335 = vpop.f32.mrb[0].mxu0
        %v4336 = vadd.f32 0.0, %v4335
        %v4337 = vpop.f32.mrb[0].mxu0
        %4338 = vmatprep.mubr.bf16.mxu0 0
        %4339 = vmatmul.mubr.bf16.gmra.mrb[0].mxu0 %v4284
        %v4340 = vpop.f32.mrb[0].mxu0
        %v4341 = vadd.f32 0.0, %v4340
        %v4342 = vpop.f32.mrb[0].mxu0
        %v4343 = vpop.f32.mrb[0].mxu0
        %v4344 = vadd.f32 0.0, %v4343
        %v4345 = vpop.f32.mrb[0].mxu0
        %4346 = vmatprep.mubr.bf16.mxu0 0
        %4347 = vmatmul.mubr.bf16.gmra.mrb[0].mxu0 %v4285
        %v4348 = vpop.f32.mrb[0].mxu0
        %v4349 = vadd.f32 0.0, %v4348
        %v4350 = vpop.f32.mrb[0].mxu0
        %v4351 = vpop.f32.mrb[0].mxu0
        %v4352 = vadd.f32 0.0, %v4351
        %v4353 = vpop.f32.mrb[0].mxu0
        %4354 = vmatprep.mubr.bf16.mxu0 0
        %4355 = vmatmul.mubr.bf16.gmra.mrb[0].mxu0 %v4286
        %v4356 = vpop.f32.mrb[0].mxu0
        %v4357 = vadd.f32 0.0, %v4356
        %v4358 = vpop.f32.mrb[0].mxu0
        %v4359 = vpop.f32.mrb[0].mxu0
        %v4360 = vadd.f32 0.0, %v4359
        %v4361 = vpop.f32.mrb[0].mxu0
        %4362 = vmatprep.mubr.bf16.mxu0 0
        %4363 = vmatmul.mubr.bf16.gmra.mrb[0].mxu0 %v4287
        %v4364 = vpop.f32.mrb[0].mxu0
        %v4365 = vadd.f32 0.0, %v4364
        %v4366 = vpop.f32.mrb[0].mxu0
        %v4367 = vpop.f32.mrb[0].mxu0
        %v4368 = vadd.f32 0.0, %v4367
        %v4369 = vpop.f32.mrb[0].mxu0
        %4370 = vmatprep.mubr.bf16.mxu0 0
        %4371 = vmatmul.mubr.bf16.gmra.mrb[0].mxu0 %v4288
        %v4372 = vpop.f32.mrb[0].mxu0
        %v4373 = vadd.f32 0.0, %v4372
        %v4374 = vpop.f32.mrb[0].mxu0
        %v4375 = vpop.f32.mrb[0].mxu0
        %v4376 = vadd.f32 0.0, %v4375
        %v4377 = vpop.f32.mrb[0].mxu0
        %4378 = vmatprep.mubr.bf16.mxu0 0
        %4379 = vmatmul.mubr.bf16.gmra.mrb[0].mxu0 %v4289
        %v4380 = vpop.f32.mrb[0].mxu0
        %v4381 = vadd.f32 0.0, %v4380
        %v4382 = vpop.f32.mrb[0].mxu0
        %v4383 = vpop.f32.mrb[0].mxu0
        %v4384 = vadd.f32 0.0, %v4383
        %v4385 = vpop.f32.mrb[0].mxu0
        %4386 = vdwg.mxu0
        %v4387 = vadd.f32 %v3947, %v4325
        %v4388 = vadd.f32 %v3948, %v4328
        %v4389 = vadd.f32 %v3949, %v4333
        %v4390 = vadd.f32 %v3950, %v4336
        %v4391 = vadd.f32 %v3951, %v4341
        %v4392 = vadd.f32 %v3952, %v4344
        %v4393 = vadd.f32 %v3953, %v4349
        %v4394 = vadd.f32 %v3954, %v4352
        %v4395 = vadd.f32 %v3955, %v4357
        %v4396 = vadd.f32 %v3956, %v4360
        %v4397 = vadd.f32 %v3957, %v4365
        %v4398 = vadd.f32 %v3958, %v4368
        %v4399 = vadd.f32 %v3959, %v4373
        %v4400 = vadd.f32 %v3960, %v4376
        %v4401 = vadd.f32 %v3961, %v4381
        %v4402 = vadd.f32 %v3962, %v4384
        %v4404 = vlaneseq
        %v4405 = vshrl.u32 %v4404, 7
        %v4406 = vsub.s32 0, %v4405
        %v4407 = vrot.slane %v1769, %v4406
        %v4409 = vmul.f32 %v1405, %v4407
        %v4410 = vmul.f32 %v1408, %v4407
        %v4411 = vmul.f32 %v1413, %v4407
        %v4412 = vmul.f32 %v1416, %v4407
        %v4413 = vmul.f32 %v1421, %v4407
        %v4414 = vmul.f32 %v1424, %v4407
        %v4415 = vmul.f32 %v1429, %v4407
        %v4416 = vmul.f32 %v1432, %v4407
        %v4417 = vmul.f32 %v1437, %v4407
        %v4418 = vmul.f32 %v1440, %v4407
        %v4419 = vmul.f32 %v1445, %v4407
        %v4420 = vmul.f32 %v1448, %v4407
        %v4421 = vmul.f32 %v1453, %v4407
        %v4422 = vmul.f32 %v1456, %v4407
        %v4423 = vmul.f32 %v1461, %v4407
        %v4424 = vmul.f32 %v1464, %v4407
        %v4425 = vpack.c.bf16 %v4410, %v4409
        %v4426 = vpack.c.bf16 %v4412, %v4411
        %v4427 = vpack.c.bf16 %v4414, %v4413
        %v4428 = vpack.c.bf16 %v4416, %v4415
        %v4429 = vpack.c.bf16 %v4418, %v4417
        %v4430 = vpack.c.bf16 %v4420, %v4419
        %v4431 = vpack.c.bf16 %v4422, %v4421
        %v4432 = vpack.c.bf16 %v4424, %v4423
        %v4433 = vmul.f32 %v1677, %v4407
        %v4434 = vmul.f32 %v1680, %v4407
        %v4435 = vmul.f32 %v1685, %v4407
        %v4436 = vmul.f32 %v1688, %v4407
        %v4437 = vmul.f32 %v1693, %v4407
        %v4438 = vmul.f32 %v1696, %v4407
        %v4439 = vmul.f32 %v1701, %v4407
        %v4440 = vmul.f32 %v1704, %v4407
        %v4441 = vmul.f32 %v1709, %v4407
        %v4442 = vmul.f32 %v1712, %v4407
        %v4443 = vmul.f32 %v1717, %v4407
        %v4444 = vmul.f32 %v1720, %v4407
        %v4445 = vmul.f32 %v1725, %v4407
        %v4446 = vmul.f32 %v1728, %v4407
        %v4447 = vmul.f32 %v1733, %v4407
        %v4448 = vmul.f32 %v1736, %v4407
        %v4449 = vpack.c.bf16 %v4434, %v4433
        %v4450 = vpack.c.bf16 %v4436, %v4435
        %v4451 = vpack.c.bf16 %v4438, %v4437
        %v4452 = vpack.c.bf16 %v4440, %v4439
        %v4453 = vpack.c.bf16 %v4442, %v4441
        %v4454 = vpack.c.bf16 %v4444, %v4443
        %v4455 = vpack.c.bf16 %v4446, %v4445
        %v4456 = vpack.c.bf16 %v4448, %v4447
        %v4458 = vsel %vm1345, %v4425, 0
        %v4461 = vsel %vm1345, %v4426, 0
        %v4464 = vsel %vm1345, %v4427, 0
        %v4467 = vsel %vm1345, %v4428, 0
        %v4470 = vsel %vm1345, %v4429, 0
        %v4473 = vsel %vm1345, %v4430, 0
        %v4476 = vsel %vm1345, %v4431, 0
        %v4479 = vsel %vm1345, %v4432, 0
        %4481 = vmatprep.subr.bf16.mxu0 0
        %4482 = vmatpush1.bf16.xpose.msra.mxu0 %v1850
        %4483 = vmatprep.subr.bf16.mxu0 0
        %4484 = vmatpush1.bf16.xpose.msra.mxu0 %v1853
        %4485 = vmatprep.subr.bf16.mxu0 0
        %4486 = vmatpush1.bf16.xpose.msra.mxu0 %v1856
        %4487 = vmatprep.subr.bf16.mxu0 0
        %4488 = vmatpush1.bf16.xpose.msra.mxu0 %v1859
        %4489 = vmatprep.subr.bf16.mxu0 0
        %4490 = vmatpush1.bf16.xpose.msra.mxu0 %v1862
        %4491 = vmatprep.subr.bf16.mxu0 0
        %4492 = vmatpush1.bf16.xpose.msra.mxu0 %v1865
        %4493 = vmatprep.subr.bf16.mxu0 0
        %4494 = vmatpush1.bf16.xpose.msra.mxu0 %v1868
        %4495 = vmatprep.subr.bf16.mxu0 0
        %4496 = vmatpush1.bf16.xpose.msra.mxu0 %v1871
        %4497 = vmatprep.subr.bf16.mxu0 0
        %4498 = vmatpush1.bf16.xpose.msra.mxu0 0
        %4499 = vmatprep.subr.bf16.mxu0 0
        %4500 = vmatpush1.bf16.xpose.msra.mxu0 0
        %4501 = vmatprep.subr.bf16.mxu0 0
        %4502 = vmatpush1.bf16.xpose.msra.mxu0 0
        %4503 = vmatprep.subr.bf16.mxu0 0
        %4504 = vmatpush1.bf16.xpose.msra.mxu0 0
        %4505 = vmatprep.subr.bf16.mxu0 0
        %4506 = vmatpush1.bf16.xpose.msra.mxu0 0
        %4507 = vmatprep.subr.bf16.mxu0 0
        %4508 = vmatpush1.bf16.xpose.msra.mxu0 0
        %4509 = vmatprep.subr.bf16.mxu0 0
        %4510 = vmatpush1.bf16.xpose.msra.mxu0 0
        %4511 = vmatprep.subr.bf16.mxu0 0
        %4512 = vmatpush1.bf16.xpose.msra.mxu0 0
        %4513 = vmatprep.mubr.bf16.mxu0 0
        %4514 = vmatmul.mubr.bf16.gmra.mrb[0].mxu0 %v4458
        %v4515 = vpop.f32.mrb[0].mxu0
        %v4516 = vadd.f32 %v1747, %v4515
        %v4517 = vpop.f32.mrb[0].mxu0
        %v4518 = vpop.f32.mrb[0].mxu0
        %v4519 = vadd.f32 %v1748, %v4518
        %v4520 = vpop.f32.mrb[0].mxu0
        %4521 = vmatprep.mubr.bf16.mxu0 0
        %4522 = vmatmul.mubr.bf16.gmra.mrb[0].mxu0 %v4461
        %v4523 = vpop.f32.mrb[0].mxu0
        %v4524 = vadd.f32 %v1749, %v4523
        %v4525 = vpop.f32.mrb[0].mxu0
        %v4526 = vpop.f32.mrb[0].mxu0
        %v4527 = vadd.f32 %v1750, %v4526
        %v4528 = vpop.f32.mrb[0].mxu0
        %4529 = vmatprep.mubr.bf16.mxu0 0
        %4530 = vmatmul.mubr.bf16.gmra.mrb[0].mxu0 %v4464
        %v4531 = vpop.f32.mrb[0].mxu0
        %v4532 = vadd.f32 %v1751, %v4531
        %v4533 = vpop.f32.mrb[0].mxu0
        %v4534 = vpop.f32.mrb[0].mxu0
        %v4535 = vadd.f32 %v1752, %v4534
        %v4536 = vpop.f32.mrb[0].mxu0
        %4537 = vmatprep.mubr.bf16.mxu0 0
        %4538 = vmatmul.mubr.bf16.gmra.mrb[0].mxu0 %v4467
        %v4539 = vpop.f32.mrb[0].mxu0
        %v4540 = vadd.f32 %v1753, %v4539
        %v4541 = vpop.f32.mrb[0].mxu0
        %v4542 = vpop.f32.mrb[0].mxu0
        %v4543 = vadd.f32 %v1754, %v4542
        %v4544 = vpop.f32.mrb[0].mxu0
        %4545 = vmatprep.mubr.bf16.mxu0 0
        %4546 = vmatmul.mubr.bf16.gmra.mrb[0].mxu0 %v4470
        %v4547 = vpop.f32.mrb[0].mxu0
        %v4548 = vadd.f32 %v1755, %v4547
        %v4549 = vpop.f32.mrb[0].mxu0
        %v4550 = vpop.f32.mrb[0].mxu0
        %v4551 = vadd.f32 %v1756, %v4550
        %v4552 = vpop.f32.mrb[0].mxu0
        %4553 = vmatprep.mubr.bf16.mxu0 0
        %4554 = vmatmul.mubr.bf16.gmra.mrb[0].mxu0 %v4473
        %v4555 = vpop.f32.mrb[0].mxu0
        %v4556 = vadd.f32 %v1757, %v4555
        %v4557 = vpop.f32.mrb[0].mxu0
        %v4558 = vpop.f32.mrb[0].mxu0
        %v4559 = vadd.f32 %v1758, %v4558
        %v4560 = vpop.f32.mrb[0].mxu0
        %4561 = vmatprep.mubr.bf16.mxu0 0
        %4562 = vmatmul.mubr.bf16.gmra.mrb[0].mxu0 %v4476
        %v4563 = vpop.f32.mrb[0].mxu0
        %v4564 = vadd.f32 %v1759, %v4563
        %v4565 = vpop.f32.mrb[0].mxu0
        %v4566 = vpop.f32.mrb[0].mxu0
        %v4567 = vadd.f32 %v1760, %v4566
        %v4568 = vpop.f32.mrb[0].mxu0
        %4569 = vmatprep.mubr.bf16.mxu0 0
        %4570 = vmatmul.mubr.bf16.gmra.mrb[0].mxu0 %v4479
        %v4571 = vpop.f32.mrb[0].mxu0
        %v4572 = vadd.f32 %v1761, %v4571
        %v4573 = vpop.f32.mrb[0].mxu0
        %v4574 = vpop.f32.mrb[0].mxu0
        %v4575 = vadd.f32 %v1762, %v4574
        %v4576 = vpop.f32.mrb[0].mxu0
        %4577 = vdwg.mxu0
        %4578 = vmax.xlane.f32.xlu0 %v4516
        %v4579 = vpop.xlane.xlu0 %4578
        %4580 = vmax.xlane.f32.xlu0 %v4519
        %v4581 = vpop.xlane.xlu0 %4580
        %4582 = vmax.xlane.f32.xlu0 %v4524
        %v4583 = vpop.xlane.xlu0 %4582
        %4584 = vmax.xlane.f32.xlu0 %v4527
        %v4585 = vpop.xlane.xlu0 %4584
        %4586 = vmax.xlane.f32.xlu0 %v4532
        %v4587 = vpop.xlane.xlu0 %4586
        %4588 = vmax.xlane.f32.xlu0 %v4535
        %v4589 = vpop.xlane.xlu0 %4588
        %4590 = vmax.xlane.f32.xlu0 %v4540
        %v4591 = vpop.xlane.xlu0 %4590
        %4592 = vmax.xlane.f32.xlu0 %v4543
        %v4593 = vpop.xlane.xlu0 %4592
        %4594 = vmax.xlane.f32.xlu0 %v4548
        %v4595 = vpop.xlane.xlu0 %4594
        %4596 = vmax.xlane.f32.xlu0 %v4551
        %v4597 = vpop.xlane.xlu0 %4596
        %4598 = vmax.xlane.f32.xlu0 %v4556
        %v4599 = vpop.xlane.xlu0 %4598
        %4600 = vmax.xlane.f32.xlu0 %v4559
        %v4601 = vpop.xlane.xlu0 %4600
        %4602 = vmax.xlane.f32.xlu0 %v4564
        %v4603 = vpop.xlane.xlu0 %4602
        %4604 = vmax.xlane.f32.xlu0 %v4567
        %v4605 = vpop.xlane.xlu0 %4604
        %4606 = vmax.xlane.f32.xlu0 %v4572
        %v4607 = vpop.xlane.xlu0 %4606
        %4608 = vmax.xlane.f32.xlu0 %v4575
        %v4609 = vpop.xlane.xlu0 %4608
        %v4610 = vsub.f32 %v4516, %v4579
        %v4611 = vsub.f32 %v4519, %v4581
        %v4612 = vsub.f32 %v4524, %v4583
        %v4613 = vsub.f32 %v4527, %v4585
        %v4614 = vsub.f32 %v4532, %v4587
        %v4615 = vsub.f32 %v4535, %v4589
        %v4616 = vsub.f32 %v4540, %v4591
        %v4617 = vsub.f32 %v4543, %v4593
        %v4618 = vsub.f32 %v4548, %v4595
        %v4619 = vsub.f32 %v4551, %v4597
        %v4620 = vsub.f32 %v4556, %v4599
        %v4621 = vsub.f32 %v4559, %v4601
        %v4622 = vsub.f32 %v4564, %v4603
        %v4623 = vsub.f32 %v4567, %v4605
        %v4624 = vsub.f32 %v4572, %v4607
        %v4625 = vsub.f32 %v4575, %v4609
        %v4626 = vmul.f32 %v4610, 1.442695
        %v4627 = vpow.pop %v4626
        %v4628 = vmul.f32 %v4611, 1.442695
        %v4629 = vpow.pop %v4628
        %v4630 = vmul.f32 %v4612, 1.442695
        %v4631 = vpow.pop %v4630
        %v4632 = vmul.f32 %v4613, 1.442695
        %v4633 = vpow.pop %v4632
        %v4634 = vmul.f32 %v4614, 1.442695
        %v4635 = vpow.pop %v4634
        %v4636 = vmul.f32 %v4615, 1.442695
        %v4637 = vpow.pop %v4636
        %v4638 = vmul.f32 %v4616, 1.442695
        %v4639 = vpow.pop %v4638
        %v4640 = vmul.f32 %v4617, 1.442695
        %v4641 = vpow.pop %v4640
        %v4642 = vmul.f32 %v4618, 1.442695
        %v4643 = vpow.pop %v4642
        %v4644 = vmul.f32 %v4619, 1.442695
        %v4645 = vpow.pop %v4644
        %v4646 = vmul.f32 %v4620, 1.442695
        %v4647 = vpow.pop %v4646
        %v4648 = vmul.f32 %v4621, 1.442695
        %v4649 = vpow.pop %v4648
        %v4650 = vmul.f32 %v4622, 1.442695
        %v4651 = vpow.pop %v4650
        %v4652 = vmul.f32 %v4623, 1.442695
        %v4653 = vpow.pop %v4652
        %v4654 = vmul.f32 %v4624, 1.442695
        %v4655 = vpow.pop %v4654
        %v4656 = vmul.f32 %v4625, 1.442695
        %v4657 = vpow.pop %v4656
        %4658 = vadd.xlane.f32.xlu0 %v4627
        %v4659 = vpop.xlane.xlu0 %4658
        %4660 = vadd.xlane.f32.xlu0 %v4629
        %v4661 = vpop.xlane.xlu0 %4660
        %4662 = vadd.xlane.f32.xlu0 %v4631
        %v4663 = vpop.xlane.xlu0 %4662
        %4664 = vadd.xlane.f32.xlu0 %v4633
        %v4665 = vpop.xlane.xlu0 %4664
        %4666 = vadd.xlane.f32.xlu0 %v4635
        %v4667 = vpop.xlane.xlu0 %4666
        %4668 = vadd.xlane.f32.xlu0 %v4637
        %v4669 = vpop.xlane.xlu0 %4668
        %4670 = vadd.xlane.f32.xlu0 %v4639
        %v4671 = vpop.xlane.xlu0 %4670
        %4672 = vadd.xlane.f32.xlu0 %v4641
        %v4673 = vpop.xlane.xlu0 %4672
        %4674 = vadd.xlane.f32.xlu0 %v4643
        %v4675 = vpop.xlane.xlu0 %4674
        %4676 = vadd.xlane.f32.xlu0 %v4645
        %v4677 = vpop.xlane.xlu0 %4676
        %4678 = vadd.xlane.f32.xlu0 %v4647
        %v4679 = vpop.xlane.xlu0 %4678
        %4680 = vadd.xlane.f32.xlu0 %v4649
        %v4681 = vpop.xlane.xlu0 %4680
        %4682 = vadd.xlane.f32.xlu0 %v4651
        %v4683 = vpop.xlane.xlu0 %4682
        %4684 = vadd.xlane.f32.xlu0 %v4653
        %v4685 = vpop.xlane.xlu0 %4684
        %4686 = vadd.xlane.f32.xlu0 %v4655
        %v4687 = vpop.xlane.xlu0 %4686
        %4688 = vadd.xlane.f32.xlu0 %v4657
        %v4689 = vpop.xlane.xlu0 %4688
        %v4690 = vrcp.pop %v4659
        %v4691 = vrcp.pop %v4661
        %v4692 = vrcp.pop %v4663
        %v4693 = vrcp.pop %v4665
        %v4694 = vrcp.pop %v4667
        %v4695 = vrcp.pop %v4669
        %v4696 = vrcp.pop %v4671
        %v4697 = vrcp.pop %v4673
        %v4698 = vrcp.pop %v4675
        %v4699 = vrcp.pop %v4677
        %v4700 = vrcp.pop %v4679
        %v4701 = vrcp.pop %v4681
        %v4702 = vrcp.pop %v4683
        %v4703 = vrcp.pop %v4685
        %v4704 = vrcp.pop %v4687
        %v4705 = vrcp.pop %v4689
        %v4706 = vmul.f32 %v4627, %v4690
        %v4707 = vmul.f32 %v4629, %v4691
        %v4708 = vmul.f32 %v4631, %v4692
        %v4709 = vmul.f32 %v4633, %v4693
        %v4710 = vmul.f32 %v4635, %v4694
        %v4711 = vmul.f32 %v4637, %v4695
        %v4712 = vmul.f32 %v4639, %v4696
        %v4713 = vmul.f32 %v4641, %v4697
        %v4714 = vmul.f32 %v4643, %v4698
        %v4715 = vmul.f32 %v4645, %v4699
        %v4716 = vmul.f32 %v4647, %v4700
        %v4717 = vmul.f32 %v4649, %v4701
        %v4718 = vmul.f32 %v4651, %v4702
        %v4719 = vmul.f32 %v4653, %v4703
        %v4720 = vmul.f32 %v4655, %v4704
        %v4721 = vmul.f32 %v4657, %v4705
        %v4722 = vpack.c.bf16 %v4707, %v4706
        %v4723 = vpack.c.bf16 %v4709, %v4708
        %v4724 = vpack.c.bf16 %v4711, %v4710
        %v4725 = vpack.c.bf16 %v4713, %v4712
        %v4726 = vpack.c.bf16 %v4715, %v4714
        %v4727 = vpack.c.bf16 %v4717, %v4716
        %v4728 = vpack.c.bf16 %v4719, %v4718
        %v4729 = vpack.c.bf16 %v4721, %v4720
        %4730 = vmatprep.subr.bf16.mxu0 0
        %4731 = vmatpush1.bf16.msra.mxu0 %v4449
        %4732 = vmatprep.subr.bf16.mxu0 0
        %4733 = vmatpush1.bf16.msra.mxu0 %v4450
        %4734 = vmatprep.subr.bf16.mxu0 0
        %4735 = vmatpush1.bf16.msra.mxu0 %v4451
        %4736 = vmatprep.subr.bf16.mxu0 0
        %4737 = vmatpush1.bf16.msra.mxu0 %v4452
        %4738 = vmatprep.subr.bf16.mxu0 0
        %4739 = vmatpush1.bf16.msra.mxu0 %v4453
        %4740 = vmatprep.subr.bf16.mxu0 0
        %4741 = vmatpush1.bf16.msra.mxu0 %v4454
        %4742 = vmatprep.subr.bf16.mxu0 0
        %4743 = vmatpush1.bf16.msra.mxu0 %v4455
        %4744 = vmatprep.subr.bf16.mxu0 0
        %4745 = vmatpush1.bf16.msra.mxu0 %v4456
        %4746 = vmatprep.subr.bf16.mxu0 0
        %4747 = vmatpush1.bf16.msra.mxu0 0
        %4748 = vmatprep.subr.bf16.mxu0 0
        %4749 = vmatpush1.bf16.msra.mxu0 0
        %4750 = vmatprep.subr.bf16.mxu0 0
        %4751 = vmatpush1.bf16.msra.mxu0 0
        %4752 = vmatprep.subr.bf16.mxu0 0
        %4753 = vmatpush1.bf16.msra.mxu0 0
        %4754 = vmatprep.subr.bf16.mxu0 0
        %4755 = vmatpush1.bf16.msra.mxu0 0
        %4756 = vmatprep.subr.bf16.mxu0 0
        %4757 = vmatpush1.bf16.msra.mxu0 0
        %4758 = vmatprep.subr.bf16.mxu0 0
        %4759 = vmatpush1.bf16.msra.mxu0 0
        %4760 = vmatprep.subr.bf16.mxu0 0
        %4761 = vmatpush1.bf16.msra.mxu0 0
        %4762 = vmatprep.mubr.bf16.mxu0 0
        %4763 = vmatmul.mubr.bf16.gmra.mrb[0].mxu0 %v4722
        %v4764 = vpop.f32.mrb[0].mxu0
        %v4765 = vadd.f32 0.0, %v4764
        %v4766 = vpop.f32.mrb[0].mxu0
        %v4767 = vpop.f32.mrb[0].mxu0
        %v4768 = vadd.f32 0.0, %v4767
        %v4769 = vpop.f32.mrb[0].mxu0
        %4770 = vmatprep.mubr.bf16.mxu0 0
        %4771 = vmatmul.mubr.bf16.gmra.mrb[0].mxu0 %v4723
        %v4772 = vpop.f32.mrb[0].mxu0
        %v4773 = vadd.f32 0.0, %v4772
        %v4774 = vpop.f32.mrb[0].mxu0
        %v4775 = vpop.f32.mrb[0].mxu0
        %v4776 = vadd.f32 0.0, %v4775
        %v4777 = vpop.f32.mrb[0].mxu0
        %4778 = vmatprep.mubr.bf16.mxu0 0
        %4779 = vmatmul.mubr.bf16.gmra.mrb[0].mxu0 %v4724
        %v4780 = vpop.f32.mrb[0].mxu0
        %v4781 = vadd.f32 0.0, %v4780
        %v4782 = vpop.f32.mrb[0].mxu0
        %v4783 = vpop.f32.mrb[0].mxu0
        %v4784 = vadd.f32 0.0, %v4783
        %v4785 = vpop.f32.mrb[0].mxu0
        %4786 = vmatprep.mubr.bf16.mxu0 0
        %4787 = vmatmul.mubr.bf16.gmra.mrb[0].mxu0 %v4725
        %v4788 = vpop.f32.mrb[0].mxu0
        %v4789 = vadd.f32 0.0, %v4788
        %v4790 = vpop.f32.mrb[0].mxu0
        %v4791 = vpop.f32.mrb[0].mxu0
        %v4792 = vadd.f32 0.0, %v4791
        %v4793 = vpop.f32.mrb[0].mxu0
        %4794 = vmatprep.mubr.bf16.mxu0 0
        %4795 = vmatmul.mubr.bf16.gmra.mrb[0].mxu0 %v4726
        %v4796 = vpop.f32.mrb[0].mxu0
        %v4797 = vadd.f32 0.0, %v4796
        %v4798 = vpop.f32.mrb[0].mxu0
        %v4799 = vpop.f32.mrb[0].mxu0
        %v4800 = vadd.f32 0.0, %v4799
        %v4801 = vpop.f32.mrb[0].mxu0
        %4802 = vmatprep.mubr.bf16.mxu0 0
        %4803 = vmatmul.mubr.bf16.gmra.mrb[0].mxu0 %v4727
        %v4804 = vpop.f32.mrb[0].mxu0
        %v4805 = vadd.f32 0.0, %v4804
        %v4806 = vpop.f32.mrb[0].mxu0
        %v4807 = vpop.f32.mrb[0].mxu0
        %v4808 = vadd.f32 0.0, %v4807
        %v4809 = vpop.f32.mrb[0].mxu0
        %4810 = vmatprep.mubr.bf16.mxu0 0
        %4811 = vmatmul.mubr.bf16.gmra.mrb[0].mxu0 %v4728
        %v4812 = vpop.f32.mrb[0].mxu0
        %v4813 = vadd.f32 0.0, %v4812
        %v4814 = vpop.f32.mrb[0].mxu0
        %v4815 = vpop.f32.mrb[0].mxu0
        %v4816 = vadd.f32 0.0, %v4815
        %v4817 = vpop.f32.mrb[0].mxu0
        %4818 = vmatprep.mubr.bf16.mxu0 0
        %4819 = vmatmul.mubr.bf16.gmra.mrb[0].mxu0 %v4729
        %v4820 = vpop.f32.mrb[0].mxu0
        %v4821 = vadd.f32 0.0, %v4820
        %v4822 = vpop.f32.mrb[0].mxu0
        %v4823 = vpop.f32.mrb[0].mxu0
        %v4824 = vadd.f32 0.0, %v4823
        %v4825 = vpop.f32.mrb[0].mxu0
        %4826 = vdwg.mxu0
        %v4827 = vadd.f32 %v4387, %v4765
        %v4828 = vadd.f32 %v4388, %v4768
        %v4829 = vadd.f32 %v4389, %v4773
        %v4830 = vadd.f32 %v4390, %v4776
        %v4831 = vadd.f32 %v4391, %v4781
        %v4832 = vadd.f32 %v4392, %v4784
        %v4833 = vadd.f32 %v4393, %v4789
        %v4834 = vadd.f32 %v4394, %v4792
        %v4835 = vadd.f32 %v4395, %v4797
        %v4836 = vadd.f32 %v4396, %v4800
        %v4837 = vadd.f32 %v4397, %v4805
        %v4838 = vadd.f32 %v4398, %v4808
        %v4839 = vadd.f32 %v4399, %v4813
        %v4840 = vadd.f32 %v4400, %v4816
        %v4841 = vadd.f32 %v4401, %v4821
        %v4842 = vadd.f32 %v4402, %v4824
        %v4844 = vlaneseq
        %v4845 = vshrl.u32 %v4844, 7
        %v4846 = vsub.s32 0, %v4845
        %v4847 = vrot.slane %v1770, %v4846
        %v4849 = vmul.f32 %v1405, %v4847
        %v4850 = vmul.f32 %v1408, %v4847
        %v4851 = vmul.f32 %v1413, %v4847
        %v4852 = vmul.f32 %v1416, %v4847
        %v4853 = vmul.f32 %v1421, %v4847
        %v4854 = vmul.f32 %v1424, %v4847
        %v4855 = vmul.f32 %v1429, %v4847
        %v4856 = vmul.f32 %v1432, %v4847
        %v4857 = vmul.f32 %v1437, %v4847
        %v4858 = vmul.f32 %v1440, %v4847
        %v4859 = vmul.f32 %v1445, %v4847
        %v4860 = vmul.f32 %v1448, %v4847
        %v4861 = vmul.f32 %v1453, %v4847
        %v4862 = vmul.f32 %v1456, %v4847
        %v4863 = vmul.f32 %v1461, %v4847
        %v4864 = vmul.f32 %v1464, %v4847
        %v4865 = vpack.c.bf16 %v4850, %v4849
        %v4866 = vpack.c.bf16 %v4852, %v4851
        %v4867 = vpack.c.bf16 %v4854, %v4853
        %v4868 = vpack.c.bf16 %v4856, %v4855
        %v4869 = vpack.c.bf16 %v4858, %v4857
        %v4870 = vpack.c.bf16 %v4860, %v4859
        %v4871 = vpack.c.bf16 %v4862, %v4861
        %v4872 = vpack.c.bf16 %v4864, %v4863
        %v4873 = vmul.f32 %v1677, %v4847
        %v4874 = vmul.f32 %v1680, %v4847
        %v4875 = vmul.f32 %v1685, %v4847
        %v4876 = vmul.f32 %v1688, %v4847
        %v4877 = vmul.f32 %v1693, %v4847
        %v4878 = vmul.f32 %v1696, %v4847
        %v4879 = vmul.f32 %v1701, %v4847
        %v4880 = vmul.f32 %v1704, %v4847
        %v4881 = vmul.f32 %v1709, %v4847
        %v4882 = vmul.f32 %v1712, %v4847
        %v4883 = vmul.f32 %v1717, %v4847
        %v4884 = vmul.f32 %v1720, %v4847
        %v4885 = vmul.f32 %v1725, %v4847
        %v4886 = vmul.f32 %v1728, %v4847
        %v4887 = vmul.f32 %v1733, %v4847
        %v4888 = vmul.f32 %v1736, %v4847
        %v4889 = vpack.c.bf16 %v4874, %v4873
        %v4890 = vpack.c.bf16 %v4876, %v4875
        %v4891 = vpack.c.bf16 %v4878, %v4877
        %v4892 = vpack.c.bf16 %v4880, %v4879
        %v4893 = vpack.c.bf16 %v4882, %v4881
        %v4894 = vpack.c.bf16 %v4884, %v4883
        %v4895 = vpack.c.bf16 %v4886, %v4885
        %v4896 = vpack.c.bf16 %v4888, %v4887
        %v4898 = vsel %vm1345, %v4865, 0
        %v4901 = vsel %vm1345, %v4866, 0
        %v4904 = vsel %vm1345, %v4867, 0
        %v4907 = vsel %vm1345, %v4868, 0
        %v4910 = vsel %vm1345, %v4869, 0
        %v4913 = vsel %vm1345, %v4870, 0
        %v4916 = vsel %vm1345, %v4871, 0
        %v4919 = vsel %vm1345, %v4872, 0
        %4921 = vmatprep.subr.bf16.mxu0 0
        %4922 = vmatpush1.bf16.xpose.msra.mxu0 %v1850
        %4923 = vmatprep.subr.bf16.mxu0 0
        %4924 = vmatpush1.bf16.xpose.msra.mxu0 %v1853
        %4925 = vmatprep.subr.bf16.mxu0 0
        %4926 = vmatpush1.bf16.xpose.msra.mxu0 %v1856
        %4927 = vmatprep.subr.bf16.mxu0 0
        %4928 = vmatpush1.bf16.xpose.msra.mxu0 %v1859
        %4929 = vmatprep.subr.bf16.mxu0 0
        %4930 = vmatpush1.bf16.xpose.msra.mxu0 %v1862
        %4931 = vmatprep.subr.bf16.mxu0 0
        %4932 = vmatpush1.bf16.xpose.msra.mxu0 %v1865
        %4933 = vmatprep.subr.bf16.mxu0 0
        %4934 = vmatpush1.bf16.xpose.msra.mxu0 %v1868
        %4935 = vmatprep.subr.bf16.mxu0 0
        %4936 = vmatpush1.bf16.xpose.msra.mxu0 %v1871
        %4937 = vmatprep.subr.bf16.mxu0 0
        %4938 = vmatpush1.bf16.xpose.msra.mxu0 0
        %4939 = vmatprep.subr.bf16.mxu0 0
        %4940 = vmatpush1.bf16.xpose.msra.mxu0 0
        %4941 = vmatprep.subr.bf16.mxu0 0
        %4942 = vmatpush1.bf16.xpose.msra.mxu0 0
        %4943 = vmatprep.subr.bf16.mxu0 0
        %4944 = vmatpush1.bf16.xpose.msra.mxu0 0
        %4945 = vmatprep.subr.bf16.mxu0 0
        %4946 = vmatpush1.bf16.xpose.msra.mxu0 0
        %4947 = vmatprep.subr.bf16.mxu0 0
        %4948 = vmatpush1.bf16.xpose.msra.mxu0 0
        %4949 = vmatprep.subr.bf16.mxu0 0
        %4950 = vmatpush1.bf16.xpose.msra.mxu0 0
        %4951 = vmatprep.subr.bf16.mxu0 0
        %4952 = vmatpush1.bf16.xpose.msra.mxu0 0
        %4953 = vmatprep.mubr.bf16.mxu0 0
        %4954 = vmatmul.mubr.bf16.gmra.mrb[0].mxu0 %v4898
        %v4955 = vpop.f32.mrb[0].mxu0
        %v4956 = vadd.f32 %v1747, %v4955
        %v4957 = vpop.f32.mrb[0].mxu0
        %v4958 = vpop.f32.mrb[0].mxu0
        %v4959 = vadd.f32 %v1748, %v4958
        %v4960 = vpop.f32.mrb[0].mxu0
        %4961 = vmatprep.mubr.bf16.mxu0 0
        %4962 = vmatmul.mubr.bf16.gmra.mrb[0].mxu0 %v4901
        %v4963 = vpop.f32.mrb[0].mxu0
        %v4964 = vadd.f32 %v1749, %v4963
        %v4965 = vpop.f32.mrb[0].mxu0
        %v4966 = vpop.f32.mrb[0].mxu0
        %v4967 = vadd.f32 %v1750, %v4966
        %v4968 = vpop.f32.mrb[0].mxu0
        %4969 = vmatprep.mubr.bf16.mxu0 0
        %4970 = vmatmul.mubr.bf16.gmra.mrb[0].mxu0 %v4904
        %v4971 = vpop.f32.mrb[0].mxu0
        %v4972 = vadd.f32 %v1751, %v4971
        %v4973 = vpop.f32.mrb[0].mxu0
        %v4974 = vpop.f32.mrb[0].mxu0
        %v4975 = vadd.f32 %v1752, %v4974
        %v4976 = vpop.f32.mrb[0].mxu0
        %4977 = vmatprep.mubr.bf16.mxu0 0
        %4978 = vmatmul.mubr.bf16.gmra.mrb[0].mxu0 %v4907
        %v4979 = vpop.f32.mrb[0].mxu0
        %v4980 = vadd.f32 %v1753, %v4979
        %v4981 = vpop.f32.mrb[0].mxu0
        %v4982 = vpop.f32.mrb[0].mxu0
        %v4983 = vadd.f32 %v1754, %v4982
        %v4984 = vpop.f32.mrb[0].mxu0
        %4985 = vmatprep.mubr.bf16.mxu0 0
        %4986 = vmatmul.mubr.bf16.gmra.mrb[0].mxu0 %v4910
        %v4987 = vpop.f32.mrb[0].mxu0
        %v4988 = vadd.f32 %v1755, %v4987
        %v4989 = vpop.f32.mrb[0].mxu0
        %v4990 = vpop.f32.mrb[0].mxu0
        %v4991 = vadd.f32 %v1756, %v4990
        %v4992 = vpop.f32.mrb[0].mxu0
        %4993 = vmatprep.mubr.bf16.mxu0 0
        %4994 = vmatmul.mubr.bf16.gmra.mrb[0].mxu0 %v4913
        %v4995 = vpop.f32.mrb[0].mxu0
        %v4996 = vadd.f32 %v1757, %v4995
        %v4997 = vpop.f32.mrb[0].mxu0
        %v4998 = vpop.f32.mrb[0].mxu0
        %v4999 = vadd.f32 %v1758, %v4998
        %v5000 = vpop.f32.mrb[0].mxu0
        %5001 = vmatprep.mubr.bf16.mxu0 0
        %5002 = vmatmul.mubr.bf16.gmra.mrb[0].mxu0 %v4916
        %v5003 = vpop.f32.mrb[0].mxu0
        %v5004 = vadd.f32 %v1759, %v5003
        %v5005 = vpop.f32.mrb[0].mxu0
        %v5006 = vpop.f32.mrb[0].mxu0
        %v5007 = vadd.f32 %v1760, %v5006
        %v5008 = vpop.f32.mrb[0].mxu0
        %5009 = vmatprep.mubr.bf16.mxu0 0
        %5010 = vmatmul.mubr.bf16.gmra.mrb[0].mxu0 %v4919
        %v5011 = vpop.f32.mrb[0].mxu0
        %v5012 = vadd.f32 %v1761, %v5011
        %v5013 = vpop.f32.mrb[0].mxu0
        %v5014 = vpop.f32.mrb[0].mxu0
        %v5015 = vadd.f32 %v1762, %v5014
        %v5016 = vpop.f32.mrb[0].mxu0
        %5017 = vdwg.mxu0
        %5018 = vmax.xlane.f32.xlu0 %v4956
        %v5019 = vpop.xlane.xlu0 %5018
        %5020 = vmax.xlane.f32.xlu0 %v4959
        %v5021 = vpop.xlane.xlu0 %5020
        %5022 = vmax.xlane.f32.xlu0 %v4964
        %v5023 = vpop.xlane.xlu0 %5022
        %5024 = vmax.xlane.f32.xlu0 %v4967
        %v5025 = vpop.xlane.xlu0 %5024
        %5026 = vmax.xlane.f32.xlu0 %v4972
        %v5027 = vpop.xlane.xlu0 %5026
        %5028 = vmax.xlane.f32.xlu0 %v4975
        %v5029 = vpop.xlane.xlu0 %5028
        %5030 = vmax.xlane.f32.xlu0 %v4980
        %v5031 = vpop.xlane.xlu0 %5030
        %5032 = vmax.xlane.f32.xlu0 %v4983
        %v5033 = vpop.xlane.xlu0 %5032
        %5034 = vmax.xlane.f32.xlu0 %v4988
        %v5035 = vpop.xlane.xlu0 %5034
        %5036 = vmax.xlane.f32.xlu0 %v4991
        %v5037 = vpop.xlane.xlu0 %5036
        %5038 = vmax.xlane.f32.xlu0 %v4996
        %v5039 = vpop.xlane.xlu0 %5038
        %5040 = vmax.xlane.f32.xlu0 %v4999
        %v5041 = vpop.xlane.xlu0 %5040
        %5042 = vmax.xlane.f32.xlu0 %v5004
        %v5043 = vpop.xlane.xlu0 %5042
        %5044 = vmax.xlane.f32.xlu0 %v5007
        %v5045 = vpop.xlane.xlu0 %5044
        %5046 = vmax.xlane.f32.xlu0 %v5012
        %v5047 = vpop.xlane.xlu0 %5046
        %5048 = vmax.xlane.f32.xlu0 %v5015
        %v5049 = vpop.xlane.xlu0 %5048
        %v5050 = vsub.f32 %v4956, %v5019
        %v5051 = vsub.f32 %v4959, %v5021
        %v5052 = vsub.f32 %v4964, %v5023
        %v5053 = vsub.f32 %v4967, %v5025
        %v5054 = vsub.f32 %v4972, %v5027
        %v5055 = vsub.f32 %v4975, %v5029
        %v5056 = vsub.f32 %v4980, %v5031
        %v5057 = vsub.f32 %v4983, %v5033
        %v5058 = vsub.f32 %v4988, %v5035
        %v5059 = vsub.f32 %v4991, %v5037
        %v5060 = vsub.f32 %v4996, %v5039
        %v5061 = vsub.f32 %v4999, %v5041
        %v5062 = vsub.f32 %v5004, %v5043
        %v5063 = vsub.f32 %v5007, %v5045
        %v5064 = vsub.f32 %v5012, %v5047
        %v5065 = vsub.f32 %v5015, %v5049
        %v5066 = vmul.f32 %v5050, 1.442695
        %v5067 = vpow.pop %v5066
        %v5068 = vmul.f32 %v5051, 1.442695
        %v5069 = vpow.pop %v5068
        %v5070 = vmul.f32 %v5052, 1.442695
        %v5071 = vpow.pop %v5070
        %v5072 = vmul.f32 %v5053, 1.442695
        %v5073 = vpow.pop %v5072
        %v5074 = vmul.f32 %v5054, 1.442695
        %v5075 = vpow.pop %v5074
        %v5076 = vmul.f32 %v5055, 1.442695
        %v5077 = vpow.pop %v5076
        %v5078 = vmul.f32 %v5056, 1.442695
        %v5079 = vpow.pop %v5078
        %v5080 = vmul.f32 %v5057, 1.442695
        %v5081 = vpow.pop %v5080
        %v5082 = vmul.f32 %v5058, 1.442695
        %v5083 = vpow.pop %v5082
        %v5084 = vmul.f32 %v5059, 1.442695
        %v5085 = vpow.pop %v5084
        %v5086 = vmul.f32 %v5060, 1.442695
        %v5087 = vpow.pop %v5086
        %v5088 = vmul.f32 %v5061, 1.442695
        %v5089 = vpow.pop %v5088
        %v5090 = vmul.f32 %v5062, 1.442695
        %v5091 = vpow.pop %v5090
        %v5092 = vmul.f32 %v5063, 1.442695
        %v5093 = vpow.pop %v5092
        %v5094 = vmul.f32 %v5064, 1.442695
        %v5095 = vpow.pop %v5094
        %v5096 = vmul.f32 %v5065, 1.442695
        %v5097 = vpow.pop %v5096
        %5098 = vadd.xlane.f32.xlu0 %v5067
        %v5099 = vpop.xlane.xlu0 %5098
        %5100 = vadd.xlane.f32.xlu0 %v5069
        %v5101 = vpop.xlane.xlu0 %5100
        %5102 = vadd.xlane.f32.xlu0 %v5071
        %v5103 = vpop.xlane.xlu0 %5102
        %5104 = vadd.xlane.f32.xlu0 %v5073
        %v5105 = vpop.xlane.xlu0 %5104
        %5106 = vadd.xlane.f32.xlu0 %v5075
        %v5107 = vpop.xlane.xlu0 %5106
        %5108 = vadd.xlane.f32.xlu0 %v5077
        %v5109 = vpop.xlane.xlu0 %5108
        %5110 = vadd.xlane.f32.xlu0 %v5079
        %v5111 = vpop.xlane.xlu0 %5110
        %5112 = vadd.xlane.f32.xlu0 %v5081
        %v5113 = vpop.xlane.xlu0 %5112
        %5114 = vadd.xlane.f32.xlu0 %v5083
        %v5115 = vpop.xlane.xlu0 %5114
        %5116 = vadd.xlane.f32.xlu0 %v5085
        %v5117 = vpop.xlane.xlu0 %5116
        %5118 = vadd.xlane.f32.xlu0 %v5087
        %v5119 = vpop.xlane.xlu0 %5118
        %5120 = vadd.xlane.f32.xlu0 %v5089
        %v5121 = vpop.xlane.xlu0 %5120
        %5122 = vadd.xlane.f32.xlu0 %v5091
        %v5123 = vpop.xlane.xlu0 %5122
        %5124 = vadd.xlane.f32.xlu0 %v5093
        %v5125 = vpop.xlane.xlu0 %5124
        %5126 = vadd.xlane.f32.xlu0 %v5095
        %v5127 = vpop.xlane.xlu0 %5126
        %5128 = vadd.xlane.f32.xlu0 %v5097
        %v5129 = vpop.xlane.xlu0 %5128
        %v5130 = vrcp.pop %v5099
        %v5131 = vrcp.pop %v5101
        %v5132 = vrcp.pop %v5103
        %v5133 = vrcp.pop %v5105
        %v5134 = vrcp.pop %v5107
        %v5135 = vrcp.pop %v5109
        %v5136 = vrcp.pop %v5111
        %v5137 = vrcp.pop %v5113
        %v5138 = vrcp.pop %v5115
        %v5139 = vrcp.pop %v5117
        %v5140 = vrcp.pop %v5119
        %v5141 = vrcp.pop %v5121
        %v5142 = vrcp.pop %v5123
        %v5143 = vrcp.pop %v5125
        %v5144 = vrcp.pop %v5127
        %v5145 = vrcp.pop %v5129
        %v5146 = vmul.f32 %v5067, %v5130
        %v5147 = vmul.f32 %v5069, %v5131
        %v5148 = vmul.f32 %v5071, %v5132
        %v5149 = vmul.f32 %v5073, %v5133
        %v5150 = vmul.f32 %v5075, %v5134
        %v5151 = vmul.f32 %v5077, %v5135
        %v5152 = vmul.f32 %v5079, %v5136
        %v5153 = vmul.f32 %v5081, %v5137
        %v5154 = vmul.f32 %v5083, %v5138
        %v5155 = vmul.f32 %v5085, %v5139
        %v5156 = vmul.f32 %v5087, %v5140
        %v5157 = vmul.f32 %v5089, %v5141
        %v5158 = vmul.f32 %v5091, %v5142
        %v5159 = vmul.f32 %v5093, %v5143
        %v5160 = vmul.f32 %v5095, %v5144
        %v5161 = vmul.f32 %v5097, %v5145
        %v5162 = vpack.c.bf16 %v5147, %v5146
        %v5163 = vpack.c.bf16 %v5149, %v5148
        %v5164 = vpack.c.bf16 %v5151, %v5150
        %v5165 = vpack.c.bf16 %v5153, %v5152
        %v5166 = vpack.c.bf16 %v5155, %v5154
        %v5167 = vpack.c.bf16 %v5157, %v5156
        %v5168 = vpack.c.bf16 %v5159, %v5158
        %v5169 = vpack.c.bf16 %v5161, %v5160
        %5170 = vmatprep.subr.bf16.mxu0 0
        %5171 = vmatpush1.bf16.msra.mxu0 %v4889
        %5172 = vmatprep.subr.bf16.mxu0 0
        %5173 = vmatpush1.bf16.msra.mxu0 %v4890
        %5174 = vmatprep.subr.bf16.mxu0 0
        %5175 = vmatpush1.bf16.msra.mxu0 %v4891
        %5176 = vmatprep.subr.bf16.mxu0 0
        %5177 = vmatpush1.bf16.msra.mxu0 %v4892
        %5178 = vmatprep.subr.bf16.mxu0 0
        %5179 = vmatpush1.bf16.msra.mxu0 %v4893
        %5180 = vmatprep.subr.bf16.mxu0 0
        %5181 = vmatpush1.bf16.msra.mxu0 %v4894
        %5182 = vmatprep.subr.bf16.mxu0 0
        %5183 = vmatpush1.bf16.msra.mxu0 %v4895
        %5184 = vmatprep.subr.bf16.mxu0 0
        %5185 = vmatpush1.bf16.msra.mxu0 %v4896
        %5186 = vmatprep.subr.bf16.mxu0 0
        %5187 = vmatpush1.bf16.msra.mxu0 0
        %5188 = vmatprep.subr.bf16.mxu0 0
        %5189 = vmatpush1.bf16.msra.mxu0 0
        %5190 = vmatprep.subr.bf16.mxu0 0
        %5191 = vmatpush1.bf16.msra.mxu0 0
        %5192 = vmatprep.subr.bf16.mxu0 0
        %5193 = vmatpush1.bf16.msra.mxu0 0
        %5194 = vmatprep.subr.bf16.mxu0 0
        %5195 = vmatpush1.bf16.msra.mxu0 0
        %5196 = vmatprep.subr.bf16.mxu0 0
        %5197 = vmatpush1.bf16.msra.mxu0 0
        %5198 = vmatprep.subr.bf16.mxu0 0
        %5199 = vmatpush1.bf16.msra.mxu0 0
        %5200 = vmatprep.subr.bf16.mxu0 0
        %5201 = vmatpush1.bf16.msra.mxu0 0
        %5202 = vmatprep.mubr.bf16.mxu0 0
        %5203 = vmatmul.mubr.bf16.gmra.mrb[0].mxu0 %v5162
        %v5204 = vpop.f32.mrb[0].mxu0
        %v5205 = vadd.f32 0.0, %v5204
        %v5206 = vpop.f32.mrb[0].mxu0
        %v5207 = vpop.f32.mrb[0].mxu0
        %v5208 = vadd.f32 0.0, %v5207
        %v5209 = vpop.f32.mrb[0].mxu0
        %5210 = vmatprep.mubr.bf16.mxu0 0
        %5211 = vmatmul.mubr.bf16.gmra.mrb[0].mxu0 %v5163
        %v5212 = vpop.f32.mrb[0].mxu0
        %v5213 = vadd.f32 0.0, %v5212
        %v5214 = vpop.f32.mrb[0].mxu0
        %v5215 = vpop.f32.mrb[0].mxu0
        %v5216 = vadd.f32 0.0, %v5215
        %v5217 = vpop.f32.mrb[0].mxu0
        %5218 = vmatprep.mubr.bf16.mxu0 0
        %5219 = vmatmul.mubr.bf16.gmra.mrb[0].mxu0 %v5164
        %v5220 = vpop.f32.mrb[0].mxu0
        %v5221 = vadd.f32 0.0, %v5220
        %v5222 = vpop.f32.mrb[0].mxu0
        %v5223 = vpop.f32.mrb[0].mxu0
        %v5224 = vadd.f32 0.0, %v5223
        %v5225 = vpop.f32.mrb[0].mxu0
        %5226 = vmatprep.mubr.bf16.mxu0 0
        %5227 = vmatmul.mubr.bf16.gmra.mrb[0].mxu0 %v5165
        %v5228 = vpop.f32.mrb[0].mxu0
        %v5229 = vadd.f32 0.0, %v5228
        %v5230 = vpop.f32.mrb[0].mxu0
        %v5231 = vpop.f32.mrb[0].mxu0
        %v5232 = vadd.f32 0.0, %v5231
        %v5233 = vpop.f32.mrb[0].mxu0
        %5234 = vmatprep.mubr.bf16.mxu0 0
        %5235 = vmatmul.mubr.bf16.gmra.mrb[0].mxu0 %v5166
        %v5236 = vpop.f32.mrb[0].mxu0
        %v5237 = vadd.f32 0.0, %v5236
        %v5238 = vpop.f32.mrb[0].mxu0
        %v5239 = vpop.f32.mrb[0].mxu0
        %v5240 = vadd.f32 0.0, %v5239
        %v5241 = vpop.f32.mrb[0].mxu0
        %5242 = vmatprep.mubr.bf16.mxu0 0
        %5243 = vmatmul.mubr.bf16.gmra.mrb[0].mxu0 %v5167
        %v5244 = vpop.f32.mrb[0].mxu0
        %v5245 = vadd.f32 0.0, %v5244
        %v5246 = vpop.f32.mrb[0].mxu0
        %v5247 = vpop.f32.mrb[0].mxu0
        %v5248 = vadd.f32 0.0, %v5247
        %v5249 = vpop.f32.mrb[0].mxu0
        %5250 = vmatprep.mubr.bf16.mxu0 0
        %5251 = vmatmul.mubr.bf16.gmra.mrb[0].mxu0 %v5168
        %v5252 = vpop.f32.mrb[0].mxu0
        %v5253 = vadd.f32 0.0, %v5252
        %v5254 = vpop.f32.mrb[0].mxu0
        %v5255 = vpop.f32.mrb[0].mxu0
        %v5256 = vadd.f32 0.0, %v5255
        %v5257 = vpop.f32.mrb[0].mxu0
        %5258 = vmatprep.mubr.bf16.mxu0 0
        %5259 = vmatmul.mubr.bf16.gmra.mrb[0].mxu0 %v5169
        %v5260 = vpop.f32.mrb[0].mxu0
        %v5261 = vadd.f32 0.0, %v5260
        %v5262 = vpop.f32.mrb[0].mxu0
        %v5263 = vpop.f32.mrb[0].mxu0
        %v5264 = vadd.f32 0.0, %v5263
        %v5265 = vpop.f32.mrb[0].mxu0
        %5266 = vdwg.mxu0
        %v5267 = vadd.f32 %v4827, %v5205
        %v5268 = vadd.f32 %v4828, %v5208
        %v5269 = vadd.f32 %v4829, %v5213
        %v5270 = vadd.f32 %v4830, %v5216
        %v5271 = vadd.f32 %v4831, %v5221
        %v5272 = vadd.f32 %v4832, %v5224
        %v5273 = vadd.f32 %v4833, %v5229
        %v5274 = vadd.f32 %v4834, %v5232
        %v5275 = vadd.f32 %v4835, %v5237
        %v5276 = vadd.f32 %v4836, %v5240
        %v5277 = vadd.f32 %v4837, %v5245
        %v5278 = vadd.f32 %v4838, %v5248
        %v5279 = vadd.f32 %v4839, %v5253
        %v5280 = vadd.f32 %v4840, %v5256
        %v5281 = vadd.f32 %v4841, %v5261
        %v5282 = vadd.f32 %v4842, %v5264
        %v5283 = vpack.c.bf16 %v5268, %v5267
        %v5284 = vpack.c.bf16 %v5270, %v5269
        %v5285 = vpack.c.bf16 %v5272, %v5271
        %v5286 = vpack.c.bf16 %v5274, %v5273
        %v5287 = vpack.c.bf16 %v5276, %v5275
        %v5288 = vpack.c.bf16 %v5278, %v5277
        %v5289 = vpack.c.bf16 %v5280, %v5279
        %v5290 = vpack.c.bf16 %v5282, %v5281
        %v5291 = vld [vmem:[%s13] sm:$0xf]
        %v5292 = vld [vmem:[%s13 + $0x4] sm:$0xf]
        %v5293 = vld [vmem:[%s13 + $0x8] sm:$0xf]
        %v5294 = vld [vmem:[%s13 + $0xc] sm:$0xf]
        %v5295 = vld [vmem:[%s13 + $0x10] sm:$0xf]
        %v5296 = vld [vmem:[%s13 + $0x14] sm:$0xf]
        %v5297 = vld [vmem:[%s13 + $0x18] sm:$0xf]
        %v5298 = vld [vmem:[%s13 + $0x1c] sm:$0xf]
        %v5299 = vld [vmem:[%s14] sm:$0x1]
        %v5301 = vlaneseq
        %v5302 = vshrl.u32 %v5301, 7
        %v5303 = vsub.s32 0, %v5302
        %v5304 = vrot.slane %v5299, %v5303
        %v5314 = vunpack.c.l.b16 %v5291
        %v5315 = vunpack.c.l.b16 %v5292
        %v5316 = vunpack.c.l.b16 %v5293
        %v5317 = vunpack.c.l.b16 %v5294
        %v5318 = vunpack.c.l.b16 %v5295
        %v5319 = vunpack.c.l.b16 %v5296
        %v5320 = vunpack.c.l.b16 %v5297
        %v5321 = vunpack.c.l.b16 %v5298
        %v5322 = vpack.c.b16 %v5315, %v5314
        %v5323 = vpack.c.b16 %v5317, %v5316
        %v5324 = vpack.c.b16 %v5319, %v5318
        %v5325 = vpack.c.b16 %v5321, %v5320
        %v5331 = vsel %vm1345, %v5283, 0
        %v5334 = vsel %vm1345, %v5284, 0
        %v5337 = vsel %vm1345, %v5285, 0
        %v5340 = vsel %vm1345, %v5286, 0
        %v5343 = vsel %vm1345, %v5287, 0
        %v5346 = vsel %vm1345, %v5288, 0
        %v5349 = vsel %vm1345, %v5289, 0
        %v5352 = vsel %vm1345, %v5290, 0
        %5354 = vmatprep.subr.bf16.mxu0 0
        %5355 = vmatpush1.bf16.msra.mxu0 %v5322
        %5356 = vmatprep.subr.bf16.mxu0 0
        %5357 = vmatpush1.bf16.msra.mxu0 %v5323
        %5358 = vmatprep.subr.bf16.mxu0 0
        %5359 = vmatpush1.bf16.msra.mxu0 %v5324
        %5360 = vmatprep.subr.bf16.mxu0 0
        %5361 = vmatpush1.bf16.msra.mxu0 %v5325
        %5362 = vmatprep.subr.bf16.mxu0 0
        %5363 = vmatpush1.bf16.msra.mxu0 0
        %5364 = vmatprep.subr.bf16.mxu0 0
        %5365 = vmatpush1.bf16.msra.mxu0 0
        %5366 = vmatprep.subr.bf16.mxu0 0
        %5367 = vmatpush1.bf16.msra.mxu0 0
        %5368 = vmatprep.subr.bf16.mxu0 0
        %5369 = vmatpush1.bf16.msra.mxu0 0
        %5370 = vmatprep.subr.bf16.mxu0 0
        %5371 = vmatpush1.bf16.msra.mxu0 0
        %5372 = vmatprep.subr.bf16.mxu0 0
        %5373 = vmatpush1.bf16.msra.mxu0 0
        %5374 = vmatprep.subr.bf16.mxu0 0
        %5375 = vmatpush1.bf16.msra.mxu0 0
        %5376 = vmatprep.subr.bf16.mxu0 0
        %5377 = vmatpush1.bf16.msra.mxu0 0
        %5378 = vmatprep.subr.bf16.mxu0 0
        %5379 = vmatpush1.bf16.msra.mxu0 0
        %5380 = vmatprep.subr.bf16.mxu0 0
        %5381 = vmatpush1.bf16.msra.mxu0 0
        %5382 = vmatprep.subr.bf16.mxu0 0
        %5383 = vmatpush1.bf16.msra.mxu0 0
        %5384 = vmatprep.subr.bf16.mxu0 0
        %5385 = vmatpush1.bf16.msra.mxu0 0
        %5386 = vmatprep.mubr.bf16.mxu0 0
        %5387 = vmatmul.mubr.bf16.gmra.mrb[0].mxu0 %v5331
        %v5388 = vpop.f32.mrb[0].mxu0
        %v5389 = vadd.f32 %v5304, %v5388
        %v5390 = vpop.f32.mrb[0].mxu0
        %v5391 = vpop.f32.mrb[0].mxu0
        %v5392 = vadd.f32 %v5304, %v5391
        %v5393 = vpop.f32.mrb[0].mxu0
        %5394 = vmatprep.mubr.bf16.mxu0 0
        %5395 = vmatmul.mubr.bf16.gmra.mrb[0].mxu0 %v5334
        %v5396 = vpop.f32.mrb[0].mxu0
        %v5397 = vadd.f32 %v5304, %v5396
        %v5398 = vpop.f32.mrb[0].mxu0
        %v5399 = vpop.f32.mrb[0].mxu0
        %v5400 = vadd.f32 %v5304, %v5399
        %v5401 = vpop.f32.mrb[0].mxu0
        %5402 = vmatprep.mubr.bf16.mxu0 0
        %5403 = vmatmul.mubr.bf16.gmra.mrb[0].mxu0 %v5337
        %v5404 = vpop.f32.mrb[0].mxu0
        %v5405 = vadd.f32 %v5304, %v5404
        %v5406 = vpop.f32.mrb[0].mxu0
        %v5407 = vpop.f32.mrb[0].mxu0
        %v5408 = vadd.f32 %v5304, %v5407
        %v5409 = vpop.f32.mrb[0].mxu0
        %5410 = vmatprep.mubr.bf16.mxu0 0
        %5411 = vmatmul.mubr.bf16.gmra.mrb[0].mxu0 %v5340
        %v5412 = vpop.f32.mrb[0].mxu0
        %v5413 = vadd.f32 %v5304, %v5412
        %v5414 = vpop.f32.mrb[0].mxu0
        %v5415 = vpop.f32.mrb[0].mxu0
        %v5416 = vadd.f32 %v5304, %v5415
        %v5417 = vpop.f32.mrb[0].mxu0
        %5418 = vmatprep.mubr.bf16.mxu0 0
        %5419 = vmatmul.mubr.bf16.gmra.mrb[0].mxu0 %v5343
        %v5420 = vpop.f32.mrb[0].mxu0
        %v5421 = vadd.f32 %v5304, %v5420
        %v5422 = vpop.f32.mrb[0].mxu0
        %v5423 = vpop.f32.mrb[0].mxu0
        %v5424 = vadd.f32 %v5304, %v5423
        %v5425 = vpop.f32.mrb[0].mxu0
        %5426 = vmatprep.mubr.bf16.mxu0 0
        %5427 = vmatmul.mubr.bf16.gmra.mrb[0].mxu0 %v5346
        %v5428 = vpop.f32.mrb[0].mxu0
        %v5429 = vadd.f32 %v5304, %v5428
        %v5430 = vpop.f32.mrb[0].mxu0
        %v5431 = vpop.f32.mrb[0].mxu0
        %v5432 = vadd.f32 %v5304, %v5431
        %v5433 = vpop.f32.mrb[0].mxu0
        %5434 = vmatprep.mubr.bf16.mxu0 0
        %5435 = vmatmul.mubr.bf16.gmra.mrb[0].mxu0 %v5349
        %v5436 = vpop.f32.mrb[0].mxu0
        %v5437 = vadd.f32 %v5304, %v5436
        %v5438 = vpop.f32.mrb[0].mxu0
        %v5439 = vpop.f32.mrb[0].mxu0
        %v5440 = vadd.f32 %v5304, %v5439
        %v5441 = vpop.f32.mrb[0].mxu0
        %5442 = vmatprep.mubr.bf16.mxu0 0
        %5443 = vmatmul.mubr.bf16.gmra.mrb[0].mxu0 %v5352
        %v5444 = vpop.f32.mrb[0].mxu0
        %v5445 = vadd.f32 %v5304, %v5444
        %v5446 = vpop.f32.mrb[0].mxu0
        %v5447 = vpop.f32.mrb[0].mxu0
        %v5448 = vadd.f32 %v5304, %v5447
        %v5449 = vpop.f32.mrb[0].mxu0
        %5450 = vdwg.mxu0
        %v5451 = vadd.f32 %v1282, %v5389
        %v5452 = vadd.f32 %v1283, %v5392
        %v5453 = vadd.f32 %v1284, %v5397
        %v5454 = vadd.f32 %v1285, %v5400
        %v5455 = vadd.f32 %v1286, %v5405
        %v5456 = vadd.f32 %v1287, %v5408
        %v5457 = vadd.f32 %v1288, %v5413
        %v5458 = vadd.f32 %v1289, %v5416
        %v5459 = vadd.f32 %v1290, %v5421
        %v5460 = vadd.f32 %v1291, %v5424
        %v5461 = vadd.f32 %v1292, %v5429
        %v5462 = vadd.f32 %v1293, %v5432
        %v5463 = vadd.f32 %v1294, %v5437
        %v5464 = vadd.f32 %v1295, %v5440
        %v5465 = vadd.f32 %v1296, %v5445
        %v5466 = vadd.f32 %v1297, %v5448
        %v5467 = vld [vmem:[%s15] sm:$0x1]
        %v5468 = vld [vmem:[%s16] sm:$0x1]
        %v5469 = vsel %vm1345, %v5451, 0.0
        %5470 = vadd.xlane.f32.xlu0 %v5469
        %v5471 = vpop.xlane.xlu0 %5470
        %v5472 = vsel %vm1345, %v5452, 0.0
        %5473 = vadd.xlane.f32.xlu0 %v5472
        %v5474 = vpop.xlane.xlu0 %5473
        %v5475 = vsel %vm1345, %v5453, 0.0
        %5476 = vadd.xlane.f32.xlu0 %v5475
        %v5477 = vpop.xlane.xlu0 %5476
        %v5478 = vsel %vm1345, %v5454, 0.0
        %5479 = vadd.xlane.f32.xlu0 %v5478
        %v5480 = vpop.xlane.xlu0 %5479
        %v5481 = vsel %vm1345, %v5455, 0.0
        %5482 = vadd.xlane.f32.xlu0 %v5481
        %v5483 = vpop.xlane.xlu0 %5482
        %v5484 = vsel %vm1345, %v5456, 0.0
        %5485 = vadd.xlane.f32.xlu0 %v5484
        %v5486 = vpop.xlane.xlu0 %5485
        %v5487 = vsel %vm1345, %v5457, 0.0
        %5488 = vadd.xlane.f32.xlu0 %v5487
        %v5489 = vpop.xlane.xlu0 %5488
        %v5490 = vsel %vm1345, %v5458, 0.0
        %5491 = vadd.xlane.f32.xlu0 %v5490
        %v5492 = vpop.xlane.xlu0 %5491
        %v5493 = vsel %vm1345, %v5459, 0.0
        %5494 = vadd.xlane.f32.xlu0 %v5493
        %v5495 = vpop.xlane.xlu0 %5494
        %v5496 = vsel %vm1345, %v5460, 0.0
        %5497 = vadd.xlane.f32.xlu0 %v5496
        %v5498 = vpop.xlane.xlu0 %5497
        %v5499 = vsel %vm1345, %v5461, 0.0
        %5500 = vadd.xlane.f32.xlu0 %v5499
        %v5501 = vpop.xlane.xlu0 %5500
        %v5502 = vsel %vm1345, %v5462, 0.0
        %5503 = vadd.xlane.f32.xlu0 %v5502
        %v5504 = vpop.xlane.xlu0 %5503
        %v5505 = vsel %vm1345, %v5463, 0.0
        %5506 = vadd.xlane.f32.xlu0 %v5505
        %v5507 = vpop.xlane.xlu0 %5506
        %v5508 = vsel %vm1345, %v5464, 0.0
        %5509 = vadd.xlane.f32.xlu0 %v5508
        %v5510 = vpop.xlane.xlu0 %5509
        %v5511 = vsel %vm1345, %v5465, 0.0
        %5512 = vadd.xlane.f32.xlu0 %v5511
        %v5513 = vpop.xlane.xlu0 %5512
        %v5514 = vsel %vm1345, %v5466, 0.0
        %5515 = vadd.xlane.f32.xlu0 %v5514
        %v5516 = vpop.xlane.xlu0 %5515
        %v5517 = vrcp.pop 64.0
        %v5518 = vmul.f32 %v5471, %v5517
        %v5519 = vmul.f32 %v5474, %v5517
        %v5520 = vmul.f32 %v5477, %v5517
        %v5521 = vmul.f32 %v5480, %v5517
        %v5522 = vmul.f32 %v5483, %v5517
        %v5523 = vmul.f32 %v5486, %v5517
        %v5524 = vmul.f32 %v5489, %v5517
        %v5525 = vmul.f32 %v5492, %v5517
        %v5526 = vmul.f32 %v5495, %v5517
        %v5527 = vmul.f32 %v5498, %v5517
        %v5528 = vmul.f32 %v5501, %v5517
        %v5529 = vmul.f32 %v5504, %v5517
        %v5530 = vmul.f32 %v5507, %v5517
        %v5531 = vmul.f32 %v5510, %v5517
        %v5532 = vmul.f32 %v5513, %v5517
        %v5533 = vmul.f32 %v5516, %v5517
        %v5534 = vsub.f32 %v5451, %v5518
        %v5535 = vsub.f32 %v5452, %v5519
        %v5536 = vsub.f32 %v5453, %v5520
        %v5537 = vsub.f32 %v5454, %v5521
        %v5538 = vsub.f32 %v5455, %v5522
        %v5539 = vsub.f32 %v5456, %v5523
        %v5540 = vsub.f32 %v5457, %v5524
        %v5541 = vsub.f32 %v5458, %v5525
        %v5542 = vsub.f32 %v5459, %v5526
        %v5543 = vsub.f32 %v5460, %v5527
        %v5544 = vsub.f32 %v5461, %v5528
        %v5545 = vsub.f32 %v5462, %v5529
        %v5546 = vsub.f32 %v5463, %v5530
        %v5547 = vsub.f32 %v5464, %v5531
        %v5548 = vsub.f32 %v5465, %v5532
        %v5549 = vsub.f32 %v5466, %v5533
        %v5550 = vmul.f32 %v5534, %v5534
        %v5551 = vmul.f32 %v5535, %v5535
        %v5552 = vmul.f32 %v5536, %v5536
        %v5553 = vmul.f32 %v5537, %v5537
        %v5554 = vmul.f32 %v5538, %v5538
        %v5555 = vmul.f32 %v5539, %v5539
        %v5556 = vmul.f32 %v5540, %v5540
        %v5557 = vmul.f32 %v5541, %v5541
        %v5558 = vmul.f32 %v5542, %v5542
        %v5559 = vmul.f32 %v5543, %v5543
        %v5560 = vmul.f32 %v5544, %v5544
        %v5561 = vmul.f32 %v5545, %v5545
        %v5562 = vmul.f32 %v5546, %v5546
        %v5563 = vmul.f32 %v5547, %v5547
        %v5564 = vmul.f32 %v5548, %v5548
        %v5565 = vmul.f32 %v5549, %v5549
        %v5566 = vsel %vm1345, %v5550, 0.0
        %5567 = vadd.xlane.f32.xlu0 %v5566
        %v5568 = vpop.xlane.xlu0 %5567
        %v5569 = vsel %vm1345, %v5551, 0.0
        %5570 = vadd.xlane.f32.xlu0 %v5569
        %v5571 = vpop.xlane.xlu0 %5570
        %v5572 = vsel %vm1345, %v5552, 0.0
        %5573 = vadd.xlane.f32.xlu0 %v5572
        %v5574 = vpop.xlane.xlu0 %5573
        %v5575 = vsel %vm1345, %v5553, 0.0
        %5576 = vadd.xlane.f32.xlu0 %v5575
        %v5577 = vpop.xlane.xlu0 %5576
        %v5578 = vsel %vm1345, %v5554, 0.0
        %5579 = vadd.xlane.f32.xlu0 %v5578
        %v5580 = vpop.xlane.xlu0 %5579
        %v5581 = vsel %vm1345, %v5555, 0.0
        %5582 = vadd.xlane.f32.xlu0 %v5581
        %v5583 = vpop.xlane.xlu0 %5582
        %v5584 = vsel %vm1345, %v5556, 0.0
        %5585 = vadd.xlane.f32.xlu0 %v5584
        %v5586 = vpop.xlane.xlu0 %5585
        %v5587 = vsel %vm1345, %v5557, 0.0
        %5588 = vadd.xlane.f32.xlu0 %v5587
        %v5589 = vpop.xlane.xlu0 %5588
        %v5590 = vsel %vm1345, %v5558, 0.0
        %5591 = vadd.xlane.f32.xlu0 %v5590
        %v5592 = vpop.xlane.xlu0 %5591
        %v5593 = vsel %vm1345, %v5559, 0.0
        %5594 = vadd.xlane.f32.xlu0 %v5593
        %v5595 = vpop.xlane.xlu0 %5594
        %v5596 = vsel %vm1345, %v5560, 0.0
        %5597 = vadd.xlane.f32.xlu0 %v5596
        %v5598 = vpop.xlane.xlu0 %5597
        %v5599 = vsel %vm1345, %v5561, 0.0
        %5600 = vadd.xlane.f32.xlu0 %v5599
        %v5601 = vpop.xlane.xlu0 %5600
        %v5602 = vsel %vm1345, %v5562, 0.0
        %5603 = vadd.xlane.f32.xlu0 %v5602
        %v5604 = vpop.xlane.xlu0 %5603
        %v5605 = vsel %vm1345, %v5563, 0.0
        %5606 = vadd.xlane.f32.xlu0 %v5605
        %v5607 = vpop.xlane.xlu0 %5606
        %v5608 = vsel %vm1345, %v5564, 0.0
        %5609 = vadd.xlane.f32.xlu0 %v5608
        %v5610 = vpop.xlane.xlu0 %5609
        %v5611 = vsel %vm1345, %v5565, 0.0
        %5612 = vadd.xlane.f32.xlu0 %v5611
        %v5613 = vpop.xlane.xlu0 %5612
        %v5614 = vmul.f32 %v5568, %v5517
        %v5615 = vmul.f32 %v5571, %v5517
        %v5616 = vmul.f32 %v5574, %v5517
        %v5617 = vmul.f32 %v5577, %v5517
        %v5618 = vmul.f32 %v5580, %v5517
        %v5619 = vmul.f32 %v5583, %v5517
        %v5620 = vmul.f32 %v5586, %v5517
        %v5621 = vmul.f32 %v5589, %v5517
        %v5622 = vmul.f32 %v5592, %v5517
        %v5623 = vmul.f32 %v5595, %v5517
        %v5624 = vmul.f32 %v5598, %v5517
        %v5625 = vmul.f32 %v5601, %v5517
        %v5626 = vmul.f32 %v5604, %v5517
        %v5627 = vmul.f32 %v5607, %v5517
        %v5628 = vmul.f32 %v5610, %v5517
        %v5629 = vmul.f32 %v5613, %v5517
        %v5630 = vadd.f32 %v5614, 1e-05
        %v5631 = vadd.f32 %v5615, 1e-05
        %v5632 = vadd.f32 %v5616, 1e-05
        %v5633 = vadd.f32 %v5617, 1e-05
        %v5634 = vadd.f32 %v5618, 1e-05
        %v5635 = vadd.f32 %v5619, 1e-05
        %v5636 = vadd.f32 %v5620, 1e-05
        %v5637 = vadd.f32 %v5621, 1e-05
        %v5638 = vadd.f32 %v5622, 1e-05
        %v5639 = vadd.f32 %v5623, 1e-05
        %v5640 = vadd.f32 %v5624, 1e-05
        %v5641 = vadd.f32 %v5625, 1e-05
        %v5642 = vadd.f32 %v5626, 1e-05
        %v5643 = vadd.f32 %v5627, 1e-05
        %v5644 = vadd.f32 %v5628, 1e-05
        %v5645 = vadd.f32 %v5629, 1e-05
        %v5646 = vrsqrt.pop %v5630
        %v5647 = vrsqrt.pop %v5631
        %v5648 = vrsqrt.pop %v5632
        %v5649 = vrsqrt.pop %v5633
        %v5650 = vrsqrt.pop %v5634
        %v5651 = vrsqrt.pop %v5635
        %v5652 = vrsqrt.pop %v5636
        %v5653 = vrsqrt.pop %v5637
        %v5654 = vrsqrt.pop %v5638
        %v5655 = vrsqrt.pop %v5639
        %v5656 = vrsqrt.pop %v5640
        %v5657 = vrsqrt.pop %v5641
        %v5658 = vrsqrt.pop %v5642
        %v5659 = vrsqrt.pop %v5643
        %v5660 = vrsqrt.pop %v5644
        %v5661 = vrsqrt.pop %v5645
        %v5662 = vmul.f32 %v5534, %v5646
        %v5663 = vmul.f32 %v5535, %v5647
        %v5664 = vmul.f32 %v5536, %v5648
        %v5665 = vmul.f32 %v5537, %v5649
        %v5666 = vmul.f32 %v5538, %v5650
        %v5667 = vmul.f32 %v5539, %v5651
        %v5668 = vmul.f32 %v5540, %v5652
        %v5669 = vmul.f32 %v5541, %v5653
        %v5670 = vmul.f32 %v5542, %v5654
        %v5671 = vmul.f32 %v5543, %v5655
        %v5672 = vmul.f32 %v5544, %v5656
        %v5673 = vmul.f32 %v5545, %v5657
        %v5674 = vmul.f32 %v5546, %v5658
        %v5675 = vmul.f32 %v5547, %v5659
        %v5676 = vmul.f32 %v5548, %v5660
        %v5677 = vmul.f32 %v5549, %v5661
        %v5679 = vlaneseq
        %v5680 = vshrl.u32 %v5679, 7
        %v5681 = vsub.s32 0, %v5680
        %v5682 = vrot.slane %v5467, %v5681
        %v5684 = vmul.f32 %v5662, %v5682
        %v5685 = vmul.f32 %v5663, %v5682
        %v5686 = vmul.f32 %v5664, %v5682
        %v5687 = vmul.f32 %v5665, %v5682
        %v5688 = vmul.f32 %v5666, %v5682
        %v5689 = vmul.f32 %v5667, %v5682
        %v5690 = vmul.f32 %v5668, %v5682
        %v5691 = vmul.f32 %v5669, %v5682
        %v5692 = vmul.f32 %v5670, %v5682
        %v5693 = vmul.f32 %v5671, %v5682
        %v5694 = vmul.f32 %v5672, %v5682
        %v5695 = vmul.f32 %v5673, %v5682
        %v5696 = vmul.f32 %v5674, %v5682
        %v5697 = vmul.f32 %v5675, %v5682
        %v5698 = vmul.f32 %v5676, %v5682
        %v5699 = vmul.f32 %v5677, %v5682
        %v5701 = vlaneseq
        %v5702 = vshrl.u32 %v5701, 7
        %v5703 = vsub.s32 0, %v5702
        %v5704 = vrot.slane %v5468, %v5703
        %v5706 = vadd.f32 %v5684, %v5704
        %v5707 = vadd.f32 %v5685, %v5704
        %v5708 = vadd.f32 %v5686, %v5704
        %v5709 = vadd.f32 %v5687, %v5704
        %v5710 = vadd.f32 %v5688, %v5704
        %v5711 = vadd.f32 %v5689, %v5704
        %v5712 = vadd.f32 %v5690, %v5704
        %v5713 = vadd.f32 %v5691, %v5704
        %v5714 = vadd.f32 %v5692, %v5704
        %v5715 = vadd.f32 %v5693, %v5704
        %v5716 = vadd.f32 %v5694, %v5704
        %v5717 = vadd.f32 %v5695, %v5704
        %v5718 = vadd.f32 %v5696, %v5704
        %v5719 = vadd.f32 %v5697, %v5704
        %v5720 = vadd.f32 %v5698, %v5704
        %v5721 = vadd.f32 %v5699, %v5704
        %v5722 = vpack.c.bf16 %v5707, %v5706
        %v5723 = vpack.c.bf16 %v5709, %v5708
        %v5724 = vpack.c.bf16 %v5711, %v5710
        %v5725 = vpack.c.bf16 %v5713, %v5712
        %v5726 = vpack.c.bf16 %v5715, %v5714
        %v5727 = vpack.c.bf16 %v5717, %v5716
        %v5728 = vpack.c.bf16 %v5719, %v5718
        %v5729 = vpack.c.bf16 %v5721, %v5720
        %v5730 = vld [vmem:[%s19] sm:$0xff]
        %v5731 = vld [vmem:[%s19 + $0x8] sm:$0xff]
        %v5732 = vld [vmem:[%s19 + $0x10] sm:$0xff]
        %v5733 = vld [vmem:[%s19 + $0x18] sm:$0xff]
        %v5734 = vld [vmem:[%s19 + $0x20] sm:$0xff]
        %v5735 = vld [vmem:[%s19 + $0x28] sm:$0xff]
        %v5736 = vld [vmem:[%s19 + $0x30] sm:$0xff]
        %v5737 = vld [vmem:[%s19 + $0x38] sm:$0xff]
        %v5738 = vld [vmem:[%s19 + $0x40] sm:$0xff]
        %v5739 = vld [vmem:[%s19 + $0x48] sm:$0xff]
        %v5740 = vld [vmem:[%s19 + $0x50] sm:$0xff]
        %v5741 = vld [vmem:[%s19 + $0x58] sm:$0xff]
        %v5742 = vld [vmem:[%s19 + $0x60] sm:$0xff]
        %v5743 = vld [vmem:[%s19 + $0x68] sm:$0xff]
        %v5744 = vld [vmem:[%s19 + $0x70] sm:$0xff]
        %v5745 = vld [vmem:[%s19 + $0x78] sm:$0xff]
        %v5746 = vld [vmem:[%s19 + $0x80] sm:$0xff]
        %v5747 = vld [vmem:[%s19 + $0x88] sm:$0xff]
        %v5748 = vld [vmem:[%s19 + $0x90] sm:$0xff]
        %v5749 = vld [vmem:[%s19 + $0x98] sm:$0xff]
        %v5750 = vld [vmem:[%s19 + $0xa0] sm:$0xff]
        %v5751 = vld [vmem:[%s19 + $0xa8] sm:$0xff]
        %v5752 = vld [vmem:[%s19 + $0xb0] sm:$0xff]
        %v5753 = vld [vmem:[%s19 + $0xb8] sm:$0xff]
        %v5754 = vld [vmem:[%s19 + $0xc0] sm:$0xff]
        %v5755 = vld [vmem:[%s19 + $0xc8] sm:$0xff]
        %v5756 = vld [vmem:[%s19 + $0xd0] sm:$0xff]
        %v5757 = vld [vmem:[%s19 + $0xd8] sm:$0xff]
        %v5758 = vld [vmem:[%s19 + $0xe0] sm:$0xff]
        %v5759 = vld [vmem:[%s19 + $0xe8] sm:$0xff]
        %v5760 = vld [vmem:[%s19 + $0xf0] sm:$0xff]
        %v5761 = vld [vmem:[%s19 + $0xf8] sm:$0xff]
        %v5762 = vld [vmem:[%s19 + $0x100] sm:$0xff]
        %v5763 = vld [vmem:[%s19 + $0x108] sm:$0xff]
        %v5764 = vld [vmem:[%s19 + $0x110] sm:$0xff]
        %v5765 = vld [vmem:[%s19 + $0x118] sm:$0xff]
        %v5766 = vld [vmem:[%s19 + $0x120] sm:$0xff]
        %v5767 = vld [vmem:[%s19 + $0x128] sm:$0xff]
        %v5768 = vld [vmem:[%s19 + $0x130] sm:$0xff]
        %v5769 = vld [vmem:[%s19 + $0x138] sm:$0xff]
        %v5770 = vld [vmem:[%s19 + $0x140] sm:$0xff]
        %v5771 = vld [vmem:[%s19 + $0x148] sm:$0xff]
        %v5772 = vld [vmem:[%s19 + $0x150] sm:$0xff]
        %v5773 = vld [vmem:[%s19 + $0x158] sm:$0xff]
        %v5774 = vld [vmem:[%s19 + $0x160] sm:$0xff]
        %v5775 = vld [vmem:[%s19 + $0x168] sm:$0xff]
        %v5776 = vld [vmem:[%s19 + $0x170] sm:$0xff]
        %v5777 = vld [vmem:[%s19 + $0x178] sm:$0xff]
        %v5778 = vld [vmem:[%s19 + $0x180] sm:$0xff]
        %v5779 = vld [vmem:[%s19 + $0x188] sm:$0xff]
        %v5780 = vld [vmem:[%s19 + $0x190] sm:$0xff]
        %v5781 = vld [vmem:[%s19 + $0x198] sm:$0xff]
        %v5782 = vld [vmem:[%s19 + $0x1a0] sm:$0xff]
        %v5783 = vld [vmem:[%s19 + $0x1a8] sm:$0xff]
        %v5784 = vld [vmem:[%s19 + $0x1b0] sm:$0xff]
        %v5785 = vld [vmem:[%s19 + $0x1b8] sm:$0xff]
        %v5786 = vld [vmem:[%s19 + $0x1c0] sm:$0xff]
        %v5787 = vld [vmem:[%s19 + $0x1c8] sm:$0xff]
        %v5788 = vld [vmem:[%s19 + $0x1d0] sm:$0xff]
        %v5789 = vld [vmem:[%s19 + $0x1d8] sm:$0xff]
        %v5790 = vld [vmem:[%s19 + $0x1e0] sm:$0xff]
        %v5791 = vld [vmem:[%s19 + $0x1e8] sm:$0xff]
        %v5792 = vld [vmem:[%s19 + $0x1f0] sm:$0xff]
        %v5793 = vld [vmem:[%s19 + $0x1f8] sm:$0xff]
        %v5794 = vld [vmem:[%s20] sm:$0xff]
        %v5795 = vld [vmem:[%s20 + $0x8] sm:$0xff]
        %v5798 = vlaneseq
        %v5799 = vshrl.u32 %v5798, 7
        %v5800 = vsub.s32 0, %v5799
        %v5801 = vrot.slane %v5794, %v5800
        %v5802 = vlaneseq
        %v5803 = vshrl.u32 %v5802, 7
        %v5804 = vsub.s32 1, %v5803
        %v5805 = vrot.slane %v5794, %v5804
        %v5806 = vlaneseq
        %v5807 = vshrl.u32 %v5806, 7
        %v5808 = vsub.s32 2, %v5807
        %v5809 = vrot.slane %v5794, %v5808
        %v5810 = vlaneseq
        %v5811 = vshrl.u32 %v5810, 7
        %v5812 = vsub.s32 3, %v5811
        %v5813 = vrot.slane %v5794, %v5812
        %v5814 = vlaneseq
        %v5815 = vshrl.u32 %v5814, 7
        %v5816 = vsub.s32 4, %v5815
        %v5817 = vrot.slane %v5794, %v5816
        %v5818 = vlaneseq
        %v5819 = vshrl.u32 %v5818, 7
        %v5820 = vsub.s32 5, %v5819
        %v5821 = vrot.slane %v5794, %v5820
        %v5822 = vlaneseq
        %v5823 = vshrl.u32 %v5822, 7
        %v5824 = vsub.s32 6, %v5823
        %v5825 = vrot.slane %v5794, %v5824
        %v5826 = vlaneseq
        %v5827 = vshrl.u32 %v5826, 7
        %v5828 = vsub.s32 7, %v5827
        %v5829 = vrot.slane %v5794, %v5828
        %v5830 = vlaneseq
        %v5831 = vshrl.u32 %v5830, 7
        %v5832 = vsub.s32 0, %v5831
        %v5833 = vrot.slane %v5795, %v5832
        %v5834 = vlaneseq
        %v5835 = vshrl.u32 %v5834, 7
        %v5836 = vsub.s32 1, %v5835
        %v5837 = vrot.slane %v5795, %v5836
        %v5838 = vlaneseq
        %v5839 = vshrl.u32 %v5838, 7
        %v5840 = vsub.s32 2, %v5839
        %v5841 = vrot.slane %v5795, %v5840
        %v5842 = vlaneseq
        %v5843 = vshrl.u32 %v5842, 7
        %v5844 = vsub.s32 3, %v5843
        %v5845 = vrot.slane %v5795, %v5844
        %v5846 = vlaneseq
        %v5847 = vshrl.u32 %v5846, 7
        %v5848 = vsub.s32 4, %v5847
        %v5849 = vrot.slane %v5795, %v5848
        %v5850 = vlaneseq
        %v5851 = vshrl.u32 %v5850, 7
        %v5852 = vsub.s32 5, %v5851
        %v5853 = vrot.slane %v5795, %v5852
        %v5854 = vlaneseq
        %v5855 = vshrl.u32 %v5854, 7
        %v5856 = vsub.s32 6, %v5855
        %v5857 = vrot.slane %v5795, %v5856
        %v5858 = vlaneseq
        %v5859 = vshrl.u32 %v5858, 7
        %v5860 = vsub.s32 7, %v5859
        %v5861 = vrot.slane %v5795, %v5860
        %v5942 = vunpack.c.l.b16 %v5730
        %v5943 = vunpack.c.h.b16 %v5730
        %v5944 = vunpack.c.l.b16 %v5731
        %v5945 = vunpack.c.h.b16 %v5731
        %v5946 = vunpack.c.l.b16 %v5732
        %v5947 = vunpack.c.h.b16 %v5732
        %v5948 = vunpack.c.l.b16 %v5733
        %v5949 = vunpack.c.h.b16 %v5733
        %v5950 = vunpack.c.l.b16 %v5734
        %v5951 = vunpack.c.h.b16 %v5734
        %v5952 = vunpack.c.l.b16 %v5735
        %v5953 = vunpack.c.h.b16 %v5735
        %v5954 = vunpack.c.l.b16 %v5736
        %v5955 = vunpack.c.h.b16 %v5736
        %v5956 = vunpack.c.l.b16 %v5737
        %v5957 = vunpack.c.h.b16 %v5737
        %v5958 = vunpack.c.l.b16 %v5738
        %v5959 = vunpack.c.h.b16 %v5738
        %v5960 = vunpack.c.l.b16 %v5739
        %v5961 = vunpack.c.h.b16 %v5739
        %v5962 = vunpack.c.l.b16 %v5740
        %v5963 = vunpack.c.h.b16 %v5740
        %v5964 = vunpack.c.l.b16 %v5741
        %v5965 = vunpack.c.h.b16 %v5741
        %v5966 = vunpack.c.l.b16 %v5742
        %v5967 = vunpack.c.h.b16 %v5742
        %v5968 = vunpack.c.l.b16 %v5743
        %v5969 = vunpack.c.h.b16 %v5743
        %v5970 = vunpack.c.l.b16 %v5744
        %v5971 = vunpack.c.h.b16 %v5744
        %v5972 = vunpack.c.l.b16 %v5745
        %v5973 = vunpack.c.h.b16 %v5745
        %v5974 = vunpack.c.l.b16 %v5746
        %v5975 = vunpack.c.h.b16 %v5746
        %v5976 = vunpack.c.l.b16 %v5747
        %v5977 = vunpack.c.h.b16 %v5747
        %v5978 = vunpack.c.l.b16 %v5748
        %v5979 = vunpack.c.h.b16 %v5748
        %v5980 = vunpack.c.l.b16 %v5749
        %v5981 = vunpack.c.h.b16 %v5749
        %v5982 = vunpack.c.l.b16 %v5750
        %v5983 = vunpack.c.h.b16 %v5750
        %v5984 = vunpack.c.l.b16 %v5751
        %v5985 = vunpack.c.h.b16 %v5751
        %v5986 = vunpack.c.l.b16 %v5752
        %v5987 = vunpack.c.h.b16 %v5752
        %v5988 = vunpack.c.l.b16 %v5753
        %v5989 = vunpack.c.h.b16 %v5753
        %v5990 = vunpack.c.l.b16 %v5754
        %v5991 = vunpack.c.h.b16 %v5754
        %v5992 = vunpack.c.l.b16 %v5755
        %v5993 = vunpack.c.h.b16 %v5755
        %v5994 = vunpack.c.l.b16 %v5756
        %v5995 = vunpack.c.h.b16 %v5756
        %v5996 = vunpack.c.l.b16 %v5757
        %v5997 = vunpack.c.h.b16 %v5757
        %v5998 = vunpack.c.l.b16 %v5758
        %v5999 = vunpack.c.h.b16 %v5758
        %v6000 = vunpack.c.l.b16 %v5759
        %v6001 = vunpack.c.h.b16 %v5759
        %v6002 = vunpack.c.l.b16 %v5760
        %v6003 = vunpack.c.h.b16 %v5760
        %v6004 = vunpack.c.l.b16 %v5761
        %v6005 = vunpack.c.h.b16 %v5761
        %v6006 = vunpack.c.l.b16 %v5762
        %v6007 = vunpack.c.h.b16 %v5762
        %v6008 = vunpack.c.l.b16 %v5763
        %v6009 = vunpack.c.h.b16 %v5763
        %v6010 = vunpack.c.l.b16 %v5764
        %v6011 = vunpack.c.h.b16 %v5764
        %v6012 = vunpack.c.l.b16 %v5765
        %v6013 = vunpack.c.h.b16 %v5765
        %v6014 = vunpack.c.l.b16 %v5766
        %v6015 = vunpack.c.h.b16 %v5766
        %v6016 = vunpack.c.l.b16 %v5767
        %v6017 = vunpack.c.h.b16 %v5767
        %v6018 = vunpack.c.l.b16 %v5768
        %v6019 = vunpack.c.h.b16 %v5768
        %v6020 = vunpack.c.l.b16 %v5769
        %v6021 = vunpack.c.h.b16 %v5769
        %v6022 = vunpack.c.l.b16 %v5770
        %v6023 = vunpack.c.h.b16 %v5770
        %v6024 = vunpack.c.l.b16 %v5771
        %v6025 = vunpack.c.h.b16 %v5771
        %v6026 = vunpack.c.l.b16 %v5772
        %v6027 = vunpack.c.h.b16 %v5772
        %v6028 = vunpack.c.l.b16 %v5773
        %v6029 = vunpack.c.h.b16 %v5773
        %v6030 = vunpack.c.l.b16 %v5774
        %v6031 = vunpack.c.h.b16 %v5774
        %v6032 = vunpack.c.l.b16 %v5775
        %v6033 = vunpack.c.h.b16 %v5775
        %v6034 = vunpack.c.l.b16 %v5776
        %v6035 = vunpack.c.h.b16 %v5776
        %v6036 = vunpack.c.l.b16 %v5777
        %v6037 = vunpack.c.h.b16 %v5777
        %v6038 = vunpack.c.l.b16 %v5778
        %v6039 = vunpack.c.h.b16 %v5778
        %v6040 = vunpack.c.l.b16 %v5779
        %v6041 = vunpack.c.h.b16 %v5779
        %v6042 = vunpack.c.l.b16 %v5780
        %v6043 = vunpack.c.h.b16 %v5780
        %v6044 = vunpack.c.l.b16 %v5781
        %v6045 = vunpack.c.h.b16 %v5781
        %v6046 = vunpack.c.l.b16 %v5782
        %v6047 = vunpack.c.h.b16 %v5782
        %v6048 = vunpack.c.l.b16 %v5783
        %v6049 = vunpack.c.h.b16 %v5783
        %v6050 = vunpack.c.l.b16 %v5784
        %v6051 = vunpack.c.h.b16 %v5784
        %v6052 = vunpack.c.l.b16 %v5785
        %v6053 = vunpack.c.h.b16 %v5785
        %v6054 = vunpack.c.l.b16 %v5786
        %v6055 = vunpack.c.h.b16 %v5786
        %v6056 = vunpack.c.l.b16 %v5787
        %v6057 = vunpack.c.h.b16 %v5787
        %v6058 = vunpack.c.l.b16 %v5788
        %v6059 = vunpack.c.h.b16 %v5788
        %v6060 = vunpack.c.l.b16 %v5789
        %v6061 = vunpack.c.h.b16 %v5789
        %v6062 = vunpack.c.l.b16 %v5790
        %v6063 = vunpack.c.h.b16 %v5790
        %v6064 = vunpack.c.l.b16 %v5791
        %v6065 = vunpack.c.h.b16 %v5791
        %v6066 = vunpack.c.l.b16 %v5792
        %v6067 = vunpack.c.h.b16 %v5792
        %v6068 = vunpack.c.l.b16 %v5793
        %v6069 = vunpack.c.h.b16 %v5793
        %v6070 = vpack.c.b16 %v5958, %v5942
        %v6071 = vpack.c.b16 %v5959, %v5943
        %v6072 = vpack.c.b16 %v5960, %v5944
        %v6073 = vpack.c.b16 %v5961, %v5945
        %v6074 = vpack.c.b16 %v5962, %v5946
        %v6075 = vpack.c.b16 %v5963, %v5947
        %v6076 = vpack.c.b16 %v5964, %v5948
        %v6077 = vpack.c.b16 %v5965, %v5949
        %v6078 = vpack.c.b16 %v5966, %v5950
        %v6079 = vpack.c.b16 %v5967, %v5951
        %v6080 = vpack.c.b16 %v5968, %v5952
        %v6081 = vpack.c.b16 %v5969, %v5953
        %v6082 = vpack.c.b16 %v5970, %v5954
        %v6083 = vpack.c.b16 %v5971, %v5955
        %v6084 = vpack.c.b16 %v5972, %v5956
        %v6085 = vpack.c.b16 %v5973, %v5957
        %v6086 = vpack.c.b16 %v5990, %v5974
        %v6087 = vpack.c.b16 %v5991, %v5975
        %v6088 = vpack.c.b16 %v5992, %v5976
        %v6089 = vpack.c.b16 %v5993, %v5977
        %v6090 = vpack.c.b16 %v5994, %v5978
        %v6091 = vpack.c.b16 %v5995, %v5979
        %v6092 = vpack.c.b16 %v5996, %v5980
        %v6093 = vpack.c.b16 %v5997, %v5981
        %v6094 = vpack.c.b16 %v5998, %v5982
        %v6095 = vpack.c.b16 %v5999, %v5983
        %v6096 = vpack.c.b16 %v6000, %v5984
        %v6097 = vpack.c.b16 %v6001, %v5985
        %v6098 = vpack.c.b16 %v6002, %v5986
        %v6099 = vpack.c.b16 %v6003, %v5987
        %v6100 = vpack.c.b16 %v6004, %v5988
        %v6101 = vpack.c.b16 %v6005, %v5989
        %v6102 = vpack.c.b16 %v6022, %v6006
        %v6103 = vpack.c.b16 %v6023, %v6007
        %v6104 = vpack.c.b16 %v6024, %v6008
        %v6105 = vpack.c.b16 %v6025, %v6009
        %v6106 = vpack.c.b16 %v6026, %v6010
        %v6107 = vpack.c.b16 %v6027, %v6011
        %v6108 = vpack.c.b16 %v6028, %v6012
        %v6109 = vpack.c.b16 %v6029, %v6013
        %v6110 = vpack.c.b16 %v6030, %v6014
        %v6111 = vpack.c.b16 %v6031, %v6015
        %v6112 = vpack.c.b16 %v6032, %v6016
        %v6113 = vpack.c.b16 %v6033, %v6017
        %v6114 = vpack.c.b16 %v6034, %v6018
        %v6115 = vpack.c.b16 %v6035, %v6019
        %v6116 = vpack.c.b16 %v6036, %v6020
        %v6117 = vpack.c.b16 %v6037, %v6021
        %v6118 = vpack.c.b16 %v6054, %v6038
        %v6119 = vpack.c.b16 %v6055, %v6039
        %v6120 = vpack.c.b16 %v6056, %v6040
        %v6121 = vpack.c.b16 %v6057, %v6041
        %v6122 = vpack.c.b16 %v6058, %v6042
        %v6123 = vpack.c.b16 %v6059, %v6043
        %v6124 = vpack.c.b16 %v6060, %v6044
        %v6125 = vpack.c.b16 %v6061, %v6045
        %v6126 = vpack.c.b16 %v6062, %v6046
        %v6127 = vpack.c.b16 %v6063, %v6047
        %v6128 = vpack.c.b16 %v6064, %v6048
        %v6129 = vpack.c.b16 %v6065, %v6049
        %v6130 = vpack.c.b16 %v6066, %v6050
        %v6131 = vpack.c.b16 %v6067, %v6051
        %v6132 = vpack.c.b16 %v6068, %v6052
        %v6133 = vpack.c.b16 %v6069, %v6053
        %v6199 = vsel %vm1345, %v5722, 0
        %v6202 = vsel %vm1345, %v5723, 0
        %v6205 = vsel %vm1345, %v5724, 0
        %v6208 = vsel %vm1345, %v5725, 0
        %v6211 = vsel %vm1345, %v5726, 0
        %v6214 = vsel %vm1345, %v5727, 0
        %v6217 = vsel %vm1345, %v5728, 0
        %v6220 = vsel %vm1345, %v5729, 0
        %6222 = vmatprep.subr.bf16.mxu0 %v6071
        %6223 = vmatpush1.bf16.msra.mxu0 %v6070
        %6224 = vmatprep.subr.bf16.mxu0 %v6087
        %6225 = vmatpush1.bf16.msra.mxu0 %v6086
        %6226 = vmatprep.subr.bf16.mxu0 %v6103
        %6227 = vmatpush1.bf16.msra.mxu0 %v6102
        %6228 = vmatprep.subr.bf16.mxu0 %v6119
        %6229 = vmatpush1.bf16.msra.mxu0 %v6118
        %6230 = vmatprep.subr.bf16.mxu0 0
        %6231 = vmatpush1.bf16.msra.mxu0 0
        %6232 = vmatprep.subr.bf16.mxu0 0
        %6233 = vmatpush1.bf16.msra.mxu0 0
        %6234 = vmatprep.subr.bf16.mxu0 0
        %6235 = vmatpush1.bf16.msra.mxu0 0
        %6236 = vmatprep.subr.bf16.mxu0 0
        %6237 = vmatpush1.bf16.msra.mxu0 0
        %6238 = vmatprep.subr.bf16.mxu0 0
        %6239 = vmatpush1.bf16.msra.mxu0 0
        %6240 = vmatprep.subr.bf16.mxu0 0
        %6241 = vmatpush1.bf16.msra.mxu0 0
        %6242 = vmatprep.subr.bf16.mxu0 0
        %6243 = vmatpush1.bf16.msra.mxu0 0
        %6244 = vmatprep.subr.bf16.mxu0 0
        %6245 = vmatpush1.bf16.msra.mxu0 0
        %6246 = vmatprep.subr.bf16.mxu0 0
        %6247 = vmatpush1.bf16.msra.mxu0 0
        %6248 = vmatprep.subr.bf16.mxu0 0
        %6249 = vmatpush1.bf16.msra.mxu0 0
        %6250 = vmatprep.subr.bf16.mxu0 0
        %6251 = vmatpush1.bf16.msra.mxu0 0
        %6252 = vmatprep.subr.bf16.mxu0 0
        %6253 = vmatpush1.bf16.msra.mxu0 0
        %6254 = vmatprep.mubr.bf16.mxu0 0
        %6255 = vmatmul.mubr.bf16.gmra.mrb[0].mxu0 %v6199
        %v6256 = vpop.f32.mrb[0].mxu0
        %v6257 = vadd.f32 %v5801, %v6256
        %v6258 = vpop.f32.mrb[0].mxu0
        %v6259 = vadd.f32 %v5805, %v6258
        %v6260 = vpop.f32.mrb[0].mxu0
        %v6261 = vadd.f32 %v5801, %v6260
        %v6262 = vpop.f32.mrb[0].mxu0
        %v6263 = vadd.f32 %v5805, %v6262
        %6264 = vmatprep.mubr.bf16.mxu0 0
        %6265 = vmatmul.mubr.bf16.gmra.mrb[0].mxu0 %v6202
        %v6266 = vpop.f32.mrb[0].mxu0
        %v6267 = vadd.f32 %v5801, %v6266
        %v6268 = vpop.f32.mrb[0].mxu0
        %v6269 = vadd.f32 %v5805, %v6268
        %v6270 = vpop.f32.mrb[0].mxu0
        %v6271 = vadd.f32 %v5801, %v6270
        %v6272 = vpop.f32.mrb[0].mxu0
        %v6273 = vadd.f32 %v5805, %v6272
        %6274 = vmatprep.mubr.bf16.mxu0 0
        %6275 = vmatmul.mubr.bf16.gmra.mrb[0].mxu0 %v6205
        %v6276 = vpop.f32.mrb[0].mxu0
        %v6277 = vadd.f32 %v5801, %v6276
        %v6278 = vpop.f32.mrb[0].mxu0
        %v6279 = vadd.f32 %v5805, %v6278
        %v6280 = vpop.f32.mrb[0].mxu0
        %v6281 = vadd.f32 %v5801, %v6280
        %v6282 = vpop.f32.mrb[0].mxu0
        %v6283 = vadd.f32 %v5805, %v6282
        %6284 = vmatprep.mubr.bf16.mxu0 0
        %6285 = vmatmul.mubr.bf16.gmra.mrb[0].mxu0 %v6208
        %v6286 = vpop.f32.mrb[0].mxu0
        %v6287 = vadd.f32 %v5801, %v6286
        %v6288 = vpop.f32.mrb[0].mxu0
        %v6289 = vadd.f32 %v5805, %v6288
        %v6290 = vpop.f32.mrb[0].mxu0
        %v6291 = vadd.f32 %v5801, %v6290
        %v6292 = vpop.f32.mrb[0].mxu0
        %v6293 = vadd.f32 %v5805, %v6292
        %6294 = vmatprep.mubr.bf16.mxu0 0
        %6295 = vmatmul.mubr.bf16.gmra.mrb[0].mxu0 %v6211
        %v6296 = vpop.f32.mrb[0].mxu0
        %v6297 = vadd.f32 %v5801, %v6296
        %v6298 = vpop.f32.mrb[0].mxu0
        %v6299 = vadd.f32 %v5805, %v6298
        %v6300 = vpop.f32.mrb[0].mxu0
        %v6301 = vadd.f32 %v5801, %v6300
        %v6302 = vpop.f32.mrb[0].mxu0
        %v6303 = vadd.f32 %v5805, %v6302
        %6304 = vmatprep.mubr.bf16.mxu0 0
        %6305 = vmatmul.mubr.bf16.gmra.mrb[0].mxu0 %v6214
        %v6306 = vpop.f32.mrb[0].mxu0
        %v6307 = vadd.f32 %v5801, %v6306
        %v6308 = vpop.f32.mrb[0].mxu0
        %v6309 = vadd.f32 %v5805, %v6308
        %v6310 = vpop.f32.mrb[0].mxu0
        %v6311 = vadd.f32 %v5801, %v6310
        %v6312 = vpop.f32.mrb[0].mxu0
        %v6313 = vadd.f32 %v5805, %v6312
        %6314 = vmatprep.mubr.bf16.mxu0 0
        %6315 = vmatmul.mubr.bf16.gmra.mrb[0].mxu0 %v6217
        %v6316 = vpop.f32.mrb[0].mxu0
        %v6317 = vadd.f32 %v5801, %v6316
        %v6318 = vpop.f32.mrb[0].mxu0
        %v6319 = vadd.f32 %v5805, %v6318
        %v6320 = vpop.f32.mrb[0].mxu0
        %v6321 = vadd.f32 %v5801, %v6320
        %v6322 = vpop.f32.mrb[0].mxu0
        %v6323 = vadd.f32 %v5805, %v6322
        %6324 = vmatprep.mubr.bf16.mxu0 0
        %6325 = vmatmul.mubr.bf16.gmra.mrb[0].mxu0 %v6220
        %v6326 = vpop.f32.mrb[0].mxu0
        %v6327 = vadd.f32 %v5801, %v6326
        %v6328 = vpop.f32.mrb[0].mxu0
        %v6329 = vadd.f32 %v5805, %v6328
        %v6330 = vpop.f32.mrb[0].mxu0
        %v6331 = vadd.f32 %v5801, %v6330
        %v6332 = vpop.f32.mrb[0].mxu0
        %v6333 = vadd.f32 %v5805, %v6332
        %6334 = vdwg.mxu0
        %6335 = vmatprep.subr.bf16.mxu0 %v6073
        %6336 = vmatpush1.bf16.msra.mxu0 %v6072
        %6337 = vmatprep.subr.bf16.mxu0 %v6089
        %6338 = vmatpush1.bf16.msra.mxu0 %v6088
        %6339 = vmatprep.subr.bf16.mxu0 %v6105
        %6340 = vmatpush1.bf16.msra.mxu0 %v6104
        %6341 = vmatprep.subr.bf16.mxu0 %v6121
        %6342 = vmatpush1.bf16.msra.mxu0 %v6120
        %6343 = vmatprep.subr.bf16.mxu0 0
        %6344 = vmatpush1.bf16.msra.mxu0 0
        %6345 = vmatprep.subr.bf16.mxu0 0
        %6346 = vmatpush1.bf16.msra.mxu0 0
        %6347 = vmatprep.subr.bf16.mxu0 0
        %6348 = vmatpush1.bf16.msra.mxu0 0
        %6349 = vmatprep.subr.bf16.mxu0 0
        %6350 = vmatpush1.bf16.msra.mxu0 0
        %6351 = vmatprep.subr.bf16.mxu0 0
        %6352 = vmatpush1.bf16.msra.mxu0 0
        %6353 = vmatprep.subr.bf16.mxu0 0
        %6354 = vmatpush1.bf16.msra.mxu0 0
        %6355 = vmatprep.subr.bf16.mxu0 0
        %6356 = vmatpush1.bf16.msra.mxu0 0
        %6357 = vmatprep.subr.bf16.mxu0 0
        %6358 = vmatpush1.bf16.msra.mxu0 0
        %6359 = vmatprep.subr.bf16.mxu0 0
        %6360 = vmatpush1.bf16.msra.mxu0 0
        %6361 = vmatprep.subr.bf16.mxu0 0
        %6362 = vmatpush1.bf16.msra.mxu0 0
        %6363 = vmatprep.subr.bf16.mxu0 0
        %6364 = vmatpush1.bf16.msra.mxu0 0
        %6365 = vmatprep.subr.bf16.mxu0 0
        %6366 = vmatpush1.bf16.msra.mxu0 0
        %6367 = vmatprep.mubr.bf16.mxu0 0
        %6368 = vmatmul.mubr.bf16.gmra.mrb[0].mxu0 %v6199
        %v6369 = vpop.f32.mrb[0].mxu0
        %v6370 = vadd.f32 %v5809, %v6369
        %v6371 = vpop.f32.mrb[0].mxu0
        %v6372 = vadd.f32 %v5813, %v6371
        %v6373 = vpop.f32.mrb[0].mxu0
        %v6374 = vadd.f32 %v5809, %v6373
        %v6375 = vpop.f32.mrb[0].mxu0
        %v6376 = vadd.f32 %v5813, %v6375
        %6377 = vmatprep.mubr.bf16.mxu0 0
        %6378 = vmatmul.mubr.bf16.gmra.mrb[0].mxu0 %v6202
        %v6379 = vpop.f32.mrb[0].mxu0
        %v6380 = vadd.f32 %v5809, %v6379
        %v6381 = vpop.f32.mrb[0].mxu0
        %v6382 = vadd.f32 %v5813, %v6381
        %v6383 = vpop.f32.mrb[0].mxu0
        %v6384 = vadd.f32 %v5809, %v6383
        %v6385 = vpop.f32.mrb[0].mxu0
        %v6386 = vadd.f32 %v5813, %v6385
        %6387 = vmatprep.mubr.bf16.mxu0 0
        %6388 = vmatmul.mubr.bf16.gmra.mrb[0].mxu0 %v6205
        %v6389 = vpop.f32.mrb[0].mxu0
        %v6390 = vadd.f32 %v5809, %v6389
        %v6391 = vpop.f32.mrb[0].mxu0
        %v6392 = vadd.f32 %v5813, %v6391
        %v6393 = vpop.f32.mrb[0].mxu0
        %v6394 = vadd.f32 %v5809, %v6393
        %v6395 = vpop.f32.mrb[0].mxu0
        %v6396 = vadd.f32 %v5813, %v6395
        %6397 = vmatprep.mubr.bf16.mxu0 0
        %6398 = vmatmul.mubr.bf16.gmra.mrb[0].mxu0 %v6208
        %v6399 = vpop.f32.mrb[0].mxu0
        %v6400 = vadd.f32 %v5809, %v6399
        %v6401 = vpop.f32.mrb[0].mxu0
        %v6402 = vadd.f32 %v5813, %v6401
        %v6403 = vpop.f32.mrb[0].mxu0
        %v6404 = vadd.f32 %v5809, %v6403
        %v6405 = vpop.f32.mrb[0].mxu0
        %v6406 = vadd.f32 %v5813, %v6405
        %6407 = vmatprep.mubr.bf16.mxu0 0
        %6408 = vmatmul.mubr.bf16.gmra.mrb[0].mxu0 %v6211
        %v6409 = vpop.f32.mrb[0].mxu0
        %v6410 = vadd.f32 %v5809, %v6409
        %v6411 = vpop.f32.mrb[0].mxu0
        %v6412 = vadd.f32 %v5813, %v6411
        %v6413 = vpop.f32.mrb[0].mxu0
        %v6414 = vadd.f32 %v5809, %v6413
        %v6415 = vpop.f32.mrb[0].mxu0
        %v6416 = vadd.f32 %v5813, %v6415
        %6417 = vmatprep.mubr.bf16.mxu0 0
        %6418 = vmatmul.mubr.bf16.gmra.mrb[0].mxu0 %v6214
        %v6419 = vpop.f32.mrb[0].mxu0
        %v6420 = vadd.f32 %v5809, %v6419
        %v6421 = vpop.f32.mrb[0].mxu0
        %v6422 = vadd.f32 %v5813, %v6421
        %v6423 = vpop.f32.mrb[0].mxu0
        %v6424 = vadd.f32 %v5809, %v6423
        %v6425 = vpop.f32.mrb[0].mxu0
        %v6426 = vadd.f32 %v5813, %v6425
        %6427 = vmatprep.mubr.bf16.mxu0 0
        %6428 = vmatmul.mubr.bf16.gmra.mrb[0].mxu0 %v6217
        %v6429 = vpop.f32.mrb[0].mxu0
        %v6430 = vadd.f32 %v5809, %v6429
        %v6431 = vpop.f32.mrb[0].mxu0
        %v6432 = vadd.f32 %v5813, %v6431
        %v6433 = vpop.f32.mrb[0].mxu0
        %v6434 = vadd.f32 %v5809, %v6433
        %v6435 = vpop.f32.mrb[0].mxu0
        %v6436 = vadd.f32 %v5813, %v6435
        %6437 = vmatprep.mubr.bf16.mxu0 0
        %6438 = vmatmul.mubr.bf16.gmra.mrb[0].mxu0 %v6220
        %v6439 = vpop.f32.mrb[0].mxu0
        %v6440 = vadd.f32 %v5809, %v6439
        %v6441 = vpop.f32.mrb[0].mxu0
        %v6442 = vadd.f32 %v5813, %v6441
        %v6443 = vpop.f32.mrb[0].mxu0
        %v6444 = vadd.f32 %v5809, %v6443
        %v6445 = vpop.f32.mrb[0].mxu0
        %v6446 = vadd.f32 %v5813, %v6445
        %6447 = vdwg.mxu0
        %6448 = vmatprep.subr.bf16.mxu0 %v6075
        %6449 = vmatpush1.bf16.msra.mxu0 %v6074
        %6450 = vmatprep.subr.bf16.mxu0 %v6091
        %6451 = vmatpush1.bf16.msra.mxu0 %v6090
        %6452 = vmatprep.subr.bf16.mxu0 %v6107
        %6453 = vmatpush1.bf16.msra.mxu0 %v6106
        %6454 = vmatprep.subr.bf16.mxu0 %v6123
        %6455 = vmatpush1.bf16.msra.mxu0 %v6122
        %6456 = vmatprep.subr.bf16.mxu0 0
        %6457 = vmatpush1.bf16.msra.mxu0 0
        %6458 = vmatprep.subr.bf16.mxu0 0
        %6459 = vmatpush1.bf16.msra.mxu0 0
        %6460 = vmatprep.subr.bf16.mxu0 0
        %6461 = vmatpush1.bf16.msra.mxu0 0
        %6462 = vmatprep.subr.bf16.mxu0 0
        %6463 = vmatpush1.bf16.msra.mxu0 0
        %6464 = vmatprep.subr.bf16.mxu0 0
        %6465 = vmatpush1.bf16.msra.mxu0 0
        %6466 = vmatprep.subr.bf16.mxu0 0
        %6467 = vmatpush1.bf16.msra.mxu0 0
        %6468 = vmatprep.subr.bf16.mxu0 0
        %6469 = vmatpush1.bf16.msra.mxu0 0
        %6470 = vmatprep.subr.bf16.mxu0 0
        %6471 = vmatpush1.bf16.msra.mxu0 0
        %6472 = vmatprep.subr.bf16.mxu0 0
        %6473 = vmatpush1.bf16.msra.mxu0 0
        %6474 = vmatprep.subr.bf16.mxu0 0
        %6475 = vmatpush1.bf16.msra.mxu0 0
        %6476 = vmatprep.subr.bf16.mxu0 0
        %6477 = vmatpush1.bf16.msra.mxu0 0
        %6478 = vmatprep.subr.bf16.mxu0 0
        %6479 = vmatpush1.bf16.msra.mxu0 0
        %6480 = vmatprep.mubr.bf16.mxu0 0
        %6481 = vmatmul.mubr.bf16.gmra.mrb[0].mxu0 %v6199
        %v6482 = vpop.f32.mrb[0].mxu0
        %v6483 = vadd.f32 %v5817, %v6482
        %v6484 = vpop.f32.mrb[0].mxu0
        %v6485 = vadd.f32 %v5821, %v6484
        %v6486 = vpop.f32.mrb[0].mxu0
        %v6487 = vadd.f32 %v5817, %v6486
        %v6488 = vpop.f32.mrb[0].mxu0
        %v6489 = vadd.f32 %v5821, %v6488
        %6490 = vmatprep.mubr.bf16.mxu0 0
        %6491 = vmatmul.mubr.bf16.gmra.mrb[0].mxu0 %v6202
        %v6492 = vpop.f32.mrb[0].mxu0
        %v6493 = vadd.f32 %v5817, %v6492
        %v6494 = vpop.f32.mrb[0].mxu0
        %v6495 = vadd.f32 %v5821, %v6494
        %v6496 = vpop.f32.mrb[0].mxu0
        %v6497 = vadd.f32 %v5817, %v6496
        %v6498 = vpop.f32.mrb[0].mxu0
        %v6499 = vadd.f32 %v5821, %v6498
        %6500 = vmatprep.mubr.bf16.mxu0 0
        %6501 = vmatmul.mubr.bf16.gmra.mrb[0].mxu0 %v6205
        %v6502 = vpop.f32.mrb[0].mxu0
        %v6503 = vadd.f32 %v5817, %v6502
        %v6504 = vpop.f32.mrb[0].mxu0
        %v6505 = vadd.f32 %v5821, %v6504
        %v6506 = vpop.f32.mrb[0].mxu0
        %v6507 = vadd.f32 %v5817, %v6506
        %v6508 = vpop.f32.mrb[0].mxu0
        %v6509 = vadd.f32 %v5821, %v6508
        %6510 = vmatprep.mubr.bf16.mxu0 0
        %6511 = vmatmul.mubr.bf16.gmra.mrb[0].mxu0 %v6208
        %v6512 = vpop.f32.mrb[0].mxu0
        %v6513 = vadd.f32 %v5817, %v6512
        %v6514 = vpop.f32.mrb[0].mxu0
        %v6515 = vadd.f32 %v5821, %v6514
        %v6516 = vpop.f32.mrb[0].mxu0
        %v6517 = vadd.f32 %v5817, %v6516
        %v6518 = vpop.f32.mrb[0].mxu0
        %v6519 = vadd.f32 %v5821, %v6518
        %6520 = vmatprep.mubr.bf16.mxu0 0
        %6521 = vmatmul.mubr.bf16.gmra.mrb[0].mxu0 %v6211
        %v6522 = vpop.f32.mrb[0].mxu0
        %v6523 = vadd.f32 %v5817, %v6522
        %v6524 = vpop.f32.mrb[0].mxu0
        %v6525 = vadd.f32 %v5821, %v6524
        %v6526 = vpop.f32.mrb[0].mxu0
        %v6527 = vadd.f32 %v5817, %v6526
        %v6528 = vpop.f32.mrb[0].mxu0
        %v6529 = vadd.f32 %v5821, %v6528
        %6530 = vmatprep.mubr.bf16.mxu0 0
        %6531 = vmatmul.mubr.bf16.gmra.mrb[0].mxu0 %v6214
        %v6532 = vpop.f32.mrb[0].mxu0
        %v6533 = vadd.f32 %v5817, %v6532
        %v6534 = vpop.f32.mrb[0].mxu0
        %v6535 = vadd.f32 %v5821, %v6534
        %v6536 = vpop.f32.mrb[0].mxu0
        %v6537 = vadd.f32 %v5817, %v6536
        %v6538 = vpop.f32.mrb[0].mxu0
        %v6539 = vadd.f32 %v5821, %v6538
        %6540 = vmatprep.mubr.bf16.mxu0 0
        %6541 = vmatmul.mubr.bf16.gmra.mrb[0].mxu0 %v6217
        %v6542 = vpop.f32.mrb[0].mxu0
        %v6543 = vadd.f32 %v5817, %v6542
        %v6544 = vpop.f32.mrb[0].mxu0
        %v6545 = vadd.f32 %v5821, %v6544
        %v6546 = vpop.f32.mrb[0].mxu0
        %v6547 = vadd.f32 %v5817, %v6546
        %v6548 = vpop.f32.mrb[0].mxu0
        %v6549 = vadd.f32 %v5821, %v6548
        %6550 = vmatprep.mubr.bf16.mxu0 0
        %6551 = vmatmul.mubr.bf16.gmra.mrb[0].mxu0 %v6220
        %v6552 = vpop.f32.mrb[0].mxu0
        %v6553 = vadd.f32 %v5817, %v6552
        %v6554 = vpop.f32.mrb[0].mxu0
        %v6555 = vadd.f32 %v5821, %v6554
        %v6556 = vpop.f32.mrb[0].mxu0
        %v6557 = vadd.f32 %v5817, %v6556
        %v6558 = vpop.f32.mrb[0].mxu0
        %v6559 = vadd.f32 %v5821, %v6558
        %6560 = vdwg.mxu0
        %6561 = vmatprep.subr.bf16.mxu0 %v6077
        %6562 = vmatpush1.bf16.msra.mxu0 %v6076
        %6563 = vmatprep.subr.bf16.mxu0 %v6093
        %6564 = vmatpush1.bf16.msra.mxu0 %v6092
        %6565 = vmatprep.subr.bf16.mxu0 %v6109
        %6566 = vmatpush1.bf16.msra.mxu0 %v6108
        %6567 = vmatprep.subr.bf16.mxu0 %v6125
        %6568 = vmatpush1.bf16.msra.mxu0 %v6124
        %6569 = vmatprep.subr.bf16.mxu0 0
        %6570 = vmatpush1.bf16.msra.mxu0 0
        %6571 = vmatprep.subr.bf16.mxu0 0
        %6572 = vmatpush1.bf16.msra.mxu0 0
        %6573 = vmatprep.subr.bf16.mxu0 0
        %6574 = vmatpush1.bf16.msra.mxu0 0
        %6575 = vmatprep.subr.bf16.mxu0 0
        %6576 = vmatpush1.bf16.msra.mxu0 0
        %6577 = vmatprep.subr.bf16.mxu0 0
        %6578 = vmatpush1.bf16.msra.mxu0 0
        %6579 = vmatprep.subr.bf16.mxu0 0
        %6580 = vmatpush1.bf16.msra.mxu0 0
        %6581 = vmatprep.subr.bf16.mxu0 0
        %6582 = vmatpush1.bf16.msra.mxu0 0
        %6583 = vmatprep.subr.bf16.mxu0 0
        %6584 = vmatpush1.bf16.msra.mxu0 0
        %6585 = vmatprep.subr.bf16.mxu0 0
        %6586 = vmatpush1.bf16.msra.mxu0 0
        %6587 = vmatprep.subr.bf16.mxu0 0
        %6588 = vmatpush1.bf16.msra.mxu0 0
        %6589 = vmatprep.subr.bf16.mxu0 0
        %6590 = vmatpush1.bf16.msra.mxu0 0
        %6591 = vmatprep.subr.bf16.mxu0 0
        %6592 = vmatpush1.bf16.msra.mxu0 0
        %6593 = vmatprep.mubr.bf16.mxu0 0
        %6594 = vmatmul.mubr.bf16.gmra.mrb[0].mxu0 %v6199
        %v6595 = vpop.f32.mrb[0].mxu0
        %v6596 = vadd.f32 %v5825, %v6595
        %v6597 = vpop.f32.mrb[0].mxu0
        %v6598 = vadd.f32 %v5829, %v6597
        %v6599 = vpop.f32.mrb[0].mxu0
        %v6600 = vadd.f32 %v5825, %v6599
        %v6601 = vpop.f32.mrb[0].mxu0
        %v6602 = vadd.f32 %v5829, %v6601
        %6603 = vmatprep.mubr.bf16.mxu0 0
        %6604 = vmatmul.mubr.bf16.gmra.mrb[0].mxu0 %v6202
        %v6605 = vpop.f32.mrb[0].mxu0
        %v6606 = vadd.f32 %v5825, %v6605
        %v6607 = vpop.f32.mrb[0].mxu0
        %v6608 = vadd.f32 %v5829, %v6607
        %v6609 = vpop.f32.mrb[0].mxu0
        %v6610 = vadd.f32 %v5825, %v6609
        %v6611 = vpop.f32.mrb[0].mxu0
        %v6612 = vadd.f32 %v5829, %v6611
        %6613 = vmatprep.mubr.bf16.mxu0 0
        %6614 = vmatmul.mubr.bf16.gmra.mrb[0].mxu0 %v6205
        %v6615 = vpop.f32.mrb[0].mxu0
        %v6616 = vadd.f32 %v5825, %v6615
        %v6617 = vpop.f32.mrb[0].mxu0
        %v6618 = vadd.f32 %v5829, %v6617
        %v6619 = vpop.f32.mrb[0].mxu0
        %v6620 = vadd.f32 %v5825, %v6619
        %v6621 = vpop.f32.mrb[0].mxu0
        %v6622 = vadd.f32 %v5829, %v6621
        %6623 = vmatprep.mubr.bf16.mxu0 0
        %6624 = vmatmul.mubr.bf16.gmra.mrb[0].mxu0 %v6208
        %v6625 = vpop.f32.mrb[0].mxu0
        %v6626 = vadd.f32 %v5825, %v6625
        %v6627 = vpop.f32.mrb[0].mxu0
        %v6628 = vadd.f32 %v5829, %v6627
        %v6629 = vpop.f32.mrb[0].mxu0
        %v6630 = vadd.f32 %v5825, %v6629
        %v6631 = vpop.f32.mrb[0].mxu0
        %v6632 = vadd.f32 %v5829, %v6631
        %6633 = vmatprep.mubr.bf16.mxu0 0
        %6634 = vmatmul.mubr.bf16.gmra.mrb[0].mxu0 %v6211
        %v6635 = vpop.f32.mrb[0].mxu0
        %v6636 = vadd.f32 %v5825, %v6635
        %v6637 = vpop.f32.mrb[0].mxu0
        %v6638 = vadd.f32 %v5829, %v6637
        %v6639 = vpop.f32.mrb[0].mxu0
        %v6640 = vadd.f32 %v5825, %v6639
        %v6641 = vpop.f32.mrb[0].mxu0
        %v6642 = vadd.f32 %v5829, %v6641
        %6643 = vmatprep.mubr.bf16.mxu0 0
        %6644 = vmatmul.mubr.bf16.gmra.mrb[0].mxu0 %v6214
        %v6645 = vpop.f32.mrb[0].mxu0
        %v6646 = vadd.f32 %v5825, %v6645
        %v6647 = vpop.f32.mrb[0].mxu0
        %v6648 = vadd.f32 %v5829, %v6647
        %v6649 = vpop.f32.mrb[0].mxu0
        %v6650 = vadd.f32 %v5825, %v6649
        %v6651 = vpop.f32.mrb[0].mxu0
        %v6652 = vadd.f32 %v5829, %v6651
        %6653 = vmatprep.mubr.bf16.mxu0 0
        %6654 = vmatmul.mubr.bf16.gmra.mrb[0].mxu0 %v6217
        %v6655 = vpop.f32.mrb[0].mxu0
        %v6656 = vadd.f32 %v5825, %v6655
        %v6657 = vpop.f32.mrb[0].mxu0
        %v6658 = vadd.f32 %v5829, %v6657
        %v6659 = vpop.f32.mrb[0].mxu0
        %v6660 = vadd.f32 %v5825, %v6659
        %v6661 = vpop.f32.mrb[0].mxu0
        %v6662 = vadd.f32 %v5829, %v6661
        %6663 = vmatprep.mubr.bf16.mxu0 0
        %6664 = vmatmul.mubr.bf16.gmra.mrb[0].mxu0 %v6220
        %v6665 = vpop.f32.mrb[0].mxu0
        %v6666 = vadd.f32 %v5825, %v6665
        %v6667 = vpop.f32.mrb[0].mxu0
        %v6668 = vadd.f32 %v5829, %v6667
        %v6669 = vpop.f32.mrb[0].mxu0
        %v6670 = vadd.f32 %v5825, %v6669
        %v6671 = vpop.f32.mrb[0].mxu0
        %v6672 = vadd.f32 %v5829, %v6671
        %6673 = vdwg.mxu0
        %6674 = vmatprep.subr.bf16.mxu0 %v6079
        %6675 = vmatpush1.bf16.msra.mxu0 %v6078
        %6676 = vmatprep.subr.bf16.mxu0 %v6095
        %6677 = vmatpush1.bf16.msra.mxu0 %v6094
        %6678 = vmatprep.subr.bf16.mxu0 %v6111
        %6679 = vmatpush1.bf16.msra.mxu0 %v6110
        %6680 = vmatprep.subr.bf16.mxu0 %v6127
        %6681 = vmatpush1.bf16.msra.mxu0 %v6126
        %6682 = vmatprep.subr.bf16.mxu0 0
        %6683 = vmatpush1.bf16.msra.mxu0 0
        %6684 = vmatprep.subr.bf16.mxu0 0
        %6685 = vmatpush1.bf16.msra.mxu0 0
        %6686 = vmatprep.subr.bf16.mxu0 0
        %6687 = vmatpush1.bf16.msra.mxu0 0
        %6688 = vmatprep.subr.bf16.mxu0 0
        %6689 = vmatpush1.bf16.msra.mxu0 0
        %6690 = vmatprep.subr.bf16.mxu0 0
        %6691 = vmatpush1.bf16.msra.mxu0 0
        %6692 = vmatprep.subr.bf16.mxu0 0
        %6693 = vmatpush1.bf16.msra.mxu0 0
        %6694 = vmatprep.subr.bf16.mxu0 0
        %6695 = vmatpush1.bf16.msra.mxu0 0
        %6696 = vmatprep.subr.bf16.mxu0 0
        %6697 = vmatpush1.bf16.msra.mxu0 0
        %6698 = vmatprep.subr.bf16.mxu0 0
        %6699 = vmatpush1.bf16.msra.mxu0 0
        %6700 = vmatprep.subr.bf16.mxu0 0
        %6701 = vmatpush1.bf16.msra.mxu0 0
        %6702 = vmatprep.subr.bf16.mxu0 0
        %6703 = vmatpush1.bf16.msra.mxu0 0
        %6704 = vmatprep.subr.bf16.mxu0 0
        %6705 = vmatpush1.bf16.msra.mxu0 0
        %6706 = vmatprep.mubr.bf16.mxu0 0
        %6707 = vmatmul.mubr.bf16.gmra.mrb[0].mxu0 %v6199
        %v6708 = vpop.f32.mrb[0].mxu0
        %v6709 = vadd.f32 %v5833, %v6708
        %v6710 = vpop.f32.mrb[0].mxu0
        %v6711 = vadd.f32 %v5837, %v6710
        %v6712 = vpop.f32.mrb[0].mxu0
        %v6713 = vadd.f32 %v5833, %v6712
        %v6714 = vpop.f32.mrb[0].mxu0
        %v6715 = vadd.f32 %v5837, %v6714
        %6716 = vmatprep.mubr.bf16.mxu0 0
        %6717 = vmatmul.mubr.bf16.gmra.mrb[0].mxu0 %v6202
        %v6718 = vpop.f32.mrb[0].mxu0
        %v6719 = vadd.f32 %v5833, %v6718
        %v6720 = vpop.f32.mrb[0].mxu0
        %v6721 = vadd.f32 %v5837, %v6720
        %v6722 = vpop.f32.mrb[0].mxu0
        %v6723 = vadd.f32 %v5833, %v6722
        %v6724 = vpop.f32.mrb[0].mxu0
        %v6725 = vadd.f32 %v5837, %v6724
        %6726 = vmatprep.mubr.bf16.mxu0 0
        %6727 = vmatmul.mubr.bf16.gmra.mrb[0].mxu0 %v6205
        %v6728 = vpop.f32.mrb[0].mxu0
        %v6729 = vadd.f32 %v5833, %v6728
        %v6730 = vpop.f32.mrb[0].mxu0
        %v6731 = vadd.f32 %v5837, %v6730
        %v6732 = vpop.f32.mrb[0].mxu0
        %v6733 = vadd.f32 %v5833, %v6732
        %v6734 = vpop.f32.mrb[0].mxu0
        %v6735 = vadd.f32 %v5837, %v6734
        %6736 = vmatprep.mubr.bf16.mxu0 0
        %6737 = vmatmul.mubr.bf16.gmra.mrb[0].mxu0 %v6208
        %v6738 = vpop.f32.mrb[0].mxu0
        %v6739 = vadd.f32 %v5833, %v6738
        %v6740 = vpop.f32.mrb[0].mxu0
        %v6741 = vadd.f32 %v5837, %v6740
        %v6742 = vpop.f32.mrb[0].mxu0
        %v6743 = vadd.f32 %v5833, %v6742
        %v6744 = vpop.f32.mrb[0].mxu0
        %v6745 = vadd.f32 %v5837, %v6744
        %6746 = vmatprep.mubr.bf16.mxu0 0
        %6747 = vmatmul.mubr.bf16.gmra.mrb[0].mxu0 %v6211
        %v6748 = vpop.f32.mrb[0].mxu0
        %v6749 = vadd.f32 %v5833, %v6748
        %v6750 = vpop.f32.mrb[0].mxu0
        %v6751 = vadd.f32 %v5837, %v6750
        %v6752 = vpop.f32.mrb[0].mxu0
        %v6753 = vadd.f32 %v5833, %v6752
        %v6754 = vpop.f32.mrb[0].mxu0
        %v6755 = vadd.f32 %v5837, %v6754
        %6756 = vmatprep.mubr.bf16.mxu0 0
        %6757 = vmatmul.mubr.bf16.gmra.mrb[0].mxu0 %v6214
        %v6758 = vpop.f32.mrb[0].mxu0
        %v6759 = vadd.f32 %v5833, %v6758
        %v6760 = vpop.f32.mrb[0].mxu0
        %v6761 = vadd.f32 %v5837, %v6760
        %v6762 = vpop.f32.mrb[0].mxu0
        %v6763 = vadd.f32 %v5833, %v6762
        %v6764 = vpop.f32.mrb[0].mxu0
        %v6765 = vadd.f32 %v5837, %v6764
        %6766 = vmatprep.mubr.bf16.mxu0 0
        %6767 = vmatmul.mubr.bf16.gmra.mrb[0].mxu0 %v6217
        %v6768 = vpop.f32.mrb[0].mxu0
        %v6769 = vadd.f32 %v5833, %v6768
        %v6770 = vpop.f32.mrb[0].mxu0
        %v6771 = vadd.f32 %v5837, %v6770
        %v6772 = vpop.f32.mrb[0].mxu0
        %v6773 = vadd.f32 %v5833, %v6772
        %v6774 = vpop.f32.mrb[0].mxu0
        %v6775 = vadd.f32 %v5837, %v6774
        %6776 = vmatprep.mubr.bf16.mxu0 0
        %6777 = vmatmul.mubr.bf16.gmra.mrb[0].mxu0 %v6220
        %v6778 = vpop.f32.mrb[0].mxu0
        %v6779 = vadd.f32 %v5833, %v6778
        %v6780 = vpop.f32.mrb[0].mxu0
        %v6781 = vadd.f32 %v5837, %v6780
        %v6782 = vpop.f32.mrb[0].mxu0
        %v6783 = vadd.f32 %v5833, %v6782
        %v6784 = vpop.f32.mrb[0].mxu0
        %v6785 = vadd.f32 %v5837, %v6784
        %6786 = vdwg.mxu0
        %6787 = vmatprep.subr.bf16.mxu0 %v6081
        %6788 = vmatpush1.bf16.msra.mxu0 %v6080
        %6789 = vmatprep.subr.bf16.mxu0 %v6097
        %6790 = vmatpush1.bf16.msra.mxu0 %v6096
        %6791 = vmatprep.subr.bf16.mxu0 %v6113
        %6792 = vmatpush1.bf16.msra.mxu0 %v6112
        %6793 = vmatprep.subr.bf16.mxu0 %v6129
        %6794 = vmatpush1.bf16.msra.mxu0 %v6128
        %6795 = vmatprep.subr.bf16.mxu0 0
        %6796 = vmatpush1.bf16.msra.mxu0 0
        %6797 = vmatprep.subr.bf16.mxu0 0
        %6798 = vmatpush1.bf16.msra.mxu0 0
        %6799 = vmatprep.subr.bf16.mxu0 0
        %6800 = vmatpush1.bf16.msra.mxu0 0
        %6801 = vmatprep.subr.bf16.mxu0 0
        %6802 = vmatpush1.bf16.msra.mxu0 0
        %6803 = vmatprep.subr.bf16.mxu0 0
        %6804 = vmatpush1.bf16.msra.mxu0 0
        %6805 = vmatprep.subr.bf16.mxu0 0
        %6806 = vmatpush1.bf16.msra.mxu0 0
        %6807 = vmatprep.subr.bf16.mxu0 0
        %6808 = vmatpush1.bf16.msra.mxu0 0
        %6809 = vmatprep.subr.bf16.mxu0 0
        %6810 = vmatpush1.bf16.msra.mxu0 0
        %6811 = vmatprep.subr.bf16.mxu0 0
        %6812 = vmatpush1.bf16.msra.mxu0 0
        %6813 = vmatprep.subr.bf16.mxu0 0
        %6814 = vmatpush1.bf16.msra.mxu0 0
        %6815 = vmatprep.subr.bf16.mxu0 0
        %6816 = vmatpush1.bf16.msra.mxu0 0
        %6817 = vmatprep.subr.bf16.mxu0 0
        %6818 = vmatpush1.bf16.msra.mxu0 0
        %6819 = vmatprep.mubr.bf16.mxu0 0
        %6820 = vmatmul.mubr.bf16.gmra.mrb[0].mxu0 %v6199
        %v6821 = vpop.f32.mrb[0].mxu0
        %v6822 = vadd.f32 %v5841, %v6821
        %v6823 = vpop.f32.mrb[0].mxu0
        %v6824 = vadd.f32 %v5845, %v6823
        %v6825 = vpop.f32.mrb[0].mxu0
        %v6826 = vadd.f32 %v5841, %v6825
        %v6827 = vpop.f32.mrb[0].mxu0
        %v6828 = vadd.f32 %v5845, %v6827
        %6829 = vmatprep.mubr.bf16.mxu0 0
        %6830 = vmatmul.mubr.bf16.gmra.mrb[0].mxu0 %v6202
        %v6831 = vpop.f32.mrb[0].mxu0
        %v6832 = vadd.f32 %v5841, %v6831
        %v6833 = vpop.f32.mrb[0].mxu0
        %v6834 = vadd.f32 %v5845, %v6833
        %v6835 = vpop.f32.mrb[0].mxu0
        %v6836 = vadd.f32 %v5841, %v6835
        %v6837 = vpop.f32.mrb[0].mxu0
        %v6838 = vadd.f32 %v5845, %v6837
        %6839 = vmatprep.mubr.bf16.mxu0 0
        %6840 = vmatmul.mubr.bf16.gmra.mrb[0].mxu0 %v6205
        %v6841 = vpop.f32.mrb[0].mxu0
        %v6842 = vadd.f32 %v5841, %v6841
        %v6843 = vpop.f32.mrb[0].mxu0
        %v6844 = vadd.f32 %v5845, %v6843
        %v6845 = vpop.f32.mrb[0].mxu0
        %v6846 = vadd.f32 %v5841, %v6845
        %v6847 = vpop.f32.mrb[0].mxu0
        %v6848 = vadd.f32 %v5845, %v6847
        %6849 = vmatprep.mubr.bf16.mxu0 0
        %6850 = vmatmul.mubr.bf16.gmra.mrb[0].mxu0 %v6208
        %v6851 = vpop.f32.mrb[0].mxu0
        %v6852 = vadd.f32 %v5841, %v6851
        %v6853 = vpop.f32.mrb[0].mxu0
        %v6854 = vadd.f32 %v5845, %v6853
        %v6855 = vpop.f32.mrb[0].mxu0
        %v6856 = vadd.f32 %v5841, %v6855
        %v6857 = vpop.f32.mrb[0].mxu0
        %v6858 = vadd.f32 %v5845, %v6857
        %6859 = vmatprep.mubr.bf16.mxu0 0
        %6860 = vmatmul.mubr.bf16.gmra.mrb[0].mxu0 %v6211
        %v6861 = vpop.f32.mrb[0].mxu0
        %v6862 = vadd.f32 %v5841, %v6861
        %v6863 = vpop.f32.mrb[0].mxu0
        %v6864 = vadd.f32 %v5845, %v6863
        %v6865 = vpop.f32.mrb[0].mxu0
        %v6866 = vadd.f32 %v5841, %v6865
        %v6867 = vpop.f32.mrb[0].mxu0
        %v6868 = vadd.f32 %v5845, %v6867
        %6869 = vmatprep.mubr.bf16.mxu0 0
        %6870 = vmatmul.mubr.bf16.gmra.mrb[0].mxu0 %v6214
        %v6871 = vpop.f32.mrb[0].mxu0
        %v6872 = vadd.f32 %v5841, %v6871
        %v6873 = vpop.f32.mrb[0].mxu0
        %v6874 = vadd.f32 %v5845, %v6873
        %v6875 = vpop.f32.mrb[0].mxu0
        %v6876 = vadd.f32 %v5841, %v6875
        %v6877 = vpop.f32.mrb[0].mxu0
        %v6878 = vadd.f32 %v5845, %v6877
        %6879 = vmatprep.mubr.bf16.mxu0 0
        %6880 = vmatmul.mubr.bf16.gmra.mrb[0].mxu0 %v6217
        %v6881 = vpop.f32.mrb[0].mxu0
        %v6882 = vadd.f32 %v5841, %v6881
        %v6883 = vpop.f32.mrb[0].mxu0
        %v6884 = vadd.f32 %v5845, %v6883
        %v6885 = vpop.f32.mrb[0].mxu0
        %v6886 = vadd.f32 %v5841, %v6885
        %v6887 = vpop.f32.mrb[0].mxu0
        %v6888 = vadd.f32 %v5845, %v6887
        %6889 = vmatprep.mubr.bf16.mxu0 0
        %6890 = vmatmul.mubr.bf16.gmra.mrb[0].mxu0 %v6220
        %v6891 = vpop.f32.mrb[0].mxu0
        %v6892 = vadd.f32 %v5841, %v6891
        %v6893 = vpop.f32.mrb[0].mxu0
        %v6894 = vadd.f32 %v5845, %v6893
        %v6895 = vpop.f32.mrb[0].mxu0
        %v6896 = vadd.f32 %v5841, %v6895
        %v6897 = vpop.f32.mrb[0].mxu0
        %v6898 = vadd.f32 %v5845, %v6897
        %6899 = vdwg.mxu0
        %6900 = vmatprep.subr.bf16.mxu0 %v6083
        %6901 = vmatpush1.bf16.msra.mxu0 %v6082
        %6902 = vmatprep.subr.bf16.mxu0 %v6099
        %6903 = vmatpush1.bf16.msra.mxu0 %v6098
        %6904 = vmatprep.subr.bf16.mxu0 %v6115
        %6905 = vmatpush1.bf16.msra.mxu0 %v6114
        %6906 = vmatprep.subr.bf16.mxu0 %v6131
        %6907 = vmatpush1.bf16.msra.mxu0 %v6130
        %6908 = vmatprep.subr.bf16.mxu0 0
        %6909 = vmatpush1.bf16.msra.mxu0 0
        %6910 = vmatprep.subr.bf16.mxu0 0
        %6911 = vmatpush1.bf16.msra.mxu0 0
        %6912 = vmatprep.subr.bf16.mxu0 0
        %6913 = vmatpush1.bf16.msra.mxu0 0
        %6914 = vmatprep.subr.bf16.mxu0 0
        %6915 = vmatpush1.bf16.msra.mxu0 0
        %6916 = vmatprep.subr.bf16.mxu0 0
        %6917 = vmatpush1.bf16.msra.mxu0 0
        %6918 = vmatprep.subr.bf16.mxu0 0
        %6919 = vmatpush1.bf16.msra.mxu0 0
        %6920 = vmatprep.subr.bf16.mxu0 0
        %6921 = vmatpush1.bf16.msra.mxu0 0
        %6922 = vmatprep.subr.bf16.mxu0 0
        %6923 = vmatpush1.bf16.msra.mxu0 0
        %6924 = vmatprep.subr.bf16.mxu0 0
        %6925 = vmatpush1.bf16.msra.mxu0 0
        %6926 = vmatprep.subr.bf16.mxu0 0
        %6927 = vmatpush1.bf16.msra.mxu0 0
        %6928 = vmatprep.subr.bf16.mxu0 0
        %6929 = vmatpush1.bf16.msra.mxu0 0
        %6930 = vmatprep.subr.bf16.mxu0 0
        %6931 = vmatpush1.bf16.msra.mxu0 0
        %6932 = vmatprep.mubr.bf16.mxu0 0
        %6933 = vmatmul.mubr.bf16.gmra.mrb[0].mxu0 %v6199
        %v6934 = vpop.f32.mrb[0].mxu0
        %v6935 = vadd.f32 %v5849, %v6934
        %v6936 = vpop.f32.mrb[0].mxu0
        %v6937 = vadd.f32 %v5853, %v6936
        %v6938 = vpop.f32.mrb[0].mxu0
        %v6939 = vadd.f32 %v5849, %v6938
        %v6940 = vpop.f32.mrb[0].mxu0
        %v6941 = vadd.f32 %v5853, %v6940
        %6942 = vmatprep.mubr.bf16.mxu0 0
        %6943 = vmatmul.mubr.bf16.gmra.mrb[0].mxu0 %v6202
        %v6944 = vpop.f32.mrb[0].mxu0
        %v6945 = vadd.f32 %v5849, %v6944
        %v6946 = vpop.f32.mrb[0].mxu0
        %v6947 = vadd.f32 %v5853, %v6946
        %v6948 = vpop.f32.mrb[0].mxu0
        %v6949 = vadd.f32 %v5849, %v6948
        %v6950 = vpop.f32.mrb[0].mxu0
        %v6951 = vadd.f32 %v5853, %v6950
        %6952 = vmatprep.mubr.bf16.mxu0 0
        %6953 = vmatmul.mubr.bf16.gmra.mrb[0].mxu0 %v6205
        %v6954 = vpop.f32.mrb[0].mxu0
        %v6955 = vadd.f32 %v5849, %v6954
        %v6956 = vpop.f32.mrb[0].mxu0
        %v6957 = vadd.f32 %v5853, %v6956
        %v6958 = vpop.f32.mrb[0].mxu0
        %v6959 = vadd.f32 %v5849, %v6958
        %v6960 = vpop.f32.mrb[0].mxu0
        %v6961 = vadd.f32 %v5853, %v6960
        %6962 = vmatprep.mubr.bf16.mxu0 0
        %6963 = vmatmul.mubr.bf16.gmra.mrb[0].mxu0 %v6208
        %v6964 = vpop.f32.mrb[0].mxu0
        %v6965 = vadd.f32 %v5849, %v6964
        %v6966 = vpop.f32.mrb[0].mxu0
        %v6967 = vadd.f32 %v5853, %v6966
        %v6968 = vpop.f32.mrb[0].mxu0
        %v6969 = vadd.f32 %v5849, %v6968
        %v6970 = vpop.f32.mrb[0].mxu0
        %v6971 = vadd.f32 %v5853, %v6970
        %6972 = vmatprep.mubr.bf16.mxu0 0
        %6973 = vmatmul.mubr.bf16.gmra.mrb[0].mxu0 %v6211
        %v6974 = vpop.f32.mrb[0].mxu0
        %v6975 = vadd.f32 %v5849, %v6974
        %v6976 = vpop.f32.mrb[0].mxu0
        %v6977 = vadd.f32 %v5853, %v6976
        %v6978 = vpop.f32.mrb[0].mxu0
        %v6979 = vadd.f32 %v5849, %v6978
        %v6980 = vpop.f32.mrb[0].mxu0
        %v6981 = vadd.f32 %v5853, %v6980
        %6982 = vmatprep.mubr.bf16.mxu0 0
        %6983 = vmatmul.mubr.bf16.gmra.mrb[0].mxu0 %v6214
        %v6984 = vpop.f32.mrb[0].mxu0
        %v6985 = vadd.f32 %v5849, %v6984
        %v6986 = vpop.f32.mrb[0].mxu0
        %v6987 = vadd.f32 %v5853, %v6986
        %v6988 = vpop.f32.mrb[0].mxu0
        %v6989 = vadd.f32 %v5849, %v6988
        %v6990 = vpop.f32.mrb[0].mxu0
        %v6991 = vadd.f32 %v5853, %v6990
        %6992 = vmatprep.mubr.bf16.mxu0 0
        %6993 = vmatmul.mubr.bf16.gmra.mrb[0].mxu0 %v6217
        %v6994 = vpop.f32.mrb[0].mxu0
        %v6995 = vadd.f32 %v5849, %v6994
        %v6996 = vpop.f32.mrb[0].mxu0
        %v6997 = vadd.f32 %v5853, %v6996
        %v6998 = vpop.f32.mrb[0].mxu0
        %v6999 = vadd.f32 %v5849, %v6998
        %v7000 = vpop.f32.mrb[0].mxu0
        %v7001 = vadd.f32 %v5853, %v7000
        %7002 = vmatprep.mubr.bf16.mxu0 0
        %7003 = vmatmul.mubr.bf16.gmra.mrb[0].mxu0 %v6220
        %v7004 = vpop.f32.mrb[0].mxu0
        %v7005 = vadd.f32 %v5849, %v7004
        %v7006 = vpop.f32.mrb[0].mxu0
        %v7007 = vadd.f32 %v5853, %v7006
        %v7008 = vpop.f32.mrb[0].mxu0
        %v7009 = vadd.f32 %v5849, %v7008
        %v7010 = vpop.f32.mrb[0].mxu0
        %v7011 = vadd.f32 %v5853, %v7010
        %7012 = vdwg.mxu0
        %7013 = vmatprep.subr.bf16.mxu0 %v6085
        %7014 = vmatpush1.bf16.msra.mxu0 %v6084
        %7015 = vmatprep.subr.bf16.mxu0 %v6101
        %7016 = vmatpush1.bf16.msra.mxu0 %v6100
        %7017 = vmatprep.subr.bf16.mxu0 %v6117
        %7018 = vmatpush1.bf16.msra.mxu0 %v6116
        %7019 = vmatprep.subr.bf16.mxu0 %v6133
        %7020 = vmatpush1.bf16.msra.mxu0 %v6132
        %7021 = vmatprep.subr.bf16.mxu0 0
        %7022 = vmatpush1.bf16.msra.mxu0 0
        %7023 = vmatprep.subr.bf16.mxu0 0
        %7024 = vmatpush1.bf16.msra.mxu0 0
        %7025 = vmatprep.subr.bf16.mxu0 0
        %7026 = vmatpush1.bf16.msra.mxu0 0
        %7027 = vmatprep.subr.bf16.mxu0 0
        %7028 = vmatpush1.bf16.msra.mxu0 0
        %7029 = vmatprep.subr.bf16.mxu0 0
        %7030 = vmatpush1.bf16.msra.mxu0 0
        %7031 = vmatprep.subr.bf16.mxu0 0
        %7032 = vmatpush1.bf16.msra.mxu0 0
        %7033 = vmatprep.subr.bf16.mxu0 0
        %7034 = vmatpush1.bf16.msra.mxu0 0
        %7035 = vmatprep.subr.bf16.mxu0 0
        %7036 = vmatpush1.bf16.msra.mxu0 0
        %7037 = vmatprep.subr.bf16.mxu0 0
        %7038 = vmatpush1.bf16.msra.mxu0 0
        %7039 = vmatprep.subr.bf16.mxu0 0
        %7040 = vmatpush1.bf16.msra.mxu0 0
        %7041 = vmatprep.subr.bf16.mxu0 0
        %7042 = vmatpush1.bf16.msra.mxu0 0
        %7043 = vmatprep.subr.bf16.mxu0 0
        %7044 = vmatpush1.bf16.msra.mxu0 0
        %7045 = vmatprep.mubr.bf16.mxu0 0
        %7046 = vmatmul.mubr.bf16.gmra.mrb[0].mxu0 %v6199
        %v7047 = vpop.f32.mrb[0].mxu0
        %v7048 = vadd.f32 %v5857, %v7047
        %v7049 = vpop.f32.mrb[0].mxu0
        %v7050 = vadd.f32 %v5861, %v7049
        %v7051 = vpop.f32.mrb[0].mxu0
        %v7052 = vadd.f32 %v5857, %v7051
        %v7053 = vpop.f32.mrb[0].mxu0
        %v7054 = vadd.f32 %v5861, %v7053
        %7055 = vmatprep.mubr.bf16.mxu0 0
        %7056 = vmatmul.mubr.bf16.gmra.mrb[0].mxu0 %v6202
        %v7057 = vpop.f32.mrb[0].mxu0
        %v7058 = vadd.f32 %v5857, %v7057
        %v7059 = vpop.f32.mrb[0].mxu0
        %v7060 = vadd.f32 %v5861, %v7059
        %v7061 = vpop.f32.mrb[0].mxu0
        %v7062 = vadd.f32 %v5857, %v7061
        %v7063 = vpop.f32.mrb[0].mxu0
        %v7064 = vadd.f32 %v5861, %v7063
        %7065 = vmatprep.mubr.bf16.mxu0 0
        %7066 = vmatmul.mubr.bf16.gmra.mrb[0].mxu0 %v6205
        %v7067 = vpop.f32.mrb[0].mxu0
        %v7068 = vadd.f32 %v5857, %v7067
        %v7069 = vpop.f32.mrb[0].mxu0
        %v7070 = vadd.f32 %v5861, %v7069
        %v7071 = vpop.f32.mrb[0].mxu0
        %v7072 = vadd.f32 %v5857, %v7071
        %v7073 = vpop.f32.mrb[0].mxu0
        %v7074 = vadd.f32 %v5861, %v7073
        %7075 = vmatprep.mubr.bf16.mxu0 0
        %7076 = vmatmul.mubr.bf16.gmra.mrb[0].mxu0 %v6208
        %v7077 = vpop.f32.mrb[0].mxu0
        %v7078 = vadd.f32 %v5857, %v7077
        %v7079 = vpop.f32.mrb[0].mxu0
        %v7080 = vadd.f32 %v5861, %v7079
        %v7081 = vpop.f32.mrb[0].mxu0
        %v7082 = vadd.f32 %v5857, %v7081
        %v7083 = vpop.f32.mrb[0].mxu0
        %v7084 = vadd.f32 %v5861, %v7083
        %7085 = vmatprep.mubr.bf16.mxu0 0
        %7086 = vmatmul.mubr.bf16.gmra.mrb[0].mxu0 %v6211
        %v7087 = vpop.f32.mrb[0].mxu0
        %v7088 = vadd.f32 %v5857, %v7087
        %v7089 = vpop.f32.mrb[0].mxu0
        %v7090 = vadd.f32 %v5861, %v7089
        %v7091 = vpop.f32.mrb[0].mxu0
        %v7092 = vadd.f32 %v5857, %v7091
        %v7093 = vpop.f32.mrb[0].mxu0
        %v7094 = vadd.f32 %v5861, %v7093
        %7095 = vmatprep.mubr.bf16.mxu0 0
        %7096 = vmatmul.mubr.bf16.gmra.mrb[0].mxu0 %v6214
        %v7097 = vpop.f32.mrb[0].mxu0
        %v7098 = vadd.f32 %v5857, %v7097
        %v7099 = vpop.f32.mrb[0].mxu0
        %v7100 = vadd.f32 %v5861, %v7099
        %v7101 = vpop.f32.mrb[0].mxu0
        %v7102 = vadd.f32 %v5857, %v7101
        %v7103 = vpop.f32.mrb[0].mxu0
        %v7104 = vadd.f32 %v5861, %v7103
        %7105 = vmatprep.mubr.bf16.mxu0 0
        %7106 = vmatmul.mubr.bf16.gmra.mrb[0].mxu0 %v6217
        %v7107 = vpop.f32.mrb[0].mxu0
        %v7108 = vadd.f32 %v5857, %v7107
        %v7109 = vpop.f32.mrb[0].mxu0
        %v7110 = vadd.f32 %v5861, %v7109
        %v7111 = vpop.f32.mrb[0].mxu0
        %v7112 = vadd.f32 %v5857, %v7111
        %v7113 = vpop.f32.mrb[0].mxu0
        %v7114 = vadd.f32 %v5861, %v7113
        %7115 = vmatprep.mubr.bf16.mxu0 0
        %7116 = vmatmul.mubr.bf16.gmra.mrb[0].mxu0 %v6220
        %v7117 = vpop.f32.mrb[0].mxu0
        %v7118 = vadd.f32 %v5857, %v7117
        %v7119 = vpop.f32.mrb[0].mxu0
        %v7120 = vadd.f32 %v5861, %v7119
        %v7121 = vpop.f32.mrb[0].mxu0
        %v7122 = vadd.f32 %v5857, %v7121
        %v7123 = vpop.f32.mrb[0].mxu0
        %v7124 = vadd.f32 %v5861, %v7123
        %7125 = vdwg.mxu0
        %v7126 = vmax.f32 %v6257, 0.0
        %v7127 = vmax.f32 %v6259, 0.0
        %v7128 = vmax.f32 %v6370, 0.0
        %v7129 = vmax.f32 %v6372, 0.0
        %v7130 = vmax.f32 %v6483, 0.0
        %v7131 = vmax.f32 %v6485, 0.0
        %v7132 = vmax.f32 %v6596, 0.0
        %v7133 = vmax.f32 %v6598, 0.0
        %v7134 = vmax.f32 %v6709, 0.0
        %v7135 = vmax.f32 %v6711, 0.0
        %v7136 = vmax.f32 %v6822, 0.0
        %v7137 = vmax.f32 %v6824, 0.0
        %v7138 = vmax.f32 %v6935, 0.0
        %v7139 = vmax.f32 %v6937, 0.0
        %v7140 = vmax.f32 %v7048, 0.0
        %v7141 = vmax.f32 %v7050, 0.0
        %v7142 = vmax.f32 %v6261, 0.0
        %v7143 = vmax.f32 %v6263, 0.0
        %v7144 = vmax.f32 %v6374, 0.0
        %v7145 = vmax.f32 %v6376, 0.0
        %v7146 = vmax.f32 %v6487, 0.0
        %v7147 = vmax.f32 %v6489, 0.0
        %v7148 = vmax.f32 %v6600, 0.0
        %v7149 = vmax.f32 %v6602, 0.0
        %v7150 = vmax.f32 %v6713, 0.0
        %v7151 = vmax.f32 %v6715, 0.0
        %v7152 = vmax.f32 %v6826, 0.0
        %v7153 = vmax.f32 %v6828, 0.0
        %v7154 = vmax.f32 %v6939, 0.0
        %v7155 = vmax.f32 %v6941, 0.0
        %v7156 = vmax.f32 %v7052, 0.0
        %v7157 = vmax.f32 %v7054, 0.0
        %v7158 = vmax.f32 %v6267, 0.0
        %v7159 = vmax.f32 %v6269, 0.0
        %v7160 = vmax.f32 %v6380, 0.0
        %v7161 = vmax.f32 %v6382, 0.0
        %v7162 = vmax.f32 %v6493, 0.0
        %v7163 = vmax.f32 %v6495, 0.0
        %v7164 = vmax.f32 %v6606, 0.0
        %v7165 = vmax.f32 %v6608, 0.0
        %v7166 = vmax.f32 %v6719, 0.0
        %v7167 = vmax.f32 %v6721, 0.0
        %v7168 = vmax.f32 %v6832, 0.0
        %v7169 = vmax.f32 %v6834, 0.0
        %v7170 = vmax.f32 %v6945, 0.0
        %v7171 = vmax.f32 %v6947, 0.0
        %v7172 = vmax.f32 %v7058, 0.0
        %v7173 = vmax.f32 %v7060, 0.0
        %v7174 = vmax.f32 %v6271, 0.0
        %v7175 = vmax.f32 %v6273, 0.0
        %v7176 = vmax.f32 %v6384, 0.0
        %v7177 = vmax.f32 %v6386, 0.0
        %v7178 = vmax.f32 %v6497, 0.0
        %v7179 = vmax.f32 %v6499, 0.0
        %v7180 = vmax.f32 %v6610, 0.0
        %v7181 = vmax.f32 %v6612, 0.0
        %v7182 = vmax.f32 %v6723, 0.0
        %v7183 = vmax.f32 %v6725, 0.0
        %v7184 = vmax.f32 %v6836, 0.0
        %v7185 = vmax.f32 %v6838, 0.0
        %v7186 = vmax.f32 %v6949, 0.0
        %v7187 = vmax.f32 %v6951, 0.0
        %v7188 = vmax.f32 %v7062, 0.0
        %v7189 = vmax.f32 %v7064, 0.0
        %v7190 = vmax.f32 %v6277, 0.0
        %v7191 = vmax.f32 %v6279, 0.0
        %v7192 = vmax.f32 %v6390, 0.0
        %v7193 = vmax.f32 %v6392, 0.0
        %v7194 = vmax.f32 %v6503, 0.0
        %v7195 = vmax.f32 %v6505, 0.0
        %v7196 = vmax.f32 %v6616, 0.0
        %v7197 = vmax.f32 %v6618, 0.0
        %v7198 = vmax.f32 %v6729, 0.0
        %v7199 = vmax.f32 %v6731, 0.0
        %v7200 = vmax.f32 %v6842, 0.0
        %v7201 = vmax.f32 %v6844, 0.0
        %v7202 = vmax.f32 %v6955, 0.0
        %v7203 = vmax.f32 %v6957, 0.0
        %v7204 = vmax.f32 %v7068, 0.0
        %v7205 = vmax.f32 %v7070, 0.0
        %v7206 = vmax.f32 %v6281, 0.0
        %v7207 = vmax.f32 %v6283, 0.0
        %v7208 = vmax.f32 %v6394, 0.0
        %v7209 = vmax.f32 %v6396, 0.0
        %v7210 = vmax.f32 %v6507, 0.0
        %v7211 = vmax.f32 %v6509, 0.0
        %v7212 = vmax.f32 %v6620, 0.0
        %v7213 = vmax.f32 %v6622, 0.0
        %v7214 = vmax.f32 %v6733, 0.0
        %v7215 = vmax.f32 %v6735, 0.0
        %v7216 = vmax.f32 %v6846, 0.0
        %v7217 = vmax.f32 %v6848, 0.0
        %v7218 = vmax.f32 %v6959, 0.0
        %v7219 = vmax.f32 %v6961, 0.0
        %v7220 = vmax.f32 %v7072, 0.0
        %v7221 = vmax.f32 %v7074, 0.0
        %v7222 = vmax.f32 %v6287, 0.0
        %v7223 = vmax.f32 %v6289, 0.0
        %v7224 = vmax.f32 %v6400, 0.0
        %v7225 = vmax.f32 %v6402, 0.0
        %v7226 = vmax.f32 %v6513, 0.0
        %v7227 = vmax.f32 %v6515, 0.0
        %v7228 = vmax.f32 %v6626, 0.0
        %v7229 = vmax.f32 %v6628, 0.0
        %v7230 = vmax.f32 %v6739, 0.0
        %v7231 = vmax.f32 %v6741, 0.0
        %v7232 = vmax.f32 %v6852, 0.0
        %v7233 = vmax.f32 %v6854, 0.0
        %v7234 = vmax.f32 %v6965, 0.0
        %v7235 = vmax.f32 %v6967, 0.0
        %v7236 = vmax.f32 %v7078, 0.0
        %v7237 = vmax.f32 %v7080, 0.0
        %v7238 = vmax.f32 %v6291, 0.0
        %v7239 = vmax.f32 %v6293, 0.0
        %v7240 = vmax.f32 %v6404, 0.0
        %v7241 = vmax.f32 %v6406, 0.0
        %v7242 = vmax.f32 %v6517, 0.0
        %v7243 = vmax.f32 %v6519, 0.0
        %v7244 = vmax.f32 %v6630, 0.0
        %v7245 = vmax.f32 %v6632, 0.0
        %v7246 = vmax.f32 %v6743, 0.0
        %v7247 = vmax.f32 %v6745, 0.0
        %v7248 = vmax.f32 %v6856, 0.0
        %v7249 = vmax.f32 %v6858, 0.0
        %v7250 = vmax.f32 %v6969, 0.0
        %v7251 = vmax.f32 %v6971, 0.0
        %v7252 = vmax.f32 %v7082, 0.0
        %v7253 = vmax.f32 %v7084, 0.0
        %v7254 = vmax.f32 %v6297, 0.0
        %v7255 = vmax.f32 %v6299, 0.0
        %v7256 = vmax.f32 %v6410, 0.0
        %v7257 = vmax.f32 %v6412, 0.0
        %v7258 = vmax.f32 %v6523, 0.0
        %v7259 = vmax.f32 %v6525, 0.0
        %v7260 = vmax.f32 %v6636, 0.0
        %v7261 = vmax.f32 %v6638, 0.0
        %v7262 = vmax.f32 %v6749, 0.0
        %v7263 = vmax.f32 %v6751, 0.0
        %v7264 = vmax.f32 %v6862, 0.0
        %v7265 = vmax.f32 %v6864, 0.0
        %v7266 = vmax.f32 %v6975, 0.0
        %v7267 = vmax.f32 %v6977, 0.0
        %v7268 = vmax.f32 %v7088, 0.0
        %v7269 = vmax.f32 %v7090, 0.0
        %v7270 = vmax.f32 %v6301, 0.0
        %v7271 = vmax.f32 %v6303, 0.0
        %v7272 = vmax.f32 %v6414, 0.0
        %v7273 = vmax.f32 %v6416, 0.0
        %v7274 = vmax.f32 %v6527, 0.0
        %v7275 = vmax.f32 %v6529, 0.0
        %v7276 = vmax.f32 %v6640, 0.0
        %v7277 = vmax.f32 %v6642, 0.0
        %v7278 = vmax.f32 %v6753, 0.0
        %v7279 = vmax.f32 %v6755, 0.0
        %v7280 = vmax.f32 %v6866, 0.0
        %v7281 = vmax.f32 %v6868, 0.0
        %v7282 = vmax.f32 %v6979, 0.0
        %v7283 = vmax.f32 %v6981, 0.0
        %v7284 = vmax.f32 %v7092, 0.0
        %v7285 = vmax.f32 %v7094, 0.0
        %v7286 = vmax.f32 %v6307, 0.0
        %v7287 = vmax.f32 %v6309, 0.0
        %v7288 = vmax.f32 %v6420, 0.0
        %v7289 = vmax.f32 %v6422, 0.0
        %v7290 = vmax.f32 %v6533, 0.0
        %v7291 = vmax.f32 %v6535, 0.0
        %v7292 = vmax.f32 %v6646, 0.0
        %v7293 = vmax.f32 %v6648, 0.0
        %v7294 = vmax.f32 %v6759, 0.0
        %v7295 = vmax.f32 %v6761, 0.0
        %v7296 = vmax.f32 %v6872, 0.0
        %v7297 = vmax.f32 %v6874, 0.0
        %v7298 = vmax.f32 %v6985, 0.0
        %v7299 = vmax.f32 %v6987, 0.0
        %v7300 = vmax.f32 %v7098, 0.0
        %v7301 = vmax.f32 %v7100, 0.0
        %v7302 = vmax.f32 %v6311, 0.0
        %v7303 = vmax.f32 %v6313, 0.0
        %v7304 = vmax.f32 %v6424, 0.0
        %v7305 = vmax.f32 %v6426, 0.0
        %v7306 = vmax.f32 %v6537, 0.0
        %v7307 = vmax.f32 %v6539, 0.0
        %v7308 = vmax.f32 %v6650, 0.0
        %v7309 = vmax.f32 %v6652, 0.0
        %v7310 = vmax.f32 %v6763, 0.0
        %v7311 = vmax.f32 %v6765, 0.0
        %v7312 = vmax.f32 %v6876, 0.0
        %v7313 = vmax.f32 %v6878, 0.0
        %v7314 = vmax.f32 %v6989, 0.0
        %v7315 = vmax.f32 %v6991, 0.0
        %v7316 = vmax.f32 %v7102, 0.0
        %v7317 = vmax.f32 %v7104, 0.0
        %v7318 = vmax.f32 %v6317, 0.0
        %v7319 = vmax.f32 %v6319, 0.0
        %v7320 = vmax.f32 %v6430, 0.0
        %v7321 = vmax.f32 %v6432, 0.0
        %v7322 = vmax.f32 %v6543, 0.0
        %v7323 = vmax.f32 %v6545, 0.0
        %v7324 = vmax.f32 %v6656, 0.0
        %v7325 = vmax.f32 %v6658, 0.0
        %v7326 = vmax.f32 %v6769, 0.0
        %v7327 = vmax.f32 %v6771, 0.0
        %v7328 = vmax.f32 %v6882, 0.0
        %v7329 = vmax.f32 %v6884, 0.0
        %v7330 = vmax.f32 %v6995, 0.0
        %v7331 = vmax.f32 %v6997, 0.0
        %v7332 = vmax.f32 %v7108, 0.0
        %v7333 = vmax.f32 %v7110, 0.0
        %v7334 = vmax.f32 %v6321, 0.0
        %v7335 = vmax.f32 %v6323, 0.0
        %v7336 = vmax.f32 %v6434, 0.0
        %v7337 = vmax.f32 %v6436, 0.0
        %v7338 = vmax.f32 %v6547, 0.0
        %v7339 = vmax.f32 %v6549, 0.0
        %v7340 = vmax.f32 %v6660, 0.0
        %v7341 = vmax.f32 %v6662, 0.0
        %v7342 = vmax.f32 %v6773, 0.0
        %v7343 = vmax.f32 %v6775, 0.0
        %v7344 = vmax.f32 %v6886, 0.0
        %v7345 = vmax.f32 %v6888, 0.0
        %v7346 = vmax.f32 %v6999, 0.0
        %v7347 = vmax.f32 %v7001, 0.0
        %v7348 = vmax.f32 %v7112, 0.0
        %v7349 = vmax.f32 %v7114, 0.0
        %v7350 = vmax.f32 %v6327, 0.0
        %v7351 = vmax.f32 %v6329, 0.0
        %v7352 = vmax.f32 %v6440, 0.0
        %v7353 = vmax.f32 %v6442, 0.0
        %v7354 = vmax.f32 %v6553, 0.0
        %v7355 = vmax.f32 %v6555, 0.0
        %v7356 = vmax.f32 %v6666, 0.0
        %v7357 = vmax.f32 %v6668, 0.0
        %v7358 = vmax.f32 %v6779, 0.0
        %v7359 = vmax.f32 %v6781, 0.0
        %v7360 = vmax.f32 %v6892, 0.0
        %v7361 = vmax.f32 %v6894, 0.0
        %v7362 = vmax.f32 %v7005, 0.0
        %v7363 = vmax.f32 %v7007, 0.0
        %v7364 = vmax.f32 %v7118, 0.0
        %v7365 = vmax.f32 %v7120, 0.0
        %v7366 = vmax.f32 %v6331, 0.0
        %v7367 = vmax.f32 %v6333, 0.0
        %v7368 = vmax.f32 %v6444, 0.0
        %v7369 = vmax.f32 %v6446, 0.0
        %v7370 = vmax.f32 %v6557, 0.0
        %v7371 = vmax.f32 %v6559, 0.0
        %v7372 = vmax.f32 %v6670, 0.0
        %v7373 = vmax.f32 %v6672, 0.0
        %v7374 = vmax.f32 %v6783, 0.0
        %v7375 = vmax.f32 %v6785, 0.0
        %v7376 = vmax.f32 %v6896, 0.0
        %v7377 = vmax.f32 %v6898, 0.0
        %v7378 = vmax.f32 %v7009, 0.0
        %v7379 = vmax.f32 %v7011, 0.0
        %v7380 = vmax.f32 %v7122, 0.0
        %v7381 = vmax.f32 %v7124, 0.0
        %v7382 = vpack.c.bf16 %v7142, %v7126
        %v7383 = vpack.c.bf16 %v7143, %v7127
        %v7384 = vpack.c.bf16 %v7144, %v7128
        %v7385 = vpack.c.bf16 %v7145, %v7129
        %v7386 = vpack.c.bf16 %v7146, %v7130
        %v7387 = vpack.c.bf16 %v7147, %v7131
        %v7388 = vpack.c.bf16 %v7148, %v7132
        %v7389 = vpack.c.bf16 %v7149, %v7133
        %v7390 = vpack.c.bf16 %v7150, %v7134
        %v7391 = vpack.c.bf16 %v7151, %v7135
        %v7392 = vpack.c.bf16 %v7152, %v7136
        %v7393 = vpack.c.bf16 %v7153, %v7137
        %v7394 = vpack.c.bf16 %v7154, %v7138
        %v7395 = vpack.c.bf16 %v7155, %v7139
        %v7396 = vpack.c.bf16 %v7156, %v7140
        %v7397 = vpack.c.bf16 %v7157, %v7141
        %v7398 = vpack.c.bf16 %v7174, %v7158
        %v7399 = vpack.c.bf16 %v7175, %v7159
        %v7400 = vpack.c.bf16 %v7176, %v7160
        %v7401 = vpack.c.bf16 %v7177, %v7161
        %v7402 = vpack.c.bf16 %v7178, %v7162
        %v7403 = vpack.c.bf16 %v7179, %v7163
        %v7404 = vpack.c.bf16 %v7180, %v7164
        %v7405 = vpack.c.bf16 %v7181, %v7165
        %v7406 = vpack.c.bf16 %v7182, %v7166
        %v7407 = vpack.c.bf16 %v7183, %v7167
        %v7408 = vpack.c.bf16 %v7184, %v7168
        %v7409 = vpack.c.bf16 %v7185, %v7169
        %v7410 = vpack.c.bf16 %v7186, %v7170
        %v7411 = vpack.c.bf16 %v7187, %v7171
        %v7412 = vpack.c.bf16 %v7188, %v7172
        %v7413 = vpack.c.bf16 %v7189, %v7173
        %v7414 = vpack.c.bf16 %v7206, %v7190
        %v7415 = vpack.c.bf16 %v7207, %v7191
        %v7416 = vpack.c.bf16 %v7208, %v7192
        %v7417 = vpack.c.bf16 %v7209, %v7193
        %v7418 = vpack.c.bf16 %v7210, %v7194
        %v7419 = vpack.c.bf16 %v7211, %v7195
        %v7420 = vpack.c.bf16 %v7212, %v7196
        %v7421 = vpack.c.bf16 %v7213, %v7197
        %v7422 = vpack.c.bf16 %v7214, %v7198
        %v7423 = vpack.c.bf16 %v7215, %v7199
        %v7424 = vpack.c.bf16 %v7216, %v7200
        %v7425 = vpack.c.bf16 %v7217, %v7201
        %v7426 = vpack.c.bf16 %v7218, %v7202
        %v7427 = vpack.c.bf16 %v7219, %v7203
        %v7428 = vpack.c.bf16 %v7220, %v7204
        %v7429 = vpack.c.bf16 %v7221, %v7205
        %v7430 = vpack.c.bf16 %v7238, %v7222
        %v7431 = vpack.c.bf16 %v7239, %v7223
        %v7432 = vpack.c.bf16 %v7240, %v7224
        %v7433 = vpack.c.bf16 %v7241, %v7225
        %v7434 = vpack.c.bf16 %v7242, %v7226
        %v7435 = vpack.c.bf16 %v7243, %v7227
        %v7436 = vpack.c.bf16 %v7244, %v7228
        %v7437 = vpack.c.bf16 %v7245, %v7229
        %v7438 = vpack.c.bf16 %v7246, %v7230
        %v7439 = vpack.c.bf16 %v7247, %v7231
        %v7440 = vpack.c.bf16 %v7248, %v7232
        %v7441 = vpack.c.bf16 %v7249, %v7233
        %v7442 = vpack.c.bf16 %v7250, %v7234
        %v7443 = vpack.c.bf16 %v7251, %v7235
        %v7444 = vpack.c.bf16 %v7252, %v7236
        %v7445 = vpack.c.bf16 %v7253, %v7237
        %v7446 = vpack.c.bf16 %v7270, %v7254
        %v7447 = vpack.c.bf16 %v7271, %v7255
        %v7448 = vpack.c.bf16 %v7272, %v7256
        %v7449 = vpack.c.bf16 %v7273, %v7257
        %v7450 = vpack.c.bf16 %v7274, %v7258
        %v7451 = vpack.c.bf16 %v7275, %v7259
        %v7452 = vpack.c.bf16 %v7276, %v7260
        %v7453 = vpack.c.bf16 %v7277, %v7261
        %v7454 = vpack.c.bf16 %v7278, %v7262
        %v7455 = vpack.c.bf16 %v7279, %v7263
        %v7456 = vpack.c.bf16 %v7280, %v7264
        %v7457 = vpack.c.bf16 %v7281, %v7265
        %v7458 = vpack.c.bf16 %v7282, %v7266
        %v7459 = vpack.c.bf16 %v7283, %v7267
        %v7460 = vpack.c.bf16 %v7284, %v7268
        %v7461 = vpack.c.bf16 %v7285, %v7269
        %v7462 = vpack.c.bf16 %v7302, %v7286
        %v7463 = vpack.c.bf16 %v7303, %v7287
        %v7464 = vpack.c.bf16 %v7304, %v7288
        %v7465 = vpack.c.bf16 %v7305, %v7289
        %v7466 = vpack.c.bf16 %v7306, %v7290
        %v7467 = vpack.c.bf16 %v7307, %v7291
        %v7468 = vpack.c.bf16 %v7308, %v7292
        %v7469 = vpack.c.bf16 %v7309, %v7293
        %v7470 = vpack.c.bf16 %v7310, %v7294
        %v7471 = vpack.c.bf16 %v7311, %v7295
        %v7472 = vpack.c.bf16 %v7312, %v7296
        %v7473 = vpack.c.bf16 %v7313, %v7297
        %v7474 = vpack.c.bf16 %v7314, %v7298
        %v7475 = vpack.c.bf16 %v7315, %v7299
        %v7476 = vpack.c.bf16 %v7316, %v7300
        %v7477 = vpack.c.bf16 %v7317, %v7301
        %v7478 = vpack.c.bf16 %v7334, %v7318
        %v7479 = vpack.c.bf16 %v7335, %v7319
        %v7480 = vpack.c.bf16 %v7336, %v7320
        %v7481 = vpack.c.bf16 %v7337, %v7321
        %v7482 = vpack.c.bf16 %v7338, %v7322
        %v7483 = vpack.c.bf16 %v7339, %v7323
        %v7484 = vpack.c.bf16 %v7340, %v7324
        %v7485 = vpack.c.bf16 %v7341, %v7325
        %v7486 = vpack.c.bf16 %v7342, %v7326
        %v7487 = vpack.c.bf16 %v7343, %v7327
        %v7488 = vpack.c.bf16 %v7344, %v7328
        %v7489 = vpack.c.bf16 %v7345, %v7329
        %v7490 = vpack.c.bf16 %v7346, %v7330
        %v7491 = vpack.c.bf16 %v7347, %v7331
        %v7492 = vpack.c.bf16 %v7348, %v7332
        %v7493 = vpack.c.bf16 %v7349, %v7333
        %v7494 = vpack.c.bf16 %v7366, %v7350
        %v7495 = vpack.c.bf16 %v7367, %v7351
        %v7496 = vpack.c.bf16 %v7368, %v7352
        %v7497 = vpack.c.bf16 %v7369, %v7353
        %v7498 = vpack.c.bf16 %v7370, %v7354
        %v7499 = vpack.c.bf16 %v7371, %v7355
        %v7500 = vpack.c.bf16 %v7372, %v7356
        %v7501 = vpack.c.bf16 %v7373, %v7357
        %v7502 = vpack.c.bf16 %v7374, %v7358
        %v7503 = vpack.c.bf16 %v7375, %v7359
        %v7504 = vpack.c.bf16 %v7376, %v7360
        %v7505 = vpack.c.bf16 %v7377, %v7361
        %v7506 = vpack.c.bf16 %v7378, %v7362
        %v7507 = vpack.c.bf16 %v7379, %v7363
        %v7508 = vpack.c.bf16 %v7380, %v7364
        %v7509 = vpack.c.bf16 %v7381, %v7365
        %v7510 = vld [vmem:[%s21] sm:$0xf]
        %v7511 = vld [vmem:[%s21 + $0x4] sm:$0xf]
        %v7512 = vld [vmem:[%s21 + $0x8] sm:$0xf]
        %v7513 = vld [vmem:[%s21 + $0xc] sm:$0xf]
        %v7514 = vld [vmem:[%s21 + $0x10] sm:$0xf]
        %v7515 = vld [vmem:[%s21 + $0x14] sm:$0xf]
        %v7516 = vld [vmem:[%s21 + $0x18] sm:$0xf]
        %v7517 = vld [vmem:[%s21 + $0x1c] sm:$0xf]
        %v7518 = vld [vmem:[%s21 + $0x20] sm:$0xf]
        %v7519 = vld [vmem:[%s21 + $0x24] sm:$0xf]
        %v7520 = vld [vmem:[%s21 + $0x28] sm:$0xf]
        %v7521 = vld [vmem:[%s21 + $0x2c] sm:$0xf]
        %v7522 = vld [vmem:[%s21 + $0x30] sm:$0xf]
        %v7523 = vld [vmem:[%s21 + $0x34] sm:$0xf]
        %v7524 = vld [vmem:[%s21 + $0x38] sm:$0xf]
        %v7525 = vld [vmem:[%s21 + $0x3c] sm:$0xf]
        %v7526 = vld [vmem:[%s21 + $0x40] sm:$0xf]
        %v7527 = vld [vmem:[%s21 + $0x44] sm:$0xf]
        %v7528 = vld [vmem:[%s21 + $0x48] sm:$0xf]
        %v7529 = vld [vmem:[%s21 + $0x4c] sm:$0xf]
        %v7530 = vld [vmem:[%s21 + $0x50] sm:$0xf]
        %v7531 = vld [vmem:[%s21 + $0x54] sm:$0xf]
        %v7532 = vld [vmem:[%s21 + $0x58] sm:$0xf]
        %v7533 = vld [vmem:[%s21 + $0x5c] sm:$0xf]
        %v7534 = vld [vmem:[%s21 + $0x60] sm:$0xf]
        %v7535 = vld [vmem:[%s21 + $0x64] sm:$0xf]
        %v7536 = vld [vmem:[%s21 + $0x68] sm:$0xf]
        %v7537 = vld [vmem:[%s21 + $0x6c] sm:$0xf]
        %v7538 = vld [vmem:[%s21 + $0x70] sm:$0xf]
        %v7539 = vld [vmem:[%s21 + $0x74] sm:$0xf]
        %v7540 = vld [vmem:[%s21 + $0x78] sm:$0xf]
        %v7541 = vld [vmem:[%s21 + $0x7c] sm:$0xf]
        %v7542 = vld [vmem:[%s21 + $0x80] sm:$0xf]
        %v7543 = vld [vmem:[%s21 + $0x84] sm:$0xf]
        %v7544 = vld [vmem:[%s21 + $0x88] sm:$0xf]
        %v7545 = vld [vmem:[%s21 + $0x8c] sm:$0xf]
        %v7546 = vld [vmem:[%s21 + $0x90] sm:$0xf]
        %v7547 = vld [vmem:[%s21 + $0x94] sm:$0xf]
        %v7548 = vld [vmem:[%s21 + $0x98] sm:$0xf]
        %v7549 = vld [vmem:[%s21 + $0x9c] sm:$0xf]
        %v7550 = vld [vmem:[%s21 + $0xa0] sm:$0xf]
        %v7551 = vld [vmem:[%s21 + $0xa4] sm:$0xf]
        %v7552 = vld [vmem:[%s21 + $0xa8] sm:$0xf]
        %v7553 = vld [vmem:[%s21 + $0xac] sm:$0xf]
        %v7554 = vld [vmem:[%s21 + $0xb0] sm:$0xf]
        %v7555 = vld [vmem:[%s21 + $0xb4] sm:$0xf]
        %v7556 = vld [vmem:[%s21 + $0xb8] sm:$0xf]
        %v7557 = vld [vmem:[%s21 + $0xbc] sm:$0xf]
        %v7558 = vld [vmem:[%s21 + $0xc0] sm:$0xf]
        %v7559 = vld [vmem:[%s21 + $0xc4] sm:$0xf]
        %v7560 = vld [vmem:[%s21 + $0xc8] sm:$0xf]
        %v7561 = vld [vmem:[%s21 + $0xcc] sm:$0xf]
        %v7562 = vld [vmem:[%s21 + $0xd0] sm:$0xf]
        %v7563 = vld [vmem:[%s21 + $0xd4] sm:$0xf]
        %v7564 = vld [vmem:[%s21 + $0xd8] sm:$0xf]
        %v7565 = vld [vmem:[%s21 + $0xdc] sm:$0xf]
        %v7566 = vld [vmem:[%s21 + $0xe0] sm:$0xf]
        %v7567 = vld [vmem:[%s21 + $0xe4] sm:$0xf]
        %v7568 = vld [vmem:[%s21 + $0xe8] sm:$0xf]
        %v7569 = vld [vmem:[%s21 + $0xec] sm:$0xf]
        %v7570 = vld [vmem:[%s21 + $0xf0] sm:$0xf]
        %v7571 = vld [vmem:[%s21 + $0xf4] sm:$0xf]
        %v7572 = vld [vmem:[%s21 + $0xf8] sm:$0xf]
        %v7573 = vld [vmem:[%s21 + $0xfc] sm:$0xf]
        %v7574 = vld [vmem:[%s21 + $0x100] sm:$0xf]
        %v7575 = vld [vmem:[%s21 + $0x104] sm:$0xf]
        %v7576 = vld [vmem:[%s21 + $0x108] sm:$0xf]
        %v7577 = vld [vmem:[%s21 + $0x10c] sm:$0xf]
        %v7578 = vld [vmem:[%s21 + $0x110] sm:$0xf]
        %v7579 = vld [vmem:[%s21 + $0x114] sm:$0xf]
        %v7580 = vld [vmem:[%s21 + $0x118] sm:$0xf]
        %v7581 = vld [vmem:[%s21 + $0x11c] sm:$0xf]
        %v7582 = vld [vmem:[%s21 + $0x120] sm:$0xf]
        %v7583 = vld [vmem:[%s21 + $0x124] sm:$0xf]
        %v7584 = vld [vmem:[%s21 + $0x128] sm:$0xf]
        %v7585 = vld [vmem:[%s21 + $0x12c] sm:$0xf]
        %v7586 = vld [vmem:[%s21 + $0x130] sm:$0xf]
        %v7587 = vld [vmem:[%s21 + $0x134] sm:$0xf]
        %v7588 = vld [vmem:[%s21 + $0x138] sm:$0xf]
        %v7589 = vld [vmem:[%s21 + $0x13c] sm:$0xf]
        %v7590 = vld [vmem:[%s21 + $0x140] sm:$0xf]
        %v7591 = vld [vmem:[%s21 + $0x144] sm:$0xf]
        %v7592 = vld [vmem:[%s21 + $0x148] sm:$0xf]
        %v7593 = vld [vmem:[%s21 + $0x14c] sm:$0xf]
        %v7594 = vld [vmem:[%s21 + $0x150] sm:$0xf]
        %v7595 = vld [vmem:[%s21 + $0x154] sm:$0xf]
        %v7596 = vld [vmem:[%s21 + $0x158] sm:$0xf]
        %v7597 = vld [vmem:[%s21 + $0x15c] sm:$0xf]
        %v7598 = vld [vmem:[%s21 + $0x160] sm:$0xf]
        %v7599 = vld [vmem:[%s21 + $0x164] sm:$0xf]
        %v7600 = vld [vmem:[%s21 + $0x168] sm:$0xf]
        %v7601 = vld [vmem:[%s21 + $0x16c] sm:$0xf]
        %v7602 = vld [vmem:[%s21 + $0x170] sm:$0xf]
        %v7603 = vld [vmem:[%s21 + $0x174] sm:$0xf]
        %v7604 = vld [vmem:[%s21 + $0x178] sm:$0xf]
        %v7605 = vld [vmem:[%s21 + $0x17c] sm:$0xf]
        %v7606 = vld [vmem:[%s21 + $0x180] sm:$0xf]
        %v7607 = vld [vmem:[%s21 + $0x184] sm:$0xf]
        %v7608 = vld [vmem:[%s21 + $0x188] sm:$0xf]
        %v7609 = vld [vmem:[%s21 + $0x18c] sm:$0xf]
        %v7610 = vld [vmem:[%s21 + $0x190] sm:$0xf]
        %v7611 = vld [vmem:[%s21 + $0x194] sm:$0xf]
        %v7612 = vld [vmem:[%s21 + $0x198] sm:$0xf]
        %v7613 = vld [vmem:[%s21 + $0x19c] sm:$0xf]
        %v7614 = vld [vmem:[%s21 + $0x1a0] sm:$0xf]
        %v7615 = vld [vmem:[%s21 + $0x1a4] sm:$0xf]
        %v7616 = vld [vmem:[%s21 + $0x1a8] sm:$0xf]
        %v7617 = vld [vmem:[%s21 + $0x1ac] sm:$0xf]
        %v7618 = vld [vmem:[%s21 + $0x1b0] sm:$0xf]
        %v7619 = vld [vmem:[%s21 + $0x1b4] sm:$0xf]
        %v7620 = vld [vmem:[%s21 + $0x1b8] sm:$0xf]
        %v7621 = vld [vmem:[%s21 + $0x1bc] sm:$0xf]
        %v7622 = vld [vmem:[%s21 + $0x1c0] sm:$0xf]
        %v7623 = vld [vmem:[%s21 + $0x1c4] sm:$0xf]
        %v7624 = vld [vmem:[%s21 + $0x1c8] sm:$0xf]
        %v7625 = vld [vmem:[%s21 + $0x1cc] sm:$0xf]
        %v7626 = vld [vmem:[%s21 + $0x1d0] sm:$0xf]
        %v7627 = vld [vmem:[%s21 + $0x1d4] sm:$0xf]
        %v7628 = vld [vmem:[%s21 + $0x1d8] sm:$0xf]
        %v7629 = vld [vmem:[%s21 + $0x1dc] sm:$0xf]
        %v7630 = vld [vmem:[%s21 + $0x1e0] sm:$0xf]
        %v7631 = vld [vmem:[%s21 + $0x1e4] sm:$0xf]
        %v7632 = vld [vmem:[%s21 + $0x1e8] sm:$0xf]
        %v7633 = vld [vmem:[%s21 + $0x1ec] sm:$0xf]
        %v7634 = vld [vmem:[%s21 + $0x1f0] sm:$0xf]
        %v7635 = vld [vmem:[%s21 + $0x1f4] sm:$0xf]
        %v7636 = vld [vmem:[%s21 + $0x1f8] sm:$0xf]
        %v7637 = vld [vmem:[%s21 + $0x1fc] sm:$0xf]
        %v7638 = vld [vmem:[%s21 + $0x200] sm:$0xf]
        %v7639 = vld [vmem:[%s21 + $0x204] sm:$0xf]
        %v7640 = vld [vmem:[%s21 + $0x208] sm:$0xf]
        %v7641 = vld [vmem:[%s21 + $0x20c] sm:$0xf]
        %v7642 = vld [vmem:[%s21 + $0x210] sm:$0xf]
        %v7643 = vld [vmem:[%s21 + $0x214] sm:$0xf]
        %v7644 = vld [vmem:[%s21 + $0x218] sm:$0xf]
        %v7645 = vld [vmem:[%s21 + $0x21c] sm:$0xf]
        %v7646 = vld [vmem:[%s21 + $0x220] sm:$0xf]
        %v7647 = vld [vmem:[%s21 + $0x224] sm:$0xf]
        %v7648 = vld [vmem:[%s21 + $0x228] sm:$0xf]
        %v7649 = vld [vmem:[%s21 + $0x22c] sm:$0xf]
        %v7650 = vld [vmem:[%s21 + $0x230] sm:$0xf]
        %v7651 = vld [vmem:[%s21 + $0x234] sm:$0xf]
        %v7652 = vld [vmem:[%s21 + $0x238] sm:$0xf]
        %v7653 = vld [vmem:[%s21 + $0x23c] sm:$0xf]
        %v7654 = vld [vmem:[%s21 + $0x240] sm:$0xf]
        %v7655 = vld [vmem:[%s21 + $0x244] sm:$0xf]
        %v7656 = vld [vmem:[%s21 + $0x248] sm:$0xf]
        %v7657 = vld [vmem:[%s21 + $0x24c] sm:$0xf]
        %v7658 = vld [vmem:[%s21 + $0x250] sm:$0xf]
        %v7659 = vld [vmem:[%s21 + $0x254] sm:$0xf]
        %v7660 = vld [vmem:[%s21 + $0x258] sm:$0xf]
        %v7661 = vld [vmem:[%s21 + $0x25c] sm:$0xf]
        %v7662 = vld [vmem:[%s21 + $0x260] sm:$0xf]
        %v7663 = vld [vmem:[%s21 + $0x264] sm:$0xf]
        %v7664 = vld [vmem:[%s21 + $0x268] sm:$0xf]
        %v7665 = vld [vmem:[%s21 + $0x26c] sm:$0xf]
        %v7666 = vld [vmem:[%s21 + $0x270] sm:$0xf]
        %v7667 = vld [vmem:[%s21 + $0x274] sm:$0xf]
        %v7668 = vld [vmem:[%s21 + $0x278] sm:$0xf]
        %v7669 = vld [vmem:[%s21 + $0x27c] sm:$0xf]
        %v7670 = vld [vmem:[%s21 + $0x280] sm:$0xf]
        %v7671 = vld [vmem:[%s21 + $0x284] sm:$0xf]
        %v7672 = vld [vmem:[%s21 + $0x288] sm:$0xf]
        %v7673 = vld [vmem:[%s21 + $0x28c] sm:$0xf]
        %v7674 = vld [vmem:[%s21 + $0x290] sm:$0xf]
        %v7675 = vld [vmem:[%s21 + $0x294] sm:$0xf]
        %v7676 = vld [vmem:[%s21 + $0x298] sm:$0xf]
        %v7677 = vld [vmem:[%s21 + $0x29c] sm:$0xf]
        %v7678 = vld [vmem:[%s21 + $0x2a0] sm:$0xf]
        %v7679 = vld [vmem:[%s21 + $0x2a4] sm:$0xf]
        %v7680 = vld [vmem:[%s21 + $0x2a8] sm:$0xf]
        %v7681 = vld [vmem:[%s21 + $0x2ac] sm:$0xf]
        %v7682 = vld [vmem:[%s21 + $0x2b0] sm:$0xf]
        %v7683 = vld [vmem:[%s21 + $0x2b4] sm:$0xf]
        %v7684 = vld [vmem:[%s21 + $0x2b8] sm:$0xf]
        %v7685 = vld [vmem:[%s21 + $0x2bc] sm:$0xf]
        %v7686 = vld [vmem:[%s21 + $0x2c0] sm:$0xf]
        %v7687 = vld [vmem:[%s21 + $0x2c4] sm:$0xf]
        %v7688 = vld [vmem:[%s21 + $0x2c8] sm:$0xf]
        %v7689 = vld [vmem:[%s21 + $0x2cc] sm:$0xf]
        %v7690 = vld [vmem:[%s21 + $0x2d0] sm:$0xf]
        %v7691 = vld [vmem:[%s21 + $0x2d4] sm:$0xf]
        %v7692 = vld [vmem:[%s21 + $0x2d8] sm:$0xf]
        %v7693 = vld [vmem:[%s21 + $0x2dc] sm:$0xf]
        %v7694 = vld [vmem:[%s21 + $0x2e0] sm:$0xf]
        %v7695 = vld [vmem:[%s21 + $0x2e4] sm:$0xf]
        %v7696 = vld [vmem:[%s21 + $0x2e8] sm:$0xf]
        %v7697 = vld [vmem:[%s21 + $0x2ec] sm:$0xf]
        %v7698 = vld [vmem:[%s21 + $0x2f0] sm:$0xf]
        %v7699 = vld [vmem:[%s21 + $0x2f4] sm:$0xf]
        %v7700 = vld [vmem:[%s21 + $0x2f8] sm:$0xf]
        %v7701 = vld [vmem:[%s21 + $0x2fc] sm:$0xf]
        %v7702 = vld [vmem:[%s21 + $0x300] sm:$0xf]
        %v7703 = vld [vmem:[%s21 + $0x304] sm:$0xf]
        %v7704 = vld [vmem:[%s21 + $0x308] sm:$0xf]
        %v7705 = vld [vmem:[%s21 + $0x30c] sm:$0xf]
        %v7706 = vld [vmem:[%s21 + $0x310] sm:$0xf]
        %v7707 = vld [vmem:[%s21 + $0x314] sm:$0xf]
        %v7708 = vld [vmem:[%s21 + $0x318] sm:$0xf]
        %v7709 = vld [vmem:[%s21 + $0x31c] sm:$0xf]
        %v7710 = vld [vmem:[%s21 + $0x320] sm:$0xf]
        %v7711 = vld [vmem:[%s21 + $0x324] sm:$0xf]
        %v7712 = vld [vmem:[%s21 + $0x328] sm:$0xf]
        %v7713 = vld [vmem:[%s21 + $0x32c] sm:$0xf]
        %v7714 = vld [vmem:[%s21 + $0x330] sm:$0xf]
        %v7715 = vld [vmem:[%s21 + $0x334] sm:$0xf]
        %v7716 = vld [vmem:[%s21 + $0x338] sm:$0xf]
        %v7717 = vld [vmem:[%s21 + $0x33c] sm:$0xf]
        %v7718 = vld [vmem:[%s21 + $0x340] sm:$0xf]
        %v7719 = vld [vmem:[%s21 + $0x344] sm:$0xf]
        %v7720 = vld [vmem:[%s21 + $0x348] sm:$0xf]
        %v7721 = vld [vmem:[%s21 + $0x34c] sm:$0xf]
        %v7722 = vld [vmem:[%s21 + $0x350] sm:$0xf]
        %v7723 = vld [vmem:[%s21 + $0x354] sm:$0xf]
        %v7724 = vld [vmem:[%s21 + $0x358] sm:$0xf]
        %v7725 = vld [vmem:[%s21 + $0x35c] sm:$0xf]
        %v7726 = vld [vmem:[%s21 + $0x360] sm:$0xf]
        %v7727 = vld [vmem:[%s21 + $0x364] sm:$0xf]
        %v7728 = vld [vmem:[%s21 + $0x368] sm:$0xf]
        %v7729 = vld [vmem:[%s21 + $0x36c] sm:$0xf]
        %v7730 = vld [vmem:[%s21 + $0x370] sm:$0xf]
        %v7731 = vld [vmem:[%s21 + $0x374] sm:$0xf]
        %v7732 = vld [vmem:[%s21 + $0x378] sm:$0xf]
        %v7733 = vld [vmem:[%s21 + $0x37c] sm:$0xf]
        %v7734 = vld [vmem:[%s21 + $0x380] sm:$0xf]
        %v7735 = vld [vmem:[%s21 + $0x384] sm:$0xf]
        %v7736 = vld [vmem:[%s21 + $0x388] sm:$0xf]
        %v7737 = vld [vmem:[%s21 + $0x38c] sm:$0xf]
        %v7738 = vld [vmem:[%s21 + $0x390] sm:$0xf]
        %v7739 = vld [vmem:[%s21 + $0x394] sm:$0xf]
        %v7740 = vld [vmem:[%s21 + $0x398] sm:$0xf]
        %v7741 = vld [vmem:[%s21 + $0x39c] sm:$0xf]
        %v7742 = vld [vmem:[%s21 + $0x3a0] sm:$0xf]
        %v7743 = vld [vmem:[%s21 + $0x3a4] sm:$0xf]
        %v7744 = vld [vmem:[%s21 + $0x3a8] sm:$0xf]
        %v7745 = vld [vmem:[%s21 + $0x3ac] sm:$0xf]
        %v7746 = vld [vmem:[%s21 + $0x3b0] sm:$0xf]
        %v7747 = vld [vmem:[%s21 + $0x3b4] sm:$0xf]
        %v7748 = vld [vmem:[%s21 + $0x3b8] sm:$0xf]
        %v7749 = vld [vmem:[%s21 + $0x3bc] sm:$0xf]
        %v7750 = vld [vmem:[%s21 + $0x3c0] sm:$0xf]
        %v7751 = vld [vmem:[%s21 + $0x3c4] sm:$0xf]
        %v7752 = vld [vmem:[%s21 + $0x3c8] sm:$0xf]
        %v7753 = vld [vmem:[%s21 + $0x3cc] sm:$0xf]
        %v7754 = vld [vmem:[%s21 + $0x3d0] sm:$0xf]
        %v7755 = vld [vmem:[%s21 + $0x3d4] sm:$0xf]
        %v7756 = vld [vmem:[%s21 + $0x3d8] sm:$0xf]
        %v7757 = vld [vmem:[%s21 + $0x3dc] sm:$0xf]
        %v7758 = vld [vmem:[%s21 + $0x3e0] sm:$0xf]
        %v7759 = vld [vmem:[%s21 + $0x3e4] sm:$0xf]
        %v7760 = vld [vmem:[%s21 + $0x3e8] sm:$0xf]
        %v7761 = vld [vmem:[%s21 + $0x3ec] sm:$0xf]
        %v7762 = vld [vmem:[%s21 + $0x3f0] sm:$0xf]
        %v7763 = vld [vmem:[%s21 + $0x3f4] sm:$0xf]
        %v7764 = vld [vmem:[%s21 + $0x3f8] sm:$0xf]
        %v7765 = vld [vmem:[%s21 + $0x3fc] sm:$0xf]
        %v7766 = vld [vmem:[%s22] sm:$0x1]
        %v7768 = vlaneseq
        %v7769 = vshrl.u32 %v7768, 7
        %v7770 = vsub.s32 0, %v7769
        %v7771 = vrot.slane %v7766, %v7770
        %v8029 = vunpack.c.l.b16 %v7510
        %v8030 = vunpack.c.l.b16 %v7511
        %v8031 = vunpack.c.l.b16 %v7512
        %v8032 = vunpack.c.l.b16 %v7513
        %v8033 = vunpack.c.l.b16 %v7514
        %v8034 = vunpack.c.l.b16 %v7515
        %v8035 = vunpack.c.l.b16 %v7516
        %v8036 = vunpack.c.l.b16 %v7517
        %v8037 = vunpack.c.l.b16 %v7518
        %v8038 = vunpack.c.l.b16 %v7519
        %v8039 = vunpack.c.l.b16 %v7520
        %v8040 = vunpack.c.l.b16 %v7521
        %v8041 = vunpack.c.l.b16 %v7522
        %v8042 = vunpack.c.l.b16 %v7523
        %v8043 = vunpack.c.l.b16 %v7524
        %v8044 = vunpack.c.l.b16 %v7525
        %v8045 = vunpack.c.l.b16 %v7526
        %v8046 = vunpack.c.l.b16 %v7527
        %v8047 = vunpack.c.l.b16 %v7528
        %v8048 = vunpack.c.l.b16 %v7529
        %v8049 = vunpack.c.l.b16 %v7530
        %v8050 = vunpack.c.l.b16 %v7531
        %v8051 = vunpack.c.l.b16 %v7532
        %v8052 = vunpack.c.l.b16 %v7533
        %v8053 = vunpack.c.l.b16 %v7534
        %v8054 = vunpack.c.l.b16 %v7535
        %v8055 = vunpack.c.l.b16 %v7536
        %v8056 = vunpack.c.l.b16 %v7537
        %v8057 = vunpack.c.l.b16 %v7538
        %v8058 = vunpack.c.l.b16 %v7539
        %v8059 = vunpack.c.l.b16 %v7540
        %v8060 = vunpack.c.l.b16 %v7541
        %v8061 = vunpack.c.l.b16 %v7542
        %v8062 = vunpack.c.l.b16 %v7543
        %v8063 = vunpack.c.l.b16 %v7544
        %v8064 = vunpack.c.l.b16 %v7545
        %v8065 = vunpack.c.l.b16 %v7546
        %v8066 = vunpack.c.l.b16 %v7547
        %v8067 = vunpack.c.l.b16 %v7548
        %v8068 = vunpack.c.l.b16 %v7549
        %v8069 = vunpack.c.l.b16 %v7550
        %v8070 = vunpack.c.l.b16 %v7551
        %v8071 = vunpack.c.l.b16 %v7552
        %v8072 = vunpack.c.l.b16 %v7553
        %v8073 = vunpack.c.l.b16 %v7554
        %v8074 = vunpack.c.l.b16 %v7555
        %v8075 = vunpack.c.l.b16 %v7556
        %v8076 = vunpack.c.l.b16 %v7557
        %v8077 = vunpack.c.l.b16 %v7558
        %v8078 = vunpack.c.l.b16 %v7559
        %v8079 = vunpack.c.l.b16 %v7560
        %v8080 = vunpack.c.l.b16 %v7561
        %v8081 = vunpack.c.l.b16 %v7562
        %v8082 = vunpack.c.l.b16 %v7563
        %v8083 = vunpack.c.l.b16 %v7564
        %v8084 = vunpack.c.l.b16 %v7565
        %v8085 = vunpack.c.l.b16 %v7566
        %v8086 = vunpack.c.l.b16 %v7567
        %v8087 = vunpack.c.l.b16 %v7568
        %v8088 = vunpack.c.l.b16 %v7569
        %v8089 = vunpack.c.l.b16 %v7570
        %v8090 = vunpack.c.l.b16 %v7571
        %v8091 = vunpack.c.l.b16 %v7572
        %v8092 = vunpack.c.l.b16 %v7573
        %v8093 = vunpack.c.l.b16 %v7574
        %v8094 = vunpack.c.l.b16 %v7575
        %v8095 = vunpack.c.l.b16 %v7576
        %v8096 = vunpack.c.l.b16 %v7577
        %v8097 = vunpack.c.l.b16 %v7578
        %v8098 = vunpack.c.l.b16 %v7579
        %v8099 = vunpack.c.l.b16 %v7580
        %v8100 = vunpack.c.l.b16 %v7581
        %v8101 = vunpack.c.l.b16 %v7582
        %v8102 = vunpack.c.l.b16 %v7583
        %v8103 = vunpack.c.l.b16 %v7584
        %v8104 = vunpack.c.l.b16 %v7585
        %v8105 = vunpack.c.l.b16 %v7586
        %v8106 = vunpack.c.l.b16 %v7587
        %v8107 = vunpack.c.l.b16 %v7588
        %v8108 = vunpack.c.l.b16 %v7589
        %v8109 = vunpack.c.l.b16 %v7590
        %v8110 = vunpack.c.l.b16 %v7591
        %v8111 = vunpack.c.l.b16 %v7592
        %v8112 = vunpack.c.l.b16 %v7593
        %v8113 = vunpack.c.l.b16 %v7594
        %v8114 = vunpack.c.l.b16 %v7595
        %v8115 = vunpack.c.l.b16 %v7596
        %v8116 = vunpack.c.l.b16 %v7597
        %v8117 = vunpack.c.l.b16 %v7598
        %v8118 = vunpack.c.l.b16 %v7599
        %v8119 = vunpack.c.l.b16 %v7600
        %v8120 = vunpack.c.l.b16 %v7601
        %v8121 = vunpack.c.l.b16 %v7602
        %v8122 = vunpack.c.l.b16 %v7603
        %v8123 = vunpack.c.l.b16 %v7604
        %v8124 = vunpack.c.l.b16 %v7605
        %v8125 = vunpack.c.l.b16 %v7606
        %v8126 = vunpack.c.l.b16 %v7607
        %v8127 = vunpack.c.l.b16 %v7608
        %v8128 = vunpack.c.l.b16 %v7609
        %v8129 = vunpack.c.l.b16 %v7610
        %v8130 = vunpack.c.l.b16 %v7611
        %v8131 = vunpack.c.l.b16 %v7612
        %v8132 = vunpack.c.l.b16 %v7613
        %v8133 = vunpack.c.l.b16 %v7614
        %v8134 = vunpack.c.l.b16 %v7615
        %v8135 = vunpack.c.l.b16 %v7616
        %v8136 = vunpack.c.l.b16 %v7617
        %v8137 = vunpack.c.l.b16 %v7618
        %v8138 = vunpack.c.l.b16 %v7619
        %v8139 = vunpack.c.l.b16 %v7620
        %v8140 = vunpack.c.l.b16 %v7621
        %v8141 = vunpack.c.l.b16 %v7622
        %v8142 = vunpack.c.l.b16 %v7623
        %v8143 = vunpack.c.l.b16 %v7624
        %v8144 = vunpack.c.l.b16 %v7625
        %v8145 = vunpack.c.l.b16 %v7626
        %v8146 = vunpack.c.l.b16 %v7627
        %v8147 = vunpack.c.l.b16 %v7628
        %v8148 = vunpack.c.l.b16 %v7629
        %v8149 = vunpack.c.l.b16 %v7630
        %v8150 = vunpack.c.l.b16 %v7631
        %v8151 = vunpack.c.l.b16 %v7632
        %v8152 = vunpack.c.l.b16 %v7633
        %v8153 = vunpack.c.l.b16 %v7634
        %v8154 = vunpack.c.l.b16 %v7635
        %v8155 = vunpack.c.l.b16 %v7636
        %v8156 = vunpack.c.l.b16 %v7637
        %v8157 = vunpack.c.l.b16 %v7638
        %v8158 = vunpack.c.l.b16 %v7639
        %v8159 = vunpack.c.l.b16 %v7640
        %v8160 = vunpack.c.l.b16 %v7641
        %v8161 = vunpack.c.l.b16 %v7642
        %v8162 = vunpack.c.l.b16 %v7643
        %v8163 = vunpack.c.l.b16 %v7644
        %v8164 = vunpack.c.l.b16 %v7645
        %v8165 = vunpack.c.l.b16 %v7646
        %v8166 = vunpack.c.l.b16 %v7647
        %v8167 = vunpack.c.l.b16 %v7648
        %v8168 = vunpack.c.l.b16 %v7649
        %v8169 = vunpack.c.l.b16 %v7650
        %v8170 = vunpack.c.l.b16 %v7651
        %v8171 = vunpack.c.l.b16 %v7652
        %v8172 = vunpack.c.l.b16 %v7653
        %v8173 = vunpack.c.l.b16 %v7654
        %v8174 = vunpack.c.l.b16 %v7655
        %v8175 = vunpack.c.l.b16 %v7656
        %v8176 = vunpack.c.l.b16 %v7657
        %v8177 = vunpack.c.l.b16 %v7658
        %v8178 = vunpack.c.l.b16 %v7659
        %v8179 = vunpack.c.l.b16 %v7660
        %v8180 = vunpack.c.l.b16 %v7661
        %v8181 = vunpack.c.l.b16 %v7662
        %v8182 = vunpack.c.l.b16 %v7663
        %v8183 = vunpack.c.l.b16 %v7664
        %v8184 = vunpack.c.l.b16 %v7665
        %v8185 = vunpack.c.l.b16 %v7666
        %v8186 = vunpack.c.l.b16 %v7667
        %v8187 = vunpack.c.l.b16 %v7668
        %v8188 = vunpack.c.l.b16 %v7669
        %v8189 = vunpack.c.l.b16 %v7670
        %v8190 = vunpack.c.l.b16 %v7671
        %v8191 = vunpack.c.l.b16 %v7672
        %v8192 = vunpack.c.l.b16 %v7673
        %v8193 = vunpack.c.l.b16 %v7674
        %v8194 = vunpack.c.l.b16 %v7675
        %v8195 = vunpack.c.l.b16 %v7676
        %v8196 = vunpack.c.l.b16 %v7677
        %v8197 = vunpack.c.l.b16 %v7678
        %v8198 = vunpack.c.l.b16 %v7679
        %v8199 = vunpack.c.l.b16 %v7680
        %v8200 = vunpack.c.l.b16 %v7681
        %v8201 = vunpack.c.l.b16 %v7682
        %v8202 = vunpack.c.l.b16 %v7683
        %v8203 = vunpack.c.l.b16 %v7684
        %v8204 = vunpack.c.l.b16 %v7685
        %v8205 = vunpack.c.l.b16 %v7686
        %v8206 = vunpack.c.l.b16 %v7687
        %v8207 = vunpack.c.l.b16 %v7688
        %v8208 = vunpack.c.l.b16 %v7689
        %v8209 = vunpack.c.l.b16 %v7690
        %v8210 = vunpack.c.l.b16 %v7691
        %v8211 = vunpack.c.l.b16 %v7692
        %v8212 = vunpack.c.l.b16 %v7693
        %v8213 = vunpack.c.l.b16 %v7694
        %v8214 = vunpack.c.l.b16 %v7695
        %v8215 = vunpack.c.l.b16 %v7696
        %v8216 = vunpack.c.l.b16 %v7697
        %v8217 = vunpack.c.l.b16 %v7698
        %v8218 = vunpack.c.l.b16 %v7699
        %v8219 = vunpack.c.l.b16 %v7700
        %v8220 = vunpack.c.l.b16 %v7701
        %v8221 = vunpack.c.l.b16 %v7702
        %v8222 = vunpack.c.l.b16 %v7703
        %v8223 = vunpack.c.l.b16 %v7704
        %v8224 = vunpack.c.l.b16 %v7705
        %v8225 = vunpack.c.l.b16 %v7706
        %v8226 = vunpack.c.l.b16 %v7707
        %v8227 = vunpack.c.l.b16 %v7708
        %v8228 = vunpack.c.l.b16 %v7709
        %v8229 = vunpack.c.l.b16 %v7710
        %v8230 = vunpack.c.l.b16 %v7711
        %v8231 = vunpack.c.l.b16 %v7712
        %v8232 = vunpack.c.l.b16 %v7713
        %v8233 = vunpack.c.l.b16 %v7714
        %v8234 = vunpack.c.l.b16 %v7715
        %v8235 = vunpack.c.l.b16 %v7716
        %v8236 = vunpack.c.l.b16 %v7717
        %v8237 = vunpack.c.l.b16 %v7718
        %v8238 = vunpack.c.l.b16 %v7719
        %v8239 = vunpack.c.l.b16 %v7720
        %v8240 = vunpack.c.l.b16 %v7721
        %v8241 = vunpack.c.l.b16 %v7722
        %v8242 = vunpack.c.l.b16 %v7723
        %v8243 = vunpack.c.l.b16 %v7724
        %v8244 = vunpack.c.l.b16 %v7725
        %v8245 = vunpack.c.l.b16 %v7726
        %v8246 = vunpack.c.l.b16 %v7727
        %v8247 = vunpack.c.l.b16 %v7728
        %v8248 = vunpack.c.l.b16 %v7729
        %v8249 = vunpack.c.l.b16 %v7730
        %v8250 = vunpack.c.l.b16 %v7731
        %v8251 = vunpack.c.l.b16 %v7732
        %v8252 = vunpack.c.l.b16 %v7733
        %v8253 = vunpack.c.l.b16 %v7734
        %v8254 = vunpack.c.l.b16 %v7735
        %v8255 = vunpack.c.l.b16 %v7736
        %v8256 = vunpack.c.l.b16 %v7737
        %v8257 = vunpack.c.l.b16 %v7738
        %v8258 = vunpack.c.l.b16 %v7739
        %v8259 = vunpack.c.l.b16 %v7740
        %v8260 = vunpack.c.l.b16 %v7741
        %v8261 = vunpack.c.l.b16 %v7742
        %v8262 = vunpack.c.l.b16 %v7743
        %v8263 = vunpack.c.l.b16 %v7744
        %v8264 = vunpack.c.l.b16 %v7745
        %v8265 = vunpack.c.l.b16 %v7746
        %v8266 = vunpack.c.l.b16 %v7747
        %v8267 = vunpack.c.l.b16 %v7748
        %v8268 = vunpack.c.l.b16 %v7749
        %v8269 = vunpack.c.l.b16 %v7750
        %v8270 = vunpack.c.l.b16 %v7751
        %v8271 = vunpack.c.l.b16 %v7752
        %v8272 = vunpack.c.l.b16 %v7753
        %v8273 = vunpack.c.l.b16 %v7754
        %v8274 = vunpack.c.l.b16 %v7755
        %v8275 = vunpack.c.l.b16 %v7756
        %v8276 = vunpack.c.l.b16 %v7757
        %v8277 = vunpack.c.l.b16 %v7758
        %v8278 = vunpack.c.l.b16 %v7759
        %v8279 = vunpack.c.l.b16 %v7760
        %v8280 = vunpack.c.l.b16 %v7761
        %v8281 = vunpack.c.l.b16 %v7762
        %v8282 = vunpack.c.l.b16 %v7763
        %v8283 = vunpack.c.l.b16 %v7764
        %v8284 = vunpack.c.l.b16 %v7765
        %v8285 = vpack.c.b16 %v8030, %v8029
        %v8286 = vpack.c.b16 %v8032, %v8031
        %v8287 = vpack.c.b16 %v8034, %v8033
        %v8288 = vpack.c.b16 %v8036, %v8035
        %v8289 = vpack.c.b16 %v8038, %v8037
        %v8290 = vpack.c.b16 %v8040, %v8039
        %v8291 = vpack.c.b16 %v8042, %v8041
        %v8292 = vpack.c.b16 %v8044, %v8043
        %v8293 = vpack.c.b16 %v8046, %v8045
        %v8294 = vpack.c.b16 %v8048, %v8047
        %v8295 = vpack.c.b16 %v8050, %v8049
        %v8296 = vpack.c.b16 %v8052, %v8051
        %v8297 = vpack.c.b16 %v8054, %v8053
        %v8298 = vpack.c.b16 %v8056, %v8055
        %v8299 = vpack.c.b16 %v8058, %v8057
        %v8300 = vpack.c.b16 %v8060, %v8059
        %v8301 = vpack.c.b16 %v8062, %v8061
        %v8302 = vpack.c.b16 %v8064, %v8063
        %v8303 = vpack.c.b16 %v8066, %v8065
        %v8304 = vpack.c.b16 %v8068, %v8067
        %v8305 = vpack.c.b16 %v8070, %v8069
        %v8306 = vpack.c.b16 %v8072, %v8071
        %v8307 = vpack.c.b16 %v8074, %v8073
        %v8308 = vpack.c.b16 %v8076, %v8075
        %v8309 = vpack.c.b16 %v8078, %v8077
        %v8310 = vpack.c.b16 %v8080, %v8079
        %v8311 = vpack.c.b16 %v8082, %v8081
        %v8312 = vpack.c.b16 %v8084, %v8083
        %v8313 = vpack.c.b16 %v8086, %v8085
        %v8314 = vpack.c.b16 %v8088, %v8087
        %v8315 = vpack.c.b16 %v8090, %v8089
        %v8316 = vpack.c.b16 %v8092, %v8091
        %v8317 = vpack.c.b16 %v8094, %v8093
        %v8318 = vpack.c.b16 %v8096, %v8095
        %v8319 = vpack.c.b16 %v8098, %v8097
        %v8320 = vpack.c.b16 %v8100, %v8099
        %v8321 = vpack.c.b16 %v8102, %v8101
        %v8322 = vpack.c.b16 %v8104, %v8103
        %v8323 = vpack.c.b16 %v8106, %v8105
        %v8324 = vpack.c.b16 %v8108, %v8107
        %v8325 = vpack.c.b16 %v8110, %v8109
        %v8326 = vpack.c.b16 %v8112, %v8111
        %v8327 = vpack.c.b16 %v8114, %v8113
        %v8328 = vpack.c.b16 %v8116, %v8115
        %v8329 = vpack.c.b16 %v8118, %v8117
        %v8330 = vpack.c.b16 %v8120, %v8119
        %v8331 = vpack.c.b16 %v8122, %v8121
        %v8332 = vpack.c.b16 %v8124, %v8123
        %v8333 = vpack.c.b16 %v8126, %v8125
        %v8334 = vpack.c.b16 %v8128, %v8127
        %v8335 = vpack.c.b16 %v8130, %v8129
        %v8336 = vpack.c.b16 %v8132, %v8131
        %v8337 = vpack.c.b16 %v8134, %v8133
        %v8338 = vpack.c.b16 %v8136, %v8135
        %v8339 = vpack.c.b16 %v8138, %v8137
        %v8340 = vpack.c.b16 %v8140, %v8139
        %v8341 = vpack.c.b16 %v8142, %v8141
        %v8342 = vpack.c.b16 %v8144, %v8143
        %v8343 = vpack.c.b16 %v8146, %v8145
        %v8344 = vpack.c.b16 %v8148, %v8147
        %v8345 = vpack.c.b16 %v8150, %v8149
        %v8346 = vpack.c.b16 %v8152, %v8151
        %v8347 = vpack.c.b16 %v8154, %v8153
        %v8348 = vpack.c.b16 %v8156, %v8155
        %v8349 = vpack.c.b16 %v8158, %v8157
        %v8350 = vpack.c.b16 %v8160, %v8159
        %v8351 = vpack.c.b16 %v8162, %v8161
        %v8352 = vpack.c.b16 %v8164, %v8163
        %v8353 = vpack.c.b16 %v8166, %v8165
        %v8354 = vpack.c.b16 %v8168, %v8167
        %v8355 = vpack.c.b16 %v8170, %v8169
        %v8356 = vpack.c.b16 %v8172, %v8171
        %v8357 = vpack.c.b16 %v8174, %v8173
        %v8358 = vpack.c.b16 %v8176, %v8175
        %v8359 = vpack.c.b16 %v8178, %v8177
        %v8360 = vpack.c.b16 %v8180, %v8179
        %v8361 = vpack.c.b16 %v8182, %v8181
        %v8362 = vpack.c.b16 %v8184, %v8183
        %v8363 = vpack.c.b16 %v8186, %v8185
        %v8364 = vpack.c.b16 %v8188, %v8187
        %v8365 = vpack.c.b16 %v8190, %v8189
        %v8366 = vpack.c.b16 %v8192, %v8191
        %v8367 = vpack.c.b16 %v8194, %v8193
        %v8368 = vpack.c.b16 %v8196, %v8195
        %v8369 = vpack.c.b16 %v8198, %v8197
        %v8370 = vpack.c.b16 %v8200, %v8199
        %v8371 = vpack.c.b16 %v8202, %v8201
        %v8372 = vpack.c.b16 %v8204, %v8203
        %v8373 = vpack.c.b16 %v8206, %v8205
        %v8374 = vpack.c.b16 %v8208, %v8207
        %v8375 = vpack.c.b16 %v8210, %v8209
        %v8376 = vpack.c.b16 %v8212, %v8211
        %v8377 = vpack.c.b16 %v8214, %v8213
        %v8378 = vpack.c.b16 %v8216, %v8215
        %v8379 = vpack.c.b16 %v8218, %v8217
        %v8380 = vpack.c.b16 %v8220, %v8219
        %v8381 = vpack.c.b16 %v8222, %v8221
        %v8382 = vpack.c.b16 %v8224, %v8223
        %v8383 = vpack.c.b16 %v8226, %v8225
        %v8384 = vpack.c.b16 %v8228, %v8227
        %v8385 = vpack.c.b16 %v8230, %v8229
        %v8386 = vpack.c.b16 %v8232, %v8231
        %v8387 = vpack.c.b16 %v8234, %v8233
        %v8388 = vpack.c.b16 %v8236, %v8235
        %v8389 = vpack.c.b16 %v8238, %v8237
        %v8390 = vpack.c.b16 %v8240, %v8239
        %v8391 = vpack.c.b16 %v8242, %v8241
        %v8392 = vpack.c.b16 %v8244, %v8243
        %v8393 = vpack.c.b16 %v8246, %v8245
        %v8394 = vpack.c.b16 %v8248, %v8247
        %v8395 = vpack.c.b16 %v8250, %v8249
        %v8396 = vpack.c.b16 %v8252, %v8251
        %v8397 = vpack.c.b16 %v8254, %v8253
        %v8398 = vpack.c.b16 %v8256, %v8255
        %v8399 = vpack.c.b16 %v8258, %v8257
        %v8400 = vpack.c.b16 %v8260, %v8259
        %v8401 = vpack.c.b16 %v8262, %v8261
        %v8402 = vpack.c.b16 %v8264, %v8263
        %v8403 = vpack.c.b16 %v8266, %v8265
        %v8404 = vpack.c.b16 %v8268, %v8267
        %v8405 = vpack.c.b16 %v8270, %v8269
        %v8406 = vpack.c.b16 %v8272, %v8271
        %v8407 = vpack.c.b16 %v8274, %v8273
        %v8408 = vpack.c.b16 %v8276, %v8275
        %v8409 = vpack.c.b16 %v8278, %v8277
        %v8410 = vpack.c.b16 %v8280, %v8279
        %v8411 = vpack.c.b16 %v8282, %v8281
        %v8412 = vpack.c.b16 %v8284, %v8283
        %8541 = vmatprep.subr.bf16.mxu0 0
        %8542 = vmatpush1.bf16.msra.mxu0 %v8285
        %8543 = vmatprep.subr.bf16.mxu0 0
        %8544 = vmatpush1.bf16.msra.mxu0 %v8286
        %8545 = vmatprep.subr.bf16.mxu0 0
        %8546 = vmatpush1.bf16.msra.mxu0 %v8287
        %8547 = vmatprep.subr.bf16.mxu0 0
        %8548 = vmatpush1.bf16.msra.mxu0 %v8288
        %8549 = vmatprep.subr.bf16.mxu0 0
        %8550 = vmatpush1.bf16.msra.mxu0 %v8289
        %8551 = vmatprep.subr.bf16.mxu0 0
        %8552 = vmatpush1.bf16.msra.mxu0 %v8290
        %8553 = vmatprep.subr.bf16.mxu0 0
        %8554 = vmatpush1.bf16.msra.mxu0 %v8291
        %8555 = vmatprep.subr.bf16.mxu0 0
        %8556 = vmatpush1.bf16.msra.mxu0 %v8292
        %8557 = vmatprep.subr.bf16.mxu0 0
        %8558 = vmatpush1.bf16.msra.mxu0 %v8293
        %8559 = vmatprep.subr.bf16.mxu0 0
        %8560 = vmatpush1.bf16.msra.mxu0 %v8294
        %8561 = vmatprep.subr.bf16.mxu0 0
        %8562 = vmatpush1.bf16.msra.mxu0 %v8295
        %8563 = vmatprep.subr.bf16.mxu0 0
        %8564 = vmatpush1.bf16.msra.mxu0 %v8296
        %8565 = vmatprep.subr.bf16.mxu0 0
        %8566 = vmatpush1.bf16.msra.mxu0 %v8297
        %8567 = vmatprep.subr.bf16.mxu0 0
        %8568 = vmatpush1.bf16.msra.mxu0 %v8298
        %8569 = vmatprep.subr.bf16.mxu0 0
        %8570 = vmatpush1.bf16.msra.mxu0 %v8299
        %8571 = vmatprep.subr.bf16.mxu0 0
        %8572 = vmatpush1.bf16.msra.mxu0 %v8300
        %8573 = vmatprep.mubr.bf16.mxu0 %v7383
        %8574 = vmatmul.mubr.bf16.gmra.mrb[0].mxu0 %v7382
        %v8575 = vpop.f32.mrb[0].mxu0
        %v8576 = vadd.f32 %v7771, %v8575
        %v8577 = vpop.f32.mrb[0].mxu0
        %v8578 = vpop.f32.mrb[0].mxu0
        %v8579 = vadd.f32 %v7771, %v8578
        %v8580 = vpop.f32.mrb[0].mxu0
        %8581 = vmatprep.mubr.bf16.mxu0 %v7399
        %8582 = vmatmul.mubr.bf16.gmra.mrb[0].mxu0 %v7398
        %v8583 = vpop.f32.mrb[0].mxu0
        %v8584 = vadd.f32 %v7771, %v8583
        %v8585 = vpop.f32.mrb[0].mxu0
        %v8586 = vpop.f32.mrb[0].mxu0
        %v8587 = vadd.f32 %v7771, %v8586
        %v8588 = vpop.f32.mrb[0].mxu0
        %8589 = vmatprep.mubr.bf16.mxu0 %v7415
        %8590 = vmatmul.mubr.bf16.gmra.mrb[0].mxu0 %v7414
        %v8591 = vpop.f32.mrb[0].mxu0
        %v8592 = vadd.f32 %v7771, %v8591
        %v8593 = vpop.f32.mrb[0].mxu0
        %v8594 = vpop.f32.mrb[0].mxu0
        %v8595 = vadd.f32 %v7771, %v8594
        %v8596 = vpop.f32.mrb[0].mxu0
        %8597 = vmatprep.mubr.bf16.mxu0 %v7431
        %8598 = vmatmul.mubr.bf16.gmra.mrb[0].mxu0 %v7430
        %v8599 = vpop.f32.mrb[0].mxu0
        %v8600 = vadd.f32 %v7771, %v8599
        %v8601 = vpop.f32.mrb[0].mxu0
        %v8602 = vpop.f32.mrb[0].mxu0
        %v8603 = vadd.f32 %v7771, %v8602
        %v8604 = vpop.f32.mrb[0].mxu0
        %8605 = vmatprep.mubr.bf16.mxu0 %v7447
        %8606 = vmatmul.mubr.bf16.gmra.mrb[0].mxu0 %v7446
        %v8607 = vpop.f32.mrb[0].mxu0
        %v8608 = vadd.f32 %v7771, %v8607
        %v8609 = vpop.f32.mrb[0].mxu0
        %v8610 = vpop.f32.mrb[0].mxu0
        %v8611 = vadd.f32 %v7771, %v8610
        %v8612 = vpop.f32.mrb[0].mxu0
        %8613 = vmatprep.mubr.bf16.mxu0 %v7463
        %8614 = vmatmul.mubr.bf16.gmra.mrb[0].mxu0 %v7462
        %v8615 = vpop.f32.mrb[0].mxu0
        %v8616 = vadd.f32 %v7771, %v8615
        %v8617 = vpop.f32.mrb[0].mxu0
        %v8618 = vpop.f32.mrb[0].mxu0
        %v8619 = vadd.f32 %v7771, %v8618
        %v8620 = vpop.f32.mrb[0].mxu0
        %8621 = vmatprep.mubr.bf16.mxu0 %v7479
        %8622 = vmatmul.mubr.bf16.gmra.mrb[0].mxu0 %v7478
        %v8623 = vpop.f32.mrb[0].mxu0
        %v8624 = vadd.f32 %v7771, %v8623
        %v8625 = vpop.f32.mrb[0].mxu0
        %v8626 = vpop.f32.mrb[0].mxu0
        %v8627 = vadd.f32 %v7771, %v8626
        %v8628 = vpop.f32.mrb[0].mxu0
        %8629 = vmatprep.mubr.bf16.mxu0 %v7495
        %8630 = vmatmul.mubr.bf16.gmra.mrb[0].mxu0 %v7494
        %v8631 = vpop.f32.mrb[0].mxu0
        %v8632 = vadd.f32 %v7771, %v8631
        %v8633 = vpop.f32.mrb[0].mxu0
        %v8634 = vpop.f32.mrb[0].mxu0
        %v8635 = vadd.f32 %v7771, %v8634
        %v8636 = vpop.f32.mrb[0].mxu0
        %8637 = vdwg.mxu0
        %8638 = vmatprep.subr.bf16.mxu0 0
        %8639 = vmatpush1.bf16.msra.mxu0 %v8301
        %8640 = vmatprep.subr.bf16.mxu0 0
        %8641 = vmatpush1.bf16.msra.mxu0 %v8302
        %8642 = vmatprep.subr.bf16.mxu0 0
        %8643 = vmatpush1.bf16.msra.mxu0 %v8303
        %8644 = vmatprep.subr.bf16.mxu0 0
        %8645 = vmatpush1.bf16.msra.mxu0 %v8304
        %8646 = vmatprep.subr.bf16.mxu0 0
        %8647 = vmatpush1.bf16.msra.mxu0 %v8305
        %8648 = vmatprep.subr.bf16.mxu0 0
        %8649 = vmatpush1.bf16.msra.mxu0 %v8306
        %8650 = vmatprep.subr.bf16.mxu0 0
        %8651 = vmatpush1.bf16.msra.mxu0 %v8307
        %8652 = vmatprep.subr.bf16.mxu0 0
        %8653 = vmatpush1.bf16.msra.mxu0 %v8308
        %8654 = vmatprep.subr.bf16.mxu0 0
        %8655 = vmatpush1.bf16.msra.mxu0 %v8309
        %8656 = vmatprep.subr.bf16.mxu0 0
        %8657 = vmatpush1.bf16.msra.mxu0 %v8310
        %8658 = vmatprep.subr.bf16.mxu0 0
        %8659 = vmatpush1.bf16.msra.mxu0 %v8311
        %8660 = vmatprep.subr.bf16.mxu0 0
        %8661 = vmatpush1.bf16.msra.mxu0 %v8312
        %8662 = vmatprep.subr.bf16.mxu0 0
        %8663 = vmatpush1.bf16.msra.mxu0 %v8313
        %8664 = vmatprep.subr.bf16.mxu0 0
        %8665 = vmatpush1.bf16.msra.mxu0 %v8314
        %8666 = vmatprep.subr.bf16.mxu0 0
        %8667 = vmatpush1.bf16.msra.mxu0 %v8315
        %8668 = vmatprep.subr.bf16.mxu0 0
        %8669 = vmatpush1.bf16.msra.mxu0 %v8316
        %8670 = vmatprep.mubr.bf16.mxu0 %v7385
        %8671 = vmatmul.mubr.bf16.gmra.mrb[0].mxu0 %v7384
        %v8672 = vpop.f32.mrb[0].mxu0
        %v8673 = vadd.f32 %v8576, %v8672
        %v8674 = vpop.f32.mrb[0].mxu0
        %v8675 = vpop.f32.mrb[0].mxu0
        %v8676 = vadd.f32 %v8579, %v8675
        %v8677 = vpop.f32.mrb[0].mxu0
        %8678 = vmatprep.mubr.bf16.mxu0 %v7401
        %8679 = vmatmul.mubr.bf16.gmra.mrb[0].mxu0 %v7400
        %v8680 = vpop.f32.mrb[0].mxu0
        %v8681 = vadd.f32 %v8584, %v8680
        %v8682 = vpop.f32.mrb[0].mxu0
        %v8683 = vpop.f32.mrb[0].mxu0
        %v8684 = vadd.f32 %v8587, %v8683
        %v8685 = vpop.f32.mrb[0].mxu0
        %8686 = vmatprep.mubr.bf16.mxu0 %v7417
        %8687 = vmatmul.mubr.bf16.gmra.mrb[0].mxu0 %v7416
        %v8688 = vpop.f32.mrb[0].mxu0
        %v8689 = vadd.f32 %v8592, %v8688
        %v8690 = vpop.f32.mrb[0].mxu0
        %v8691 = vpop.f32.mrb[0].mxu0
        %v8692 = vadd.f32 %v8595, %v8691
        %v8693 = vpop.f32.mrb[0].mxu0
        %8694 = vmatprep.mubr.bf16.mxu0 %v7433
        %8695 = vmatmul.mubr.bf16.gmra.mrb[0].mxu0 %v7432
        %v8696 = vpop.f32.mrb[0].mxu0
        %v8697 = vadd.f32 %v8600, %v8696
        %v8698 = vpop.f32.mrb[0].mxu0
        %v8699 = vpop.f32.mrb[0].mxu0
        %v8700 = vadd.f32 %v8603, %v8699
        %v8701 = vpop.f32.mrb[0].mxu0
        %8702 = vmatprep.mubr.bf16.mxu0 %v7449
        %8703 = vmatmul.mubr.bf16.gmra.mrb[0].mxu0 %v7448
        %v8704 = vpop.f32.mrb[0].mxu0
        %v8705 = vadd.f32 %v8608, %v8704
        %v8706 = vpop.f32.mrb[0].mxu0
        %v8707 = vpop.f32.mrb[0].mxu0
        %v8708 = vadd.f32 %v8611, %v8707
        %v8709 = vpop.f32.mrb[0].mxu0
        %8710 = vmatprep.mubr.bf16.mxu0 %v7465
        %8711 = vmatmul.mubr.bf16.gmra.mrb[0].mxu0 %v7464
        %v8712 = vpop.f32.mrb[0].mxu0
        %v8713 = vadd.f32 %v8616, %v8712
        %v8714 = vpop.f32.mrb[0].mxu0
        %v8715 = vpop.f32.mrb[0].mxu0
        %v8716 = vadd.f32 %v8619, %v8715
        %v8717 = vpop.f32.mrb[0].mxu0
        %8718 = vmatprep.mubr.bf16.mxu0 %v7481
        %8719 = vmatmul.mubr.bf16.gmra.mrb[0].mxu0 %v7480
        %v8720 = vpop.f32.mrb[0].mxu0
        %v8721 = vadd.f32 %v8624, %v8720
        %v8722 = vpop.f32.mrb[0].mxu0
        %v8723 = vpop.f32.mrb[0].mxu0
        %v8724 = vadd.f32 %v8627, %v8723
        %v8725 = vpop.f32.mrb[0].mxu0
        %8726 = vmatprep.mubr.bf16.mxu0 %v7497
        %8727 = vmatmul.mubr.bf16.gmra.mrb[0].mxu0 %v7496
        %v8728 = vpop.f32.mrb[0].mxu0
        %v8729 = vadd.f32 %v8632, %v8728
        %v8730 = vpop.f32.mrb[0].mxu0
        %v8731 = vpop.f32.mrb[0].mxu0
        %v8732 = vadd.f32 %v8635, %v8731
        %v8733 = vpop.f32.mrb[0].mxu0
        %8734 = vdwg.mxu0
        %8735 = vmatprep.subr.bf16.mxu0 0
        %8736 = vmatpush1.bf16.msra.mxu0 %v8317
        %8737 = vmatprep.subr.bf16.mxu0 0
        %8738 = vmatpush1.bf16.msra.mxu0 %v8318
        %8739 = vmatprep.subr.bf16.mxu0 0
        %8740 = vmatpush1.bf16.msra.mxu0 %v8319
        %8741 = vmatprep.subr.bf16.mxu0 0
        %8742 = vmatpush1.bf16.msra.mxu0 %v8320
        %8743 = vmatprep.subr.bf16.mxu0 0
        %8744 = vmatpush1.bf16.msra.mxu0 %v8321
        %8745 = vmatprep.subr.bf16.mxu0 0
        %8746 = vmatpush1.bf16.msra.mxu0 %v8322
        %8747 = vmatprep.subr.bf16.mxu0 0
        %8748 = vmatpush1.bf16.msra.mxu0 %v8323
        %8749 = vmatprep.subr.bf16.mxu0 0
        %8750 = vmatpush1.bf16.msra.mxu0 %v8324
        %8751 = vmatprep.subr.bf16.mxu0 0
        %8752 = vmatpush1.bf16.msra.mxu0 %v8325
        %8753 = vmatprep.subr.bf16.mxu0 0
        %8754 = vmatpush1.bf16.msra.mxu0 %v8326
        %8755 = vmatprep.subr.bf16.mxu0 0
        %8756 = vmatpush1.bf16.msra.mxu0 %v8327
        %8757 = vmatprep.subr.bf16.mxu0 0
        %8758 = vmatpush1.bf16.msra.mxu0 %v8328
        %8759 = vmatprep.subr.bf16.mxu0 0
        %8760 = vmatpush1.bf16.msra.mxu0 %v8329
        %8761 = vmatprep.subr.bf16.mxu0 0
        %8762 = vmatpush1.bf16.msra.mxu0 %v8330
        %8763 = vmatprep.subr.bf16.mxu0 0
        %8764 = vmatpush1.bf16.msra.mxu0 %v8331
        %8765 = vmatprep.subr.bf16.mxu0 0
        %8766 = vmatpush1.bf16.msra.mxu0 %v8332
        %8767 = vmatprep.mubr.bf16.mxu0 %v7387
        %8768 = vmatmul.mubr.bf16.gmra.mrb[0].mxu0 %v7386
        %v8769 = vpop.f32.mrb[0].mxu0
        %v8770 = vadd.f32 %v8673, %v8769
        %v8771 = vpop.f32.mrb[0].mxu0
        %v8772 = vpop.f32.mrb[0].mxu0
        %v8773 = vadd.f32 %v8676, %v8772
        %v8774 = vpop.f32.mrb[0].mxu0
        %8775 = vmatprep.mubr.bf16.mxu0 %v7403
        %8776 = vmatmul.mubr.bf16.gmra.mrb[0].mxu0 %v7402
        %v8777 = vpop.f32.mrb[0].mxu0
        %v8778 = vadd.f32 %v8681, %v8777
        %v8779 = vpop.f32.mrb[0].mxu0
        %v8780 = vpop.f32.mrb[0].mxu0
        %v8781 = vadd.f32 %v8684, %v8780
        %v8782 = vpop.f32.mrb[0].mxu0
        %8783 = vmatprep.mubr.bf16.mxu0 %v7419
        %8784 = vmatmul.mubr.bf16.gmra.mrb[0].mxu0 %v7418
        %v8785 = vpop.f32.mrb[0].mxu0
        %v8786 = vadd.f32 %v8689, %v8785
        %v8787 = vpop.f32.mrb[0].mxu0
        %v8788 = vpop.f32.mrb[0].mxu0
        %v8789 = vadd.f32 %v8692, %v8788
        %v8790 = vpop.f32.mrb[0].mxu0
        %8791 = vmatprep.mubr.bf16.mxu0 %v7435
        %8792 = vmatmul.mubr.bf16.gmra.mrb[0].mxu0 %v7434
        %v8793 = vpop.f32.mrb[0].mxu0
        %v8794 = vadd.f32 %v8697, %v8793
        %v8795 = vpop.f32.mrb[0].mxu0
        %v8796 = vpop.f32.mrb[0].mxu0
        %v8797 = vadd.f32 %v8700, %v8796
        %v8798 = vpop.f32.mrb[0].mxu0
        %8799 = vmatprep.mubr.bf16.mxu0 %v7451
        %8800 = vmatmul.mubr.bf16.gmra.mrb[0].mxu0 %v7450
        %v8801 = vpop.f32.mrb[0].mxu0
        %v8802 = vadd.f32 %v8705, %v8801
        %v8803 = vpop.f32.mrb[0].mxu0
        %v8804 = vpop.f32.mrb[0].mxu0
        %v8805 = vadd.f32 %v8708, %v8804
        %v8806 = vpop.f32.mrb[0].mxu0
        %8807 = vmatprep.mubr.bf16.mxu0 %v7467
        %8808 = vmatmul.mubr.bf16.gmra.mrb[0].mxu0 %v7466
        %v8809 = vpop.f32.mrb[0].mxu0
        %v8810 = vadd.f32 %v8713, %v8809
        %v8811 = vpop.f32.mrb[0].mxu0
        %v8812 = vpop.f32.mrb[0].mxu0
        %v8813 = vadd.f32 %v8716, %v8812
        %v8814 = vpop.f32.mrb[0].mxu0
        %8815 = vmatprep.mubr.bf16.mxu0 %v7483
        %8816 = vmatmul.mubr.bf16.gmra.mrb[0].mxu0 %v7482
        %v8817 = vpop.f32.mrb[0].mxu0
        %v8818 = vadd.f32 %v8721, %v8817
        %v8819 = vpop.f32.mrb[0].mxu0
        %v8820 = vpop.f32.mrb[0].mxu0
        %v8821 = vadd.f32 %v8724, %v8820
        %v8822 = vpop.f32.mrb[0].mxu0
        %8823 = vmatprep.mubr.bf16.mxu0 %v7499
        %8824 = vmatmul.mubr.bf16.gmra.mrb[0].mxu0 %v7498
        %v8825 = vpop.f32.mrb[0].mxu0
        %v8826 = vadd.f32 %v8729, %v8825
        %v8827 = vpop.f32.mrb[0].mxu0
        %v8828 = vpop.f32.mrb[0].mxu0
        %v8829 = vadd.f32 %v8732, %v8828
        %v8830 = vpop.f32.mrb[0].mxu0
        %8831 = vdwg.mxu0
        %8832 = vmatprep.subr.bf16.mxu0 0
        %8833 = vmatpush1.bf16.msra.mxu0 %v8333
        %8834 = vmatprep.subr.bf16.mxu0 0
        %8835 = vmatpush1.bf16.msra.mxu0 %v8334
        %8836 = vmatprep.subr.bf16.mxu0 0
        %8837 = vmatpush1.bf16.msra.mxu0 %v8335
        %8838 = vmatprep.subr.bf16.mxu0 0
        %8839 = vmatpush1.bf16.msra.mxu0 %v8336
        %8840 = vmatprep.subr.bf16.mxu0 0
        %8841 = vmatpush1.bf16.msra.mxu0 %v8337
        %8842 = vmatprep.subr.bf16.mxu0 0
        %8843 = vmatpush1.bf16.msra.mxu0 %v8338
        %8844 = vmatprep.subr.bf16.mxu0 0
        %8845 = vmatpush1.bf16.msra.mxu0 %v8339
        %8846 = vmatprep.subr.bf16.mxu0 0
        %8847 = vmatpush1.bf16.msra.mxu0 %v8340
        %8848 = vmatprep.subr.bf16.mxu0 0
        %8849 = vmatpush1.bf16.msra.mxu0 %v8341
        %8850 = vmatprep.subr.bf16.mxu0 0
        %8851 = vmatpush1.bf16.msra.mxu0 %v8342
        %8852 = vmatprep.subr.bf16.mxu0 0
        %8853 = vmatpush1.bf16.msra.mxu0 %v8343
        %8854 = vmatprep.subr.bf16.mxu0 0
        %8855 = vmatpush1.bf16.msra.mxu0 %v8344
        %8856 = vmatprep.subr.bf16.mxu0 0
        %8857 = vmatpush1.bf16.msra.mxu0 %v8345
        %8858 = vmatprep.subr.bf16.mxu0 0
        %8859 = vmatpush1.bf16.msra.mxu0 %v8346
        %8860 = vmatprep.subr.bf16.mxu0 0
        %8861 = vmatpush1.bf16.msra.mxu0 %v8347
        %8862 = vmatprep.subr.bf16.mxu0 0
        %8863 = vmatpush1.bf16.msra.mxu0 %v8348
        %8864 = vmatprep.mubr.bf16.mxu0 %v7389
        %8865 = vmatmul.mubr.bf16.gmra.mrb[0].mxu0 %v7388
        %v8866 = vpop.f32.mrb[0].mxu0
        %v8867 = vadd.f32 %v8770, %v8866
        %v8868 = vpop.f32.mrb[0].mxu0
        %v8869 = vpop.f32.mrb[0].mxu0
        %v8870 = vadd.f32 %v8773, %v8869
        %v8871 = vpop.f32.mrb[0].mxu0
        %8872 = vmatprep.mubr.bf16.mxu0 %v7405
        %8873 = vmatmul.mubr.bf16.gmra.mrb[0].mxu0 %v7404
        %v8874 = vpop.f32.mrb[0].mxu0
        %v8875 = vadd.f32 %v8778, %v8874
        %v8876 = vpop.f32.mrb[0].mxu0
        %v8877 = vpop.f32.mrb[0].mxu0
        %v8878 = vadd.f32 %v8781, %v8877
        %v8879 = vpop.f32.mrb[0].mxu0
        %8880 = vmatprep.mubr.bf16.mxu0 %v7421
        %8881 = vmatmul.mubr.bf16.gmra.mrb[0].mxu0 %v7420
        %v8882 = vpop.f32.mrb[0].mxu0
        %v8883 = vadd.f32 %v8786, %v8882
        %v8884 = vpop.f32.mrb[0].mxu0
        %v8885 = vpop.f32.mrb[0].mxu0
        %v8886 = vadd.f32 %v8789, %v8885
        %v8887 = vpop.f32.mrb[0].mxu0
        %8888 = vmatprep.mubr.bf16.mxu0 %v7437
        %8889 = vmatmul.mubr.bf16.gmra.mrb[0].mxu0 %v7436
        %v8890 = vpop.f32.mrb[0].mxu0
        %v8891 = vadd.f32 %v8794, %v8890
        %v8892 = vpop.f32.mrb[0].mxu0
        %v8893 = vpop.f32.mrb[0].mxu0
        %v8894 = vadd.f32 %v8797, %v8893
        %v8895 = vpop.f32.mrb[0].mxu0
        %8896 = vmatprep.mubr.bf16.mxu0 %v7453
        %8897 = vmatmul.mubr.bf16.gmra.mrb[0].mxu0 %v7452
        %v8898 = vpop.f32.mrb[0].mxu0
        %v8899 = vadd.f32 %v8802, %v8898
        %v8900 = vpop.f32.mrb[0].mxu0
        %v8901 = vpop.f32.mrb[0].mxu0
        %v8902 = vadd.f32 %v8805, %v8901
        %v8903 = vpop.f32.mrb[0].mxu0
        %8904 = vmatprep.mubr.bf16.mxu0 %v7469
        %8905 = vmatmul.mubr.bf16.gmra.mrb[0].mxu0 %v7468
        %v8906 = vpop.f32.mrb[0].mxu0
        %v8907 = vadd.f32 %v8810, %v8906
        %v8908 = vpop.f32.mrb[0].mxu0
        %v8909 = vpop.f32.mrb[0].mxu0
        %v8910 = vadd.f32 %v8813, %v8909
        %v8911 = vpop.f32.mrb[0].mxu0
        %8912 = vmatprep.mubr.bf16.mxu0 %v7485
        %8913 = vmatmul.mubr.bf16.gmra.mrb[0].mxu0 %v7484
        %v8914 = vpop.f32.mrb[0].mxu0
        %v8915 = vadd.f32 %v8818, %v8914
        %v8916 = vpop.f32.mrb[0].mxu0
        %v8917 = vpop.f32.mrb[0].mxu0
        %v8918 = vadd.f32 %v8821, %v8917
        %v8919 = vpop.f32.mrb[0].mxu0
        %8920 = vmatprep.mubr.bf16.mxu0 %v7501
        %8921 = vmatmul.mubr.bf16.gmra.mrb[0].mxu0 %v7500
        %v8922 = vpop.f32.mrb[0].mxu0
        %v8923 = vadd.f32 %v8826, %v8922
        %v8924 = vpop.f32.mrb[0].mxu0
        %v8925 = vpop.f32.mrb[0].mxu0
        %v8926 = vadd.f32 %v8829, %v8925
        %v8927 = vpop.f32.mrb[0].mxu0
        %8928 = vdwg.mxu0
        %8929 = vmatprep.subr.bf16.mxu0 0
        %8930 = vmatpush1.bf16.msra.mxu0 %v8349
        %8931 = vmatprep.subr.bf16.mxu0 0
        %8932 = vmatpush1.bf16.msra.mxu0 %v8350
        %8933 = vmatprep.subr.bf16.mxu0 0
        %8934 = vmatpush1.bf16.msra.mxu0 %v8351
        %8935 = vmatprep.subr.bf16.mxu0 0
        %8936 = vmatpush1.bf16.msra.mxu0 %v8352
        %8937 = vmatprep.subr.bf16.mxu0 0
        %8938 = vmatpush1.bf16.msra.mxu0 %v8353
        %8939 = vmatprep.subr.bf16.mxu0 0
        %8940 = vmatpush1.bf16.msra.mxu0 %v8354
        %8941 = vmatprep.subr.bf16.mxu0 0
        %8942 = vmatpush1.bf16.msra.mxu0 %v8355
        %8943 = vmatprep.subr.bf16.mxu0 0
        %8944 = vmatpush1.bf16.msra.mxu0 %v8356
        %8945 = vmatprep.subr.bf16.mxu0 0
        %8946 = vmatpush1.bf16.msra.mxu0 %v8357
        %8947 = vmatprep.subr.bf16.mxu0 0
        %8948 = vmatpush1.bf16.msra.mxu0 %v8358
        %8949 = vmatprep.subr.bf16.mxu0 0
        %8950 = vmatpush1.bf16.msra.mxu0 %v8359
        %8951 = vmatprep.subr.bf16.mxu0 0
        %8952 = vmatpush1.bf16.msra.mxu0 %v8360
        %8953 = vmatprep.subr.bf16.mxu0 0
        %8954 = vmatpush1.bf16.msra.mxu0 %v8361
        %8955 = vmatprep.subr.bf16.mxu0 0
        %8956 = vmatpush1.bf16.msra.mxu0 %v8362
        %8957 = vmatprep.subr.bf16.mxu0 0
        %8958 = vmatpush1.bf16.msra.mxu0 %v8363
        %8959 = vmatprep.subr.bf16.mxu0 0
        %8960 = vmatpush1.bf16.msra.mxu0 %v8364
        %8961 = vmatprep.mubr.bf16.mxu0 %v7391
        %8962 = vmatmul.mubr.bf16.gmra.mrb[0].mxu0 %v7390
        %v8963 = vpop.f32.mrb[0].mxu0
        %v8964 = vadd.f32 %v8867, %v8963
        %v8965 = vpop.f32.mrb[0].mxu0
        %v8966 = vpop.f32.mrb[0].mxu0
        %v8967 = vadd.f32 %v8870, %v8966
        %v8968 = vpop.f32.mrb[0].mxu0
        %8969 = vmatprep.mubr.bf16.mxu0 %v7407
        %8970 = vmatmul.mubr.bf16.gmra.mrb[0].mxu0 %v7406
        %v8971 = vpop.f32.mrb[0].mxu0
        %v8972 = vadd.f32 %v8875, %v8971
        %v8973 = vpop.f32.mrb[0].mxu0
        %v8974 = vpop.f32.mrb[0].mxu0
        %v8975 = vadd.f32 %v8878, %v8974
        %v8976 = vpop.f32.mrb[0].mxu0
        %8977 = vmatprep.mubr.bf16.mxu0 %v7423
        %8978 = vmatmul.mubr.bf16.gmra.mrb[0].mxu0 %v7422
        %v8979 = vpop.f32.mrb[0].mxu0
        %v8980 = vadd.f32 %v8883, %v8979
        %v8981 = vpop.f32.mrb[0].mxu0
        %v8982 = vpop.f32.mrb[0].mxu0
        %v8983 = vadd.f32 %v8886, %v8982
        %v8984 = vpop.f32.mrb[0].mxu0
        %8985 = vmatprep.mubr.bf16.mxu0 %v7439
        %8986 = vmatmul.mubr.bf16.gmra.mrb[0].mxu0 %v7438
        %v8987 = vpop.f32.mrb[0].mxu0
        %v8988 = vadd.f32 %v8891, %v8987
        %v8989 = vpop.f32.mrb[0].mxu0
        %v8990 = vpop.f32.mrb[0].mxu0
        %v8991 = vadd.f32 %v8894, %v8990
        %v8992 = vpop.f32.mrb[0].mxu0
        %8993 = vmatprep.mubr.bf16.mxu0 %v7455
        %8994 = vmatmul.mubr.bf16.gmra.mrb[0].mxu0 %v7454
        %v8995 = vpop.f32.mrb[0].mxu0
        %v8996 = vadd.f32 %v8899, %v8995
        %v8997 = vpop.f32.mrb[0].mxu0
        %v8998 = vpop.f32.mrb[0].mxu0
        %v8999 = vadd.f32 %v8902, %v8998
        %v9000 = vpop.f32.mrb[0].mxu0
        %9001 = vmatprep.mubr.bf16.mxu0 %v7471
        %9002 = vmatmul.mubr.bf16.gmra.mrb[0].mxu0 %v7470
        %v9003 = vpop.f32.mrb[0].mxu0
        %v9004 = vadd.f32 %v8907, %v9003
        %v9005 = vpop.f32.mrb[0].mxu0
        %v9006 = vpop.f32.mrb[0].mxu0
        %v9007 = vadd.f32 %v8910, %v9006
        %v9008 = vpop.f32.mrb[0].mxu0
        %9009 = vmatprep.mubr.bf16.mxu0 %v7487
        %9010 = vmatmul.mubr.bf16.gmra.mrb[0].mxu0 %v7486
        %v9011 = vpop.f32.mrb[0].mxu0
        %v9012 = vadd.f32 %v8915, %v9011
        %v9013 = vpop.f32.mrb[0].mxu0
        %v9014 = vpop.f32.mrb[0].mxu0
        %v9015 = vadd.f32 %v8918, %v9014
        %v9016 = vpop.f32.mrb[0].mxu0
        %9017 = vmatprep.mubr.bf16.mxu0 %v7503
        %9018 = vmatmul.mubr.bf16.gmra.mrb[0].mxu0 %v7502
        %v9019 = vpop.f32.mrb[0].mxu0
        %v9020 = vadd.f32 %v8923, %v9019
        %v9021 = vpop.f32.mrb[0].mxu0
        %v9022 = vpop.f32.mrb[0].mxu0
        %v9023 = vadd.f32 %v8926, %v9022
        %v9024 = vpop.f32.mrb[0].mxu0
        %9025 = vdwg.mxu0
        %9026 = vmatprep.subr.bf16.mxu0 0
        %9027 = vmatpush1.bf16.msra.mxu0 %v8365
        %9028 = vmatprep.subr.bf16.mxu0 0
        %9029 = vmatpush1.bf16.msra.mxu0 %v8366
        %9030 = vmatprep.subr.bf16.mxu0 0
        %9031 = vmatpush1.bf16.msra.mxu0 %v8367
        %9032 = vmatprep.subr.bf16.mxu0 0
        %9033 = vmatpush1.bf16.msra.mxu0 %v8368
        %9034 = vmatprep.subr.bf16.mxu0 0
        %9035 = vmatpush1.bf16.msra.mxu0 %v8369
        %9036 = vmatprep.subr.bf16.mxu0 0
        %9037 = vmatpush1.bf16.msra.mxu0 %v8370
        %9038 = vmatprep.subr.bf16.mxu0 0
        %9039 = vmatpush1.bf16.msra.mxu0 %v8371
        %9040 = vmatprep.subr.bf16.mxu0 0
        %9041 = vmatpush1.bf16.msra.mxu0 %v8372
        %9042 = vmatprep.subr.bf16.mxu0 0
        %9043 = vmatpush1.bf16.msra.mxu0 %v8373
        %9044 = vmatprep.subr.bf16.mxu0 0
        %9045 = vmatpush1.bf16.msra.mxu0 %v8374
        %9046 = vmatprep.subr.bf16.mxu0 0
        %9047 = vmatpush1.bf16.msra.mxu0 %v8375
        %9048 = vmatprep.subr.bf16.mxu0 0
        %9049 = vmatpush1.bf16.msra.mxu0 %v8376
        %9050 = vmatprep.subr.bf16.mxu0 0
        %9051 = vmatpush1.bf16.msra.mxu0 %v8377
        %9052 = vmatprep.subr.bf16.mxu0 0
        %9053 = vmatpush1.bf16.msra.mxu0 %v8378
        %9054 = vmatprep.subr.bf16.mxu0 0
        %9055 = vmatpush1.bf16.msra.mxu0 %v8379
        %9056 = vmatprep.subr.bf16.mxu0 0
        %9057 = vmatpush1.bf16.msra.mxu0 %v8380
        %9058 = vmatprep.mubr.bf16.mxu0 %v7393
        %9059 = vmatmul.mubr.bf16.gmra.mrb[0].mxu0 %v7392
        %v9060 = vpop.f32.mrb[0].mxu0
        %v9061 = vadd.f32 %v8964, %v9060
        %v9062 = vpop.f32.mrb[0].mxu0
        %v9063 = vpop.f32.mrb[0].mxu0
        %v9064 = vadd.f32 %v8967, %v9063
        %v9065 = vpop.f32.mrb[0].mxu0
        %9066 = vmatprep.mubr.bf16.mxu0 %v7409
        %9067 = vmatmul.mubr.bf16.gmra.mrb[0].mxu0 %v7408
        %v9068 = vpop.f32.mrb[0].mxu0
        %v9069 = vadd.f32 %v8972, %v9068
        %v9070 = vpop.f32.mrb[0].mxu0
        %v9071 = vpop.f32.mrb[0].mxu0
        %v9072 = vadd.f32 %v8975, %v9071
        %v9073 = vpop.f32.mrb[0].mxu0
        %9074 = vmatprep.mubr.bf16.mxu0 %v7425
        %9075 = vmatmul.mubr.bf16.gmra.mrb[0].mxu0 %v7424
        %v9076 = vpop.f32.mrb[0].mxu0
        %v9077 = vadd.f32 %v8980, %v9076
        %v9078 = vpop.f32.mrb[0].mxu0
        %v9079 = vpop.f32.mrb[0].mxu0
        %v9080 = vadd.f32 %v8983, %v9079
        %v9081 = vpop.f32.mrb[0].mxu0
        %9082 = vmatprep.mubr.bf16.mxu0 %v7441
        %9083 = vmatmul.mubr.bf16.gmra.mrb[0].mxu0 %v7440
        %v9084 = vpop.f32.mrb[0].mxu0
        %v9085 = vadd.f32 %v8988, %v9084
        %v9086 = vpop.f32.mrb[0].mxu0
        %v9087 = vpop.f32.mrb[0].mxu0
        %v9088 = vadd.f32 %v8991, %v9087
        %v9089 = vpop.f32.mrb[0].mxu0
        %9090 = vmatprep.mubr.bf16.mxu0 %v7457
        %9091 = vmatmul.mubr.bf16.gmra.mrb[0].mxu0 %v7456
        %v9092 = vpop.f32.mrb[0].mxu0
        %v9093 = vadd.f32 %v8996, %v9092
        %v9094 = vpop.f32.mrb[0].mxu0
        %v9095 = vpop.f32.mrb[0].mxu0
        %v9096 = vadd.f32 %v8999, %v9095
        %v9097 = vpop.f32.mrb[0].mxu0
        %9098 = vmatprep.mubr.bf16.mxu0 %v7473
        %9099 = vmatmul.mubr.bf16.gmra.mrb[0].mxu0 %v7472
        %v9100 = vpop.f32.mrb[0].mxu0
        %v9101 = vadd.f32 %v9004, %v9100
        %v9102 = vpop.f32.mrb[0].mxu0
        %v9103 = vpop.f32.mrb[0].mxu0
        %v9104 = vadd.f32 %v9007, %v9103
        %v9105 = vpop.f32.mrb[0].mxu0
        %9106 = vmatprep.mubr.bf16.mxu0 %v7489
        %9107 = vmatmul.mubr.bf16.gmra.mrb[0].mxu0 %v7488
        %v9108 = vpop.f32.mrb[0].mxu0
        %v9109 = vadd.f32 %v9012, %v9108
        %v9110 = vpop.f32.mrb[0].mxu0
        %v9111 = vpop.f32.mrb[0].mxu0
        %v9112 = vadd.f32 %v9015, %v9111
        %v9113 = vpop.f32.mrb[0].mxu0
        %9114 = vmatprep.mubr.bf16.mxu0 %v7505
        %9115 = vmatmul.mubr.bf16.gmra.mrb[0].mxu0 %v7504
        %v9116 = vpop.f32.mrb[0].mxu0
        %v9117 = vadd.f32 %v9020, %v9116
        %v9118 = vpop.f32.mrb[0].mxu0
        %v9119 = vpop.f32.mrb[0].mxu0
        %v9120 = vadd.f32 %v9023, %v9119
        %v9121 = vpop.f32.mrb[0].mxu0
        %9122 = vdwg.mxu0
        %9123 = vmatprep.subr.bf16.mxu0 0
        %9124 = vmatpush1.bf16.msra.mxu0 %v8381
        %9125 = vmatprep.subr.bf16.mxu0 0
        %9126 = vmatpush1.bf16.msra.mxu0 %v8382
        %9127 = vmatprep.subr.bf16.mxu0 0
        %9128 = vmatpush1.bf16.msra.mxu0 %v8383
        %9129 = vmatprep.subr.bf16.mxu0 0
        %9130 = vmatpush1.bf16.msra.mxu0 %v8384
        %9131 = vmatprep.subr.bf16.mxu0 0
        %9132 = vmatpush1.bf16.msra.mxu0 %v8385
        %9133 = vmatprep.subr.bf16.mxu0 0
        %9134 = vmatpush1.bf16.msra.mxu0 %v8386
        %9135 = vmatprep.subr.bf16.mxu0 0
        %9136 = vmatpush1.bf16.msra.mxu0 %v8387
        %9137 = vmatprep.subr.bf16.mxu0 0
        %9138 = vmatpush1.bf16.msra.mxu0 %v8388
        %9139 = vmatprep.subr.bf16.mxu0 0
        %9140 = vmatpush1.bf16.msra.mxu0 %v8389
        %9141 = vmatprep.subr.bf16.mxu0 0
        %9142 = vmatpush1.bf16.msra.mxu0 %v8390
        %9143 = vmatprep.subr.bf16.mxu0 0
        %9144 = vmatpush1.bf16.msra.mxu0 %v8391
        %9145 = vmatprep.subr.bf16.mxu0 0
        %9146 = vmatpush1.bf16.msra.mxu0 %v8392
        %9147 = vmatprep.subr.bf16.mxu0 0
        %9148 = vmatpush1.bf16.msra.mxu0 %v8393
        %9149 = vmatprep.subr.bf16.mxu0 0
        %9150 = vmatpush1.bf16.msra.mxu0 %v8394
        %9151 = vmatprep.subr.bf16.mxu0 0
        %9152 = vmatpush1.bf16.msra.mxu0 %v8395
        %9153 = vmatprep.subr.bf16.mxu0 0
        %9154 = vmatpush1.bf16.msra.mxu0 %v8396
        %9155 = vmatprep.mubr.bf16.mxu0 %v7395
        %9156 = vmatmul.mubr.bf16.gmra.mrb[0].mxu0 %v7394
        %v9157 = vpop.f32.mrb[0].mxu0
        %v9158 = vadd.f32 %v9061, %v9157
        %v9159 = vpop.f32.mrb[0].mxu0
        %v9160 = vpop.f32.mrb[0].mxu0
        %v9161 = vadd.f32 %v9064, %v9160
        %v9162 = vpop.f32.mrb[0].mxu0
        %9163 = vmatprep.mubr.bf16.mxu0 %v7411
        %9164 = vmatmul.mubr.bf16.gmra.mrb[0].mxu0 %v7410
        %v9165 = vpop.f32.mrb[0].mxu0
        %v9166 = vadd.f32 %v9069, %v9165
        %v9167 = vpop.f32.mrb[0].mxu0
        %v9168 = vpop.f32.mrb[0].mxu0
        %v9169 = vadd.f32 %v9072, %v9168
        %v9170 = vpop.f32.mrb[0].mxu0
        %9171 = vmatprep.mubr.bf16.mxu0 %v7427
        %9172 = vmatmul.mubr.bf16.gmra.mrb[0].mxu0 %v7426
        %v9173 = vpop.f32.mrb[0].mxu0
        %v9174 = vadd.f32 %v9077, %v9173
        %v9175 = vpop.f32.mrb[0].mxu0
        %v9176 = vpop.f32.mrb[0].mxu0
        %v9177 = vadd.f32 %v9080, %v9176
        %v9178 = vpop.f32.mrb[0].mxu0
        %9179 = vmatprep.mubr.bf16.mxu0 %v7443
        %9180 = vmatmul.mubr.bf16.gmra.mrb[0].mxu0 %v7442
        %v9181 = vpop.f32.mrb[0].mxu0
        %v9182 = vadd.f32 %v9085, %v9181
        %v9183 = vpop.f32.mrb[0].mxu0
        %v9184 = vpop.f32.mrb[0].mxu0
        %v9185 = vadd.f32 %v9088, %v9184
        %v9186 = vpop.f32.mrb[0].mxu0
        %9187 = vmatprep.mubr.bf16.mxu0 %v7459
        %9188 = vmatmul.mubr.bf16.gmra.mrb[0].mxu0 %v7458
        %v9189 = vpop.f32.mrb[0].mxu0
        %v9190 = vadd.f32 %v9093, %v9189
        %v9191 = vpop.f32.mrb[0].mxu0
        %v9192 = vpop.f32.mrb[0].mxu0
        %v9193 = vadd.f32 %v9096, %v9192
        %v9194 = vpop.f32.mrb[0].mxu0
        %9195 = vmatprep.mubr.bf16.mxu0 %v7475
        %9196 = vmatmul.mubr.bf16.gmra.mrb[0].mxu0 %v7474
        %v9197 = vpop.f32.mrb[0].mxu0
        %v9198 = vadd.f32 %v9101, %v9197
        %v9199 = vpop.f32.mrb[0].mxu0
        %v9200 = vpop.f32.mrb[0].mxu0
        %v9201 = vadd.f32 %v9104, %v9200
        %v9202 = vpop.f32.mrb[0].mxu0
        %9203 = vmatprep.mubr.bf16.mxu0 %v7491
        %9204 = vmatmul.mubr.bf16.gmra.mrb[0].mxu0 %v7490
        %v9205 = vpop.f32.mrb[0].mxu0
        %v9206 = vadd.f32 %v9109, %v9205
        %v9207 = vpop.f32.mrb[0].mxu0
        %v9208 = vpop.f32.mrb[0].mxu0
        %v9209 = vadd.f32 %v9112, %v9208
        %v9210 = vpop.f32.mrb[0].mxu0
        %9211 = vmatprep.mubr.bf16.mxu0 %v7507
        %9212 = vmatmul.mubr.bf16.gmra.mrb[0].mxu0 %v7506
        %v9213 = vpop.f32.mrb[0].mxu0
        %v9214 = vadd.f32 %v9117, %v9213
        %v9215 = vpop.f32.mrb[0].mxu0
        %v9216 = vpop.f32.mrb[0].mxu0
        %v9217 = vadd.f32 %v9120, %v9216
        %v9218 = vpop.f32.mrb[0].mxu0
        %9219 = vdwg.mxu0
        %9220 = vmatprep.subr.bf16.mxu0 0
        %9221 = vmatpush1.bf16.msra.mxu0 %v8397
        %9222 = vmatprep.subr.bf16.mxu0 0
        %9223 = vmatpush1.bf16.msra.mxu0 %v8398
        %9224 = vmatprep.subr.bf16.mxu0 0
        %9225 = vmatpush1.bf16.msra.mxu0 %v8399
        %9226 = vmatprep.subr.bf16.mxu0 0
        %9227 = vmatpush1.bf16.msra.mxu0 %v8400
        %9228 = vmatprep.subr.bf16.mxu0 0
        %9229 = vmatpush1.bf16.msra.mxu0 %v8401
        %9230 = vmatprep.subr.bf16.mxu0 0
        %9231 = vmatpush1.bf16.msra.mxu0 %v8402
        %9232 = vmatprep.subr.bf16.mxu0 0
        %9233 = vmatpush1.bf16.msra.mxu0 %v8403
        %9234 = vmatprep.subr.bf16.mxu0 0
        %9235 = vmatpush1.bf16.msra.mxu0 %v8404
        %9236 = vmatprep.subr.bf16.mxu0 0
        %9237 = vmatpush1.bf16.msra.mxu0 %v8405
        %9238 = vmatprep.subr.bf16.mxu0 0
        %9239 = vmatpush1.bf16.msra.mxu0 %v8406
        %9240 = vmatprep.subr.bf16.mxu0 0
        %9241 = vmatpush1.bf16.msra.mxu0 %v8407
        %9242 = vmatprep.subr.bf16.mxu0 0
        %9243 = vmatpush1.bf16.msra.mxu0 %v8408
        %9244 = vmatprep.subr.bf16.mxu0 0
        %9245 = vmatpush1.bf16.msra.mxu0 %v8409
        %9246 = vmatprep.subr.bf16.mxu0 0
        %9247 = vmatpush1.bf16.msra.mxu0 %v8410
        %9248 = vmatprep.subr.bf16.mxu0 0
        %9249 = vmatpush1.bf16.msra.mxu0 %v8411
        %9250 = vmatprep.subr.bf16.mxu0 0
        %9251 = vmatpush1.bf16.msra.mxu0 %v8412
        %9252 = vmatprep.mubr.bf16.mxu0 %v7397
        %9253 = vmatmul.mubr.bf16.gmra.mrb[0].mxu0 %v7396
        %v9254 = vpop.f32.mrb[0].mxu0
        %v9255 = vadd.f32 %v9158, %v9254
        %v9256 = vpop.f32.mrb[0].mxu0
        %v9257 = vpop.f32.mrb[0].mxu0
        %v9258 = vadd.f32 %v9161, %v9257
        %v9259 = vpop.f32.mrb[0].mxu0
        %9260 = vmatprep.mubr.bf16.mxu0 %v7413
        %9261 = vmatmul.mubr.bf16.gmra.mrb[0].mxu0 %v7412
        %v9262 = vpop.f32.mrb[0].mxu0
        %v9263 = vadd.f32 %v9166, %v9262
        %v9264 = vpop.f32.mrb[0].mxu0
        %v9265 = vpop.f32.mrb[0].mxu0
        %v9266 = vadd.f32 %v9169, %v9265
        %v9267 = vpop.f32.mrb[0].mxu0
        %9268 = vmatprep.mubr.bf16.mxu0 %v7429
        %9269 = vmatmul.mubr.bf16.gmra.mrb[0].mxu0 %v7428
        %v9270 = vpop.f32.mrb[0].mxu0
        %v9271 = vadd.f32 %v9174, %v9270
        %v9272 = vpop.f32.mrb[0].mxu0
        %v9273 = vpop.f32.mrb[0].mxu0
        %v9274 = vadd.f32 %v9177, %v9273
        %v9275 = vpop.f32.mrb[0].mxu0
        %9276 = vmatprep.mubr.bf16.mxu0 %v7445
        %9277 = vmatmul.mubr.bf16.gmra.mrb[0].mxu0 %v7444
        %v9278 = vpop.f32.mrb[0].mxu0
        %v9279 = vadd.f32 %v9182, %v9278
        %v9280 = vpop.f32.mrb[0].mxu0
        %v9281 = vpop.f32.mrb[0].mxu0
        %v9282 = vadd.f32 %v9185, %v9281
        %v9283 = vpop.f32.mrb[0].mxu0
        %9284 = vmatprep.mubr.bf16.mxu0 %v7461
        %9285 = vmatmul.mubr.bf16.gmra.mrb[0].mxu0 %v7460
        %v9286 = vpop.f32.mrb[0].mxu0
        %v9287 = vadd.f32 %v9190, %v9286
        %v9288 = vpop.f32.mrb[0].mxu0
        %v9289 = vpop.f32.mrb[0].mxu0
        %v9290 = vadd.f32 %v9193, %v9289
        %v9291 = vpop.f32.mrb[0].mxu0
        %9292 = vmatprep.mubr.bf16.mxu0 %v7477
        %9293 = vmatmul.mubr.bf16.gmra.mrb[0].mxu0 %v7476
        %v9294 = vpop.f32.mrb[0].mxu0
        %v9295 = vadd.f32 %v9198, %v9294
        %v9296 = vpop.f32.mrb[0].mxu0
        %v9297 = vpop.f32.mrb[0].mxu0
        %v9298 = vadd.f32 %v9201, %v9297
        %v9299 = vpop.f32.mrb[0].mxu0
        %9300 = vmatprep.mubr.bf16.mxu0 %v7493
        %9301 = vmatmul.mubr.bf16.gmra.mrb[0].mxu0 %v7492
        %v9302 = vpop.f32.mrb[0].mxu0
        %v9303 = vadd.f32 %v9206, %v9302
        %v9304 = vpop.f32.mrb[0].mxu0
        %v9305 = vpop.f32.mrb[0].mxu0
        %v9306 = vadd.f32 %v9209, %v9305
        %v9307 = vpop.f32.mrb[0].mxu0
        %9308 = vmatprep.mubr.bf16.mxu0 %v7509
        %9309 = vmatmul.mubr.bf16.gmra.mrb[0].mxu0 %v7508
        %v9310 = vpop.f32.mrb[0].mxu0
        %v9311 = vadd.f32 %v9214, %v9310
        %v9312 = vpop.f32.mrb[0].mxu0
        %v9313 = vpop.f32.mrb[0].mxu0
        %v9314 = vadd.f32 %v9217, %v9313
        %v9315 = vpop.f32.mrb[0].mxu0
        %9316 = vdwg.mxu0
        %v9317 = vadd.f32 %v5706, %v9255
        %v9318 = vadd.f32 %v5707, %v9258
        %v9319 = vadd.f32 %v5708, %v9263
        %v9320 = vadd.f32 %v5709, %v9266
        %v9321 = vadd.f32 %v5710, %v9271
        %v9322 = vadd.f32 %v5711, %v9274
        %v9323 = vadd.f32 %v5712, %v9279
        %v9324 = vadd.f32 %v5713, %v9282
        %v9325 = vadd.f32 %v5714, %v9287
        %v9326 = vadd.f32 %v5715, %v9290
        %v9327 = vadd.f32 %v5716, %v9295
        %v9328 = vadd.f32 %v5717, %v9298
        %v9329 = vadd.f32 %v5718, %v9303
        %v9330 = vadd.f32 %v5719, %v9306
        %v9331 = vadd.f32 %v5720, %v9311
        %v9332 = vadd.f32 %v5721, %v9314
        %v9333 = vld [vmem:[%s17] sm:$0x1]
        %v9334 = vld [vmem:[%s18] sm:$0x1]
        %v9335 = vsel %vm1345, %v9317, 0.0
        %9336 = vadd.xlane.f32.xlu0 %v9335
        %v9337 = vpop.xlane.xlu0 %9336
        %v9338 = vsel %vm1345, %v9318, 0.0
        %9339 = vadd.xlane.f32.xlu0 %v9338
        %v9340 = vpop.xlane.xlu0 %9339
        %v9341 = vsel %vm1345, %v9319, 0.0
        %9342 = vadd.xlane.f32.xlu0 %v9341
        %v9343 = vpop.xlane.xlu0 %9342
        %v9344 = vsel %vm1345, %v9320, 0.0
        %9345 = vadd.xlane.f32.xlu0 %v9344
        %v9346 = vpop.xlane.xlu0 %9345
        %v9347 = vsel %vm1345, %v9321, 0.0
        %9348 = vadd.xlane.f32.xlu0 %v9347
        %v9349 = vpop.xlane.xlu0 %9348
        %v9350 = vsel %vm1345, %v9322, 0.0
        %9351 = vadd.xlane.f32.xlu0 %v9350
        %v9352 = vpop.xlane.xlu0 %9351
        %v9353 = vsel %vm1345, %v9323, 0.0
        %9354 = vadd.xlane.f32.xlu0 %v9353
        %v9355 = vpop.xlane.xlu0 %9354
        %v9356 = vsel %vm1345, %v9324, 0.0
        %9357 = vadd.xlane.f32.xlu0 %v9356
        %v9358 = vpop.xlane.xlu0 %9357
        %v9359 = vsel %vm1345, %v9325, 0.0
        %9360 = vadd.xlane.f32.xlu0 %v9359
        %v9361 = vpop.xlane.xlu0 %9360
        %v9362 = vsel %vm1345, %v9326, 0.0
        %9363 = vadd.xlane.f32.xlu0 %v9362
        %v9364 = vpop.xlane.xlu0 %9363
        %v9365 = vsel %vm1345, %v9327, 0.0
        %9366 = vadd.xlane.f32.xlu0 %v9365
        %v9367 = vpop.xlane.xlu0 %9366
        %v9368 = vsel %vm1345, %v9328, 0.0
        %9369 = vadd.xlane.f32.xlu0 %v9368
        %v9370 = vpop.xlane.xlu0 %9369
        %v9371 = vsel %vm1345, %v9329, 0.0
        %9372 = vadd.xlane.f32.xlu0 %v9371
        %v9373 = vpop.xlane.xlu0 %9372
        %v9374 = vsel %vm1345, %v9330, 0.0
        %9375 = vadd.xlane.f32.xlu0 %v9374
        %v9376 = vpop.xlane.xlu0 %9375
        %v9377 = vsel %vm1345, %v9331, 0.0
        %9378 = vadd.xlane.f32.xlu0 %v9377
        %v9379 = vpop.xlane.xlu0 %9378
        %v9380 = vsel %vm1345, %v9332, 0.0
        %9381 = vadd.xlane.f32.xlu0 %v9380
        %v9382 = vpop.xlane.xlu0 %9381
        %v9383 = vmul.f32 %v9337, %v5517
        %v9384 = vmul.f32 %v9340, %v5517
        %v9385 = vmul.f32 %v9343, %v5517
        %v9386 = vmul.f32 %v9346, %v5517
        %v9387 = vmul.f32 %v9349, %v5517
        %v9388 = vmul.f32 %v9352, %v5517
        %v9389 = vmul.f32 %v9355, %v5517
        %v9390 = vmul.f32 %v9358, %v5517
        %v9391 = vmul.f32 %v9361, %v5517
        %v9392 = vmul.f32 %v9364, %v5517
        %v9393 = vmul.f32 %v9367, %v5517
        %v9394 = vmul.f32 %v9370, %v5517
        %v9395 = vmul.f32 %v9373, %v5517
        %v9396 = vmul.f32 %v9376, %v5517
        %v9397 = vmul.f32 %v9379, %v5517
        %v9398 = vmul.f32 %v9382, %v5517
        %v9399 = vsub.f32 %v9317, %v9383
        %v9400 = vsub.f32 %v9318, %v9384
        %v9401 = vsub.f32 %v9319, %v9385
        %v9402 = vsub.f32 %v9320, %v9386
        %v9403 = vsub.f32 %v9321, %v9387
        %v9404 = vsub.f32 %v9322, %v9388
        %v9405 = vsub.f32 %v9323, %v9389
        %v9406 = vsub.f32 %v9324, %v9390
        %v9407 = vsub.f32 %v9325, %v9391
        %v9408 = vsub.f32 %v9326, %v9392
        %v9409 = vsub.f32 %v9327, %v9393
        %v9410 = vsub.f32 %v9328, %v9394
        %v9411 = vsub.f32 %v9329, %v9395
        %v9412 = vsub.f32 %v9330, %v9396
        %v9413 = vsub.f32 %v9331, %v9397
        %v9414 = vsub.f32 %v9332, %v9398
        %v9415 = vmul.f32 %v9399, %v9399
        %v9416 = vmul.f32 %v9400, %v9400
        %v9417 = vmul.f32 %v9401, %v9401
        %v9418 = vmul.f32 %v9402, %v9402
        %v9419 = vmul.f32 %v9403, %v9403
        %v9420 = vmul.f32 %v9404, %v9404
        %v9421 = vmul.f32 %v9405, %v9405
        %v9422 = vmul.f32 %v9406, %v9406
        %v9423 = vmul.f32 %v9407, %v9407
        %v9424 = vmul.f32 %v9408, %v9408
        %v9425 = vmul.f32 %v9409, %v9409
        %v9426 = vmul.f32 %v9410, %v9410
        %v9427 = vmul.f32 %v9411, %v9411
        %v9428 = vmul.f32 %v9412, %v9412
        %v9429 = vmul.f32 %v9413, %v9413
        %v9430 = vmul.f32 %v9414, %v9414
        %v9431 = vsel %vm1345, %v9415, 0.0
        %9432 = vadd.xlane.f32.xlu0 %v9431
        %v9433 = vpop.xlane.xlu0 %9432
        %v9434 = vsel %vm1345, %v9416, 0.0
        %9435 = vadd.xlane.f32.xlu0 %v9434
        %v9436 = vpop.xlane.xlu0 %9435
        %v9437 = vsel %vm1345, %v9417, 0.0
        %9438 = vadd.xlane.f32.xlu0 %v9437
        %v9439 = vpop.xlane.xlu0 %9438
        %v9440 = vsel %vm1345, %v9418, 0.0
        %9441 = vadd.xlane.f32.xlu0 %v9440
        %v9442 = vpop.xlane.xlu0 %9441
        %v9443 = vsel %vm1345, %v9419, 0.0
        %9444 = vadd.xlane.f32.xlu0 %v9443
        %v9445 = vpop.xlane.xlu0 %9444
        %v9446 = vsel %vm1345, %v9420, 0.0
        %9447 = vadd.xlane.f32.xlu0 %v9446
        %v9448 = vpop.xlane.xlu0 %9447
        %v9449 = vsel %vm1345, %v9421, 0.0
        %9450 = vadd.xlane.f32.xlu0 %v9449
        %v9451 = vpop.xlane.xlu0 %9450
        %v9452 = vsel %vm1345, %v9422, 0.0
        %9453 = vadd.xlane.f32.xlu0 %v9452
        %v9454 = vpop.xlane.xlu0 %9453
        %v9455 = vsel %vm1345, %v9423, 0.0
        %9456 = vadd.xlane.f32.xlu0 %v9455
        %v9457 = vpop.xlane.xlu0 %9456
        %v9458 = vsel %vm1345, %v9424, 0.0
        %9459 = vadd.xlane.f32.xlu0 %v9458
        %v9460 = vpop.xlane.xlu0 %9459
        %v9461 = vsel %vm1345, %v9425, 0.0
        %9462 = vadd.xlane.f32.xlu0 %v9461
        %v9463 = vpop.xlane.xlu0 %9462
        %v9464 = vsel %vm1345, %v9426, 0.0
        %9465 = vadd.xlane.f32.xlu0 %v9464
        %v9466 = vpop.xlane.xlu0 %9465
        %v9467 = vsel %vm1345, %v9427, 0.0
        %9468 = vadd.xlane.f32.xlu0 %v9467
        %v9469 = vpop.xlane.xlu0 %9468
        %v9470 = vsel %vm1345, %v9428, 0.0
        %9471 = vadd.xlane.f32.xlu0 %v9470
        %v9472 = vpop.xlane.xlu0 %9471
        %v9473 = vsel %vm1345, %v9429, 0.0
        %9474 = vadd.xlane.f32.xlu0 %v9473
        %v9475 = vpop.xlane.xlu0 %9474
        %v9476 = vsel %vm1345, %v9430, 0.0
        %9477 = vadd.xlane.f32.xlu0 %v9476
        %v9478 = vpop.xlane.xlu0 %9477
        %v9479 = vmul.f32 %v9433, %v5517
        %v9480 = vmul.f32 %v9436, %v5517
        %v9481 = vmul.f32 %v9439, %v5517
        %v9482 = vmul.f32 %v9442, %v5517
        %v9483 = vmul.f32 %v9445, %v5517
        %v9484 = vmul.f32 %v9448, %v5517
        %v9485 = vmul.f32 %v9451, %v5517
        %v9486 = vmul.f32 %v9454, %v5517
        %v9487 = vmul.f32 %v9457, %v5517
        %v9488 = vmul.f32 %v9460, %v5517
        %v9489 = vmul.f32 %v9463, %v5517
        %v9490 = vmul.f32 %v9466, %v5517
        %v9491 = vmul.f32 %v9469, %v5517
        %v9492 = vmul.f32 %v9472, %v5517
        %v9493 = vmul.f32 %v9475, %v5517
        %v9494 = vmul.f32 %v9478, %v5517
        %v9495 = vadd.f32 %v9479, 1e-05
        %v9496 = vadd.f32 %v9480, 1e-05
        %v9497 = vadd.f32 %v9481, 1e-05
        %v9498 = vadd.f32 %v9482, 1e-05
        %v9499 = vadd.f32 %v9483, 1e-05
        %v9500 = vadd.f32 %v9484, 1e-05
        %v9501 = vadd.f32 %v9485, 1e-05
        %v9502 = vadd.f32 %v9486, 1e-05
        %v9503 = vadd.f32 %v9487, 1e-05
        %v9504 = vadd.f32 %v9488, 1e-05
        %v9505 = vadd.f32 %v9489, 1e-05
        %v9506 = vadd.f32 %v9490, 1e-05
        %v9507 = vadd.f32 %v9491, 1e-05
        %v9508 = vadd.f32 %v9492, 1e-05
        %v9509 = vadd.f32 %v9493, 1e-05
        %v9510 = vadd.f32 %v9494, 1e-05
        %v9511 = vrsqrt.pop %v9495
        %v9512 = vrsqrt.pop %v9496
        %v9513 = vrsqrt.pop %v9497
        %v9514 = vrsqrt.pop %v9498
        %v9515 = vrsqrt.pop %v9499
        %v9516 = vrsqrt.pop %v9500
        %v9517 = vrsqrt.pop %v9501
        %v9518 = vrsqrt.pop %v9502
        %v9519 = vrsqrt.pop %v9503
        %v9520 = vrsqrt.pop %v9504
        %v9521 = vrsqrt.pop %v9505
        %v9522 = vrsqrt.pop %v9506
        %v9523 = vrsqrt.pop %v9507
        %v9524 = vrsqrt.pop %v9508
        %v9525 = vrsqrt.pop %v9509
        %v9526 = vrsqrt.pop %v9510
        %v9527 = vmul.f32 %v9399, %v9511
        %v9528 = vmul.f32 %v9400, %v9512
        %v9529 = vmul.f32 %v9401, %v9513
        %v9530 = vmul.f32 %v9402, %v9514
        %v9531 = vmul.f32 %v9403, %v9515
        %v9532 = vmul.f32 %v9404, %v9516
        %v9533 = vmul.f32 %v9405, %v9517
        %v9534 = vmul.f32 %v9406, %v9518
        %v9535 = vmul.f32 %v9407, %v9519
        %v9536 = vmul.f32 %v9408, %v9520
        %v9537 = vmul.f32 %v9409, %v9521
        %v9538 = vmul.f32 %v9410, %v9522
        %v9539 = vmul.f32 %v9411, %v9523
        %v9540 = vmul.f32 %v9412, %v9524
        %v9541 = vmul.f32 %v9413, %v9525
        %v9542 = vmul.f32 %v9414, %v9526
        %v9544 = vlaneseq
        %v9545 = vshrl.u32 %v9544, 7
        %v9546 = vsub.s32 0, %v9545
        %v9547 = vrot.slane %v9333, %v9546
        %v9549 = vmul.f32 %v9527, %v9547
        %v9550 = vmul.f32 %v9528, %v9547
        %v9551 = vmul.f32 %v9529, %v9547
        %v9552 = vmul.f32 %v9530, %v9547
        %v9553 = vmul.f32 %v9531, %v9547
        %v9554 = vmul.f32 %v9532, %v9547
        %v9555 = vmul.f32 %v9533, %v9547
        %v9556 = vmul.f32 %v9534, %v9547
        %v9557 = vmul.f32 %v9535, %v9547
        %v9558 = vmul.f32 %v9536, %v9547
        %v9559 = vmul.f32 %v9537, %v9547
        %v9560 = vmul.f32 %v9538, %v9547
        %v9561 = vmul.f32 %v9539, %v9547
        %v9562 = vmul.f32 %v9540, %v9547
        %v9563 = vmul.f32 %v9541, %v9547
        %v9564 = vmul.f32 %v9542, %v9547
        %v9566 = vlaneseq
        %v9567 = vshrl.u32 %v9566, 7
        %v9568 = vsub.s32 0, %v9567
        %v9569 = vrot.slane %v9334, %v9568
        %v9571 = vadd.f32 %v9549, %v9569
        %v9572 = vadd.f32 %v9550, %v9569
        %v9573 = vadd.f32 %v9551, %v9569
        %v9574 = vadd.f32 %v9552, %v9569
        %v9575 = vadd.f32 %v9553, %v9569
        %v9576 = vadd.f32 %v9554, %v9569
        %v9577 = vadd.f32 %v9555, %v9569
        %v9578 = vadd.f32 %v9556, %v9569
        %v9579 = vadd.f32 %v9557, %v9569
        %v9580 = vadd.f32 %v9558, %v9569
        %v9581 = vadd.f32 %v9559, %v9569
        %v9582 = vadd.f32 %v9560, %v9569
        %v9583 = vadd.f32 %v9561, %v9569
        %v9584 = vadd.f32 %v9562, %v9569
        %v9585 = vadd.f32 %v9563, %v9569
        %v9586 = vadd.f32 %v9564, %v9569
        %vm9587 = vcmp.gt.f32.partialorder %v9571, 0.0
        %vm9588 = vcmp.gt.f32.partialorder %v9572, 0.0
        %vm9589 = vcmp.gt.f32.partialorder %v9573, 0.0
        %vm9590 = vcmp.gt.f32.partialorder %v9574, 0.0
        %vm9591 = vcmp.gt.f32.partialorder %v9575, 0.0
        %vm9592 = vcmp.gt.f32.partialorder %v9576, 0.0
        %vm9593 = vcmp.gt.f32.partialorder %v9577, 0.0
        %vm9594 = vcmp.gt.f32.partialorder %v9578, 0.0
        %vm9595 = vcmp.gt.f32.partialorder %v9579, 0.0
        %vm9596 = vcmp.gt.f32.partialorder %v9580, 0.0
        %vm9597 = vcmp.gt.f32.partialorder %v9581, 0.0
        %vm9598 = vcmp.gt.f32.partialorder %v9582, 0.0
        %vm9599 = vcmp.gt.f32.partialorder %v9583, 0.0
        %vm9600 = vcmp.gt.f32.partialorder %v9584, 0.0
        %vm9601 = vcmp.gt.f32.partialorder %v9585, 0.0
        %vm9602 = vcmp.gt.f32.partialorder %v9586, 0.0
        %v9603 = vmul.f32 %v9571, 0.2
        %v9604 = vmul.f32 %v9572, 0.2
        %v9605 = vmul.f32 %v9573, 0.2
        %v9606 = vmul.f32 %v9574, 0.2
        %v9607 = vmul.f32 %v9575, 0.2
        %v9608 = vmul.f32 %v9576, 0.2
        %v9609 = vmul.f32 %v9577, 0.2
        %v9610 = vmul.f32 %v9578, 0.2
        %v9611 = vmul.f32 %v9579, 0.2
        %v9612 = vmul.f32 %v9580, 0.2
        %v9613 = vmul.f32 %v9581, 0.2
        %v9614 = vmul.f32 %v9582, 0.2
        %v9615 = vmul.f32 %v9583, 0.2
        %v9616 = vmul.f32 %v9584, 0.2
        %v9617 = vmul.f32 %v9585, 0.2
        %v9618 = vmul.f32 %v9586, 0.2
        %v9619 = vsel %vm9587, %v9571, %v9603
        %v9620 = vsel %vm9588, %v9572, %v9604
        %v9621 = vsel %vm9589, %v9573, %v9605
        %v9622 = vsel %vm9590, %v9574, %v9606
        %v9623 = vsel %vm9591, %v9575, %v9607
        %v9624 = vsel %vm9592, %v9576, %v9608
        %v9625 = vsel %vm9593, %v9577, %v9609
        %v9626 = vsel %vm9594, %v9578, %v9610
        %v9627 = vsel %vm9595, %v9579, %v9611
        %v9628 = vsel %vm9596, %v9580, %v9612
        %v9629 = vsel %vm9597, %v9581, %v9613
        %v9630 = vsel %vm9598, %v9582, %v9614
        %v9631 = vsel %vm9599, %v9583, %v9615
        %v9632 = vsel %vm9600, %v9584, %v9616
        %v9633 = vsel %vm9601, %v9585, %v9617
        %v9634 = vsel %vm9602, %v9586, %v9618
        %v9635 = vpack.c.bf16 %v9620, %v9619
        %v9636 = vpack.c.bf16 %v9622, %v9621
        %v9637 = vpack.c.bf16 %v9624, %v9623
        %v9638 = vpack.c.bf16 %v9626, %v9625
        %v9639 = vpack.c.bf16 %v9628, %v9627
        %v9640 = vpack.c.bf16 %v9630, %v9629
        %v9641 = vpack.c.bf16 %v9632, %v9631
        %v9642 = vpack.c.bf16 %v9634, %v9633
        %v9643 = vld [vmem:[%s23] sm:$0xf]
        %v9644 = vld [vmem:[%s23 + $0x4] sm:$0xf]
        %v9645 = vld [vmem:[%s23 + $0x8] sm:$0xf]
        %v9646 = vld [vmem:[%s23 + $0xc] sm:$0xf]
        %v9647 = vld [vmem:[%s23 + $0x10] sm:$0xf]
        %v9648 = vld [vmem:[%s23 + $0x14] sm:$0xf]
        %v9649 = vld [vmem:[%s23 + $0x18] sm:$0xf]
        %v9650 = vld [vmem:[%s23 + $0x1c] sm:$0xf]
        %v9651 = vld [vmem:[%s24] sm:$0x1]
        %v9653 = vlaneseq
        %v9654 = vshrl.u32 %v9653, 7
        %v9655 = vsub.s32 0, %v9654
        %v9656 = vrot.slane %v9651, %v9655
        %v9666 = vunpack.c.l.b16 %v9643
        %v9667 = vunpack.c.l.b16 %v9644
        %v9668 = vunpack.c.l.b16 %v9645
        %v9669 = vunpack.c.l.b16 %v9646
        %v9670 = vunpack.c.l.b16 %v9647
        %v9671 = vunpack.c.l.b16 %v9648
        %v9672 = vunpack.c.l.b16 %v9649
        %v9673 = vunpack.c.l.b16 %v9650
        %v9674 = vpack.c.b16 %v9667, %v9666
        %v9675 = vpack.c.b16 %v9669, %v9668
        %v9676 = vpack.c.b16 %v9671, %v9670
        %v9677 = vpack.c.b16 %v9673, %v9672
        %v9683 = vsel %vm1345, %v9635, 0
        %v9686 = vsel %vm1345, %v9636, 0
        %v9689 = vsel %vm1345, %v9637, 0
        %v9692 = vsel %vm1345, %v9638, 0
        %v9695 = vsel %vm1345, %v9639, 0
        %v9698 = vsel %vm1345, %v9640, 0
        %v9701 = vsel %vm1345, %v9641, 0
        %v9704 = vsel %vm1345, %v9642, 0
        %9706 = vmatprep.subr.bf16.mxu0 0
        %9707 = vmatpush1.bf16.msra.mxu0 %v9674
        %9708 = vmatprep.subr.bf16.mxu0 0
        %9709 = vmatpush1.bf16.msra.mxu0 %v9675
        %9710 = vmatprep.subr.bf16.mxu0 0
        %9711 = vmatpush1.bf16.msra.mxu0 %v9676
        %9712 = vmatprep.subr.bf16.mxu0 0
        %9713 = vmatpush1.bf16.msra.mxu0 %v9677
        %9714 = vmatprep.subr.bf16.mxu0 0
        %9715 = vmatpush1.bf16.msra.mxu0 0
        %9716 = vmatprep.subr.bf16.mxu0 0
        %9717 = vmatpush1.bf16.msra.mxu0 0
        %9718 = vmatprep.subr.bf16.mxu0 0
        %9719 = vmatpush1.bf16.msra.mxu0 0
        %9720 = vmatprep.subr.bf16.mxu0 0
        %9721 = vmatpush1.bf16.msra.mxu0 0
        %9722 = vmatprep.subr.bf16.mxu0 0
        %9723 = vmatpush1.bf16.msra.mxu0 0
        %9724 = vmatprep.subr.bf16.mxu0 0
        %9725 = vmatpush1.bf16.msra.mxu0 0
        %9726 = vmatprep.subr.bf16.mxu0 0
        %9727 = vmatpush1.bf16.msra.mxu0 0
        %9728 = vmatprep.subr.bf16.mxu0 0
        %9729 = vmatpush1.bf16.msra.mxu0 0
        %9730 = vmatprep.subr.bf16.mxu0 0
        %9731 = vmatpush1.bf16.msra.mxu0 0
        %9732 = vmatprep.subr.bf16.mxu0 0
        %9733 = vmatpush1.bf16.msra.mxu0 0
        %9734 = vmatprep.subr.bf16.mxu0 0
        %9735 = vmatpush1.bf16.msra.mxu0 0
        %9736 = vmatprep.subr.bf16.mxu0 0
        %9737 = vmatpush1.bf16.msra.mxu0 0
        %9738 = vmatprep.mubr.bf16.mxu0 0
        %9739 = vmatmul.mubr.bf16.gmra.mrb[0].mxu0 %v9683
        %v9740 = vpop.f32.mrb[0].mxu0
        %v9741 = vadd.f32 %v9656, %v9740
        %v9742 = vpop.f32.mrb[0].mxu0
        %v9743 = vpop.f32.mrb[0].mxu0
        %v9744 = vadd.f32 %v9656, %v9743
        %v9745 = vpop.f32.mrb[0].mxu0
        %9746 = vmatprep.mubr.bf16.mxu0 0
        %9747 = vmatmul.mubr.bf16.gmra.mrb[0].mxu0 %v9686
        %v9748 = vpop.f32.mrb[0].mxu0
        %v9749 = vadd.f32 %v9656, %v9748
        %v9750 = vpop.f32.mrb[0].mxu0
        %v9751 = vpop.f32.mrb[0].mxu0
        %v9752 = vadd.f32 %v9656, %v9751
        %v9753 = vpop.f32.mrb[0].mxu0
        %9754 = vmatprep.mubr.bf16.mxu0 0
        %9755 = vmatmul.mubr.bf16.gmra.mrb[0].mxu0 %v9689
        %v9756 = vpop.f32.mrb[0].mxu0
        %v9757 = vadd.f32 %v9656, %v9756
        %v9758 = vpop.f32.mrb[0].mxu0
        %v9759 = vpop.f32.mrb[0].mxu0
        %v9760 = vadd.f32 %v9656, %v9759
        %v9761 = vpop.f32.mrb[0].mxu0
        %9762 = vmatprep.mubr.bf16.mxu0 0
        %9763 = vmatmul.mubr.bf16.gmra.mrb[0].mxu0 %v9692
        %v9764 = vpop.f32.mrb[0].mxu0
        %v9765 = vadd.f32 %v9656, %v9764
        %v9766 = vpop.f32.mrb[0].mxu0
        %v9767 = vpop.f32.mrb[0].mxu0
        %v9768 = vadd.f32 %v9656, %v9767
        %v9769 = vpop.f32.mrb[0].mxu0
        %9770 = vmatprep.mubr.bf16.mxu0 0
        %9771 = vmatmul.mubr.bf16.gmra.mrb[0].mxu0 %v9695
        %v9772 = vpop.f32.mrb[0].mxu0
        %v9773 = vadd.f32 %v9656, %v9772
        %v9774 = vpop.f32.mrb[0].mxu0
        %v9775 = vpop.f32.mrb[0].mxu0
        %v9776 = vadd.f32 %v9656, %v9775
        %v9777 = vpop.f32.mrb[0].mxu0
        %9778 = vmatprep.mubr.bf16.mxu0 0
        %9779 = vmatmul.mubr.bf16.gmra.mrb[0].mxu0 %v9698
        %v9780 = vpop.f32.mrb[0].mxu0
        %v9781 = vadd.f32 %v9656, %v9780
        %v9782 = vpop.f32.mrb[0].mxu0
        %v9783 = vpop.f32.mrb[0].mxu0
        %v9784 = vadd.f32 %v9656, %v9783
        %v9785 = vpop.f32.mrb[0].mxu0
        %9786 = vmatprep.mubr.bf16.mxu0 0
        %9787 = vmatmul.mubr.bf16.gmra.mrb[0].mxu0 %v9701
        %v9788 = vpop.f32.mrb[0].mxu0
        %v9789 = vadd.f32 %v9656, %v9788
        %v9790 = vpop.f32.mrb[0].mxu0
        %v9791 = vpop.f32.mrb[0].mxu0
        %v9792 = vadd.f32 %v9656, %v9791
        %v9793 = vpop.f32.mrb[0].mxu0
        %9794 = vmatprep.mubr.bf16.mxu0 0
        %9795 = vmatmul.mubr.bf16.gmra.mrb[0].mxu0 %v9704
        %v9796 = vpop.f32.mrb[0].mxu0
        %v9797 = vadd.f32 %v9656, %v9796
        %v9798 = vpop.f32.mrb[0].mxu0
        %v9799 = vpop.f32.mrb[0].mxu0
        %v9800 = vadd.f32 %v9656, %v9799
        %v9801 = vpop.f32.mrb[0].mxu0
        %9802 = vdwg.mxu0
        %vm9803 = vcmask 130048
        %9804 = vst.msk [vmem:[%s968] sm:$0xff] %vm9803, %v9741
        %9805 = vst.msk [vmem:[%s968 + $0x8] sm:$0xff] %vm9803, %v9744
        %9806 = vst.msk [vmem:[%s968 + $0x10] sm:$0xff] %vm9803, %v9749
        %9807 = vst.msk [vmem:[%s968 + $0x18] sm:$0xff] %vm9803, %v9752
        %9808 = vst.msk [vmem:[%s968 + $0x20] sm:$0xff] %vm9803, %v9757
        %9809 = vst.msk [vmem:[%s968 + $0x28] sm:$0xff] %vm9803, %v9760
        %9810 = vst.msk [vmem:[%s968 + $0x30] sm:$0xff] %vm9803, %v9765
        %9811 = vst.msk [vmem:[%s968 + $0x38] sm:$0xff] %vm9803, %v9768
        %9812 = vst.msk [vmem:[%s968 + $0x40] sm:$0xff] %vm9803, %v9773
        %9813 = vst.msk [vmem:[%s968 + $0x48] sm:$0xff] %vm9803, %v9776
        %9814 = vst.msk [vmem:[%s968 + $0x50] sm:$0xff] %vm9803, %v9781
        %9815 = vst.msk [vmem:[%s968 + $0x58] sm:$0xff] %vm9803, %v9784
        %9816 = vst.msk [vmem:[%s968 + $0x60] sm:$0xff] %vm9803, %v9789
        %9817 = vst.msk [vmem:[%s968 + $0x68] sm:$0xff] %vm9803, %v9792
        %9818 = vst.msk [vmem:[%s968 + $0x70] sm:$0xff] %vm9803, %v9797
        %9819 = vst.msk [vmem:[%s968 + $0x78] sm:$0xff] %vm9803, %v9800
        %s9820 = sand.u32 %s579, 1
        %s9821 = sand.u32 %s579, 1
        %s9822 = smul.addr %s9821, 128
        %s9823 = scalar_lea.vmem [#allocation4], %s9822
        // Predicated region
        $region197: #{tpu_custom_call.1} parent=187 // pred_check
          %p9824 = pneg %p589
        $region198: #{tpu_custom_call.1} parent=187 // pred_check_branch
          %9826 = sbr.rel (%p9824) target = $region200
        $region199: #{tpu_custom_call.1} parent=187 // pred_region
          %s9827 = smul.u32 2, %s36
          %s9828 = smul.addr %s9827, 8
          %s9829 = scalar_lea.vmem %s25, %s9828
          // Predicated region
          $region201: #{tpu_custom_call.1} parent=199 // pred_check
            _
          $region202: #{tpu_custom_call.1} parent=199 // pred_check_branch
            %9831 = sbr.rel (0) target = $region204
          $region203: #{tpu_custom_call.1} parent=199 // pred_region
            // Predicated region
            $region205: #{tpu_custom_call.1} parent=203 // pred_check
              _
            $region206: #{tpu_custom_call.1} parent=203 // pred_check_branch
              %9833 = sbr.rel (0) target = $region208
            $region207: #{tpu_custom_call.1} parent=203 // pred_region
              // Predicated region
              $region220: #{tpu_custom_call.1} parent=207 // pred_check
                _
              $region221: #{tpu_custom_call.1} parent=207 // pred_check_branch
                %9878 = sbr.rel (0) target = $region223
              $region222: #{tpu_custom_call.1} parent=207 // pred_region
                loop: start=0, step=1, limit=1
                $region224: #{tpu_custom_call.1} parent=222 // loop_pre_header
                  _
                $region225: #{tpu_custom_call.1} parent=222 // loop_header
                  %s9880 = sphi 0, %s9884
                  %p9881 = scmp.ge.s32.totalorder %s9880, 1
                  %s9885 = sphi %s9823, %s9823
                  %s9886 = sphi %s9829, %s9829
                $region226: #{tpu_custom_call.1} parent=222 // loop_header_branch
                  %9883 = sbr.rel (%p9881) target = $region230
                $region227: #{tpu_custom_call.1} parent=222 // loop_body
                  %v9887 = vld [vmem:[%s9885] sm:$0xff]
                  %9888 = vst [vmem:[%s9886] sm:$0xff] %v9887
                  %v9889 = vld [vmem:[%s9885 + $0x8] sm:$0xff]
                  %9890 = vst [vmem:[%s9886 + $0x8] sm:$0xff] %v9889
                  %v9891 = vld [vmem:[%s9885 + $0x10] sm:$0xff]
                  %9892 = vst [vmem:[%s9886 + $0x20] sm:$0xff] %v9891
                  %v9893 = vld [vmem:[%s9885 + $0x18] sm:$0xff]
                  %9894 = vst [vmem:[%s9886 + $0x28] sm:$0xff] %v9893
                  %v9895 = vld [vmem:[%s9885 + $0x20] sm:$0xff]
                  %9896 = vst [vmem:[%s9886 + $0x40] sm:$0xff] %v9895
                  %v9897 = vld [vmem:[%s9885 + $0x28] sm:$0xff]
                  %9898 = vst [vmem:[%s9886 + $0x48] sm:$0xff] %v9897
                  %v9899 = vld [vmem:[%s9885 + $0x30] sm:$0xff]
                  %9900 = vst [vmem:[%s9886 + $0x60] sm:$0xff] %v9899
                  %v9901 = vld [vmem:[%s9885 + $0x38] sm:$0xff]
                  %9902 = vst [vmem:[%s9886 + $0x68] sm:$0xff] %v9901
                  %v9903 = vld [vmem:[%s9885 + $0x40] sm:$0xff]
                  %9904 = vst [vmem:[%s9886 + $0x80] sm:$0xff] %v9903
                  %v9905 = vld [vmem:[%s9885 + $0x48] sm:$0xff]
                  %9906 = vst [vmem:[%s9886 + $0x88] sm:$0xff] %v9905
                  %v9907 = vld [vmem:[%s9885 + $0x50] sm:$0xff]
                  %9908 = vst [vmem:[%s9886 + $0xa0] sm:$0xff] %v9907
                  %v9909 = vld [vmem:[%s9885 + $0x58] sm:$0xff]
                  %9910 = vst [vmem:[%s9886 + $0xa8] sm:$0xff] %v9909
                  %v9911 = vld [vmem:[%s9885 + $0x60] sm:$0xff]
                  %9912 = vst [vmem:[%s9886 + $0xc0] sm:$0xff] %v9911
                  %v9913 = vld [vmem:[%s9885 + $0x68] sm:$0xff]
                  %9914 = vst [vmem:[%s9886 + $0xc8] sm:$0xff] %v9913
                  %v9915 = vld [vmem:[%s9885 + $0x70] sm:$0xff]
                  %9916 = vst [vmem:[%s9886 + $0xe0] sm:$0xff] %v9915
                  %v9917 = vld [vmem:[%s9885 + $0x78] sm:$0xff]
                  %9918 = vst [vmem:[%s9886 + $0xe8] sm:$0xff] %v9917
                $region228: #{tpu_custom_call.1} parent=222 // loop_footer
                  %s9884 = sadd.s32 1, %s9880
                $region229: #{tpu_custom_call.1} parent=222 // loop_footer_branch
                  %9879 = sbr.rel target = $region225
                $region230: #{tpu_custom_call.1} parent=222 // loop_exit
                  _
              $region223: #{tpu_custom_call.1} parent=207 // pred_fallthru
                _
              // Predicated region
              $region231: #{tpu_custom_call.1} parent=207 // pred_check
                _
              $region232: #{tpu_custom_call.1} parent=207 // pred_check_branch
                %9920 = sbr.rel target = $region234
              $region233: #{tpu_custom_call.1} parent=207 // pred_region
                _
              $region234: #{tpu_custom_call.1} parent=207 // pred_fallthru
                _
            $region208: #{tpu_custom_call.1} parent=203 // pred_fallthru
              _
            // Predicated region
            $region209: #{tpu_custom_call.1} parent=203 // pred_check
              _
            $region210: #{tpu_custom_call.1} parent=203 // pred_check_branch
              %9835 = sbr.rel target = $region212
            $region211: #{tpu_custom_call.1} parent=203 // pred_region
              loop: start=0, step=1, limit=1
              $region213: #{tpu_custom_call.1} parent=211 // loop_pre_header
                _
              $region214: #{tpu_custom_call.1} parent=211 // loop_header
                %s9838 = sphi 0, %s9842
                %p9839 = scmp.ge.s32.totalorder %s9838, 1
                %s9843 = sphi %s9823, %s9823
                %s9844 = sphi %s9829, %s9829
              $region215: #{tpu_custom_call.1} parent=211 // loop_header_branch
                %9841 = sbr.rel (%p9839) target = $region219
              $region216: #{tpu_custom_call.1} parent=211 // loop_body
                %v9845 = vld [vmem:[%s9843] sm:$0xff]
                %9846 = vst [vmem:[%s9844] sm:$0xff] %v9845
                %v9847 = vld [vmem:[%s9843 + $0x8] sm:$0xff]
                %9848 = vst [vmem:[%s9844 + $0x8] sm:$0xff] %v9847
                %v9849 = vld [vmem:[%s9843 + $0x10] sm:$0xff]
                %9850 = vst [vmem:[%s9844 + $0x20] sm:$0xff] %v9849
                %v9851 = vld [vmem:[%s9843 + $0x18] sm:$0xff]
                %9852 = vst [vmem:[%s9844 + $0x28] sm:$0xff] %v9851
                %v9853 = vld [vmem:[%s9843 + $0x20] sm:$0xff]
                %9854 = vst [vmem:[%s9844 + $0x40] sm:$0xff] %v9853
                %v9855 = vld [vmem:[%s9843 + $0x28] sm:$0xff]
                %9856 = vst [vmem:[%s9844 + $0x48] sm:$0xff] %v9855
                %v9857 = vld [vmem:[%s9843 + $0x30] sm:$0xff]
                %9858 = vst [vmem:[%s9844 + $0x60] sm:$0xff] %v9857
                %v9859 = vld [vmem:[%s9843 + $0x38] sm:$0xff]
                %9860 = vst [vmem:[%s9844 + $0x68] sm:$0xff] %v9859
                %v9861 = vld [vmem:[%s9843 + $0x40] sm:$0xff]
                %9862 = vst [vmem:[%s9844 + $0x80] sm:$0xff] %v9861
                %v9863 = vld [vmem:[%s9843 + $0x48] sm:$0xff]
                %9864 = vst [vmem:[%s9844 + $0x88] sm:$0xff] %v9863
                %v9865 = vld [vmem:[%s9843 + $0x50] sm:$0xff]
                %9866 = vst [vmem:[%s9844 + $0xa0] sm:$0xff] %v9865
                %v9867 = vld [vmem:[%s9843 + $0x58] sm:$0xff]
                %9868 = vst [vmem:[%s9844 + $0xa8] sm:$0xff] %v9867
                %v9869 = vld [vmem:[%s9843 + $0x60] sm:$0xff]
                %9870 = vst [vmem:[%s9844 + $0xc0] sm:$0xff] %v9869
                %v9871 = vld [vmem:[%s9843 + $0x68] sm:$0xff]
                %9872 = vst [vmem:[%s9844 + $0xc8] sm:$0xff] %v9871
                %v9873 = vld [vmem:[%s9843 + $0x70] sm:$0xff]
                %9874 = vst [vmem:[%s9844 + $0xe0] sm:$0xff] %v9873
                %v9875 = vld [vmem:[%s9843 + $0x78] sm:$0xff]
                %9876 = vst [vmem:[%s9844 + $0xe8] sm:$0xff] %v9875
              $region217: #{tpu_custom_call.1} parent=211 // loop_footer
                %s9842 = sadd.s32 1, %s9838
              $region218: #{tpu_custom_call.1} parent=211 // loop_footer_branch
                %9837 = sbr.rel target = $region214
              $region219: #{tpu_custom_call.1} parent=211 // loop_exit
                _
            $region212: #{tpu_custom_call.1} parent=203 // pred_fallthru
              _
          $region204: #{tpu_custom_call.1} parent=199 // pred_fallthru
            _
          %9921 = vnop
        $region200: #{tpu_custom_call.1} parent=187 // pred_fallthru
          _
      $region188: #{tpu_custom_call.1} parent=5 // pred_fallthru
        _
      %p9922 = scmp.le.s32.totalorder 2, %s31
      // Predicated region
      $region235: #{tpu_custom_call.1} parent=5 // pred_check
        %p9923 = pneg %p9922
      $region236: #{tpu_custom_call.1} parent=5 // pred_check_branch
        %9925 = sbr.rel (%p9923) target = $region238
      $region237: #{tpu_custom_call.1} parent=5 // pred_region
        %s9926 = ssub.s32 %s31, 2
        // Predicated region
        $region239: #{tpu_custom_call.1} parent=237 // pred_check
          %p9927 = pneg %p595
        $region240: #{tpu_custom_call.1} parent=237 // pred_check_branch
          %9929 = sbr.rel (%p9927) target = $region242
        $region241: #{tpu_custom_call.1} parent=237 // pred_region
          %s9930 = sand.u32 %s580, 1
          %s9931 = sand.u32 %s580, 1
          %s9932 = smul.addr %s9931, 128
          %s9933 = scalar_lea.vmem [#allocation4], %s9932
        $region242: #{tpu_custom_call.1} parent=237 // pred_fallthru
          _
      $region238: #{tpu_custom_call.1} parent=5 // pred_fallthru
        _
    $region6: #{tpu_custom_call.1} parent=1 // loop_footer
      %s35 = sadd.s32 1, %s31
    $region7: #{tpu_custom_call.1} parent=1 // loop_footer_branch
      %30 = sbr.rel target = $region3
    $region8: #{tpu_custom_call.1} parent=1 // loop_exit
      _

</llo_original>
